<compile_context>
chip_gen: v6e
topology: v6e:2x2x1
jax: 0.10.0
libtpu: 0.0.40
codegen_flags: <defaults>
</compile_context>

<pallas_src>
import jax
import jax.numpy as jnp
from jax.experimental import pallas as pl
from jax.experimental.pallas import tpu as pltpu  # noqa: F401

# ---------------------------------------------------------------------------
# Model hyper-parameters (consistent with the module's __init__)
# ---------------------------------------------------------------------------
DIM = 32
N_HEAD = 4
HEAD_DIM = 8
FF_DIM = 64
ENCODER_DEPTH = 2
DECODER_DEPTH = 2
INNER_DIM = N_HEAD * HEAD_DIM          # 32
SCALE = HEAD_DIM ** -0.5
LN_EPS = 1e-5

B = 2      # batch
S = 16     # source (encoder) sequence length
T = 8      # target (decoder) sequence length

# ----- packed-slab bookkeeping -----
N_ATTN = ENCODER_DEPTH + 2 * DECODER_DEPTH     # 6 attention blocks
N_FF = ENCODER_DEPTH + DECODER_DEPTH           # 4 feed-forward blocks
ATTN_VEC_ROWS = 3 * N_ATTN                     # ln_g, ln_b, b_o per attn block
FF_VEC_ROWS = 4 * N_FF                         # ln_g, ln_b, b1, b2 per ff block
VEC_ROWS = ATTN_VEC_ROWS + FF_VEC_ROWS         # 34
VEC_ROWS_PAD = ((VEC_ROWS + 7) // 8) * 8       # 40
VEC_COLS = 128                                 # lane-dense rows; b1 uses 0:64

MASK_ENC_R0 = 0
MASK_DEC_R0 = B * S                            # 32
MASK_CROSS_R0 = B * S + B * T                  # 48
MASK_ROWS = B * S + 2 * B * T                  # 64
MASK_COLS = B * S                              # 32


# ---------------------------------------------------------------------------
# In-kernel building blocks (operate on f32 values + small weight values)
# ---------------------------------------------------------------------------
def _layernorm(x, g, b):
    mu = jnp.mean(x, axis=-1, keepdims=True)
    var = jnp.mean(jnp.square(x - mu), axis=-1, keepdims=True)
    return (x - mu) * jax.lax.rsqrt(var + LN_EPS) * g + b


def _attn_block(x, kv, w, ln_g, ln_b, b_o, mask):
    """PreNorm multi-head attention with residual.

    x    : (Rq, D) residual / query input (LayerNorm applied to this only).
    kv   : (Rk, D) key/value source, or None for self-attention.
    w    : (D, 128) packed weights [Wq*scale | Wk | Wv | Wo] (pre-transposed).
    mask : additive f32 block-diagonal batch mask, shape (Rq, Rk).
    """
    xn = _layernorm(x, ln_g, ln_b)
    if kv is None:
        # fused QKV: one (Rq,32) @ (32,96) matmul
        qkv = jnp.dot(xn, w[:, 0:3 * INNER_DIM], preferred_element_type=jnp.float32)
        q_all = qkv[:, 0:INNER_DIM]
        k_all = qkv[:, INNER_DIM:2 * INNER_DIM]
        v_all = qkv[:, 2 * INNER_DIM:3 * INNER_DIM]
    else:
        q_all = jnp.dot(xn, w[:, 0:INNER_DIM], preferred_element_type=jnp.float32)
        kv_all = jnp.dot(kv, w[:, INNER_DIM:3 * INNER_DIM],
                         preferred_element_type=jnp.float32)
        k_all = kv_all[:, 0:INNER_DIM]
        v_all = kv_all[:, INNER_DIM:2 * INNER_DIM]

    heads = []
    for h in range(N_HEAD):                    # static unrolled loop (4 heads)
        lo, hi = h * HEAD_DIM, (h + 1) * HEAD_DIM
        q = q_all[:, lo:hi]
        k = k_all[:, lo:hi]
        v = v_all[:, lo:hi]
        # q @ k^T without an explicit transpose (contract last dims of both)
        dots = jax.lax.dot_general(q, k, (((1,), (1,)), ((), ())),
                                   preferred_element_type=jnp.float32)
        dots = dots + mask                     # additive 0 / -1e30 batch mask
        dots = dots - jnp.max(dots, axis=-1, keepdims=True)
        e = jnp.exp(dots)
        p = e / jnp.sum(e, axis=-1, keepdims=True)   # exact reciprocal
        heads.append(jnp.dot(p, v, preferred_element_type=jnp.float32))

    o = jnp.concatenate(heads, axis=-1)        # (Rq, 32) lane-dense head concat
    wo = w[:, 3 * INNER_DIM:3 * INNER_DIM + DIM]
    return x + jnp.dot(o, wo, preferred_element_type=jnp.float32) + b_o


def _ff_block(x, w1, b1, w2, b2, ln_g, ln_b):
    """PreNorm FeedForward with residual: x + W2(GELU(W1(LN(x)) + b1)) + b2."""
    xn = _layernorm(x, ln_g, ln_b)
    h = jnp.dot(xn, w1, preferred_element_type=jnp.float32) + b1
    h = 0.5 * h * (1.0 + jax.lax.erf(h * (2.0 ** -0.5)))   # exact erf GELU
    return x + jnp.dot(h, w2, preferred_element_type=jnp.float32) + b2


# ---------------------------------------------------------------------------
# The single fused kernel: full encoder + decoder forward in one invocation
# ---------------------------------------------------------------------------
def _transformer_kernel(src_ref, tgt_ref, attn_w_ref, ff_w1_ref, ff_w2_ref,
                        vec_ref, masks_ref, out_ref):
    # Precomputed additive block-diagonal batch masks (static slices)
    mask_enc = masks_ref[MASK_ENC_R0:MASK_ENC_R0 + B * S, 0:B * S]        # (32,32)
    mask_dec = masks_ref[MASK_DEC_R0:MASK_DEC_R0 + B * T, 0:B * T]        # (16,16)
    mask_cross = masks_ref[MASK_CROSS_R0:MASK_CROSS_R0 + B * T, 0:B * S]  # (16,32)

    def attn_vecs(i):
        r = 3 * i
        return (vec_ref[r:r + 1, 0:DIM],
                vec_ref[r + 1:r + 2, 0:DIM],
                vec_ref[r + 2:r + 3, 0:DIM])

    def ff_vecs(j):
        r = ATTN_VEC_ROWS + 4 * j
        return (vec_ref[r:r + 1, 0:DIM],
                vec_ref[r + 1:r + 2, 0:DIM],
                vec_ref[r + 2:r + 3, 0:FF_DIM],
                vec_ref[r + 3:r + 4, 0:DIM])

    def run_attn(x, kv, i, mask):
        ln_g, ln_b, b_o = attn_vecs(i)
        return _attn_block(x, kv, attn_w_ref[i], ln_g, ln_b, b_o, mask)

    def run_ff(x, j):
        ln_g, ln_b, b1, b2 = ff_vecs(j)
        return _ff_block(x, ff_w1_ref[j], b1, ff_w2_ref[j], b2, ln_g, ln_b)

    # ----- encoder -----
    x = src_ref[...]                           # (B*S, D)
    a_i, f_i = 0, 0
    for _ in range(ENCODER_DEPTH):
        x = run_attn(x, None, a_i, mask_enc); a_i += 1
        x = run_ff(x, f_i); f_i += 1
    memory = x                                 # stays resident in VMEM/vregs

    # ----- decoder (unmasked self-attn, matching the reference module) -----
    y = tgt_ref[...]                           # (B*T, D)
    for _ in range(DECODER_DEPTH):
        y = run_attn(y, None, a_i, mask_dec); a_i += 1
        y = run_attn(y, memory, a_i, mask_cross); a_i += 1
        y = run_ff(y, f_i); f_i += 1

    out_ref[...] = y                           # single small store


# ---------------------------------------------------------------------------
# pallas_call wrapper: one call, no grid, 7 packed operands, all in VMEM
# ---------------------------------------------------------------------------
@jax.jit
def transformer_forward(src, tgt, kparams):
    b, s_len, d = src.shape
    _, t_len, _ = tgt.shape
    src2 = src.reshape(b * s_len, d)
    tgt2 = tgt.reshape(b * t_len, d)
    operands = (src2, tgt2, kparams["attn_w"], kparams["ff_w1"],
                kparams["ff_w2"], kparams["vec"], kparams["masks"])
    bytes_accessed = sum(int(o.size) * o.dtype.itemsize for o in operands)
    bytes_accessed += b * t_len * d * 4
    cost = pl.CostEstimate(flops=2_500_000, transcendentals=20_000,
                           bytes_accessed=int(bytes_accessed))
    out2 = pl.pallas_call(
        _transformer_kernel,
        out_shape=jax.ShapeDtypeStruct((b * t_len, d), jnp.float32),
        cost_estimate=cost,
    )(*operands)
    return out2.reshape(b, t_len, d)


# ---------------------------------------------------------------------------
# Parameter init (torch convention: W is (out_features, in_features))
# ---------------------------------------------------------------------------
def init_attn_params(key):
    k1, k2, k3, k4 = jax.random.split(key, 4)
    return {
        "gamma": jnp.ones((1, DIM), jnp.float32),                               # LayerNorm weight
        "beta": jnp.zeros((1, DIM), jnp.float32),                               # LayerNorm bias
        "wq": 0.05 * jax.random.normal(k1, (INNER_DIM, DIM), jnp.float32),      # to_q.weight
        "wkv": 0.05 * jax.random.normal(k2, (2 * INNER_DIM, DIM), jnp.float32), # to_kv.weight
        "wo": 0.05 * jax.random.normal(k3, (DIM, INNER_DIM), jnp.float32),      # to_out[0].weight
        "bo": 0.01 * jax.random.normal(k4, (1, DIM), jnp.float32),              # to_out[0].bias
    }


def init_ff_params(key):
    k1, k2, k3, k4 = jax.random.split(key, 4)
    return {
        "gamma": jnp.ones((1, DIM), jnp.float32),
        "beta": jnp.zeros((1, DIM), jnp.float32),
        "w1": 0.05 * jax.random.normal(k1, (FF_DIM, DIM), jnp.float32),
        "b1": 0.01 * jax.random.normal(k2, (1, FF_DIM), jnp.float32),
        "w2": 0.05 * jax.random.normal(k3, (DIM, FF_DIM), jnp.float32),
        "b2": 0.01 * jax.random.normal(k4, (1, DIM), jnp.float32),
    }


def init_transformer_params(key):
    params = {"encoder": [], "decoder": []}
    for _ in range(ENCODER_DEPTH):
        key, ka, kf = jax.random.split(key, 3)
        params["encoder"].append({"attn": init_attn_params(ka),
                                  "ff": init_ff_params(kf)})
    for _ in range(DECODER_DEPTH):
        key, ks, kc, kf = jax.random.split(key, 4)
        params["decoder"].append({"self_attn": init_attn_params(ks),
                                  "cross_attn": init_attn_params(kc),
                                  "ff": init_ff_params(kf)})
    return params


# ---------------------------------------------------------------------------
# One-time host-side weight packing into a handful of lane-dense slabs
# ---------------------------------------------------------------------------
def _bdiag_mask_host(n_q, n_k):
    """Additive 0 / -1e30 mask: row i (batch i//n_q) attends only to its batch."""
    qb = jnp.arange(B * n_q)[:, None] // n_q
    kb = jnp.arange(B * n_k)[None, :] // n_k
    return jnp.where(qb == kb, 0.0, -1e30).astype(jnp.float32)


def prepare_kernel_params(params):
    # Block order must match the kernel's sequential indices:
    #   attn: enc0, enc1, dec0_self, dec0_cross, dec1_self, dec1_cross
    #   ff  : enc0, enc1, dec0, dec1
    attn_blocks, ff_blocks = [], []
    for layer in params["encoder"]:
        attn_blocks.append(layer["attn"])
        ff_blocks.append(layer["ff"])
    for layer in params["decoder"]:
        attn_blocks.append(layer["self_attn"])
        attn_blocks.append(layer["cross_attn"])
        ff_blocks.append(layer["ff"])

    # Attention weight slab: (N_ATTN, 32, 128) = [Wq^T*scale | Wkv^T | Wo^T]
    aw = []
    for p in attn_blocks:
        wq_t = p["wq"].T * SCALE          # (32, 32), softmax scale folded in
        wkv_t = p["wkv"].T                # (32, 64): cols 0:32 = K, 32:64 = V
        wo_t = p["wo"].T                  # (32, 32)
        aw.append(jnp.concatenate([wq_t, wkv_t, wo_t], axis=1))
    attn_w = jnp.stack(aw, axis=0)        # (6, 32, 128)

    ff_w1 = jnp.stack([p["w1"].T for p in ff_blocks], axis=0)   # (4, 32, 64)
    ff_w2 = jnp.stack([p["w2"].T for p in ff_blocks], axis=0)   # (4, 64, 32)

    # All LN gammas/betas and biases packed into one (40, 128) slab
    vec = jnp.zeros((VEC_ROWS_PAD, VEC_COLS), jnp.float32)
    for i, p in enumerate(attn_blocks):
        r = 3 * i
        vec = vec.at[r, 0:DIM].set(p["gamma"][0])
        vec = vec.at[r + 1, 0:DIM].set(p["beta"][0])
        vec = vec.at[r + 2, 0:DIM].set(p["bo"][0])
    for j, p in enumerate(ff_blocks):
        r = ATTN_VEC_ROWS + 4 * j
        vec = vec.at[r, 0:DIM].set(p["gamma"][0])
        vec = vec.at[r + 1, 0:DIM].set(p["beta"][0])
        vec = vec.at[r + 2, 0:FF_DIM].set(p["b1"][0])
        vec = vec.at[r + 3, 0:DIM].set(p["b2"][0])

    # Precomputed additive block-diagonal batch masks, packed into (64, 32)
    masks = jnp.zeros((MASK_ROWS, MASK_COLS), jnp.float32)
    masks = masks.at[MASK_ENC_R0:MASK_ENC_R0 + B * S, 0:B * S].set(_bdiag_mask_host(S, S))
    masks = masks.at[MASK_DEC_R0:MASK_DEC_R0 + B * T, 0:B * T].set(_bdiag_mask_host(T, T))
    masks = masks.at[MASK_CROSS_R0:MASK_CROSS_R0 + B * T, 0:B * S].set(_bdiag_mask_host(T, S))

    return {"attn_w": attn_w, "ff_w1": ff_w1, "ff_w2": ff_w2,
            "vec": vec, "masks": masks}


# ---------------------------------------------------------------------------
# Pure-JAX reference (mirrors the PyTorch module) for correctness checking
# ---------------------------------------------------------------------------
def reference_forward(src, tgt, params):
    def ln(x, g, b):
        mu = jnp.mean(x, axis=-1, keepdims=True)
        var = jnp.mean(jnp.square(x - mu), axis=-1, keepdims=True)
        return (x - mu) / jnp.sqrt(var + LN_EPS) * g + b

    def split_heads(t):                  # (B, N, H*d) -> (B, H, N, d)
        bb, n, _ = t.shape
        return t.reshape(bb, n, N_HEAD, HEAD_DIM).transpose(0, 2, 1, 3)

    def attention(fr, to, p):
        q = fr @ p["wq"].T
        kv = to @ p["wkv"].T
        k, v = kv[..., :INNER_DIM], kv[..., INNER_DIM:]
        qh, kh, vh = split_heads(q), split_heads(k), split_heads(v)
        dots = jnp.einsum("bhqd,bhkd->bhqk", qh, kh) * SCALE
        attn = jax.nn.softmax(dots, axis=-1)
        o = jnp.einsum("bhqk,bhkd->bhqd", attn, vh)
        bb, _, n, _ = o.shape
        o = o.transpose(0, 2, 1, 3).reshape(bb, n, INNER_DIM)
        return o @ p["wo"].T + p["bo"]

    def ff(x, p):
        h = x @ p["w1"].T + p["b1"]
        h = 0.5 * h * (1.0 + jax.lax.erf(h * (2.0 ** -0.5)))
        return h @ p["w2"].T + p["b2"]

    x = src
    for layer in params["encoder"]:
        a, f = layer["attn"], layer["ff"]
        xn = ln(x, a["gamma"], a["beta"])
        x = x + attention(xn, xn, a)
        x = x + ff(ln(x, f["gamma"], f["beta"]), f)
    memory = x

    y = tgt
    for layer in params["decoder"]:
        a, c, f = layer["self_attn"], layer["cross_attn"], layer["ff"]
        yn = ln(y, a["gamma"], a["beta"])
        y = y + attention(yn, yn, a)
        y = y + attention(ln(y, c["gamma"], c["beta"]), memory, c)
        y = y + ff(ln(y, f["gamma"], f["beta"]), f)
    return y


# ---------------------------------------------------------------------------
if __name__ == "__main__":
    root = jax.random.PRNGKey(0)
    k_params, k_src, k_tgt = jax.random.split(root, 3)

    params = init_transformer_params(k_params)      # torch-convention weights
    kparams = prepare_kernel_params(params)         # one-time packed-slab prep

    src = jax.random.normal(k_src, (B, S, DIM), jnp.float32)   # encoder input
    tgt = jax.random.normal(k_tgt, (B, T, DIM), jnp.float32)   # decoder input

    out = transformer_forward(src, tgt, kparams)
    out = jax.block_until_ready(out)

    assert out.shape == (B, T, DIM), out.shape
    assert bool(jnp.all(jnp.isfinite(out)))

    # correctness vs pure-JAX reference (exact-reciprocal softmax -> tight tol)
    ref = reference_forward(src, tgt, params)
    max_err = float(jnp.max(jnp.abs(out - ref)))
    assert jnp.allclose(out, ref, atol=1e-3, rtol=1e-3), max_err

    print("KERNEL_OK")
</pallas_src>

<mosaic_0001>
module attributes {stable_mosaic.version = 11 : i64} {
  func.func @_transformer_kernel(%arg0: memref<32x32xf32, #tpu.memory_space<vmem>>, %arg1: memref<16x32xf32, #tpu.memory_space<vmem>>, %arg2: memref<6x32x128xf32, #tpu.memory_space<vmem>>, %arg3: memref<4x32x64xf32, #tpu.memory_space<vmem>>, %arg4: memref<4x64x32xf32, #tpu.memory_space<vmem>>, %arg5: memref<40x128xf32, #tpu.memory_space<vmem>>, %arg6: memref<64x32xf32, #tpu.memory_space<vmem>>, %arg7: memref<16x32xf32, #tpu.memory_space<vmem>>) attributes {dimension_semantics = [], scalar_prefetch = 0 : i64, scratch_operands = 0 : i64, tpu.core_type = #tpu.core_type<tc>} {
    %c0 = arith.constant 0 : index
    %c0_0 = arith.constant 0 : index
    %0 = vector.load %arg6[%c0, %c0_0] : memref<64x32xf32, #tpu.memory_space<vmem>>, vector<32x32xf32>
    %c32 = arith.constant 32 : index
    %c0_1 = arith.constant 0 : index
    %1 = vector.load %arg6[%c32, %c0_1] : memref<64x32xf32, #tpu.memory_space<vmem>>, vector<16x16xf32>
    %c48 = arith.constant 48 : index
    %c0_2 = arith.constant 0 : index
    %2 = vector.load %arg6[%c48, %c0_2] : memref<64x32xf32, #tpu.memory_space<vmem>>, vector<16x32xf32>
    %c0_3 = arith.constant 0 : index
    %c0_4 = arith.constant 0 : index
    %3 = vector.load %arg0[%c0_3, %c0_4] : memref<32x32xf32, #tpu.memory_space<vmem>>, vector<32x32xf32>
    %c0_5 = arith.constant 0 : index
    %c0_6 = arith.constant 0 : index
    %4 = vector.load %arg5[%c0_5, %c0_6] : memref<40x128xf32, #tpu.memory_space<vmem>>, vector<1x32xf32>
    %c1 = arith.constant 1 : index
    %c0_7 = arith.constant 0 : index
    %5 = vector.load %arg5[%c1, %c0_7] : memref<40x128xf32, #tpu.memory_space<vmem>>, vector<1x32xf32>
    %c2 = arith.constant 2 : index
    %c0_8 = arith.constant 0 : index
    %6 = vector.load %arg5[%c2, %c0_8] : memref<40x128xf32, #tpu.memory_space<vmem>>, vector<1x32xf32>
    %c0_9 = arith.constant 0 : index
    %c0_10 = arith.constant 0 : index
    %c0_11 = arith.constant 0 : index
    %7 = vector.load %arg2[%c0_9, %c0_10, %c0_11] : memref<6x32x128xf32, #tpu.memory_space<vmem>>, vector<1x32x128xf32>
    %8 = vector.shape_cast %7 : vector<1x32x128xf32> to vector<32x128xf32>
    %cst = arith.constant dense<0.000000e+00> : vector<32xf32>
    %9 = vector.multi_reduction <add>, %3, %cst [1] : vector<32x32xf32> to vector<32xf32>
    %10 = vector.shape_cast %9 : vector<32xf32> to vector<32x1xf32>
    %cst_12 = arith.constant 3.200000e+01 : f32
    %11 = vector.broadcast %cst_12 : f32 to vector<32x1xf32>
    %12 = arith.divf %10, %11 : vector<32x1xf32>
    %13 = vector.broadcast %12 : vector<32x1xf32> to vector<32x32xf32>
    %14 = arith.subf %3, %13 : vector<32x32xf32>
    %15 = arith.mulf %14, %14 : vector<32x32xf32>
    %cst_13 = arith.constant dense<0.000000e+00> : vector<32xf32>
    %16 = vector.multi_reduction <add>, %15, %cst_13 [1] : vector<32x32xf32> to vector<32xf32>
    %17 = vector.shape_cast %16 : vector<32xf32> to vector<32x1xf32>
    %cst_14 = arith.constant 3.200000e+01 : f32
    %18 = vector.broadcast %cst_14 : f32 to vector<32x1xf32>
    %19 = arith.divf %17, %18 : vector<32x1xf32>
    %20 = vector.broadcast %12 : vector<32x1xf32> to vector<32x32xf32>
    %21 = arith.subf %3, %20 : vector<32x32xf32>
    %cst_15 = arith.constant 9.99999974E-6 : f32
    %22 = vector.broadcast %cst_15 : f32 to vector<32x1xf32>
    %23 = arith.addf %19, %22 : vector<32x1xf32>
    %24 = math.rsqrt %23 : vector<32x1xf32>
    %25 = vector.broadcast %24 : vector<32x1xf32> to vector<32x32xf32>
    %26 = arith.mulf %21, %25 : vector<32x32xf32>
    %27 = vector.broadcast %4 : vector<1x32xf32> to vector<32x32xf32>
    %28 = arith.mulf %26, %27 : vector<32x32xf32>
    %29 = vector.broadcast %5 : vector<1x32xf32> to vector<32x32xf32>
    %30 = arith.addf %28, %29 : vector<32x32xf32>
    %31 = vector.extract_strided_slice %8 {offsets = [0, 0], sizes = [32, 96], strides = [1, 1]} : vector<32x128xf32> to vector<32x96xf32>
    %cst_16 = arith.constant dense<0.000000e+00> : vector<32x96xf32>
    %32 = tpu.matmul %30, %31, %cst_16 {dimension_numbers = #tpu.dot_dimension_numbers<[1], [0], [0], [1], [0, 0, 1, 1], [], []>} : vector<32x32xf32>, vector<32x96xf32>, vector<32x96xf32> -> vector<32x96xf32>
    %33 = vector.extract_strided_slice %32 {offsets = [0, 0], sizes = [32, 32], strides = [1, 1]} : vector<32x96xf32> to vector<32x32xf32>
    %34 = vector.extract_strided_slice %32 {offsets = [0, 32], sizes = [32, 32], strides = [1, 1]} : vector<32x96xf32> to vector<32x32xf32>
    %35 = vector.extract_strided_slice %32 {offsets = [0, 64], sizes = [32, 32], strides = [1, 1]} : vector<32x96xf32> to vector<32x32xf32>
    %36 = vector.extract_strided_slice %33 {offsets = [0, 0], sizes = [32, 8], strides = [1, 1]} : vector<32x32xf32> to vector<32x8xf32>
    %37 = vector.extract_strided_slice %34 {offsets = [0, 0], sizes = [32, 8], strides = [1, 1]} : vector<32x32xf32> to vector<32x8xf32>
    %38 = vector.extract_strided_slice %35 {offsets = [0, 0], sizes = [32, 8], strides = [1, 1]} : vector<32x32xf32> to vector<32x8xf32>
    %cst_17 = arith.constant dense<0.000000e+00> : vector<32x32xf32>
    %39 = tpu.matmul %36, %37, %cst_17 {dimension_numbers = #tpu.dot_dimension_numbers<[1], [1], [0], [0], [0, 0, 1, 0], [], []>} : vector<32x8xf32>, vector<32x8xf32>, vector<32x32xf32> -> vector<32x32xf32>
    %40 = arith.addf %39, %0 : vector<32x32xf32>
    %cst_18 = arith.constant dense<0xFF800000> : vector<32xf32>
    %41 = vector.multi_reduction <maximumf>, %40, %cst_18 [1] : vector<32x32xf32> to vector<32xf32>
    %42 = vector.shape_cast %41 : vector<32xf32> to vector<32x1xf32>
    %43 = vector.broadcast %42 : vector<32x1xf32> to vector<32x32xf32>
    %44 = arith.subf %40, %43 : vector<32x32xf32>
    %45 = math.exp %44 : vector<32x32xf32>
    %cst_19 = arith.constant dense<0.000000e+00> : vector<32xf32>
    %46 = vector.multi_reduction <add>, %45, %cst_19 [1] : vector<32x32xf32> to vector<32xf32>
    %47 = vector.shape_cast %46 : vector<32xf32> to vector<32x1xf32>
    %48 = vector.broadcast %47 : vector<32x1xf32> to vector<32x32xf32>
    %49 = arith.divf %45, %48 : vector<32x32xf32>
    %cst_20 = arith.constant dense<0.000000e+00> : vector<32x8xf32>
    %50 = tpu.matmul %49, %38, %cst_20 {dimension_numbers = #tpu.dot_dimension_numbers<[1], [0], [0], [1], [0, 0, 1, 1], [], []>} : vector<32x32xf32>, vector<32x8xf32>, vector<32x8xf32> -> vector<32x8xf32>
    %51 = vector.extract_strided_slice %33 {offsets = [0, 8], sizes = [32, 8], strides = [1, 1]} : vector<32x32xf32> to vector<32x8xf32>
    %52 = vector.extract_strided_slice %34 {offsets = [0, 8], sizes = [32, 8], strides = [1, 1]} : vector<32x32xf32> to vector<32x8xf32>
    %53 = vector.extract_strided_slice %35 {offsets = [0, 8], sizes = [32, 8], strides = [1, 1]} : vector<32x32xf32> to vector<32x8xf32>
    %cst_21 = arith.constant dense<0.000000e+00> : vector<32x32xf32>
    %54 = tpu.matmul %51, %52, %cst_21 {dimension_numbers = #tpu.dot_dimension_numbers<[1], [1], [0], [0], [0, 0, 1, 0], [], []>} : vector<32x8xf32>, vector<32x8xf32>, vector<32x32xf32> -> vector<32x32xf32>
    %55 = arith.addf %54, %0 : vector<32x32xf32>
    %cst_22 = arith.constant dense<0xFF800000> : vector<32xf32>
    %56 = vector.multi_reduction <maximumf>, %55, %cst_22 [1] : vector<32x32xf32> to vector<32xf32>
    %57 = vector.shape_cast %56 : vector<32xf32> to vector<32x1xf32>
    %58 = vector.broadcast %57 : vector<32x1xf32> to vector<32x32xf32>
    %59 = arith.subf %55, %58 : vector<32x32xf32>
    %60 = math.exp %59 : vector<32x32xf32>
    %cst_23 = arith.constant dense<0.000000e+00> : vector<32xf32>
    %61 = vector.multi_reduction <add>, %60, %cst_23 [1] : vector<32x32xf32> to vector<32xf32>
    %62 = vector.shape_cast %61 : vector<32xf32> to vector<32x1xf32>
    %63 = vector.broadcast %62 : vector<32x1xf32> to vector<32x32xf32>
    %64 = arith.divf %60, %63 : vector<32x32xf32>
    %cst_24 = arith.constant dense<0.000000e+00> : vector<32x8xf32>
    %65 = tpu.matmul %64, %53, %cst_24 {dimension_numbers = #tpu.dot_dimension_numbers<[1], [0], [0], [1], [0, 0, 1, 1], [], []>} : vector<32x32xf32>, vector<32x8xf32>, vector<32x8xf32> -> vector<32x8xf32>
    %66 = vector.extract_strided_slice %33 {offsets = [0, 16], sizes = [32, 8], strides = [1, 1]} : vector<32x32xf32> to vector<32x8xf32>
    %67 = vector.extract_strided_slice %34 {offsets = [0, 16], sizes = [32, 8], strides = [1, 1]} : vector<32x32xf32> to vector<32x8xf32>
    %68 = vector.extract_strided_slice %35 {offsets = [0, 16], sizes = [32, 8], strides = [1, 1]} : vector<32x32xf32> to vector<32x8xf32>
    %cst_25 = arith.constant dense<0.000000e+00> : vector<32x32xf32>
    %69 = tpu.matmul %66, %67, %cst_25 {dimension_numbers = #tpu.dot_dimension_numbers<[1], [1], [0], [0], [0, 0, 1, 0], [], []>} : vector<32x8xf32>, vector<32x8xf32>, vector<32x32xf32> -> vector<32x32xf32>
    %70 = arith.addf %69, %0 : vector<32x32xf32>
    %cst_26 = arith.constant dense<0xFF800000> : vector<32xf32>
    %71 = vector.multi_reduction <maximumf>, %70, %cst_26 [1] : vector<32x32xf32> to vector<32xf32>
    %72 = vector.shape_cast %71 : vector<32xf32> to vector<32x1xf32>
    %73 = vector.broadcast %72 : vector<32x1xf32> to vector<32x32xf32>
    %74 = arith.subf %70, %73 : vector<32x32xf32>
    %75 = math.exp %74 : vector<32x32xf32>
    %cst_27 = arith.constant dense<0.000000e+00> : vector<32xf32>
    %76 = vector.multi_reduction <add>, %75, %cst_27 [1] : vector<32x32xf32> to vector<32xf32>
    %77 = vector.shape_cast %76 : vector<32xf32> to vector<32x1xf32>
    %78 = vector.broadcast %77 : vector<32x1xf32> to vector<32x32xf32>
    %79 = arith.divf %75, %78 : vector<32x32xf32>
    %cst_28 = arith.constant dense<0.000000e+00> : vector<32x8xf32>
    %80 = tpu.matmul %79, %68, %cst_28 {dimension_numbers = #tpu.dot_dimension_numbers<[1], [0], [0], [1], [0, 0, 1, 1], [], []>} : vector<32x32xf32>, vector<32x8xf32>, vector<32x8xf32> -> vector<32x8xf32>
    %81 = vector.extract_strided_slice %33 {offsets = [0, 24], sizes = [32, 8], strides = [1, 1]} : vector<32x32xf32> to vector<32x8xf32>
    %82 = vector.extract_strided_slice %34 {offsets = [0, 24], sizes = [32, 8], strides = [1, 1]} : vector<32x32xf32> to vector<32x8xf32>
    %83 = vector.extract_strided_slice %35 {offsets = [0, 24], sizes = [32, 8], strides = [1, 1]} : vector<32x32xf32> to vector<32x8xf32>
    %cst_29 = arith.constant dense<0.000000e+00> : vector<32x32xf32>
    %84 = tpu.matmul %81, %82, %cst_29 {dimension_numbers = #tpu.dot_dimension_numbers<[1], [1], [0], [0], [0, 0, 1, 0], [], []>} : vector<32x8xf32>, vector<32x8xf32>, vector<32x32xf32> -> vector<32x32xf32>
    %85 = arith.addf %84, %0 : vector<32x32xf32>
    %cst_30 = arith.constant dense<0xFF800000> : vector<32xf32>
    %86 = vector.multi_reduction <maximumf>, %85, %cst_30 [1] : vector<32x32xf32> to vector<32xf32>
    %87 = vector.shape_cast %86 : vector<32xf32> to vector<32x1xf32>
    %88 = vector.broadcast %87 : vector<32x1xf32> to vector<32x32xf32>
    %89 = arith.subf %85, %88 : vector<32x32xf32>
    %90 = math.exp %89 : vector<32x32xf32>
    %cst_31 = arith.constant dense<0.000000e+00> : vector<32xf32>
    %91 = vector.multi_reduction <add>, %90, %cst_31 [1] : vector<32x32xf32> to vector<32xf32>
    %92 = vector.shape_cast %91 : vector<32xf32> to vector<32x1xf32>
    %93 = vector.broadcast %92 : vector<32x1xf32> to vector<32x32xf32>
    %94 = arith.divf %90, %93 : vector<32x32xf32>
    %cst_32 = arith.constant dense<0.000000e+00> : vector<32x8xf32>
    %95 = tpu.matmul %94, %83, %cst_32 {dimension_numbers = #tpu.dot_dimension_numbers<[1], [0], [0], [1], [0, 0, 1, 1], [], []>} : vector<32x32xf32>, vector<32x8xf32>, vector<32x8xf32> -> vector<32x8xf32>
    %96 = tpu.concatenate %50, %65, %80, %95 in 1 : vector<32x8xf32>, vector<32x8xf32>, vector<32x8xf32>, vector<32x8xf32> -> vector<32x32xf32>
    %97 = vector.extract_strided_slice %8 {offsets = [0, 96], sizes = [32, 32], strides = [1, 1]} : vector<32x128xf32> to vector<32x32xf32>
    %cst_33 = arith.constant dense<0.000000e+00> : vector<32x32xf32>
    %98 = tpu.matmul %96, %97, %cst_33 {dimension_numbers = #tpu.dot_dimension_numbers<[1], [0], [0], [1], [0, 0, 1, 1], [], []>} : vector<32x32xf32>, vector<32x32xf32>, vector<32x32xf32> -> vector<32x32xf32>
    %99 = arith.addf %3, %98 : vector<32x32xf32>
    %100 = vector.broadcast %6 : vector<1x32xf32> to vector<32x32xf32>
    %101 = arith.addf %99, %100 : vector<32x32xf32>
    %c18 = arith.constant 18 : index
    %c0_34 = arith.constant 0 : index
    %102 = vector.load %arg5[%c18, %c0_34] : memref<40x128xf32, #tpu.memory_space<vmem>>, vector<1x32xf32>
    %c19 = arith.constant 19 : index
    %c0_35 = arith.constant 0 : index
    %103 = vector.load %arg5[%c19, %c0_35] : memref<40x128xf32, #tpu.memory_space<vmem>>, vector<1x32xf32>
    %c20 = arith.constant 20 : index
    %c0_36 = arith.constant 0 : index
    %104 = vector.load %arg5[%c20, %c0_36] : memref<40x128xf32, #tpu.memory_space<vmem>>, vector<1x64xf32>
    %c21 = arith.constant 21 : index
    %c0_37 = arith.constant 0 : index
    %105 = vector.load %arg5[%c21, %c0_37] : memref<40x128xf32, #tpu.memory_space<vmem>>, vector<1x32xf32>
    %c0_38 = arith.constant 0 : index
    %c0_39 = arith.constant 0 : index
    %c0_40 = arith.constant 0 : index
    %106 = vector.load %arg3[%c0_38, %c0_39, %c0_40] : memref<4x32x64xf32, #tpu.memory_space<vmem>>, vector<1x32x64xf32>
    %107 = vector.shape_cast %106 : vector<1x32x64xf32> to vector<32x64xf32>
    %c0_41 = arith.constant 0 : index
    %c0_42 = arith.constant 0 : index
    %c0_43 = arith.constant 0 : index
    %108 = vector.load %arg4[%c0_41, %c0_42, %c0_43] : memref<4x64x32xf32, #tpu.memory_space<vmem>>, vector<1x64x32xf32>
    %109 = vector.shape_cast %108 : vector<1x64x32xf32> to vector<64x32xf32>
    %cst_44 = arith.constant dense<0.000000e+00> : vector<32xf32>
    %110 = vector.multi_reduction <add>, %101, %cst_44 [1] : vector<32x32xf32> to vector<32xf32>
    %111 = vector.shape_cast %110 : vector<32xf32> to vector<32x1xf32>
    %cst_45 = arith.constant 3.200000e+01 : f32
    %112 = vector.broadcast %cst_45 : f32 to vector<32x1xf32>
    %113 = arith.divf %111, %112 : vector<32x1xf32>
    %114 = vector.broadcast %113 : vector<32x1xf32> to vector<32x32xf32>
    %115 = arith.subf %101, %114 : vector<32x32xf32>
    %116 = arith.mulf %115, %115 : vector<32x32xf32>
    %cst_46 = arith.constant dense<0.000000e+00> : vector<32xf32>
    %117 = vector.multi_reduction <add>, %116, %cst_46 [1] : vector<32x32xf32> to vector<32xf32>
    %118 = vector.shape_cast %117 : vector<32xf32> to vector<32x1xf32>
    %cst_47 = arith.constant 3.200000e+01 : f32
    %119 = vector.broadcast %cst_47 : f32 to vector<32x1xf32>
    %120 = arith.divf %118, %119 : vector<32x1xf32>
    %121 = vector.broadcast %113 : vector<32x1xf32> to vector<32x32xf32>
    %122 = arith.subf %101, %121 : vector<32x32xf32>
    %cst_48 = arith.constant 9.99999974E-6 : f32
    %123 = vector.broadcast %cst_48 : f32 to vector<32x1xf32>
    %124 = arith.addf %120, %123 : vector<32x1xf32>
    %125 = math.rsqrt %124 : vector<32x1xf32>
    %126 = vector.broadcast %125 : vector<32x1xf32> to vector<32x32xf32>
    %127 = arith.mulf %122, %126 : vector<32x32xf32>
    %128 = vector.broadcast %102 : vector<1x32xf32> to vector<32x32xf32>
    %129 = arith.mulf %127, %128 : vector<32x32xf32>
    %130 = vector.broadcast %103 : vector<1x32xf32> to vector<32x32xf32>
    %131 = arith.addf %129, %130 : vector<32x32xf32>
    %cst_49 = arith.constant dense<0.000000e+00> : vector<32x64xf32>
    %132 = tpu.matmul %131, %107, %cst_49 {dimension_numbers = #tpu.dot_dimension_numbers<[1], [0], [0], [1], [0, 0, 1, 1], [], []>} : vector<32x32xf32>, vector<32x64xf32>, vector<32x64xf32> -> vector<32x64xf32>
    %133 = vector.broadcast %104 : vector<1x64xf32> to vector<32x64xf32>
    %134 = arith.addf %132, %133 : vector<32x64xf32>
    %cst_50 = arith.constant 5.000000e-01 : f32
    %135 = vector.broadcast %cst_50 : f32 to vector<32x64xf32>
    %136 = arith.mulf %135, %134 : vector<32x64xf32>
    %cst_51 = arith.constant 0.707106769 : f32
    %137 = vector.broadcast %cst_51 : f32 to vector<32x64xf32>
    %138 = arith.mulf %134, %137 : vector<32x64xf32>
    %139 = math.erf %138 : vector<32x64xf32>
    %cst_52 = arith.constant 1.000000e+00 : f32
    %140 = vector.broadcast %cst_52 : f32 to vector<32x64xf32>
    %141 = arith.addf %140, %139 : vector<32x64xf32>
    %142 = arith.mulf %136, %141 : vector<32x64xf32>
    %cst_53 = arith.constant dense<0.000000e+00> : vector<32x32xf32>
    %143 = tpu.matmul %142, %109, %cst_53 {dimension_numbers = #tpu.dot_dimension_numbers<[1], [0], [0], [1], [0, 0, 1, 1], [], []>} : vector<32x64xf32>, vector<64x32xf32>, vector<32x32xf32> -> vector<32x32xf32>
    %144 = arith.addf %101, %143 : vector<32x32xf32>
    %145 = vector.broadcast %105 : vector<1x32xf32> to vector<32x32xf32>
    %146 = arith.addf %144, %145 : vector<32x32xf32>
    %c3 = arith.constant 3 : index
    %c0_54 = arith.constant 0 : index
    %147 = vector.load %arg5[%c3, %c0_54] : memref<40x128xf32, #tpu.memory_space<vmem>>, vector<1x32xf32>
    %c4 = arith.constant 4 : index
    %c0_55 = arith.constant 0 : index
    %148 = vector.load %arg5[%c4, %c0_55] : memref<40x128xf32, #tpu.memory_space<vmem>>, vector<1x32xf32>
    %c5 = arith.constant 5 : index
    %c0_56 = arith.constant 0 : index
    %149 = vector.load %arg5[%c5, %c0_56] : memref<40x128xf32, #tpu.memory_space<vmem>>, vector<1x32xf32>
    %c1_57 = arith.constant 1 : index
    %c0_58 = arith.constant 0 : index
    %c0_59 = arith.constant 0 : index
    %150 = vector.load %arg2[%c1_57, %c0_58, %c0_59] : memref<6x32x128xf32, #tpu.memory_space<vmem>>, vector<1x32x128xf32>
    %151 = vector.shape_cast %150 : vector<1x32x128xf32> to vector<32x128xf32>
    %cst_60 = arith.constant dense<0.000000e+00> : vector<32xf32>
    %152 = vector.multi_reduction <add>, %146, %cst_60 [1] : vector<32x32xf32> to vector<32xf32>
    %153 = vector.shape_cast %152 : vector<32xf32> to vector<32x1xf32>
    %cst_61 = arith.constant 3.200000e+01 : f32
    %154 = vector.broadcast %cst_61 : f32 to vector<32x1xf32>
    %155 = arith.divf %153, %154 : vector<32x1xf32>
    %156 = vector.broadcast %155 : vector<32x1xf32> to vector<32x32xf32>
    %157 = arith.subf %146, %156 : vector<32x32xf32>
    %158 = arith.mulf %157, %157 : vector<32x32xf32>
    %cst_62 = arith.constant dense<0.000000e+00> : vector<32xf32>
    %159 = vector.multi_reduction <add>, %158, %cst_62 [1] : vector<32x32xf32> to vector<32xf32>
    %160 = vector.shape_cast %159 : vector<32xf32> to vector<32x1xf32>
    %cst_63 = arith.constant 3.200000e+01 : f32
    %161 = vector.broadcast %cst_63 : f32 to vector<32x1xf32>
    %162 = arith.divf %160, %161 : vector<32x1xf32>
    %163 = vector.broadcast %155 : vector<32x1xf32> to vector<32x32xf32>
    %164 = arith.subf %146, %163 : vector<32x32xf32>
    %cst_64 = arith.constant 9.99999974E-6 : f32
    %165 = vector.broadcast %cst_64 : f32 to vector<32x1xf32>
    %166 = arith.addf %162, %165 : vector<32x1xf32>
    %167 = math.rsqrt %166 : vector<32x1xf32>
    %168 = vector.broadcast %167 : vector<32x1xf32> to vector<32x32xf32>
    %169 = arith.mulf %164, %168 : vector<32x32xf32>
    %170 = vector.broadcast %147 : vector<1x32xf32> to vector<32x32xf32>
    %171 = arith.mulf %169, %170 : vector<32x32xf32>
    %172 = vector.broadcast %148 : vector<1x32xf32> to vector<32x32xf32>
    %173 = arith.addf %171, %172 : vector<32x32xf32>
    %174 = vector.extract_strided_slice %151 {offsets = [0, 0], sizes = [32, 96], strides = [1, 1]} : vector<32x128xf32> to vector<32x96xf32>
    %cst_65 = arith.constant dense<0.000000e+00> : vector<32x96xf32>
    %175 = tpu.matmul %173, %174, %cst_65 {dimension_numbers = #tpu.dot_dimension_numbers<[1], [0], [0], [1], [0, 0, 1, 1], [], []>} : vector<32x32xf32>, vector<32x96xf32>, vector<32x96xf32> -> vector<32x96xf32>
    %176 = vector.extract_strided_slice %175 {offsets = [0, 0], sizes = [32, 32], strides = [1, 1]} : vector<32x96xf32> to vector<32x32xf32>
    %177 = vector.extract_strided_slice %175 {offsets = [0, 32], sizes = [32, 32], strides = [1, 1]} : vector<32x96xf32> to vector<32x32xf32>
    %178 = vector.extract_strided_slice %175 {offsets = [0, 64], sizes = [32, 32], strides = [1, 1]} : vector<32x96xf32> to vector<32x32xf32>
    %179 = vector.extract_strided_slice %176 {offsets = [0, 0], sizes = [32, 8], strides = [1, 1]} : vector<32x32xf32> to vector<32x8xf32>
    %180 = vector.extract_strided_slice %177 {offsets = [0, 0], sizes = [32, 8], strides = [1, 1]} : vector<32x32xf32> to vector<32x8xf32>
    %181 = vector.extract_strided_slice %178 {offsets = [0, 0], sizes = [32, 8], strides = [1, 1]} : vector<32x32xf32> to vector<32x8xf32>
    %cst_66 = arith.constant dense<0.000000e+00> : vector<32x32xf32>
    %182 = tpu.matmul %179, %180, %cst_66 {dimension_numbers = #tpu.dot_dimension_numbers<[1], [1], [0], [0], [0, 0, 1, 0], [], []>} : vector<32x8xf32>, vector<32x8xf32>, vector<32x32xf32> -> vector<32x32xf32>
    %183 = arith.addf %182, %0 : vector<32x32xf32>
    %cst_67 = arith.constant dense<0xFF800000> : vector<32xf32>
    %184 = vector.multi_reduction <maximumf>, %183, %cst_67 [1] : vector<32x32xf32> to vector<32xf32>
    %185 = vector.shape_cast %184 : vector<32xf32> to vector<32x1xf32>
    %186 = vector.broadcast %185 : vector<32x1xf32> to vector<32x32xf32>
    %187 = arith.subf %183, %186 : vector<32x32xf32>
    %188 = math.exp %187 : vector<32x32xf32>
    %cst_68 = arith.constant dense<0.000000e+00> : vector<32xf32>
    %189 = vector.multi_reduction <add>, %188, %cst_68 [1] : vector<32x32xf32> to vector<32xf32>
    %190 = vector.shape_cast %189 : vector<32xf32> to vector<32x1xf32>
    %191 = vector.broadcast %190 : vector<32x1xf32> to vector<32x32xf32>
    %192 = arith.divf %188, %191 : vector<32x32xf32>
    %cst_69 = arith.constant dense<0.000000e+00> : vector<32x8xf32>
    %193 = tpu.matmul %192, %181, %cst_69 {dimension_numbers = #tpu.dot_dimension_numbers<[1], [0], [0], [1], [0, 0, 1, 1], [], []>} : vector<32x32xf32>, vector<32x8xf32>, vector<32x8xf32> -> vector<32x8xf32>
    %194 = vector.extract_strided_slice %176 {offsets = [0, 8], sizes = [32, 8], strides = [1, 1]} : vector<32x32xf32> to vector<32x8xf32>
    %195 = vector.extract_strided_slice %177 {offsets = [0, 8], sizes = [32, 8], strides = [1, 1]} : vector<32x32xf32> to vector<32x8xf32>
    %196 = vector.extract_strided_slice %178 {offsets = [0, 8], sizes = [32, 8], strides = [1, 1]} : vector<32x32xf32> to vector<32x8xf32>
    %cst_70 = arith.constant dense<0.000000e+00> : vector<32x32xf32>
    %197 = tpu.matmul %194, %195, %cst_70 {dimension_numbers = #tpu.dot_dimension_numbers<[1], [1], [0], [0], [0, 0, 1, 0], [], []>} : vector<32x8xf32>, vector<32x8xf32>, vector<32x32xf32> -> vector<32x32xf32>
    %198 = arith.addf %197, %0 : vector<32x32xf32>
    %cst_71 = arith.constant dense<0xFF800000> : vector<32xf32>
    %199 = vector.multi_reduction <maximumf>, %198, %cst_71 [1] : vector<32x32xf32> to vector<32xf32>
    %200 = vector.shape_cast %199 : vector<32xf32> to vector<32x1xf32>
    %201 = vector.broadcast %200 : vector<32x1xf32> to vector<32x32xf32>
    %202 = arith.subf %198, %201 : vector<32x32xf32>
    %203 = math.exp %202 : vector<32x32xf32>
    %cst_72 = arith.constant dense<0.000000e+00> : vector<32xf32>
    %204 = vector.multi_reduction <add>, %203, %cst_72 [1] : vector<32x32xf32> to vector<32xf32>
    %205 = vector.shape_cast %204 : vector<32xf32> to vector<32x1xf32>
    %206 = vector.broadcast %205 : vector<32x1xf32> to vector<32x32xf32>
    %207 = arith.divf %203, %206 : vector<32x32xf32>
    %cst_73 = arith.constant dense<0.000000e+00> : vector<32x8xf32>
    %208 = tpu.matmul %207, %196, %cst_73 {dimension_numbers = #tpu.dot_dimension_numbers<[1], [0], [0], [1], [0, 0, 1, 1], [], []>} : vector<32x32xf32>, vector<32x8xf32>, vector<32x8xf32> -> vector<32x8xf32>
    %209 = vector.extract_strided_slice %176 {offsets = [0, 16], sizes = [32, 8], strides = [1, 1]} : vector<32x32xf32> to vector<32x8xf32>
    %210 = vector.extract_strided_slice %177 {offsets = [0, 16], sizes = [32, 8], strides = [1, 1]} : vector<32x32xf32> to vector<32x8xf32>
    %211 = vector.extract_strided_slice %178 {offsets = [0, 16], sizes = [32, 8], strides = [1, 1]} : vector<32x32xf32> to vector<32x8xf32>
    %cst_74 = arith.constant dense<0.000000e+00> : vector<32x32xf32>
    %212 = tpu.matmul %209, %210, %cst_74 {dimension_numbers = #tpu.dot_dimension_numbers<[1], [1], [0], [0], [0, 0, 1, 0], [], []>} : vector<32x8xf32>, vector<32x8xf32>, vector<32x32xf32> -> vector<32x32xf32>
    %213 = arith.addf %212, %0 : vector<32x32xf32>
    %cst_75 = arith.constant dense<0xFF800000> : vector<32xf32>
    %214 = vector.multi_reduction <maximumf>, %213, %cst_75 [1] : vector<32x32xf32> to vector<32xf32>
    %215 = vector.shape_cast %214 : vector<32xf32> to vector<32x1xf32>
    %216 = vector.broadcast %215 : vector<32x1xf32> to vector<32x32xf32>
    %217 = arith.subf %213, %216 : vector<32x32xf32>
    %218 = math.exp %217 : vector<32x32xf32>
    %cst_76 = arith.constant dense<0.000000e+00> : vector<32xf32>
    %219 = vector.multi_reduction <add>, %218, %cst_76 [1] : vector<32x32xf32> to vector<32xf32>
    %220 = vector.shape_cast %219 : vector<32xf32> to vector<32x1xf32>
    %221 = vector.broadcast %220 : vector<32x1xf32> to vector<32x32xf32>
    %222 = arith.divf %218, %221 : vector<32x32xf32>
    %cst_77 = arith.constant dense<0.000000e+00> : vector<32x8xf32>
    %223 = tpu.matmul %222, %211, %cst_77 {dimension_numbers = #tpu.dot_dimension_numbers<[1], [0], [0], [1], [0, 0, 1, 1], [], []>} : vector<32x32xf32>, vector<32x8xf32>, vector<32x8xf32> -> vector<32x8xf32>
    %224 = vector.extract_strided_slice %176 {offsets = [0, 24], sizes = [32, 8], strides = [1, 1]} : vector<32x32xf32> to vector<32x8xf32>
    %225 = vector.extract_strided_slice %177 {offsets = [0, 24], sizes = [32, 8], strides = [1, 1]} : vector<32x32xf32> to vector<32x8xf32>
    %226 = vector.extract_strided_slice %178 {offsets = [0, 24], sizes = [32, 8], strides = [1, 1]} : vector<32x32xf32> to vector<32x8xf32>
    %cst_78 = arith.constant dense<0.000000e+00> : vector<32x32xf32>
    %227 = tpu.matmul %224, %225, %cst_78 {dimension_numbers = #tpu.dot_dimension_numbers<[1], [1], [0], [0], [0, 0, 1, 0], [], []>} : vector<32x8xf32>, vector<32x8xf32>, vector<32x32xf32> -> vector<32x32xf32>
    %228 = arith.addf %227, %0 : vector<32x32xf32>
    %cst_79 = arith.constant dense<0xFF800000> : vector<32xf32>
    %229 = vector.multi_reduction <maximumf>, %228, %cst_79 [1] : vector<32x32xf32> to vector<32xf32>
    %230 = vector.shape_cast %229 : vector<32xf32> to vector<32x1xf32>
    %231 = vector.broadcast %230 : vector<32x1xf32> to vector<32x32xf32>
    %232 = arith.subf %228, %231 : vector<32x32xf32>
    %233 = math.exp %232 : vector<32x32xf32>
    %cst_80 = arith.constant dense<0.000000e+00> : vector<32xf32>
    %234 = vector.multi_reduction <add>, %233, %cst_80 [1] : vector<32x32xf32> to vector<32xf32>
    %235 = vector.shape_cast %234 : vector<32xf32> to vector<32x1xf32>
    %236 = vector.broadcast %235 : vector<32x1xf32> to vector<32x32xf32>
    %237 = arith.divf %233, %236 : vector<32x32xf32>
    %cst_81 = arith.constant dense<0.000000e+00> : vector<32x8xf32>
    %238 = tpu.matmul %237, %226, %cst_81 {dimension_numbers = #tpu.dot_dimension_numbers<[1], [0], [0], [1], [0, 0, 1, 1], [], []>} : vector<32x32xf32>, vector<32x8xf32>, vector<32x8xf32> -> vector<32x8xf32>
    %239 = tpu.concatenate %193, %208, %223, %238 in 1 : vector<32x8xf32>, vector<32x8xf32>, vector<32x8xf32>, vector<32x8xf32> -> vector<32x32xf32>
    %240 = vector.extract_strided_slice %151 {offsets = [0, 96], sizes = [32, 32], strides = [1, 1]} : vector<32x128xf32> to vector<32x32xf32>
    %cst_82 = arith.constant dense<0.000000e+00> : vector<32x32xf32>
    %241 = tpu.matmul %239, %240, %cst_82 {dimension_numbers = #tpu.dot_dimension_numbers<[1], [0], [0], [1], [0, 0, 1, 1], [], []>} : vector<32x32xf32>, vector<32x32xf32>, vector<32x32xf32> -> vector<32x32xf32>
    %242 = arith.addf %146, %241 : vector<32x32xf32>
    %243 = vector.broadcast %149 : vector<1x32xf32> to vector<32x32xf32>
    %244 = arith.addf %242, %243 : vector<32x32xf32>
    %c22 = arith.constant 22 : index
    %c0_83 = arith.constant 0 : index
    %245 = vector.load %arg5[%c22, %c0_83] : memref<40x128xf32, #tpu.memory_space<vmem>>, vector<1x32xf32>
    %c23 = arith.constant 23 : index
    %c0_84 = arith.constant 0 : index
    %246 = vector.load %arg5[%c23, %c0_84] : memref<40x128xf32, #tpu.memory_space<vmem>>, vector<1x32xf32>
    %c24 = arith.constant 24 : index
    %c0_85 = arith.constant 0 : index
    %247 = vector.load %arg5[%c24, %c0_85] : memref<40x128xf32, #tpu.memory_space<vmem>>, vector<1x64xf32>
    %c25 = arith.constant 25 : index
    %c0_86 = arith.constant 0 : index
    %248 = vector.load %arg5[%c25, %c0_86] : memref<40x128xf32, #tpu.memory_space<vmem>>, vector<1x32xf32>
    %c1_87 = arith.constant 1 : index
    %c0_88 = arith.constant 0 : index
    %c0_89 = arith.constant 0 : index
    %249 = vector.load %arg3[%c1_87, %c0_88, %c0_89] : memref<4x32x64xf32, #tpu.memory_space<vmem>>, vector<1x32x64xf32>
    %250 = vector.shape_cast %249 : vector<1x32x64xf32> to vector<32x64xf32>
    %c1_90 = arith.constant 1 : index
    %c0_91 = arith.constant 0 : index
    %c0_92 = arith.constant 0 : index
    %251 = vector.load %arg4[%c1_90, %c0_91, %c0_92] : memref<4x64x32xf32, #tpu.memory_space<vmem>>, vector<1x64x32xf32>
    %252 = vector.shape_cast %251 : vector<1x64x32xf32> to vector<64x32xf32>
    %cst_93 = arith.constant dense<0.000000e+00> : vector<32xf32>
    %253 = vector.multi_reduction <add>, %244, %cst_93 [1] : vector<32x32xf32> to vector<32xf32>
    %254 = vector.shape_cast %253 : vector<32xf32> to vector<32x1xf32>
    %cst_94 = arith.constant 3.200000e+01 : f32
    %255 = vector.broadcast %cst_94 : f32 to vector<32x1xf32>
    %256 = arith.divf %254, %255 : vector<32x1xf32>
    %257 = vector.broadcast %256 : vector<32x1xf32> to vector<32x32xf32>
    %258 = arith.subf %244, %257 : vector<32x32xf32>
    %259 = arith.mulf %258, %258 : vector<32x32xf32>
    %cst_95 = arith.constant dense<0.000000e+00> : vector<32xf32>
    %260 = vector.multi_reduction <add>, %259, %cst_95 [1] : vector<32x32xf32> to vector<32xf32>
    %261 = vector.shape_cast %260 : vector<32xf32> to vector<32x1xf32>
    %cst_96 = arith.constant 3.200000e+01 : f32
    %262 = vector.broadcast %cst_96 : f32 to vector<32x1xf32>
    %263 = arith.divf %261, %262 : vector<32x1xf32>
    %264 = vector.broadcast %256 : vector<32x1xf32> to vector<32x32xf32>
    %265 = arith.subf %244, %264 : vector<32x32xf32>
    %cst_97 = arith.constant 9.99999974E-6 : f32
    %266 = vector.broadcast %cst_97 : f32 to vector<32x1xf32>
    %267 = arith.addf %263, %266 : vector<32x1xf32>
    %268 = math.rsqrt %267 : vector<32x1xf32>
    %269 = vector.broadcast %268 : vector<32x1xf32> to vector<32x32xf32>
    %270 = arith.mulf %265, %269 : vector<32x32xf32>
    %271 = vector.broadcast %245 : vector<1x32xf32> to vector<32x32xf32>
    %272 = arith.mulf %270, %271 : vector<32x32xf32>
    %273 = vector.broadcast %246 : vector<1x32xf32> to vector<32x32xf32>
    %274 = arith.addf %272, %273 : vector<32x32xf32>
    %cst_98 = arith.constant dense<0.000000e+00> : vector<32x64xf32>
    %275 = tpu.matmul %274, %250, %cst_98 {dimension_numbers = #tpu.dot_dimension_numbers<[1], [0], [0], [1], [0, 0, 1, 1], [], []>} : vector<32x32xf32>, vector<32x64xf32>, vector<32x64xf32> -> vector<32x64xf32>
    %276 = vector.broadcast %247 : vector<1x64xf32> to vector<32x64xf32>
    %277 = arith.addf %275, %276 : vector<32x64xf32>
    %cst_99 = arith.constant 5.000000e-01 : f32
    %278 = vector.broadcast %cst_99 : f32 to vector<32x64xf32>
    %279 = arith.mulf %278, %277 : vector<32x64xf32>
    %cst_100 = arith.constant 0.707106769 : f32
    %280 = vector.broadcast %cst_100 : f32 to vector<32x64xf32>
    %281 = arith.mulf %277, %280 : vector<32x64xf32>
    %282 = math.erf %281 : vector<32x64xf32>
    %cst_101 = arith.constant 1.000000e+00 : f32
    %283 = vector.broadcast %cst_101 : f32 to vector<32x64xf32>
    %284 = arith.addf %283, %282 : vector<32x64xf32>
    %285 = arith.mulf %279, %284 : vector<32x64xf32>
    %cst_102 = arith.constant dense<0.000000e+00> : vector<32x32xf32>
    %286 = tpu.matmul %285, %252, %cst_102 {dimension_numbers = #tpu.dot_dimension_numbers<[1], [0], [0], [1], [0, 0, 1, 1], [], []>} : vector<32x64xf32>, vector<64x32xf32>, vector<32x32xf32> -> vector<32x32xf32>
    %287 = arith.addf %244, %286 : vector<32x32xf32>
    %288 = vector.broadcast %248 : vector<1x32xf32> to vector<32x32xf32>
    %289 = arith.addf %287, %288 : vector<32x32xf32>
    %c0_103 = arith.constant 0 : index
    %c0_104 = arith.constant 0 : index
    %290 = vector.load %arg1[%c0_103, %c0_104] : memref<16x32xf32, #tpu.memory_space<vmem>>, vector<16x32xf32>
    %c6 = arith.constant 6 : index
    %c0_105 = arith.constant 0 : index
    %291 = vector.load %arg5[%c6, %c0_105] : memref<40x128xf32, #tpu.memory_space<vmem>>, vector<1x32xf32>
    %c7 = arith.constant 7 : index
    %c0_106 = arith.constant 0 : index
    %292 = vector.load %arg5[%c7, %c0_106] : memref<40x128xf32, #tpu.memory_space<vmem>>, vector<1x32xf32>
    %c8 = arith.constant 8 : index
    %c0_107 = arith.constant 0 : index
    %293 = vector.load %arg5[%c8, %c0_107] : memref<40x128xf32, #tpu.memory_space<vmem>>, vector<1x32xf32>
    %c2_108 = arith.constant 2 : index
    %c0_109 = arith.constant 0 : index
    %c0_110 = arith.constant 0 : index
    %294 = vector.load %arg2[%c2_108, %c0_109, %c0_110] : memref<6x32x128xf32, #tpu.memory_space<vmem>>, vector<1x32x128xf32>
    %295 = vector.shape_cast %294 : vector<1x32x128xf32> to vector<32x128xf32>
    %cst_111 = arith.constant dense<0.000000e+00> : vector<16xf32>
    %296 = vector.multi_reduction <add>, %290, %cst_111 [1] : vector<16x32xf32> to vector<16xf32>
    %297 = vector.shape_cast %296 : vector<16xf32> to vector<16x1xf32>
    %cst_112 = arith.constant 3.200000e+01 : f32
    %298 = vector.broadcast %cst_112 : f32 to vector<16x1xf32>
    %299 = arith.divf %297, %298 : vector<16x1xf32>
    %300 = vector.broadcast %299 : vector<16x1xf32> to vector<16x32xf32>
    %301 = arith.subf %290, %300 : vector<16x32xf32>
    %302 = arith.mulf %301, %301 : vector<16x32xf32>
    %cst_113 = arith.constant dense<0.000000e+00> : vector<16xf32>
    %303 = vector.multi_reduction <add>, %302, %cst_113 [1] : vector<16x32xf32> to vector<16xf32>
    %304 = vector.shape_cast %303 : vector<16xf32> to vector<16x1xf32>
    %cst_114 = arith.constant 3.200000e+01 : f32
    %305 = vector.broadcast %cst_114 : f32 to vector<16x1xf32>
    %306 = arith.divf %304, %305 : vector<16x1xf32>
    %307 = vector.broadcast %299 : vector<16x1xf32> to vector<16x32xf32>
    %308 = arith.subf %290, %307 : vector<16x32xf32>
    %cst_115 = arith.constant 9.99999974E-6 : f32
    %309 = vector.broadcast %cst_115 : f32 to vector<16x1xf32>
    %310 = arith.addf %306, %309 : vector<16x1xf32>
    %311 = math.rsqrt %310 : vector<16x1xf32>
    %312 = vector.broadcast %311 : vector<16x1xf32> to vector<16x32xf32>
    %313 = arith.mulf %308, %312 : vector<16x32xf32>
    %314 = vector.broadcast %291 : vector<1x32xf32> to vector<16x32xf32>
    %315 = arith.mulf %313, %314 : vector<16x32xf32>
    %316 = vector.broadcast %292 : vector<1x32xf32> to vector<16x32xf32>
    %317 = arith.addf %315, %316 : vector<16x32xf32>
    %318 = vector.extract_strided_slice %295 {offsets = [0, 0], sizes = [32, 96], strides = [1, 1]} : vector<32x128xf32> to vector<32x96xf32>
    %cst_116 = arith.constant dense<0.000000e+00> : vector<16x96xf32>
    %319 = tpu.matmul %317, %318, %cst_116 {dimension_numbers = #tpu.dot_dimension_numbers<[1], [0], [0], [1], [0, 0, 1, 1], [], []>} : vector<16x32xf32>, vector<32x96xf32>, vector<16x96xf32> -> vector<16x96xf32>
    %320 = vector.extract_strided_slice %319 {offsets = [0, 0], sizes = [16, 32], strides = [1, 1]} : vector<16x96xf32> to vector<16x32xf32>
    %321 = vector.extract_strided_slice %319 {offsets = [0, 32], sizes = [16, 32], strides = [1, 1]} : vector<16x96xf32> to vector<16x32xf32>
    %322 = vector.extract_strided_slice %319 {offsets = [0, 64], sizes = [16, 32], strides = [1, 1]} : vector<16x96xf32> to vector<16x32xf32>
    %323 = vector.extract_strided_slice %320 {offsets = [0, 0], sizes = [16, 8], strides = [1, 1]} : vector<16x32xf32> to vector<16x8xf32>
    %324 = vector.extract_strided_slice %321 {offsets = [0, 0], sizes = [16, 8], strides = [1, 1]} : vector<16x32xf32> to vector<16x8xf32>
    %325 = vector.extract_strided_slice %322 {offsets = [0, 0], sizes = [16, 8], strides = [1, 1]} : vector<16x32xf32> to vector<16x8xf32>
    %cst_117 = arith.constant dense<0.000000e+00> : vector<16x16xf32>
    %326 = tpu.matmul %323, %324, %cst_117 {dimension_numbers = #tpu.dot_dimension_numbers<[1], [1], [0], [0], [0, 0, 1, 0], [], []>} : vector<16x8xf32>, vector<16x8xf32>, vector<16x16xf32> -> vector<16x16xf32>
    %327 = arith.addf %326, %1 : vector<16x16xf32>
    %cst_118 = arith.constant dense<0xFF800000> : vector<16xf32>
    %328 = vector.multi_reduction <maximumf>, %327, %cst_118 [1] : vector<16x16xf32> to vector<16xf32>
    %329 = vector.shape_cast %328 : vector<16xf32> to vector<16x1xf32>
    %330 = vector.broadcast %329 : vector<16x1xf32> to vector<16x16xf32>
    %331 = arith.subf %327, %330 : vector<16x16xf32>
    %332 = math.exp %331 : vector<16x16xf32>
    %cst_119 = arith.constant dense<0.000000e+00> : vector<16xf32>
    %333 = vector.multi_reduction <add>, %332, %cst_119 [1] : vector<16x16xf32> to vector<16xf32>
    %334 = vector.shape_cast %333 : vector<16xf32> to vector<16x1xf32>
    %335 = vector.broadcast %334 : vector<16x1xf32> to vector<16x16xf32>
    %336 = arith.divf %332, %335 : vector<16x16xf32>
    %cst_120 = arith.constant dense<0.000000e+00> : vector<16x8xf32>
    %337 = tpu.matmul %336, %325, %cst_120 {dimension_numbers = #tpu.dot_dimension_numbers<[1], [0], [0], [1], [0, 0, 1, 1], [], []>} : vector<16x16xf32>, vector<16x8xf32>, vector<16x8xf32> -> vector<16x8xf32>
    %338 = vector.extract_strided_slice %320 {offsets = [0, 8], sizes = [16, 8], strides = [1, 1]} : vector<16x32xf32> to vector<16x8xf32>
    %339 = vector.extract_strided_slice %321 {offsets = [0, 8], sizes = [16, 8], strides = [1, 1]} : vector<16x32xf32> to vector<16x8xf32>
    %340 = vector.extract_strided_slice %322 {offsets = [0, 8], sizes = [16, 8], strides = [1, 1]} : vector<16x32xf32> to vector<16x8xf32>
    %cst_121 = arith.constant dense<0.000000e+00> : vector<16x16xf32>
    %341 = tpu.matmul %338, %339, %cst_121 {dimension_numbers = #tpu.dot_dimension_numbers<[1], [1], [0], [0], [0, 0, 1, 0], [], []>} : vector<16x8xf32>, vector<16x8xf32>, vector<16x16xf32> -> vector<16x16xf32>
    %342 = arith.addf %341, %1 : vector<16x16xf32>
    %cst_122 = arith.constant dense<0xFF800000> : vector<16xf32>
    %343 = vector.multi_reduction <maximumf>, %342, %cst_122 [1] : vector<16x16xf32> to vector<16xf32>
    %344 = vector.shape_cast %343 : vector<16xf32> to vector<16x1xf32>
    %345 = vector.broadcast %344 : vector<16x1xf32> to vector<16x16xf32>
    %346 = arith.subf %342, %345 : vector<16x16xf32>
    %347 = math.exp %346 : vector<16x16xf32>
    %cst_123 = arith.constant dense<0.000000e+00> : vector<16xf32>
    %348 = vector.multi_reduction <add>, %347, %cst_123 [1] : vector<16x16xf32> to vector<16xf32>
    %349 = vector.shape_cast %348 : vector<16xf32> to vector<16x1xf32>
    %350 = vector.broadcast %349 : vector<16x1xf32> to vector<16x16xf32>
    %351 = arith.divf %347, %350 : vector<16x16xf32>
    %cst_124 = arith.constant dense<0.000000e+00> : vector<16x8xf32>
    %352 = tpu.matmul %351, %340, %cst_124 {dimension_numbers = #tpu.dot_dimension_numbers<[1], [0], [0], [1], [0, 0, 1, 1], [], []>} : vector<16x16xf32>, vector<16x8xf32>, vector<16x8xf32> -> vector<16x8xf32>
    %353 = vector.extract_strided_slice %320 {offsets = [0, 16], sizes = [16, 8], strides = [1, 1]} : vector<16x32xf32> to vector<16x8xf32>
    %354 = vector.extract_strided_slice %321 {offsets = [0, 16], sizes = [16, 8], strides = [1, 1]} : vector<16x32xf32> to vector<16x8xf32>
    %355 = vector.extract_strided_slice %322 {offsets = [0, 16], sizes = [16, 8], strides = [1, 1]} : vector<16x32xf32> to vector<16x8xf32>
    %cst_125 = arith.constant dense<0.000000e+00> : vector<16x16xf32>
    %356 = tpu.matmul %353, %354, %cst_125 {dimension_numbers = #tpu.dot_dimension_numbers<[1], [1], [0], [0], [0, 0, 1, 0], [], []>} : vector<16x8xf32>, vector<16x8xf32>, vector<16x16xf32> -> vector<16x16xf32>
    %357 = arith.addf %356, %1 : vector<16x16xf32>
    %cst_126 = arith.constant dense<0xFF800000> : vector<16xf32>
    %358 = vector.multi_reduction <maximumf>, %357, %cst_126 [1] : vector<16x16xf32> to vector<16xf32>
    %359 = vector.shape_cast %358 : vector<16xf32> to vector<16x1xf32>
    %360 = vector.broadcast %359 : vector<16x1xf32> to vector<16x16xf32>
    %361 = arith.subf %357, %360 : vector<16x16xf32>
    %362 = math.exp %361 : vector<16x16xf32>
    %cst_127 = arith.constant dense<0.000000e+00> : vector<16xf32>
    %363 = vector.multi_reduction <add>, %362, %cst_127 [1] : vector<16x16xf32> to vector<16xf32>
    %364 = vector.shape_cast %363 : vector<16xf32> to vector<16x1xf32>
    %365 = vector.broadcast %364 : vector<16x1xf32> to vector<16x16xf32>
    %366 = arith.divf %362, %365 : vector<16x16xf32>
    %cst_128 = arith.constant dense<0.000000e+00> : vector<16x8xf32>
    %367 = tpu.matmul %366, %355, %cst_128 {dimension_numbers = #tpu.dot_dimension_numbers<[1], [0], [0], [1], [0, 0, 1, 1], [], []>} : vector<16x16xf32>, vector<16x8xf32>, vector<16x8xf32> -> vector<16x8xf32>
    %368 = vector.extract_strided_slice %320 {offsets = [0, 24], sizes = [16, 8], strides = [1, 1]} : vector<16x32xf32> to vector<16x8xf32>
    %369 = vector.extract_strided_slice %321 {offsets = [0, 24], sizes = [16, 8], strides = [1, 1]} : vector<16x32xf32> to vector<16x8xf32>
    %370 = vector.extract_strided_slice %322 {offsets = [0, 24], sizes = [16, 8], strides = [1, 1]} : vector<16x32xf32> to vector<16x8xf32>
    %cst_129 = arith.constant dense<0.000000e+00> : vector<16x16xf32>
    %371 = tpu.matmul %368, %369, %cst_129 {dimension_numbers = #tpu.dot_dimension_numbers<[1], [1], [0], [0], [0, 0, 1, 0], [], []>} : vector<16x8xf32>, vector<16x8xf32>, vector<16x16xf32> -> vector<16x16xf32>
    %372 = arith.addf %371, %1 : vector<16x16xf32>
    %cst_130 = arith.constant dense<0xFF800000> : vector<16xf32>
    %373 = vector.multi_reduction <maximumf>, %372, %cst_130 [1] : vector<16x16xf32> to vector<16xf32>
    %374 = vector.shape_cast %373 : vector<16xf32> to vector<16x1xf32>
    %375 = vector.broadcast %374 : vector<16x1xf32> to vector<16x16xf32>
    %376 = arith.subf %372, %375 : vector<16x16xf32>
    %377 = math.exp %376 : vector<16x16xf32>
    %cst_131 = arith.constant dense<0.000000e+00> : vector<16xf32>
    %378 = vector.multi_reduction <add>, %377, %cst_131 [1] : vector<16x16xf32> to vector<16xf32>
    %379 = vector.shape_cast %378 : vector<16xf32> to vector<16x1xf32>
    %380 = vector.broadcast %379 : vector<16x1xf32> to vector<16x16xf32>
    %381 = arith.divf %377, %380 : vector<16x16xf32>
    %cst_132 = arith.constant dense<0.000000e+00> : vector<16x8xf32>
    %382 = tpu.matmul %381, %370, %cst_132 {dimension_numbers = #tpu.dot_dimension_numbers<[1], [0], [0], [1], [0, 0, 1, 1], [], []>} : vector<16x16xf32>, vector<16x8xf32>, vector<16x8xf32> -> vector<16x8xf32>
    %383 = tpu.concatenate %337, %352, %367, %382 in 1 : vector<16x8xf32>, vector<16x8xf32>, vector<16x8xf32>, vector<16x8xf32> -> vector<16x32xf32>
    %384 = vector.extract_strided_slice %295 {offsets = [0, 96], sizes = [32, 32], strides = [1, 1]} : vector<32x128xf32> to vector<32x32xf32>
    %cst_133 = arith.constant dense<0.000000e+00> : vector<16x32xf32>
    %385 = tpu.matmul %383, %384, %cst_133 {dimension_numbers = #tpu.dot_dimension_numbers<[1], [0], [0], [1], [0, 0, 1, 1], [], []>} : vector<16x32xf32>, vector<32x32xf32>, vector<16x32xf32> -> vector<16x32xf32>
    %386 = arith.addf %290, %385 : vector<16x32xf32>
    %387 = vector.broadcast %293 : vector<1x32xf32> to vector<16x32xf32>
    %388 = arith.addf %386, %387 : vector<16x32xf32>
    %c9 = arith.constant 9 : index
    %c0_134 = arith.constant 0 : index
    %389 = vector.load %arg5[%c9, %c0_134] : memref<40x128xf32, #tpu.memory_space<vmem>>, vector<1x32xf32>
    %c10 = arith.constant 10 : index
    %c0_135 = arith.constant 0 : index
    %390 = vector.load %arg5[%c10, %c0_135] : memref<40x128xf32, #tpu.memory_space<vmem>>, vector<1x32xf32>
    %c11 = arith.constant 11 : index
    %c0_136 = arith.constant 0 : index
    %391 = vector.load %arg5[%c11, %c0_136] : memref<40x128xf32, #tpu.memory_space<vmem>>, vector<1x32xf32>
    %c3_137 = arith.constant 3 : index
    %c0_138 = arith.constant 0 : index
    %c0_139 = arith.constant 0 : index
    %392 = vector.load %arg2[%c3_137, %c0_138, %c0_139] : memref<6x32x128xf32, #tpu.memory_space<vmem>>, vector<1x32x128xf32>
    %393 = vector.shape_cast %392 : vector<1x32x128xf32> to vector<32x128xf32>
    %cst_140 = arith.constant dense<0.000000e+00> : vector<16xf32>
    %394 = vector.multi_reduction <add>, %388, %cst_140 [1] : vector<16x32xf32> to vector<16xf32>
    %395 = vector.shape_cast %394 : vector<16xf32> to vector<16x1xf32>
    %cst_141 = arith.constant 3.200000e+01 : f32
    %396 = vector.broadcast %cst_141 : f32 to vector<16x1xf32>
    %397 = arith.divf %395, %396 : vector<16x1xf32>
    %398 = vector.broadcast %397 : vector<16x1xf32> to vector<16x32xf32>
    %399 = arith.subf %388, %398 : vector<16x32xf32>
    %400 = arith.mulf %399, %399 : vector<16x32xf32>
    %cst_142 = arith.constant dense<0.000000e+00> : vector<16xf32>
    %401 = vector.multi_reduction <add>, %400, %cst_142 [1] : vector<16x32xf32> to vector<16xf32>
    %402 = vector.shape_cast %401 : vector<16xf32> to vector<16x1xf32>
    %cst_143 = arith.constant 3.200000e+01 : f32
    %403 = vector.broadcast %cst_143 : f32 to vector<16x1xf32>
    %404 = arith.divf %402, %403 : vector<16x1xf32>
    %405 = vector.broadcast %397 : vector<16x1xf32> to vector<16x32xf32>
    %406 = arith.subf %388, %405 : vector<16x32xf32>
    %cst_144 = arith.constant 9.99999974E-6 : f32
    %407 = vector.broadcast %cst_144 : f32 to vector<16x1xf32>
    %408 = arith.addf %404, %407 : vector<16x1xf32>
    %409 = math.rsqrt %408 : vector<16x1xf32>
    %410 = vector.broadcast %409 : vector<16x1xf32> to vector<16x32xf32>
    %411 = arith.mulf %406, %410 : vector<16x32xf32>
    %412 = vector.broadcast %389 : vector<1x32xf32> to vector<16x32xf32>
    %413 = arith.mulf %411, %412 : vector<16x32xf32>
    %414 = vector.broadcast %390 : vector<1x32xf32> to vector<16x32xf32>
    %415 = arith.addf %413, %414 : vector<16x32xf32>
    %416 = vector.extract_strided_slice %393 {offsets = [0, 0], sizes = [32, 32], strides = [1, 1]} : vector<32x128xf32> to vector<32x32xf32>
    %cst_145 = arith.constant dense<0.000000e+00> : vector<16x32xf32>
    %417 = tpu.matmul %415, %416, %cst_145 {dimension_numbers = #tpu.dot_dimension_numbers<[1], [0], [0], [1], [0, 0, 1, 1], [], []>} : vector<16x32xf32>, vector<32x32xf32>, vector<16x32xf32> -> vector<16x32xf32>
    %418 = vector.extract_strided_slice %393 {offsets = [0, 32], sizes = [32, 64], strides = [1, 1]} : vector<32x128xf32> to vector<32x64xf32>
    %cst_146 = arith.constant dense<0.000000e+00> : vector<32x64xf32>
    %419 = tpu.matmul %289, %418, %cst_146 {dimension_numbers = #tpu.dot_dimension_numbers<[1], [0], [0], [1], [0, 0, 1, 1], [], []>} : vector<32x32xf32>, vector<32x64xf32>, vector<32x64xf32> -> vector<32x64xf32>
    %420 = vector.extract_strided_slice %419 {offsets = [0, 0], sizes = [32, 32], strides = [1, 1]} : vector<32x64xf32> to vector<32x32xf32>
    %421 = vector.extract_strided_slice %419 {offsets = [0, 32], sizes = [32, 32], strides = [1, 1]} : vector<32x64xf32> to vector<32x32xf32>
    %422 = vector.extract_strided_slice %417 {offsets = [0, 0], sizes = [16, 8], strides = [1, 1]} : vector<16x32xf32> to vector<16x8xf32>
    %423 = vector.extract_strided_slice %420 {offsets = [0, 0], sizes = [32, 8], strides = [1, 1]} : vector<32x32xf32> to vector<32x8xf32>
    %424 = vector.extract_strided_slice %421 {offsets = [0, 0], sizes = [32, 8], strides = [1, 1]} : vector<32x32xf32> to vector<32x8xf32>
    %cst_147 = arith.constant dense<0.000000e+00> : vector<16x32xf32>
    %425 = tpu.matmul %422, %423, %cst_147 {dimension_numbers = #tpu.dot_dimension_numbers<[1], [1], [0], [0], [0, 0, 1, 0], [], []>} : vector<16x8xf32>, vector<32x8xf32>, vector<16x32xf32> -> vector<16x32xf32>
    %426 = arith.addf %425, %2 : vector<16x32xf32>
    %cst_148 = arith.constant dense<0xFF800000> : vector<16xf32>
    %427 = vector.multi_reduction <maximumf>, %426, %cst_148 [1] : vector<16x32xf32> to vector<16xf32>
    %428 = vector.shape_cast %427 : vector<16xf32> to vector<16x1xf32>
    %429 = vector.broadcast %428 : vector<16x1xf32> to vector<16x32xf32>
    %430 = arith.subf %426, %429 : vector<16x32xf32>
    %431 = math.exp %430 : vector<16x32xf32>
    %cst_149 = arith.constant dense<0.000000e+00> : vector<16xf32>
    %432 = vector.multi_reduction <add>, %431, %cst_149 [1] : vector<16x32xf32> to vector<16xf32>
    %433 = vector.shape_cast %432 : vector<16xf32> to vector<16x1xf32>
    %434 = vector.broadcast %433 : vector<16x1xf32> to vector<16x32xf32>
    %435 = arith.divf %431, %434 : vector<16x32xf32>
    %cst_150 = arith.constant dense<0.000000e+00> : vector<16x8xf32>
    %436 = tpu.matmul %435, %424, %cst_150 {dimension_numbers = #tpu.dot_dimension_numbers<[1], [0], [0], [1], [0, 0, 1, 1], [], []>} : vector<16x32xf32>, vector<32x8xf32>, vector<16x8xf32> -> vector<16x8xf32>
    %437 = vector.extract_strided_slice %417 {offsets = [0, 8], sizes = [16, 8], strides = [1, 1]} : vector<16x32xf32> to vector<16x8xf32>
    %438 = vector.extract_strided_slice %420 {offsets = [0, 8], sizes = [32, 8], strides = [1, 1]} : vector<32x32xf32> to vector<32x8xf32>
    %439 = vector.extract_strided_slice %421 {offsets = [0, 8], sizes = [32, 8], strides = [1, 1]} : vector<32x32xf32> to vector<32x8xf32>
    %cst_151 = arith.constant dense<0.000000e+00> : vector<16x32xf32>
    %440 = tpu.matmul %437, %438, %cst_151 {dimension_numbers = #tpu.dot_dimension_numbers<[1], [1], [0], [0], [0, 0, 1, 0], [], []>} : vector<16x8xf32>, vector<32x8xf32>, vector<16x32xf32> -> vector<16x32xf32>
    %441 = arith.addf %440, %2 : vector<16x32xf32>
    %cst_152 = arith.constant dense<0xFF800000> : vector<16xf32>
    %442 = vector.multi_reduction <maximumf>, %441, %cst_152 [1] : vector<16x32xf32> to vector<16xf32>
    %443 = vector.shape_cast %442 : vector<16xf32> to vector<16x1xf32>
    %444 = vector.broadcast %443 : vector<16x1xf32> to vector<16x32xf32>
    %445 = arith.subf %441, %444 : vector<16x32xf32>
    %446 = math.exp %445 : vector<16x32xf32>
    %cst_153 = arith.constant dense<0.000000e+00> : vector<16xf32>
    %447 = vector.multi_reduction <add>, %446, %cst_153 [1] : vector<16x32xf32> to vector<16xf32>
    %448 = vector.shape_cast %447 : vector<16xf32> to vector<16x1xf32>
    %449 = vector.broadcast %448 : vector<16x1xf32> to vector<16x32xf32>
    %450 = arith.divf %446, %449 : vector<16x32xf32>
    %cst_154 = arith.constant dense<0.000000e+00> : vector<16x8xf32>
    %451 = tpu.matmul %450, %439, %cst_154 {dimension_numbers = #tpu.dot_dimension_numbers<[1], [0], [0], [1], [0, 0, 1, 1], [], []>} : vector<16x32xf32>, vector<32x8xf32>, vector<16x8xf32> -> vector<16x8xf32>
    %452 = vector.extract_strided_slice %417 {offsets = [0, 16], sizes = [16, 8], strides = [1, 1]} : vector<16x32xf32> to vector<16x8xf32>
    %453 = vector.extract_strided_slice %420 {offsets = [0, 16], sizes = [32, 8], strides = [1, 1]} : vector<32x32xf32> to vector<32x8xf32>
    %454 = vector.extract_strided_slice %421 {offsets = [0, 16], sizes = [32, 8], strides = [1, 1]} : vector<32x32xf32> to vector<32x8xf32>
    %cst_155 = arith.constant dense<0.000000e+00> : vector<16x32xf32>
    %455 = tpu.matmul %452, %453, %cst_155 {dimension_numbers = #tpu.dot_dimension_numbers<[1], [1], [0], [0], [0, 0, 1, 0], [], []>} : vector<16x8xf32>, vector<32x8xf32>, vector<16x32xf32> -> vector<16x32xf32>
    %456 = arith.addf %455, %2 : vector<16x32xf32>
    %cst_156 = arith.constant dense<0xFF800000> : vector<16xf32>
    %457 = vector.multi_reduction <maximumf>, %456, %cst_156 [1] : vector<16x32xf32> to vector<16xf32>
    %458 = vector.shape_cast %457 : vector<16xf32> to vector<16x1xf32>
    %459 = vector.broadcast %458 : vector<16x1xf32> to vector<16x32xf32>
    %460 = arith.subf %456, %459 : vector<16x32xf32>
    %461 = math.exp %460 : vector<16x32xf32>
    %cst_157 = arith.constant dense<0.000000e+00> : vector<16xf32>
    %462 = vector.multi_reduction <add>, %461, %cst_157 [1] : vector<16x32xf32> to vector<16xf32>
    %463 = vector.shape_cast %462 : vector<16xf32> to vector<16x1xf32>
    %464 = vector.broadcast %463 : vector<16x1xf32> to vector<16x32xf32>
    %465 = arith.divf %461, %464 : vector<16x32xf32>
    %cst_158 = arith.constant dense<0.000000e+00> : vector<16x8xf32>
    %466 = tpu.matmul %465, %454, %cst_158 {dimension_numbers = #tpu.dot_dimension_numbers<[1], [0], [0], [1], [0, 0, 1, 1], [], []>} : vector<16x32xf32>, vector<32x8xf32>, vector<16x8xf32> -> vector<16x8xf32>
    %467 = vector.extract_strided_slice %417 {offsets = [0, 24], sizes = [16, 8], strides = [1, 1]} : vector<16x32xf32> to vector<16x8xf32>
    %468 = vector.extract_strided_slice %420 {offsets = [0, 24], sizes = [32, 8], strides = [1, 1]} : vector<32x32xf32> to vector<32x8xf32>
    %469 = vector.extract_strided_slice %421 {offsets = [0, 24], sizes = [32, 8], strides = [1, 1]} : vector<32x32xf32> to vector<32x8xf32>
    %cst_159 = arith.constant dense<0.000000e+00> : vector<16x32xf32>
    %470 = tpu.matmul %467, %468, %cst_159 {dimension_numbers = #tpu.dot_dimension_numbers<[1], [1], [0], [0], [0, 0, 1, 0], [], []>} : vector<16x8xf32>, vector<32x8xf32>, vector<16x32xf32> -> vector<16x32xf32>
    %471 = arith.addf %470, %2 : vector<16x32xf32>
    %cst_160 = arith.constant dense<0xFF800000> : vector<16xf32>
    %472 = vector.multi_reduction <maximumf>, %471, %cst_160 [1] : vector<16x32xf32> to vector<16xf32>
    %473 = vector.shape_cast %472 : vector<16xf32> to vector<16x1xf32>
    %474 = vector.broadcast %473 : vector<16x1xf32> to vector<16x32xf32>
    %475 = arith.subf %471, %474 : vector<16x32xf32>
    %476 = math.exp %475 : vector<16x32xf32>
    %cst_161 = arith.constant dense<0.000000e+00> : vector<16xf32>
    %477 = vector.multi_reduction <add>, %476, %cst_161 [1] : vector<16x32xf32> to vector<16xf32>
    %478 = vector.shape_cast %477 : vector<16xf32> to vector<16x1xf32>
    %479 = vector.broadcast %478 : vector<16x1xf32> to vector<16x32xf32>
    %480 = arith.divf %476, %479 : vector<16x32xf32>
    %cst_162 = arith.constant dense<0.000000e+00> : vector<16x8xf32>
    %481 = tpu.matmul %480, %469, %cst_162 {dimension_numbers = #tpu.dot_dimension_numbers<[1], [0], [0], [1], [0, 0, 1, 1], [], []>} : vector<16x32xf32>, vector<32x8xf32>, vector<16x8xf32> -> vector<16x8xf32>
    %482 = tpu.concatenate %436, %451, %466, %481 in 1 : vector<16x8xf32>, vector<16x8xf32>, vector<16x8xf32>, vector<16x8xf32> -> vector<16x32xf32>
    %483 = vector.extract_strided_slice %393 {offsets = [0, 96], sizes = [32, 32], strides = [1, 1]} : vector<32x128xf32> to vector<32x32xf32>
    %cst_163 = arith.constant dense<0.000000e+00> : vector<16x32xf32>
    %484 = tpu.matmul %482, %483, %cst_163 {dimension_numbers = #tpu.dot_dimension_numbers<[1], [0], [0], [1], [0, 0, 1, 1], [], []>} : vector<16x32xf32>, vector<32x32xf32>, vector<16x32xf32> -> vector<16x32xf32>
    %485 = arith.addf %388, %484 : vector<16x32xf32>
    %486 = vector.broadcast %391 : vector<1x32xf32> to vector<16x32xf32>
    %487 = arith.addf %485, %486 : vector<16x32xf32>
    %c26 = arith.constant 26 : index
    %c0_164 = arith.constant 0 : index
    %488 = vector.load %arg5[%c26, %c0_164] : memref<40x128xf32, #tpu.memory_space<vmem>>, vector<1x32xf32>
    %c27 = arith.constant 27 : index
    %c0_165 = arith.constant 0 : index
    %489 = vector.load %arg5[%c27, %c0_165] : memref<40x128xf32, #tpu.memory_space<vmem>>, vector<1x32xf32>
    %c28 = arith.constant 28 : index
    %c0_166 = arith.constant 0 : index
    %490 = vector.load %arg5[%c28, %c0_166] : memref<40x128xf32, #tpu.memory_space<vmem>>, vector<1x64xf32>
    %c29 = arith.constant 29 : index
    %c0_167 = arith.constant 0 : index
    %491 = vector.load %arg5[%c29, %c0_167] : memref<40x128xf32, #tpu.memory_space<vmem>>, vector<1x32xf32>
    %c2_168 = arith.constant 2 : index
    %c0_169 = arith.constant 0 : index
    %c0_170 = arith.constant 0 : index
    %492 = vector.load %arg3[%c2_168, %c0_169, %c0_170] : memref<4x32x64xf32, #tpu.memory_space<vmem>>, vector<1x32x64xf32>
    %493 = vector.shape_cast %492 : vector<1x32x64xf32> to vector<32x64xf32>
    %c2_171 = arith.constant 2 : index
    %c0_172 = arith.constant 0 : index
    %c0_173 = arith.constant 0 : index
    %494 = vector.load %arg4[%c2_171, %c0_172, %c0_173] : memref<4x64x32xf32, #tpu.memory_space<vmem>>, vector<1x64x32xf32>
    %495 = vector.shape_cast %494 : vector<1x64x32xf32> to vector<64x32xf32>
    %cst_174 = arith.constant dense<0.000000e+00> : vector<16xf32>
    %496 = vector.multi_reduction <add>, %487, %cst_174 [1] : vector<16x32xf32> to vector<16xf32>
    %497 = vector.shape_cast %496 : vector<16xf32> to vector<16x1xf32>
    %cst_175 = arith.constant 3.200000e+01 : f32
    %498 = vector.broadcast %cst_175 : f32 to vector<16x1xf32>
    %499 = arith.divf %497, %498 : vector<16x1xf32>
    %500 = vector.broadcast %499 : vector<16x1xf32> to vector<16x32xf32>
    %501 = arith.subf %487, %500 : vector<16x32xf32>
    %502 = arith.mulf %501, %501 : vector<16x32xf32>
    %cst_176 = arith.constant dense<0.000000e+00> : vector<16xf32>
    %503 = vector.multi_reduction <add>, %502, %cst_176 [1] : vector<16x32xf32> to vector<16xf32>
    %504 = vector.shape_cast %503 : vector<16xf32> to vector<16x1xf32>
    %cst_177 = arith.constant 3.200000e+01 : f32
    %505 = vector.broadcast %cst_177 : f32 to vector<16x1xf32>
    %506 = arith.divf %504, %505 : vector<16x1xf32>
    %507 = vector.broadcast %499 : vector<16x1xf32> to vector<16x32xf32>
    %508 = arith.subf %487, %507 : vector<16x32xf32>
    %cst_178 = arith.constant 9.99999974E-6 : f32
    %509 = vector.broadcast %cst_178 : f32 to vector<16x1xf32>
    %510 = arith.addf %506, %509 : vector<16x1xf32>
    %511 = math.rsqrt %510 : vector<16x1xf32>
    %512 = vector.broadcast %511 : vector<16x1xf32> to vector<16x32xf32>
    %513 = arith.mulf %508, %512 : vector<16x32xf32>
    %514 = vector.broadcast %488 : vector<1x32xf32> to vector<16x32xf32>
    %515 = arith.mulf %513, %514 : vector<16x32xf32>
    %516 = vector.broadcast %489 : vector<1x32xf32> to vector<16x32xf32>
    %517 = arith.addf %515, %516 : vector<16x32xf32>
    %cst_179 = arith.constant dense<0.000000e+00> : vector<16x64xf32>
    %518 = tpu.matmul %517, %493, %cst_179 {dimension_numbers = #tpu.dot_dimension_numbers<[1], [0], [0], [1], [0, 0, 1, 1], [], []>} : vector<16x32xf32>, vector<32x64xf32>, vector<16x64xf32> -> vector<16x64xf32>
    %519 = vector.broadcast %490 : vector<1x64xf32> to vector<16x64xf32>
    %520 = arith.addf %518, %519 : vector<16x64xf32>
    %cst_180 = arith.constant 5.000000e-01 : f32
    %521 = vector.broadcast %cst_180 : f32 to vector<16x64xf32>
    %522 = arith.mulf %521, %520 : vector<16x64xf32>
    %cst_181 = arith.constant 0.707106769 : f32
    %523 = vector.broadcast %cst_181 : f32 to vector<16x64xf32>
    %524 = arith.mulf %520, %523 : vector<16x64xf32>
    %525 = math.erf %524 : vector<16x64xf32>
    %cst_182 = arith.constant 1.000000e+00 : f32
    %526 = vector.broadcast %cst_182 : f32 to vector<16x64xf32>
    %527 = arith.addf %526, %525 : vector<16x64xf32>
    %528 = arith.mulf %522, %527 : vector<16x64xf32>
    %cst_183 = arith.constant dense<0.000000e+00> : vector<16x32xf32>
    %529 = tpu.matmul %528, %495, %cst_183 {dimension_numbers = #tpu.dot_dimension_numbers<[1], [0], [0], [1], [0, 0, 1, 1], [], []>} : vector<16x64xf32>, vector<64x32xf32>, vector<16x32xf32> -> vector<16x32xf32>
    %530 = arith.addf %487, %529 : vector<16x32xf32>
    %531 = vector.broadcast %491 : vector<1x32xf32> to vector<16x32xf32>
    %532 = arith.addf %530, %531 : vector<16x32xf32>
    %c12 = arith.constant 12 : index
    %c0_184 = arith.constant 0 : index
    %533 = vector.load %arg5[%c12, %c0_184] : memref<40x128xf32, #tpu.memory_space<vmem>>, vector<1x32xf32>
    %c13 = arith.constant 13 : index
    %c0_185 = arith.constant 0 : index
    %534 = vector.load %arg5[%c13, %c0_185] : memref<40x128xf32, #tpu.memory_space<vmem>>, vector<1x32xf32>
    %c14 = arith.constant 14 : index
    %c0_186 = arith.constant 0 : index
    %535 = vector.load %arg5[%c14, %c0_186] : memref<40x128xf32, #tpu.memory_space<vmem>>, vector<1x32xf32>
    %c4_187 = arith.constant 4 : index
    %c0_188 = arith.constant 0 : index
    %c0_189 = arith.constant 0 : index
    %536 = vector.load %arg2[%c4_187, %c0_188, %c0_189] : memref<6x32x128xf32, #tpu.memory_space<vmem>>, vector<1x32x128xf32>
    %537 = vector.shape_cast %536 : vector<1x32x128xf32> to vector<32x128xf32>
    %cst_190 = arith.constant dense<0.000000e+00> : vector<16xf32>
    %538 = vector.multi_reduction <add>, %532, %cst_190 [1] : vector<16x32xf32> to vector<16xf32>
    %539 = vector.shape_cast %538 : vector<16xf32> to vector<16x1xf32>
    %cst_191 = arith.constant 3.200000e+01 : f32
    %540 = vector.broadcast %cst_191 : f32 to vector<16x1xf32>
    %541 = arith.divf %539, %540 : vector<16x1xf32>
    %542 = vector.broadcast %541 : vector<16x1xf32> to vector<16x32xf32>
    %543 = arith.subf %532, %542 : vector<16x32xf32>
    %544 = arith.mulf %543, %543 : vector<16x32xf32>
    %cst_192 = arith.constant dense<0.000000e+00> : vector<16xf32>
    %545 = vector.multi_reduction <add>, %544, %cst_192 [1] : vector<16x32xf32> to vector<16xf32>
    %546 = vector.shape_cast %545 : vector<16xf32> to vector<16x1xf32>
    %cst_193 = arith.constant 3.200000e+01 : f32
    %547 = vector.broadcast %cst_193 : f32 to vector<16x1xf32>
    %548 = arith.divf %546, %547 : vector<16x1xf32>
    %549 = vector.broadcast %541 : vector<16x1xf32> to vector<16x32xf32>
    %550 = arith.subf %532, %549 : vector<16x32xf32>
    %cst_194 = arith.constant 9.99999974E-6 : f32
    %551 = vector.broadcast %cst_194 : f32 to vector<16x1xf32>
    %552 = arith.addf %548, %551 : vector<16x1xf32>
    %553 = math.rsqrt %552 : vector<16x1xf32>
    %554 = vector.broadcast %553 : vector<16x1xf32> to vector<16x32xf32>
    %555 = arith.mulf %550, %554 : vector<16x32xf32>
    %556 = vector.broadcast %533 : vector<1x32xf32> to vector<16x32xf32>
    %557 = arith.mulf %555, %556 : vector<16x32xf32>
    %558 = vector.broadcast %534 : vector<1x32xf32> to vector<16x32xf32>
    %559 = arith.addf %557, %558 : vector<16x32xf32>
    %560 = vector.extract_strided_slice %537 {offsets = [0, 0], sizes = [32, 96], strides = [1, 1]} : vector<32x128xf32> to vector<32x96xf32>
    %cst_195 = arith.constant dense<0.000000e+00> : vector<16x96xf32>
    %561 = tpu.matmul %559, %560, %cst_195 {dimension_numbers = #tpu.dot_dimension_numbers<[1], [0], [0], [1], [0, 0, 1, 1], [], []>} : vector<16x32xf32>, vector<32x96xf32>, vector<16x96xf32> -> vector<16x96xf32>
    %562 = vector.extract_strided_slice %561 {offsets = [0, 0], sizes = [16, 32], strides = [1, 1]} : vector<16x96xf32> to vector<16x32xf32>
    %563 = vector.extract_strided_slice %561 {offsets = [0, 32], sizes = [16, 32], strides = [1, 1]} : vector<16x96xf32> to vector<16x32xf32>
    %564 = vector.extract_strided_slice %561 {offsets = [0, 64], sizes = [16, 32], strides = [1, 1]} : vector<16x96xf32> to vector<16x32xf32>
    %565 = vector.extract_strided_slice %562 {offsets = [0, 0], sizes = [16, 8], strides = [1, 1]} : vector<16x32xf32> to vector<16x8xf32>
    %566 = vector.extract_strided_slice %563 {offsets = [0, 0], sizes = [16, 8], strides = [1, 1]} : vector<16x32xf32> to vector<16x8xf32>
    %567 = vector.extract_strided_slice %564 {offsets = [0, 0], sizes = [16, 8], strides = [1, 1]} : vector<16x32xf32> to vector<16x8xf32>
    %cst_196 = arith.constant dense<0.000000e+00> : vector<16x16xf32>
    %568 = tpu.matmul %565, %566, %cst_196 {dimension_numbers = #tpu.dot_dimension_numbers<[1], [1], [0], [0], [0, 0, 1, 0], [], []>} : vector<16x8xf32>, vector<16x8xf32>, vector<16x16xf32> -> vector<16x16xf32>
    %569 = arith.addf %568, %1 : vector<16x16xf32>
    %cst_197 = arith.constant dense<0xFF800000> : vector<16xf32>
    %570 = vector.multi_reduction <maximumf>, %569, %cst_197 [1] : vector<16x16xf32> to vector<16xf32>
    %571 = vector.shape_cast %570 : vector<16xf32> to vector<16x1xf32>
    %572 = vector.broadcast %571 : vector<16x1xf32> to vector<16x16xf32>
    %573 = arith.subf %569, %572 : vector<16x16xf32>
    %574 = math.exp %573 : vector<16x16xf32>
    %cst_198 = arith.constant dense<0.000000e+00> : vector<16xf32>
    %575 = vector.multi_reduction <add>, %574, %cst_198 [1] : vector<16x16xf32> to vector<16xf32>
    %576 = vector.shape_cast %575 : vector<16xf32> to vector<16x1xf32>
    %577 = vector.broadcast %576 : vector<16x1xf32> to vector<16x16xf32>
    %578 = arith.divf %574, %577 : vector<16x16xf32>
    %cst_199 = arith.constant dense<0.000000e+00> : vector<16x8xf32>
    %579 = tpu.matmul %578, %567, %cst_199 {dimension_numbers = #tpu.dot_dimension_numbers<[1], [0], [0], [1], [0, 0, 1, 1], [], []>} : vector<16x16xf32>, vector<16x8xf32>, vector<16x8xf32> -> vector<16x8xf32>
    %580 = vector.extract_strided_slice %562 {offsets = [0, 8], sizes = [16, 8], strides = [1, 1]} : vector<16x32xf32> to vector<16x8xf32>
    %581 = vector.extract_strided_slice %563 {offsets = [0, 8], sizes = [16, 8], strides = [1, 1]} : vector<16x32xf32> to vector<16x8xf32>
    %582 = vector.extract_strided_slice %564 {offsets = [0, 8], sizes = [16, 8], strides = [1, 1]} : vector<16x32xf32> to vector<16x8xf32>
    %cst_200 = arith.constant dense<0.000000e+00> : vector<16x16xf32>
    %583 = tpu.matmul %580, %581, %cst_200 {dimension_numbers = #tpu.dot_dimension_numbers<[1], [1], [0], [0], [0, 0, 1, 0], [], []>} : vector<16x8xf32>, vector<16x8xf32>, vector<16x16xf32> -> vector<16x16xf32>
    %584 = arith.addf %583, %1 : vector<16x16xf32>
    %cst_201 = arith.constant dense<0xFF800000> : vector<16xf32>
    %585 = vector.multi_reduction <maximumf>, %584, %cst_201 [1] : vector<16x16xf32> to vector<16xf32>
    %586 = vector.shape_cast %585 : vector<16xf32> to vector<16x1xf32>
    %587 = vector.broadcast %586 : vector<16x1xf32> to vector<16x16xf32>
    %588 = arith.subf %584, %587 : vector<16x16xf32>
    %589 = math.exp %588 : vector<16x16xf32>
    %cst_202 = arith.constant dense<0.000000e+00> : vector<16xf32>
    %590 = vector.multi_reduction <add>, %589, %cst_202 [1] : vector<16x16xf32> to vector<16xf32>
    %591 = vector.shape_cast %590 : vector<16xf32> to vector<16x1xf32>
    %592 = vector.broadcast %591 : vector<16x1xf32> to vector<16x16xf32>
    %593 = arith.divf %589, %592 : vector<16x16xf32>
    %cst_203 = arith.constant dense<0.000000e+00> : vector<16x8xf32>
    %594 = tpu.matmul %593, %582, %cst_203 {dimension_numbers = #tpu.dot_dimension_numbers<[1], [0], [0], [1], [0, 0, 1, 1], [], []>} : vector<16x16xf32>, vector<16x8xf32>, vector<16x8xf32> -> vector<16x8xf32>
    %595 = vector.extract_strided_slice %562 {offsets = [0, 16], sizes = [16, 8], strides = [1, 1]} : vector<16x32xf32> to vector<16x8xf32>
    %596 = vector.extract_strided_slice %563 {offsets = [0, 16], sizes = [16, 8], strides = [1, 1]} : vector<16x32xf32> to vector<16x8xf32>
    %597 = vector.extract_strided_slice %564 {offsets = [0, 16], sizes = [16, 8], strides = [1, 1]} : vector<16x32xf32> to vector<16x8xf32>
    %cst_204 = arith.constant dense<0.000000e+00> : vector<16x16xf32>
    %598 = tpu.matmul %595, %596, %cst_204 {dimension_numbers = #tpu.dot_dimension_numbers<[1], [1], [0], [0], [0, 0, 1, 0], [], []>} : vector<16x8xf32>, vector<16x8xf32>, vector<16x16xf32> -> vector<16x16xf32>
    %599 = arith.addf %598, %1 : vector<16x16xf32>
    %cst_205 = arith.constant dense<0xFF800000> : vector<16xf32>
    %600 = vector.multi_reduction <maximumf>, %599, %cst_205 [1] : vector<16x16xf32> to vector<16xf32>
    %601 = vector.shape_cast %600 : vector<16xf32> to vector<16x1xf32>
    %602 = vector.broadcast %601 : vector<16x1xf32> to vector<16x16xf32>
    %603 = arith.subf %599, %602 : vector<16x16xf32>
    %604 = math.exp %603 : vector<16x16xf32>
    %cst_206 = arith.constant dense<0.000000e+00> : vector<16xf32>
    %605 = vector.multi_reduction <add>, %604, %cst_206 [1] : vector<16x16xf32> to vector<16xf32>
    %606 = vector.shape_cast %605 : vector<16xf32> to vector<16x1xf32>
    %607 = vector.broadcast %606 : vector<16x1xf32> to vector<16x16xf32>
    %608 = arith.divf %604, %607 : vector<16x16xf32>
    %cst_207 = arith.constant dense<0.000000e+00> : vector<16x8xf32>
    %609 = tpu.matmul %608, %597, %cst_207 {dimension_numbers = #tpu.dot_dimension_numbers<[1], [0], [0], [1], [0, 0, 1, 1], [], []>} : vector<16x16xf32>, vector<16x8xf32>, vector<16x8xf32> -> vector<16x8xf32>
    %610 = vector.extract_strided_slice %562 {offsets = [0, 24], sizes = [16, 8], strides = [1, 1]} : vector<16x32xf32> to vector<16x8xf32>
    %611 = vector.extract_strided_slice %563 {offsets = [0, 24], sizes = [16, 8], strides = [1, 1]} : vector<16x32xf32> to vector<16x8xf32>
    %612 = vector.extract_strided_slice %564 {offsets = [0, 24], sizes = [16, 8], strides = [1, 1]} : vector<16x32xf32> to vector<16x8xf32>
    %cst_208 = arith.constant dense<0.000000e+00> : vector<16x16xf32>
    %613 = tpu.matmul %610, %611, %cst_208 {dimension_numbers = #tpu.dot_dimension_numbers<[1], [1], [0], [0], [0, 0, 1, 0], [], []>} : vector<16x8xf32>, vector<16x8xf32>, vector<16x16xf32> -> vector<16x16xf32>
    %614 = arith.addf %613, %1 : vector<16x16xf32>
    %cst_209 = arith.constant dense<0xFF800000> : vector<16xf32>
    %615 = vector.multi_reduction <maximumf>, %614, %cst_209 [1] : vector<16x16xf32> to vector<16xf32>
    %616 = vector.shape_cast %615 : vector<16xf32> to vector<16x1xf32>
    %617 = vector.broadcast %616 : vector<16x1xf32> to vector<16x16xf32>
    %618 = arith.subf %614, %617 : vector<16x16xf32>
    %619 = math.exp %618 : vector<16x16xf32>
    %cst_210 = arith.constant dense<0.000000e+00> : vector<16xf32>
    %620 = vector.multi_reduction <add>, %619, %cst_210 [1] : vector<16x16xf32> to vector<16xf32>
    %621 = vector.shape_cast %620 : vector<16xf32> to vector<16x1xf32>
    %622 = vector.broadcast %621 : vector<16x1xf32> to vector<16x16xf32>
    %623 = arith.divf %619, %622 : vector<16x16xf32>
    %cst_211 = arith.constant dense<0.000000e+00> : vector<16x8xf32>
    %624 = tpu.matmul %623, %612, %cst_211 {dimension_numbers = #tpu.dot_dimension_numbers<[1], [0], [0], [1], [0, 0, 1, 1], [], []>} : vector<16x16xf32>, vector<16x8xf32>, vector<16x8xf32> -> vector<16x8xf32>
    %625 = tpu.concatenate %579, %594, %609, %624 in 1 : vector<16x8xf32>, vector<16x8xf32>, vector<16x8xf32>, vector<16x8xf32> -> vector<16x32xf32>
    %626 = vector.extract_strided_slice %537 {offsets = [0, 96], sizes = [32, 32], strides = [1, 1]} : vector<32x128xf32> to vector<32x32xf32>
    %cst_212 = arith.constant dense<0.000000e+00> : vector<16x32xf32>
    %627 = tpu.matmul %625, %626, %cst_212 {dimension_numbers = #tpu.dot_dimension_numbers<[1], [0], [0], [1], [0, 0, 1, 1], [], []>} : vector<16x32xf32>, vector<32x32xf32>, vector<16x32xf32> -> vector<16x32xf32>
    %628 = arith.addf %532, %627 : vector<16x32xf32>
    %629 = vector.broadcast %535 : vector<1x32xf32> to vector<16x32xf32>
    %630 = arith.addf %628, %629 : vector<16x32xf32>
    %c15 = arith.constant 15 : index
    %c0_213 = arith.constant 0 : index
    %631 = vector.load %arg5[%c15, %c0_213] : memref<40x128xf32, #tpu.memory_space<vmem>>, vector<1x32xf32>
    %c16 = arith.constant 16 : index
    %c0_214 = arith.constant 0 : index
    %632 = vector.load %arg5[%c16, %c0_214] : memref<40x128xf32, #tpu.memory_space<vmem>>, vector<1x32xf32>
    %c17 = arith.constant 17 : index
    %c0_215 = arith.constant 0 : index
    %633 = vector.load %arg5[%c17, %c0_215] : memref<40x128xf32, #tpu.memory_space<vmem>>, vector<1x32xf32>
    %c5_216 = arith.constant 5 : index
    %c0_217 = arith.constant 0 : index
    %c0_218 = arith.constant 0 : index
    %634 = vector.load %arg2[%c5_216, %c0_217, %c0_218] : memref<6x32x128xf32, #tpu.memory_space<vmem>>, vector<1x32x128xf32>
    %635 = vector.shape_cast %634 : vector<1x32x128xf32> to vector<32x128xf32>
    %cst_219 = arith.constant dense<0.000000e+00> : vector<16xf32>
    %636 = vector.multi_reduction <add>, %630, %cst_219 [1] : vector<16x32xf32> to vector<16xf32>
    %637 = vector.shape_cast %636 : vector<16xf32> to vector<16x1xf32>
    %cst_220 = arith.constant 3.200000e+01 : f32
    %638 = vector.broadcast %cst_220 : f32 to vector<16x1xf32>
    %639 = arith.divf %637, %638 : vector<16x1xf32>
    %640 = vector.broadcast %639 : vector<16x1xf32> to vector<16x32xf32>
    %641 = arith.subf %630, %640 : vector<16x32xf32>
    %642 = arith.mulf %641, %641 : vector<16x32xf32>
    %cst_221 = arith.constant dense<0.000000e+00> : vector<16xf32>
    %643 = vector.multi_reduction <add>, %642, %cst_221 [1] : vector<16x32xf32> to vector<16xf32>
    %644 = vector.shape_cast %643 : vector<16xf32> to vector<16x1xf32>
    %cst_222 = arith.constant 3.200000e+01 : f32
    %645 = vector.broadcast %cst_222 : f32 to vector<16x1xf32>
    %646 = arith.divf %644, %645 : vector<16x1xf32>
    %647 = vector.broadcast %639 : vector<16x1xf32> to vector<16x32xf32>
    %648 = arith.subf %630, %647 : vector<16x32xf32>
    %cst_223 = arith.constant 9.99999974E-6 : f32
    %649 = vector.broadcast %cst_223 : f32 to vector<16x1xf32>
    %650 = arith.addf %646, %649 : vector<16x1xf32>
    %651 = math.rsqrt %650 : vector<16x1xf32>
    %652 = vector.broadcast %651 : vector<16x1xf32> to vector<16x32xf32>
    %653 = arith.mulf %648, %652 : vector<16x32xf32>
    %654 = vector.broadcast %631 : vector<1x32xf32> to vector<16x32xf32>
    %655 = arith.mulf %653, %654 : vector<16x32xf32>
    %656 = vector.broadcast %632 : vector<1x32xf32> to vector<16x32xf32>
    %657 = arith.addf %655, %656 : vector<16x32xf32>
    %658 = vector.extract_strided_slice %635 {offsets = [0, 0], sizes = [32, 32], strides = [1, 1]} : vector<32x128xf32> to vector<32x32xf32>
    %cst_224 = arith.constant dense<0.000000e+00> : vector<16x32xf32>
    %659 = tpu.matmul %657, %658, %cst_224 {dimension_numbers = #tpu.dot_dimension_numbers<[1], [0], [0], [1], [0, 0, 1, 1], [], []>} : vector<16x32xf32>, vector<32x32xf32>, vector<16x32xf32> -> vector<16x32xf32>
    %660 = vector.extract_strided_slice %635 {offsets = [0, 32], sizes = [32, 64], strides = [1, 1]} : vector<32x128xf32> to vector<32x64xf32>
    %cst_225 = arith.constant dense<0.000000e+00> : vector<32x64xf32>
    %661 = tpu.matmul %289, %660, %cst_225 {dimension_numbers = #tpu.dot_dimension_numbers<[1], [0], [0], [1], [0, 0, 1, 1], [], []>} : vector<32x32xf32>, vector<32x64xf32>, vector<32x64xf32> -> vector<32x64xf32>
    %662 = vector.extract_strided_slice %661 {offsets = [0, 0], sizes = [32, 32], strides = [1, 1]} : vector<32x64xf32> to vector<32x32xf32>
    %663 = vector.extract_strided_slice %661 {offsets = [0, 32], sizes = [32, 32], strides = [1, 1]} : vector<32x64xf32> to vector<32x32xf32>
    %664 = vector.extract_strided_slice %659 {offsets = [0, 0], sizes = [16, 8], strides = [1, 1]} : vector<16x32xf32> to vector<16x8xf32>
    %665 = vector.extract_strided_slice %662 {offsets = [0, 0], sizes = [32, 8], strides = [1, 1]} : vector<32x32xf32> to vector<32x8xf32>
    %666 = vector.extract_strided_slice %663 {offsets = [0, 0], sizes = [32, 8], strides = [1, 1]} : vector<32x32xf32> to vector<32x8xf32>
    %cst_226 = arith.constant dense<0.000000e+00> : vector<16x32xf32>
    %667 = tpu.matmul %664, %665, %cst_226 {dimension_numbers = #tpu.dot_dimension_numbers<[1], [1], [0], [0], [0, 0, 1, 0], [], []>} : vector<16x8xf32>, vector<32x8xf32>, vector<16x32xf32> -> vector<16x32xf32>
    %668 = arith.addf %667, %2 : vector<16x32xf32>
    %cst_227 = arith.constant dense<0xFF800000> : vector<16xf32>
    %669 = vector.multi_reduction <maximumf>, %668, %cst_227 [1] : vector<16x32xf32> to vector<16xf32>
    %670 = vector.shape_cast %669 : vector<16xf32> to vector<16x1xf32>
    %671 = vector.broadcast %670 : vector<16x1xf32> to vector<16x32xf32>
    %672 = arith.subf %668, %671 : vector<16x32xf32>
    %673 = math.exp %672 : vector<16x32xf32>
    %cst_228 = arith.constant dense<0.000000e+00> : vector<16xf32>
    %674 = vector.multi_reduction <add>, %673, %cst_228 [1] : vector<16x32xf32> to vector<16xf32>
    %675 = vector.shape_cast %674 : vector<16xf32> to vector<16x1xf32>
    %676 = vector.broadcast %675 : vector<16x1xf32> to vector<16x32xf32>
    %677 = arith.divf %673, %676 : vector<16x32xf32>
    %cst_229 = arith.constant dense<0.000000e+00> : vector<16x8xf32>
    %678 = tpu.matmul %677, %666, %cst_229 {dimension_numbers = #tpu.dot_dimension_numbers<[1], [0], [0], [1], [0, 0, 1, 1], [], []>} : vector<16x32xf32>, vector<32x8xf32>, vector<16x8xf32> -> vector<16x8xf32>
    %679 = vector.extract_strided_slice %659 {offsets = [0, 8], sizes = [16, 8], strides = [1, 1]} : vector<16x32xf32> to vector<16x8xf32>
    %680 = vector.extract_strided_slice %662 {offsets = [0, 8], sizes = [32, 8], strides = [1, 1]} : vector<32x32xf32> to vector<32x8xf32>
    %681 = vector.extract_strided_slice %663 {offsets = [0, 8], sizes = [32, 8], strides = [1, 1]} : vector<32x32xf32> to vector<32x8xf32>
    %cst_230 = arith.constant dense<0.000000e+00> : vector<16x32xf32>
    %682 = tpu.matmul %679, %680, %cst_230 {dimension_numbers = #tpu.dot_dimension_numbers<[1], [1], [0], [0], [0, 0, 1, 0], [], []>} : vector<16x8xf32>, vector<32x8xf32>, vector<16x32xf32> -> vector<16x32xf32>
    %683 = arith.addf %682, %2 : vector<16x32xf32>
    %cst_231 = arith.constant dense<0xFF800000> : vector<16xf32>
    %684 = vector.multi_reduction <maximumf>, %683, %cst_231 [1] : vector<16x32xf32> to vector<16xf32>
    %685 = vector.shape_cast %684 : vector<16xf32> to vector<16x1xf32>
    %686 = vector.broadcast %685 : vector<16x1xf32> to vector<16x32xf32>
    %687 = arith.subf %683, %686 : vector<16x32xf32>
    %688 = math.exp %687 : vector<16x32xf32>
    %cst_232 = arith.constant dense<0.000000e+00> : vector<16xf32>
    %689 = vector.multi_reduction <add>, %688, %cst_232 [1] : vector<16x32xf32> to vector<16xf32>
    %690 = vector.shape_cast %689 : vector<16xf32> to vector<16x1xf32>
    %691 = vector.broadcast %690 : vector<16x1xf32> to vector<16x32xf32>
    %692 = arith.divf %688, %691 : vector<16x32xf32>
    %cst_233 = arith.constant dense<0.000000e+00> : vector<16x8xf32>
    %693 = tpu.matmul %692, %681, %cst_233 {dimension_numbers = #tpu.dot_dimension_numbers<[1], [0], [0], [1], [0, 0, 1, 1], [], []>} : vector<16x32xf32>, vector<32x8xf32>, vector<16x8xf32> -> vector<16x8xf32>
    %694 = vector.extract_strided_slice %659 {offsets = [0, 16], sizes = [16, 8], strides = [1, 1]} : vector<16x32xf32> to vector<16x8xf32>
    %695 = vector.extract_strided_slice %662 {offsets = [0, 16], sizes = [32, 8], strides = [1, 1]} : vector<32x32xf32> to vector<32x8xf32>
    %696 = vector.extract_strided_slice %663 {offsets = [0, 16], sizes = [32, 8], strides = [1, 1]} : vector<32x32xf32> to vector<32x8xf32>
    %cst_234 = arith.constant dense<0.000000e+00> : vector<16x32xf32>
    %697 = tpu.matmul %694, %695, %cst_234 {dimension_numbers = #tpu.dot_dimension_numbers<[1], [1], [0], [0], [0, 0, 1, 0], [], []>} : vector<16x8xf32>, vector<32x8xf32>, vector<16x32xf32> -> vector<16x32xf32>
    %698 = arith.addf %697, %2 : vector<16x32xf32>
    %cst_235 = arith.constant dense<0xFF800000> : vector<16xf32>
    %699 = vector.multi_reduction <maximumf>, %698, %cst_235 [1] : vector<16x32xf32> to vector<16xf32>
    %700 = vector.shape_cast %699 : vector<16xf32> to vector<16x1xf32>
    %701 = vector.broadcast %700 : vector<16x1xf32> to vector<16x32xf32>
    %702 = arith.subf %698, %701 : vector<16x32xf32>
    %703 = math.exp %702 : vector<16x32xf32>
    %cst_236 = arith.constant dense<0.000000e+00> : vector<16xf32>
    %704 = vector.multi_reduction <add>, %703, %cst_236 [1] : vector<16x32xf32> to vector<16xf32>
    %705 = vector.shape_cast %704 : vector<16xf32> to vector<16x1xf32>
    %706 = vector.broadcast %705 : vector<16x1xf32> to vector<16x32xf32>
    %707 = arith.divf %703, %706 : vector<16x32xf32>
    %cst_237 = arith.constant dense<0.000000e+00> : vector<16x8xf32>
    %708 = tpu.matmul %707, %696, %cst_237 {dimension_numbers = #tpu.dot_dimension_numbers<[1], [0], [0], [1], [0, 0, 1, 1], [], []>} : vector<16x32xf32>, vector<32x8xf32>, vector<16x8xf32> -> vector<16x8xf32>
    %709 = vector.extract_strided_slice %659 {offsets = [0, 24], sizes = [16, 8], strides = [1, 1]} : vector<16x32xf32> to vector<16x8xf32>
    %710 = vector.extract_strided_slice %662 {offsets = [0, 24], sizes = [32, 8], strides = [1, 1]} : vector<32x32xf32> to vector<32x8xf32>
    %711 = vector.extract_strided_slice %663 {offsets = [0, 24], sizes = [32, 8], strides = [1, 1]} : vector<32x32xf32> to vector<32x8xf32>
    %cst_238 = arith.constant dense<0.000000e+00> : vector<16x32xf32>
    %712 = tpu.matmul %709, %710, %cst_238 {dimension_numbers = #tpu.dot_dimension_numbers<[1], [1], [0], [0], [0, 0, 1, 0], [], []>} : vector<16x8xf32>, vector<32x8xf32>, vector<16x32xf32> -> vector<16x32xf32>
    %713 = arith.addf %712, %2 : vector<16x32xf32>
    %cst_239 = arith.constant dense<0xFF800000> : vector<16xf32>
    %714 = vector.multi_reduction <maximumf>, %713, %cst_239 [1] : vector<16x32xf32> to vector<16xf32>
    %715 = vector.shape_cast %714 : vector<16xf32> to vector<16x1xf32>
    %716 = vector.broadcast %715 : vector<16x1xf32> to vector<16x32xf32>
    %717 = arith.subf %713, %716 : vector<16x32xf32>
    %718 = math.exp %717 : vector<16x32xf32>
    %cst_240 = arith.constant dense<0.000000e+00> : vector<16xf32>
    %719 = vector.multi_reduction <add>, %718, %cst_240 [1] : vector<16x32xf32> to vector<16xf32>
    %720 = vector.shape_cast %719 : vector<16xf32> to vector<16x1xf32>
    %721 = vector.broadcast %720 : vector<16x1xf32> to vector<16x32xf32>
    %722 = arith.divf %718, %721 : vector<16x32xf32>
    %cst_241 = arith.constant dense<0.000000e+00> : vector<16x8xf32>
    %723 = tpu.matmul %722, %711, %cst_241 {dimension_numbers = #tpu.dot_dimension_numbers<[1], [0], [0], [1], [0, 0, 1, 1], [], []>} : vector<16x32xf32>, vector<32x8xf32>, vector<16x8xf32> -> vector<16x8xf32>
    %724 = tpu.concatenate %678, %693, %708, %723 in 1 : vector<16x8xf32>, vector<16x8xf32>, vector<16x8xf32>, vector<16x8xf32> -> vector<16x32xf32>
    %725 = vector.extract_strided_slice %635 {offsets = [0, 96], sizes = [32, 32], strides = [1, 1]} : vector<32x128xf32> to vector<32x32xf32>
    %cst_242 = arith.constant dense<0.000000e+00> : vector<16x32xf32>
    %726 = tpu.matmul %724, %725, %cst_242 {dimension_numbers = #tpu.dot_dimension_numbers<[1], [0], [0], [1], [0, 0, 1, 1], [], []>} : vector<16x32xf32>, vector<32x32xf32>, vector<16x32xf32> -> vector<16x32xf32>
    %727 = arith.addf %630, %726 : vector<16x32xf32>
    %728 = vector.broadcast %633 : vector<1x32xf32> to vector<16x32xf32>
    %729 = arith.addf %727, %728 : vector<16x32xf32>
    %c30 = arith.constant 30 : index
    %c0_243 = arith.constant 0 : index
    %730 = vector.load %arg5[%c30, %c0_243] : memref<40x128xf32, #tpu.memory_space<vmem>>, vector<1x32xf32>
    %c31 = arith.constant 31 : index
    %c0_244 = arith.constant 0 : index
    %731 = vector.load %arg5[%c31, %c0_244] : memref<40x128xf32, #tpu.memory_space<vmem>>, vector<1x32xf32>
    %c32_245 = arith.constant 32 : index
    %c0_246 = arith.constant 0 : index
    %732 = vector.load %arg5[%c32_245, %c0_246] : memref<40x128xf32, #tpu.memory_space<vmem>>, vector<1x64xf32>
    %c33 = arith.constant 33 : index
    %c0_247 = arith.constant 0 : index
    %733 = vector.load %arg5[%c33, %c0_247] : memref<40x128xf32, #tpu.memory_space<vmem>>, vector<1x32xf32>
    %c3_248 = arith.constant 3 : index
    %c0_249 = arith.constant 0 : index
    %c0_250 = arith.constant 0 : index
    %734 = vector.load %arg3[%c3_248, %c0_249, %c0_250] : memref<4x32x64xf32, #tpu.memory_space<vmem>>, vector<1x32x64xf32>
    %735 = vector.shape_cast %734 : vector<1x32x64xf32> to vector<32x64xf32>
    %c3_251 = arith.constant 3 : index
    %c0_252 = arith.constant 0 : index
    %c0_253 = arith.constant 0 : index
    %736 = vector.load %arg4[%c3_251, %c0_252, %c0_253] : memref<4x64x32xf32, #tpu.memory_space<vmem>>, vector<1x64x32xf32>
    %737 = vector.shape_cast %736 : vector<1x64x32xf32> to vector<64x32xf32>
    %cst_254 = arith.constant dense<0.000000e+00> : vector<16xf32>
    %738 = vector.multi_reduction <add>, %729, %cst_254 [1] : vector<16x32xf32> to vector<16xf32>
    %739 = vector.shape_cast %738 : vector<16xf32> to vector<16x1xf32>
    %cst_255 = arith.constant 3.200000e+01 : f32
    %740 = vector.broadcast %cst_255 : f32 to vector<16x1xf32>
    %741 = arith.divf %739, %740 : vector<16x1xf32>
    %742 = vector.broadcast %741 : vector<16x1xf32> to vector<16x32xf32>
    %743 = arith.subf %729, %742 : vector<16x32xf32>
    %744 = arith.mulf %743, %743 : vector<16x32xf32>
    %cst_256 = arith.constant dense<0.000000e+00> : vector<16xf32>
    %745 = vector.multi_reduction <add>, %744, %cst_256 [1] : vector<16x32xf32> to vector<16xf32>
    %746 = vector.shape_cast %745 : vector<16xf32> to vector<16x1xf32>
    %cst_257 = arith.constant 3.200000e+01 : f32
    %747 = vector.broadcast %cst_257 : f32 to vector<16x1xf32>
    %748 = arith.divf %746, %747 : vector<16x1xf32>
    %749 = vector.broadcast %741 : vector<16x1xf32> to vector<16x32xf32>
    %750 = arith.subf %729, %749 : vector<16x32xf32>
    %cst_258 = arith.constant 9.99999974E-6 : f32
    %751 = vector.broadcast %cst_258 : f32 to vector<16x1xf32>
    %752 = arith.addf %748, %751 : vector<16x1xf32>
    %753 = math.rsqrt %752 : vector<16x1xf32>
    %754 = vector.broadcast %753 : vector<16x1xf32> to vector<16x32xf32>
    %755 = arith.mulf %750, %754 : vector<16x32xf32>
    %756 = vector.broadcast %730 : vector<1x32xf32> to vector<16x32xf32>
    %757 = arith.mulf %755, %756 : vector<16x32xf32>
    %758 = vector.broadcast %731 : vector<1x32xf32> to vector<16x32xf32>
    %759 = arith.addf %757, %758 : vector<16x32xf32>
    %cst_259 = arith.constant dense<0.000000e+00> : vector<16x64xf32>
    %760 = tpu.matmul %759, %735, %cst_259 {dimension_numbers = #tpu.dot_dimension_numbers<[1], [0], [0], [1], [0, 0, 1, 1], [], []>} : vector<16x32xf32>, vector<32x64xf32>, vector<16x64xf32> -> vector<16x64xf32>
    %761 = vector.broadcast %732 : vector<1x64xf32> to vector<16x64xf32>
    %762 = arith.addf %760, %761 : vector<16x64xf32>
    %cst_260 = arith.constant 5.000000e-01 : f32
    %763 = vector.broadcast %cst_260 : f32 to vector<16x64xf32>
    %764 = arith.mulf %763, %762 : vector<16x64xf32>
    %cst_261 = arith.constant 0.707106769 : f32
    %765 = vector.broadcast %cst_261 : f32 to vector<16x64xf32>
    %766 = arith.mulf %762, %765 : vector<16x64xf32>
    %767 = math.erf %766 : vector<16x64xf32>
    %cst_262 = arith.constant 1.000000e+00 : f32
    %768 = vector.broadcast %cst_262 : f32 to vector<16x64xf32>
    %769 = arith.addf %768, %767 : vector<16x64xf32>
    %770 = arith.mulf %764, %769 : vector<16x64xf32>
    %cst_263 = arith.constant dense<0.000000e+00> : vector<16x32xf32>
    %771 = tpu.matmul %770, %737, %cst_263 {dimension_numbers = #tpu.dot_dimension_numbers<[1], [0], [0], [1], [0, 0, 1, 1], [], []>} : vector<16x64xf32>, vector<64x32xf32>, vector<16x32xf32> -> vector<16x32xf32>
    %772 = arith.addf %729, %771 : vector<16x32xf32>
    %773 = vector.broadcast %733 : vector<1x32xf32> to vector<16x32xf32>
    %774 = arith.addf %772, %773 : vector<16x32xf32>
    %c0_264 = arith.constant 0 : index
    %c0_265 = arith.constant 0 : index
    %775 = vector.load %arg7[%c0_264, %c0_265] : memref<16x32xf32, #tpu.memory_space<vmem>>, vector<16x32xf32>
    tpu.vector_store %arg7[%c0_264, %c0_265], %774 {strides = array<i32>} : memref<16x32xf32, #tpu.memory_space<vmem>>, vector<16x32xf32>,
    return
  }
}

</mosaic_0001>

<llo_original>
// kernel: transformer_forward.1
$region0: #{transformer_forward.1}
  #allocation0 [shape = 'u32[]', space=smem, size = 0x4, offset = 0x4, fixed_abs, tag = 'smem constant byte address 0x4 - core index']
  #allocation1 [shape = 'u32[144,128]{1,0:T(1,128)}', space=vmem, size = 0x12000, scoped, tag = 'internal scratch']
  %s0 = inlined_call_operand.vmem [shape: f32[32,32], index: 0, kind: input, shape index: {}]
  %s1 = inlined_call_operand.vmem [shape: f32[16,32], index: 1, kind: input, shape index: {}]
  %s2 = inlined_call_operand.vmem [shape: f32[6,32,128], index: 2, kind: input, shape index: {}]
  %s3 = inlined_call_operand.vmem [shape: f32[4,32,64], index: 3, kind: input, shape index: {}]
  %s4 = inlined_call_operand.vmem [shape: f32[4,64,32], index: 4, kind: input, shape index: {}]
  %s5 = inlined_call_operand.vmem [shape: f32[40,128], index: 5, kind: input, shape index: {}]
  %s6 = inlined_call_operand.vmem [shape: f32[64,32], index: 6, kind: input, shape index: {}]
  %s7 = inlined_call_operand.hbm [shape: f32[16,32], index: 7, kind: output, shape index: {}]
  %s8 = sld [smem:[#allocation0]]
  $region38: #{transformer_forward.1} parent=0
    _
  %s10 = ssub.s32 1, %s8
  %s11 = scalar_select 0, %s10, %s8
  $region1: #{transformer_forward.1} parent=0
    #allocation2 [shape = 'u8[8192]{0}', space=vmem, size = 0x2000, scoped, tag = 'output window, operand 0, single buffered']
    #allocation3 [shape = 's32[1]{0}', space=sflag, size = 0x4, scoped, tag = 'scoped memory for transformer_forward.1']
    %12 = vsyncpa [#allocation3], 0
    // Predicated region
    $region2: #{transformer_forward.1} parent=1 // pred_check
      _
    $region3: #{transformer_forward.1} parent=1 // pred_check_branch
      %14 = sbr.rel (0) target = $region5
    $region4: #{transformer_forward.1} parent=1 // pred_region
      _
    $region5: #{transformer_forward.1} parent=1 // pred_fallthru
      _
    // Predicated region
    $region6: #{transformer_forward.1} parent=1 // pred_check
      _
    $region7: #{transformer_forward.1} parent=1 // pred_check_branch
      %16 = sbr.rel (0) target = $region9
    $region8: #{transformer_forward.1} parent=1 // pred_region
      _
    $region9: #{transformer_forward.1} parent=1 // pred_fallthru
      _
    // Predicated region
    $region10: #{transformer_forward.1} parent=1 // pred_check
      _
    $region11: #{transformer_forward.1} parent=1 // pred_check_branch
      %18 = sbr.rel (0) target = $region13
    $region12: #{transformer_forward.1} parent=1 // pred_region
      _
    $region13: #{transformer_forward.1} parent=1 // pred_fallthru
      _
    // Predicated region
    $region14: #{transformer_forward.1} parent=1 // pred_check
      _
    $region15: #{transformer_forward.1} parent=1 // pred_check_branch
      %20 = sbr.rel (0) target = $region17
    $region16: #{transformer_forward.1} parent=1 // pred_region
      _
    $region17: #{transformer_forward.1} parent=1 // pred_fallthru
      _
    // Predicated region
    $region18: #{transformer_forward.1} parent=1 // pred_check
      _
    $region19: #{transformer_forward.1} parent=1 // pred_check_branch
      %22 = sbr.rel (0) target = $region21
    $region20: #{transformer_forward.1} parent=1 // pred_region
      _
    $region21: #{transformer_forward.1} parent=1 // pred_fallthru
      _
    // Predicated region
    $region22: #{transformer_forward.1} parent=1 // pred_check
      _
    $region23: #{transformer_forward.1} parent=1 // pred_check_branch
      %24 = sbr.rel (0) target = $region25
    $region24: #{transformer_forward.1} parent=1 // pred_region
      _
    $region25: #{transformer_forward.1} parent=1 // pred_fallthru
      _
    // Predicated region
    $region26: #{transformer_forward.1} parent=1 // pred_check
      _
    $region27: #{transformer_forward.1} parent=1 // pred_check_branch
      %26 = sbr.rel (0) target = $region29
    $region28: #{transformer_forward.1} parent=1 // pred_region
      _
    $region29: #{transformer_forward.1} parent=1 // pred_fallthru
      _
    %v27 = vld [vmem:[%s6] sm:$0xff]
    %v28 = vld [vmem:[%s6 + $0x8] sm:$0xff]
    %v29 = vld [vmem:[%s6 + $0x10] sm:$0xff]
    %v30 = vld [vmem:[%s6 + $0x18] sm:$0xff]
    %v31 = vld [vmem:[%s6 + $0x20] sm:$0xff]
    %v32 = vld [vmem:[%s6 + $0x28] sm:$0xff]
    %v33 = vld [vmem:[%s6 + $0x30] sm:$0xff]
    %v34 = vld [vmem:[%s6 + $0x38] sm:$0xff]
    %v35 = vld [vmem:[%s0] sm:$0xff]
    %v36 = vld [vmem:[%s0 + $0x8] sm:$0xff]
    %v37 = vld [vmem:[%s0 + $0x10] sm:$0xff]
    %v38 = vld [vmem:[%s0 + $0x18] sm:$0xff]
    %v39 = vld [vmem:[%s5] sm:$0x1]
    %v40 = vld [vmem:[%s5 + $0x1] sm:$0x1]
    %v41 = vld [vmem:[%s5 + $0x2] sm:$0x1]
    %v42 = vld [vmem:[%s2] sm:$0xff]
    %v43 = vld [vmem:[%s2 + $0x8] sm:$0xff]
    %v44 = vld [vmem:[%s2 + $0x10] sm:$0xff]
    %v45 = vld [vmem:[%s2 + $0x18] sm:$0xff]
    %vm46 = vcmask 261120
    %v47 = vsel %vm46, %v35, 0.0
    %48 = vadd.xlane.f32.xlu0 %v47
    %v49 = vpop.xlane.xlu0 %48
    %v50 = vsel %vm46, %v36, 0.0
    %51 = vadd.xlane.f32.xlu0 %v50
    %v52 = vpop.xlane.xlu0 %51
    %v53 = vsel %vm46, %v37, 0.0
    %54 = vadd.xlane.f32.xlu0 %v53
    %v55 = vpop.xlane.xlu0 %54
    %v56 = vsel %vm46, %v38, 0.0
    %57 = vadd.xlane.f32.xlu0 %v56
    %v58 = vpop.xlane.xlu0 %57
    %v59 = vrcp.pop 32.0
    %v60 = vmul.f32 %v49, %v59
    %v61 = vmul.f32 %v52, %v59
    %v62 = vmul.f32 %v55, %v59
    %v63 = vmul.f32 %v58, %v59
    %v64 = vsub.f32 %v35, %v60
    %v65 = vsub.f32 %v36, %v61
    %v66 = vsub.f32 %v37, %v62
    %v67 = vsub.f32 %v38, %v63
    %v68 = vmul.f32 %v64, %v64
    %v69 = vmul.f32 %v65, %v65
    %v70 = vmul.f32 %v66, %v66
    %v71 = vmul.f32 %v67, %v67
    %v72 = vsel %vm46, %v68, 0.0
    %73 = vadd.xlane.f32.xlu0 %v72
    %v74 = vpop.xlane.xlu0 %73
    %v75 = vsel %vm46, %v69, 0.0
    %76 = vadd.xlane.f32.xlu0 %v75
    %v77 = vpop.xlane.xlu0 %76
    %v78 = vsel %vm46, %v70, 0.0
    %79 = vadd.xlane.f32.xlu0 %v78
    %v80 = vpop.xlane.xlu0 %79
    %v81 = vsel %vm46, %v71, 0.0
    %82 = vadd.xlane.f32.xlu0 %v81
    %v83 = vpop.xlane.xlu0 %82
    %v84 = vmul.f32 %v74, %v59
    %v85 = vmul.f32 %v77, %v59
    %v86 = vmul.f32 %v80, %v59
    %v87 = vmul.f32 %v83, %v59
    %v88 = vadd.f32 %v84, 1e-05
    %v89 = vadd.f32 %v85, 1e-05
    %v90 = vadd.f32 %v86, 1e-05
    %v91 = vadd.f32 %v87, 1e-05
    %v92 = vrsqrt.pop %v88
    %v93 = vrsqrt.pop %v89
    %v94 = vrsqrt.pop %v90
    %v95 = vrsqrt.pop %v91
    %v96 = vmul.f32 %v64, %v92
    %v97 = vmul.f32 %v65, %v93
    %v98 = vmul.f32 %v66, %v94
    %v99 = vmul.f32 %v67, %v95
    %v100 = vlaneseq
    %v101 = vshrl.u32 %v100, 7
    %v102 = vsub.s32 0, %v101
    %v103 = vrot.slane %v39, %v102
    %v104 = vmul.f32 %v96, %v103
    %v105 = vmul.f32 %v97, %v103
    %v106 = vmul.f32 %v98, %v103
    %v107 = vmul.f32 %v99, %v103
    %v108 = vlaneseq
    %v109 = vshrl.u32 %v108, 7
    %v110 = vsub.s32 0, %v109
    %v111 = vrot.slane %v40, %v110
    %v112 = vadd.f32 %v104, %v111
    %v113 = vadd.f32 %v105, %v111
    %v114 = vadd.f32 %v106, %v111
    %v115 = vadd.f32 %v107, %v111
    %v117 = vsel %vm46, %v112, 0
    %v120 = vsel %vm46, %v113, 0
    %v123 = vsel %vm46, %v114, 0
    %v126 = vsel %vm46, %v115, 0
    %128 = vmatprep.subr.mxu0 0.0
    %129 = vmatpush1.msra.mxu0 0.0
    %130 = vmatprep.subr.mxu0 0.0
    %131 = vmatpush1.msra.mxu0 0.0
    %132 = vmatprep.subr.mxu0 0.0
    %133 = vmatpush1.msra.mxu0 0.0
    %134 = vmatprep.subr.mxu0 0.0
    %135 = vmatpush1.msra.mxu0 0.0
    %136 = vmatprep.subr.mxu0 0.0
    %137 = vmatpush1.msra.mxu0 0.0
    %138 = vmatprep.subr.mxu0 0.0
    %139 = vmatpush1.msra.mxu0 0.0
    %140 = vmatprep.subr.mxu0 0.0
    %141 = vmatpush1.msra.mxu0 0.0
    %142 = vmatprep.subr.mxu0 0.0
    %143 = vmatpush1.msra.mxu0 0.0
    %144 = vmatprep.subr.mxu0 0.0
    %145 = vmatpush1.msra.mxu0 0.0
    %146 = vmatprep.subr.mxu0 0.0
    %147 = vmatpush1.msra.mxu0 0.0
    %148 = vmatprep.subr.mxu0 0.0
    %149 = vmatpush1.msra.mxu0 0.0
    %150 = vmatprep.subr.mxu0 0.0
    %151 = vmatpush1.msra.mxu0 0.0
    %152 = vmatprep.subr.mxu0 0.0
    %153 = vmatpush1.msra.mxu0 %v45
    %154 = vmatprep.subr.mxu0 0.0
    %155 = vmatpush1.msra.mxu0 %v44
    %156 = vmatprep.subr.mxu0 0.0
    %157 = vmatpush1.msra.mxu0 %v43
    %158 = vmatprep.subr.mxu0 0.0
    %159 = vmatpush1.msra.mxu0 %v42
    %160 = vmatprep.subr.mxu0 0.0
    %161 = vmatpush2.msra.mxu0 0.0
    %162 = vmatprep.subr.mxu0 0.0
    %163 = vmatpush2.msra.mxu0 0.0
    %164 = vmatprep.subr.mxu0 0.0
    %165 = vmatpush2.msra.mxu0 0.0
    %166 = vmatprep.subr.mxu0 0.0
    %167 = vmatpush2.msra.mxu0 0.0
    %168 = vmatprep.subr.mxu0 0.0
    %169 = vmatpush2.msra.mxu0 0.0
    %170 = vmatprep.subr.mxu0 0.0
    %171 = vmatpush2.msra.mxu0 0.0
    %172 = vmatprep.subr.mxu0 0.0
    %173 = vmatpush2.msra.mxu0 0.0
    %174 = vmatprep.subr.mxu0 0.0
    %175 = vmatpush2.msra.mxu0 0.0
    %176 = vmatprep.subr.mxu0 0.0
    %177 = vmatpush2.msra.mxu0 0.0
    %178 = vmatprep.subr.mxu0 0.0
    %179 = vmatpush2.msra.mxu0 0.0
    %180 = vmatprep.subr.mxu0 0.0
    %181 = vmatpush2.msra.mxu0 0.0
    %182 = vmatprep.subr.mxu0 0.0
    %183 = vmatpush2.msra.mxu0 0.0
    %184 = vmatprep.subr.mxu0 0.0
    %185 = vmatpush2.msra.mxu0 0.0
    %186 = vmatprep.subr.mxu0 0.0
    %187 = vmatpush2.msra.mxu0 0.0
    %188 = vmatprep.subr.mxu0 0.0
    %189 = vmatpush2.msra.mxu0 0.0
    %190 = vmatprep.subr.mxu0 0.0
    %191 = vmatpush2.msra.mxu0 0.0
    %192 = vmatprep.mubr.f32.mxu0 0.0
    %193 = vmatmul.mubr.f32.gmra.mxu0 %v117
    %v194 = vpop.f32.mrf.mxu0
    %v195 = vadd.f32 0.0, %v194
    %v196 = vpop.f32.mrf.mxu0
    %197 = vmatprep.mubr.f32.mxu0 0.0
    %198 = vmatmul.mubr.f32.gmra.mxu0 %v120
    %v199 = vpop.f32.mrf.mxu0
    %v200 = vadd.f32 0.0, %v199
    %v201 = vpop.f32.mrf.mxu0
    %202 = vmatprep.mubr.f32.mxu0 0.0
    %203 = vmatmul.mubr.f32.gmra.mxu0 %v123
    %v204 = vpop.f32.mrf.mxu0
    %v205 = vadd.f32 0.0, %v204
    %v206 = vpop.f32.mrf.mxu0
    %207 = vmatprep.mubr.f32.mxu0 0.0
    %208 = vmatmul.mubr.f32.gmra.mxu0 %v126
    %v209 = vpop.f32.mrf.mxu0
    %v210 = vadd.f32 0.0, %v209
    %v211 = vpop.f32.mrf.mxu0
    %212 = vdwg.mxu0
    %217 = vrot.lane.b32.xlu0 %v195, 96
    %v218 = vpop.permute.xlu0 %217
    %219 = vrot.lane.b32.xlu0 %v200, 96
    %v220 = vpop.permute.xlu0 %219
    %221 = vrot.lane.b32.xlu0 %v205, 96
    %v222 = vpop.permute.xlu0 %221
    %223 = vrot.lane.b32.xlu0 %v210, 96
    %v224 = vpop.permute.xlu0 %223
    %vm225 = vcmask 64512
    %v226 = vsel %vm225, %v195, 0
    %v228 = vsel %vm225, %v200, 0
    %v230 = vsel %vm225, %v205, 0
    %v232 = vsel %vm225, %v210, 0
    %v234 = vsel %vm225, %v218, 0
    %v236 = vsel %vm225, %v220, 0
    %v238 = vsel %vm225, %v222, 0
    %v240 = vsel %vm225, %v224, 0
    %242 = vmatprep.subr.mxu0 0.0
    %243 = vmatpush1.xpose.msra.mxu0 0.0
    %244 = vmatprep.subr.mxu0 0.0
    %245 = vmatpush1.xpose.msra.mxu0 0.0
    %246 = vmatprep.subr.mxu0 0.0
    %247 = vmatpush1.xpose.msra.mxu0 0.0
    %248 = vmatprep.subr.mxu0 0.0
    %249 = vmatpush1.xpose.msra.mxu0 0.0
    %250 = vmatprep.subr.mxu0 0.0
    %251 = vmatpush1.xpose.msra.mxu0 0.0
    %252 = vmatprep.subr.mxu0 0.0
    %253 = vmatpush1.xpose.msra.mxu0 0.0
    %254 = vmatprep.subr.mxu0 0.0
    %255 = vmatpush1.xpose.msra.mxu0 0.0
    %256 = vmatprep.subr.mxu0 0.0
    %257 = vmatpush1.xpose.msra.mxu0 0.0
    %258 = vmatprep.subr.mxu0 0.0
    %259 = vmatpush1.xpose.msra.mxu0 0.0
    %260 = vmatprep.subr.mxu0 0.0
    %261 = vmatpush1.xpose.msra.mxu0 0.0
    %262 = vmatprep.subr.mxu0 0.0
    %263 = vmatpush1.xpose.msra.mxu0 0.0
    %264 = vmatprep.subr.mxu0 0.0
    %265 = vmatpush1.xpose.msra.mxu0 0.0
    %266 = vmatprep.subr.mxu0 0.0
    %267 = vmatpush1.xpose.msra.mxu0 %v240
    %268 = vmatprep.subr.mxu0 0.0
    %269 = vmatpush1.xpose.msra.mxu0 %v238
    %270 = vmatprep.subr.mxu0 0.0
    %271 = vmatpush1.xpose.msra.mxu0 %v236
    %272 = vmatprep.subr.mxu0 0.0
    %273 = vmatpush1.xpose.msra.mxu0 %v234
    %274 = vmatprep.subr.mxu0 0.0
    %275 = vmatpush2.xpose.msra.mxu0 0.0
    %276 = vmatprep.subr.mxu0 0.0
    %277 = vmatpush2.xpose.msra.mxu0 0.0
    %278 = vmatprep.subr.mxu0 0.0
    %279 = vmatpush2.xpose.msra.mxu0 0.0
    %280 = vmatprep.subr.mxu0 0.0
    %281 = vmatpush2.xpose.msra.mxu0 0.0
    %282 = vmatprep.subr.mxu0 0.0
    %283 = vmatpush2.xpose.msra.mxu0 0.0
    %284 = vmatprep.subr.mxu0 0.0
    %285 = vmatpush2.xpose.msra.mxu0 0.0
    %286 = vmatprep.subr.mxu0 0.0
    %287 = vmatpush2.xpose.msra.mxu0 0.0
    %288 = vmatprep.subr.mxu0 0.0
    %289 = vmatpush2.xpose.msra.mxu0 0.0
    %290 = vmatprep.subr.mxu0 0.0
    %291 = vmatpush2.xpose.msra.mxu0 0.0
    %292 = vmatprep.subr.mxu0 0.0
    %293 = vmatpush2.xpose.msra.mxu0 0.0
    %294 = vmatprep.subr.mxu0 0.0
    %295 = vmatpush2.xpose.msra.mxu0 0.0
    %296 = vmatprep.subr.mxu0 0.0
    %297 = vmatpush2.xpose.msra.mxu0 0.0
    %298 = vmatprep.subr.mxu0 0.0
    %299 = vmatpush2.xpose.msra.mxu0 0.0
    %300 = vmatprep.subr.mxu0 0.0
    %301 = vmatpush2.xpose.msra.mxu0 0.0
    %302 = vmatprep.subr.mxu0 0.0
    %303 = vmatpush2.xpose.msra.mxu0 0.0
    %304 = vmatprep.subr.mxu0 0.0
    %305 = vmatpush2.xpose.msra.mxu0 0.0
    %306 = vmatprep.mubr.f32.mxu0 0.0
    %307 = vmatmul.mubr.f32.gmra.mxu0 %v226
    %v308 = vpop.f32.mrf.mxu0
    %v309 = vadd.f32 %v27, %v308
    %v310 = vpop.f32.mrf.mxu0
    %311 = vmatprep.mubr.f32.mxu0 0.0
    %312 = vmatmul.mubr.f32.gmra.mxu0 %v228
    %v313 = vpop.f32.mrf.mxu0
    %v314 = vadd.f32 %v28, %v313
    %v315 = vpop.f32.mrf.mxu0
    %316 = vmatprep.mubr.f32.mxu0 0.0
    %317 = vmatmul.mubr.f32.gmra.mxu0 %v230
    %v318 = vpop.f32.mrf.mxu0
    %v319 = vadd.f32 %v29, %v318
    %v320 = vpop.f32.mrf.mxu0
    %321 = vmatprep.mubr.f32.mxu0 0.0
    %322 = vmatmul.mubr.f32.gmra.mxu0 %v232
    %v323 = vpop.f32.mrf.mxu0
    %v324 = vadd.f32 %v30, %v323
    %v325 = vpop.f32.mrf.mxu0
    %326 = vdwg.mxu0
    %v327 = vsel %vm46, %v309, -inf
    %328 = vmax.xlane.f32.xlu0 %v327
    %v329 = vpop.xlane.xlu0 %328
    %v330 = vsel %vm46, %v314, -inf
    %331 = vmax.xlane.f32.xlu0 %v330
    %v332 = vpop.xlane.xlu0 %331
    %v333 = vsel %vm46, %v319, -inf
    %334 = vmax.xlane.f32.xlu0 %v333
    %v335 = vpop.xlane.xlu0 %334
    %v336 = vsel %vm46, %v324, -inf
    %337 = vmax.xlane.f32.xlu0 %v336
    %v338 = vpop.xlane.xlu0 %337
    %v339 = vsub.f32 %v309, %v329
    %v340 = vsub.f32 %v314, %v332
    %v341 = vsub.f32 %v319, %v335
    %v342 = vsub.f32 %v324, %v338
    %v343 = vmul.f32 %v339, 1.442695
    %v344 = vpow.pop %v343
    %v345 = vmul.f32 %v340, 1.442695
    %v346 = vpow.pop %v345
    %v347 = vmul.f32 %v341, 1.442695
    %v348 = vpow.pop %v347
    %v349 = vmul.f32 %v342, 1.442695
    %v350 = vpow.pop %v349
    %v351 = vsel %vm46, %v344, 0.0
    %352 = vadd.xlane.f32.xlu0 %v351
    %v353 = vpop.xlane.xlu0 %352
    %v354 = vsel %vm46, %v346, 0.0
    %355 = vadd.xlane.f32.xlu0 %v354
    %v356 = vpop.xlane.xlu0 %355
    %v357 = vsel %vm46, %v348, 0.0
    %358 = vadd.xlane.f32.xlu0 %v357
    %v359 = vpop.xlane.xlu0 %358
    %v360 = vsel %vm46, %v350, 0.0
    %361 = vadd.xlane.f32.xlu0 %v360
    %v362 = vpop.xlane.xlu0 %361
    %v363 = vrcp.pop %v353
    %v364 = vmul.f32 %v344, %v363
    %v365 = vrcp.pop %v356
    %v366 = vmul.f32 %v346, %v365
    %v367 = vrcp.pop %v359
    %v368 = vmul.f32 %v348, %v367
    %v369 = vrcp.pop %v362
    %v370 = vmul.f32 %v350, %v369
    %371 = vrot.lane.b32.xlu0 %v195, 64
    %v372 = vpop.permute.xlu0 %371
    %373 = vrot.lane.b32.xlu0 %v200, 64
    %v374 = vpop.permute.xlu0 %373
    %375 = vrot.lane.b32.xlu0 %v205, 64
    %v376 = vpop.permute.xlu0 %375
    %377 = vrot.lane.b32.xlu0 %v210, 64
    %v378 = vpop.permute.xlu0 %377
    %v384 = vsel %vm46, %v364, 0
    %v387 = vsel %vm46, %v366, 0
    %v390 = vsel %vm46, %v368, 0
    %v393 = vsel %vm46, %v370, 0
    %395 = vmatprep.subr.mxu0 0.0
    %396 = vmatpush1.msra.mxu0 0.0
    %397 = vmatprep.subr.mxu0 0.0
    %398 = vmatpush1.msra.mxu0 0.0
    %399 = vmatprep.subr.mxu0 0.0
    %400 = vmatpush1.msra.mxu0 0.0
    %401 = vmatprep.subr.mxu0 0.0
    %402 = vmatpush1.msra.mxu0 0.0
    %403 = vmatprep.subr.mxu0 0.0
    %404 = vmatpush1.msra.mxu0 0.0
    %405 = vmatprep.subr.mxu0 0.0
    %406 = vmatpush1.msra.mxu0 0.0
    %407 = vmatprep.subr.mxu0 0.0
    %408 = vmatpush1.msra.mxu0 0.0
    %409 = vmatprep.subr.mxu0 0.0
    %410 = vmatpush1.msra.mxu0 0.0
    %411 = vmatprep.subr.mxu0 0.0
    %412 = vmatpush1.msra.mxu0 0.0
    %413 = vmatprep.subr.mxu0 0.0
    %414 = vmatpush1.msra.mxu0 0.0
    %415 = vmatprep.subr.mxu0 0.0
    %416 = vmatpush1.msra.mxu0 0.0
    %417 = vmatprep.subr.mxu0 0.0
    %418 = vmatpush1.msra.mxu0 0.0
    %419 = vmatprep.subr.mxu0 0.0
    %420 = vmatpush1.msra.mxu0 %v378
    %421 = vmatprep.subr.mxu0 0.0
    %422 = vmatpush1.msra.mxu0 %v376
    %423 = vmatprep.subr.mxu0 0.0
    %424 = vmatpush1.msra.mxu0 %v374
    %425 = vmatprep.subr.mxu0 0.0
    %426 = vmatpush1.msra.mxu0 %v372
    %427 = vmatprep.subr.mxu0 0.0
    %428 = vmatpush2.msra.mxu0 0.0
    %429 = vmatprep.subr.mxu0 0.0
    %430 = vmatpush2.msra.mxu0 0.0
    %431 = vmatprep.subr.mxu0 0.0
    %432 = vmatpush2.msra.mxu0 0.0
    %433 = vmatprep.subr.mxu0 0.0
    %434 = vmatpush2.msra.mxu0 0.0
    %435 = vmatprep.subr.mxu0 0.0
    %436 = vmatpush2.msra.mxu0 0.0
    %437 = vmatprep.subr.mxu0 0.0
    %438 = vmatpush2.msra.mxu0 0.0
    %439 = vmatprep.subr.mxu0 0.0
    %440 = vmatpush2.msra.mxu0 0.0
    %441 = vmatprep.subr.mxu0 0.0
    %442 = vmatpush2.msra.mxu0 0.0
    %443 = vmatprep.subr.mxu0 0.0
    %444 = vmatpush2.msra.mxu0 0.0
    %445 = vmatprep.subr.mxu0 0.0
    %446 = vmatpush2.msra.mxu0 0.0
    %447 = vmatprep.subr.mxu0 0.0
    %448 = vmatpush2.msra.mxu0 0.0
    %449 = vmatprep.subr.mxu0 0.0
    %450 = vmatpush2.msra.mxu0 0.0
    %451 = vmatprep.subr.mxu0 0.0
    %452 = vmatpush2.msra.mxu0 0.0
    %453 = vmatprep.subr.mxu0 0.0
    %454 = vmatpush2.msra.mxu0 0.0
    %455 = vmatprep.subr.mxu0 0.0
    %456 = vmatpush2.msra.mxu0 0.0
    %457 = vmatprep.subr.mxu0 0.0
    %458 = vmatpush2.msra.mxu0 0.0
    %459 = vmatprep.mubr.f32.mxu0 0.0
    %460 = vmatmul.mubr.f32.gmra.mxu0 %v384
    %v461 = vpop.f32.mrf.mxu0
    %v462 = vadd.f32 0.0, %v461
    %v463 = vpop.f32.mrf.mxu0
    %464 = vmatprep.mubr.f32.mxu0 0.0
    %465 = vmatmul.mubr.f32.gmra.mxu0 %v387
    %v466 = vpop.f32.mrf.mxu0
    %v467 = vadd.f32 0.0, %v466
    %v468 = vpop.f32.mrf.mxu0
    %469 = vmatprep.mubr.f32.mxu0 0.0
    %470 = vmatmul.mubr.f32.gmra.mxu0 %v390
    %v471 = vpop.f32.mrf.mxu0
    %v472 = vadd.f32 0.0, %v471
    %v473 = vpop.f32.mrf.mxu0
    %474 = vmatprep.mubr.f32.mxu0 0.0
    %475 = vmatmul.mubr.f32.gmra.mxu0 %v393
    %v476 = vpop.f32.mrf.mxu0
    %v477 = vadd.f32 0.0, %v476
    %v478 = vpop.f32.mrf.mxu0
    %479 = vdwg.mxu0
    %480 = vrot.lane.b32.xlu0 %v195, 120
    %v481 = vpop.permute.xlu0 %480
    %482 = vrot.lane.b32.xlu0 %v200, 120
    %v483 = vpop.permute.xlu0 %482
    %484 = vrot.lane.b32.xlu0 %v205, 120
    %v485 = vpop.permute.xlu0 %484
    %486 = vrot.lane.b32.xlu0 %v210, 120
    %v487 = vpop.permute.xlu0 %486
    %488 = vrot.lane.b32.xlu0 %v195, 88
    %v489 = vpop.permute.xlu0 %488
    %490 = vrot.lane.b32.xlu0 %v200, 88
    %v491 = vpop.permute.xlu0 %490
    %492 = vrot.lane.b32.xlu0 %v205, 88
    %v493 = vpop.permute.xlu0 %492
    %494 = vrot.lane.b32.xlu0 %v210, 88
    %v495 = vpop.permute.xlu0 %494
    %v496 = vsel %vm225, %v481, 0
    %v498 = vsel %vm225, %v483, 0
    %v500 = vsel %vm225, %v485, 0
    %v502 = vsel %vm225, %v487, 0
    %v504 = vsel %vm225, %v489, 0
    %v506 = vsel %vm225, %v491, 0
    %v508 = vsel %vm225, %v493, 0
    %v510 = vsel %vm225, %v495, 0
    %512 = vmatprep.subr.mxu0 0.0
    %513 = vmatpush1.xpose.msra.mxu0 0.0
    %514 = vmatprep.subr.mxu0 0.0
    %515 = vmatpush1.xpose.msra.mxu0 0.0
    %516 = vmatprep.subr.mxu0 0.0
    %517 = vmatpush1.xpose.msra.mxu0 0.0
    %518 = vmatprep.subr.mxu0 0.0
    %519 = vmatpush1.xpose.msra.mxu0 0.0
    %520 = vmatprep.subr.mxu0 0.0
    %521 = vmatpush1.xpose.msra.mxu0 0.0
    %522 = vmatprep.subr.mxu0 0.0
    %523 = vmatpush1.xpose.msra.mxu0 0.0
    %524 = vmatprep.subr.mxu0 0.0
    %525 = vmatpush1.xpose.msra.mxu0 0.0
    %526 = vmatprep.subr.mxu0 0.0
    %527 = vmatpush1.xpose.msra.mxu0 0.0
    %528 = vmatprep.subr.mxu0 0.0
    %529 = vmatpush1.xpose.msra.mxu0 0.0
    %530 = vmatprep.subr.mxu0 0.0
    %531 = vmatpush1.xpose.msra.mxu0 0.0
    %532 = vmatprep.subr.mxu0 0.0
    %533 = vmatpush1.xpose.msra.mxu0 0.0
    %534 = vmatprep.subr.mxu0 0.0
    %535 = vmatpush1.xpose.msra.mxu0 0.0
    %536 = vmatprep.subr.mxu0 0.0
    %537 = vmatpush1.xpose.msra.mxu0 %v510
    %538 = vmatprep.subr.mxu0 0.0
    %539 = vmatpush1.xpose.msra.mxu0 %v508
    %540 = vmatprep.subr.mxu0 0.0
    %541 = vmatpush1.xpose.msra.mxu0 %v506
    %542 = vmatprep.subr.mxu0 0.0
    %543 = vmatpush1.xpose.msra.mxu0 %v504
    %544 = vmatprep.subr.mxu0 0.0
    %545 = vmatpush2.xpose.msra.mxu0 0.0
    %546 = vmatprep.subr.mxu0 0.0
    %547 = vmatpush2.xpose.msra.mxu0 0.0
    %548 = vmatprep.subr.mxu0 0.0
    %549 = vmatpush2.xpose.msra.mxu0 0.0
    %550 = vmatprep.subr.mxu0 0.0
    %551 = vmatpush2.xpose.msra.mxu0 0.0
    %552 = vmatprep.subr.mxu0 0.0
    %553 = vmatpush2.xpose.msra.mxu0 0.0
    %554 = vmatprep.subr.mxu0 0.0
    %555 = vmatpush2.xpose.msra.mxu0 0.0
    %556 = vmatprep.subr.mxu0 0.0
    %557 = vmatpush2.xpose.msra.mxu0 0.0
    %558 = vmatprep.subr.mxu0 0.0
    %559 = vmatpush2.xpose.msra.mxu0 0.0
    %560 = vmatprep.subr.mxu0 0.0
    %561 = vmatpush2.xpose.msra.mxu0 0.0
    %562 = vmatprep.subr.mxu0 0.0
    %563 = vmatpush2.xpose.msra.mxu0 0.0
    %564 = vmatprep.subr.mxu0 0.0
    %565 = vmatpush2.xpose.msra.mxu0 0.0
    %566 = vmatprep.subr.mxu0 0.0
    %567 = vmatpush2.xpose.msra.mxu0 0.0
    %568 = vmatprep.subr.mxu0 0.0
    %569 = vmatpush2.xpose.msra.mxu0 0.0
    %570 = vmatprep.subr.mxu0 0.0
    %571 = vmatpush2.xpose.msra.mxu0 0.0
    %572 = vmatprep.subr.mxu0 0.0
    %573 = vmatpush2.xpose.msra.mxu0 0.0
    %574 = vmatprep.subr.mxu0 0.0
    %575 = vmatpush2.xpose.msra.mxu0 0.0
    %576 = vmatprep.mubr.f32.mxu0 0.0
    %577 = vmatmul.mubr.f32.gmra.mxu0 %v496
    %v578 = vpop.f32.mrf.mxu0
    %v579 = vadd.f32 %v27, %v578
    %v580 = vpop.f32.mrf.mxu0
    %581 = vmatprep.mubr.f32.mxu0 0.0
    %582 = vmatmul.mubr.f32.gmra.mxu0 %v498
    %v583 = vpop.f32.mrf.mxu0
    %v584 = vadd.f32 %v28, %v583
    %v585 = vpop.f32.mrf.mxu0
    %586 = vmatprep.mubr.f32.mxu0 0.0
    %587 = vmatmul.mubr.f32.gmra.mxu0 %v500
    %v588 = vpop.f32.mrf.mxu0
    %v589 = vadd.f32 %v29, %v588
    %v590 = vpop.f32.mrf.mxu0
    %591 = vmatprep.mubr.f32.mxu0 0.0
    %592 = vmatmul.mubr.f32.gmra.mxu0 %v502
    %v593 = vpop.f32.mrf.mxu0
    %v594 = vadd.f32 %v30, %v593
    %v595 = vpop.f32.mrf.mxu0
    %596 = vdwg.mxu0
    %v597 = vsel %vm46, %v579, -inf
    %598 = vmax.xlane.f32.xlu0 %v597
    %v599 = vpop.xlane.xlu0 %598
    %v600 = vsel %vm46, %v584, -inf
    %601 = vmax.xlane.f32.xlu0 %v600
    %v602 = vpop.xlane.xlu0 %601
    %v603 = vsel %vm46, %v589, -inf
    %604 = vmax.xlane.f32.xlu0 %v603
    %v605 = vpop.xlane.xlu0 %604
    %v606 = vsel %vm46, %v594, -inf
    %607 = vmax.xlane.f32.xlu0 %v606
    %v608 = vpop.xlane.xlu0 %607
    %v609 = vsub.f32 %v579, %v599
    %v610 = vsub.f32 %v584, %v602
    %v611 = vsub.f32 %v589, %v605
    %v612 = vsub.f32 %v594, %v608
    %v613 = vmul.f32 %v609, 1.442695
    %v614 = vpow.pop %v613
    %v615 = vmul.f32 %v610, 1.442695
    %v616 = vpow.pop %v615
    %v617 = vmul.f32 %v611, 1.442695
    %v618 = vpow.pop %v617
    %v619 = vmul.f32 %v612, 1.442695
    %v620 = vpow.pop %v619
    %v621 = vsel %vm46, %v614, 0.0
    %622 = vadd.xlane.f32.xlu0 %v621
    %v623 = vpop.xlane.xlu0 %622
    %v624 = vsel %vm46, %v616, 0.0
    %625 = vadd.xlane.f32.xlu0 %v624
    %v626 = vpop.xlane.xlu0 %625
    %v627 = vsel %vm46, %v618, 0.0
    %628 = vadd.xlane.f32.xlu0 %v627
    %v629 = vpop.xlane.xlu0 %628
    %v630 = vsel %vm46, %v620, 0.0
    %631 = vadd.xlane.f32.xlu0 %v630
    %v632 = vpop.xlane.xlu0 %631
    %v633 = vrcp.pop %v623
    %v634 = vmul.f32 %v614, %v633
    %v635 = vrcp.pop %v626
    %v636 = vmul.f32 %v616, %v635
    %v637 = vrcp.pop %v629
    %v638 = vmul.f32 %v618, %v637
    %v639 = vrcp.pop %v632
    %v640 = vmul.f32 %v620, %v639
    %641 = vrot.lane.b32.xlu0 %v195, 56
    %v642 = vpop.permute.xlu0 %641
    %643 = vrot.lane.b32.xlu0 %v200, 56
    %v644 = vpop.permute.xlu0 %643
    %645 = vrot.lane.b32.xlu0 %v205, 56
    %v646 = vpop.permute.xlu0 %645
    %647 = vrot.lane.b32.xlu0 %v210, 56
    %v648 = vpop.permute.xlu0 %647
    %v654 = vsel %vm46, %v634, 0
    %v657 = vsel %vm46, %v636, 0
    %v660 = vsel %vm46, %v638, 0
    %v663 = vsel %vm46, %v640, 0
    %665 = vmatprep.subr.mxu0 0.0
    %666 = vmatpush1.msra.mxu0 0.0
    %667 = vmatprep.subr.mxu0 0.0
    %668 = vmatpush1.msra.mxu0 0.0
    %669 = vmatprep.subr.mxu0 0.0
    %670 = vmatpush1.msra.mxu0 0.0
    %671 = vmatprep.subr.mxu0 0.0
    %672 = vmatpush1.msra.mxu0 0.0
    %673 = vmatprep.subr.mxu0 0.0
    %674 = vmatpush1.msra.mxu0 0.0
    %675 = vmatprep.subr.mxu0 0.0
    %676 = vmatpush1.msra.mxu0 0.0
    %677 = vmatprep.subr.mxu0 0.0
    %678 = vmatpush1.msra.mxu0 0.0
    %679 = vmatprep.subr.mxu0 0.0
    %680 = vmatpush1.msra.mxu0 0.0
    %681 = vmatprep.subr.mxu0 0.0
    %682 = vmatpush1.msra.mxu0 0.0
    %683 = vmatprep.subr.mxu0 0.0
    %684 = vmatpush1.msra.mxu0 0.0
    %685 = vmatprep.subr.mxu0 0.0
    %686 = vmatpush1.msra.mxu0 0.0
    %687 = vmatprep.subr.mxu0 0.0
    %688 = vmatpush1.msra.mxu0 0.0
    %689 = vmatprep.subr.mxu0 0.0
    %690 = vmatpush1.msra.mxu0 %v648
    %691 = vmatprep.subr.mxu0 0.0
    %692 = vmatpush1.msra.mxu0 %v646
    %693 = vmatprep.subr.mxu0 0.0
    %694 = vmatpush1.msra.mxu0 %v644
    %695 = vmatprep.subr.mxu0 0.0
    %696 = vmatpush1.msra.mxu0 %v642
    %697 = vmatprep.subr.mxu0 0.0
    %698 = vmatpush2.msra.mxu0 0.0
    %699 = vmatprep.subr.mxu0 0.0
    %700 = vmatpush2.msra.mxu0 0.0
    %701 = vmatprep.subr.mxu0 0.0
    %702 = vmatpush2.msra.mxu0 0.0
    %703 = vmatprep.subr.mxu0 0.0
    %704 = vmatpush2.msra.mxu0 0.0
    %705 = vmatprep.subr.mxu0 0.0
    %706 = vmatpush2.msra.mxu0 0.0
    %707 = vmatprep.subr.mxu0 0.0
    %708 = vmatpush2.msra.mxu0 0.0
    %709 = vmatprep.subr.mxu0 0.0
    %710 = vmatpush2.msra.mxu0 0.0
    %711 = vmatprep.subr.mxu0 0.0
    %712 = vmatpush2.msra.mxu0 0.0
    %713 = vmatprep.subr.mxu0 0.0
    %714 = vmatpush2.msra.mxu0 0.0
    %715 = vmatprep.subr.mxu0 0.0
    %716 = vmatpush2.msra.mxu0 0.0
    %717 = vmatprep.subr.mxu0 0.0
    %718 = vmatpush2.msra.mxu0 0.0
    %719 = vmatprep.subr.mxu0 0.0
    %720 = vmatpush2.msra.mxu0 0.0
    %721 = vmatprep.subr.mxu0 0.0
    %722 = vmatpush2.msra.mxu0 0.0
    %723 = vmatprep.subr.mxu0 0.0
    %724 = vmatpush2.msra.mxu0 0.0
    %725 = vmatprep.subr.mxu0 0.0
    %726 = vmatpush2.msra.mxu0 0.0
    %727 = vmatprep.subr.mxu0 0.0
    %728 = vmatpush2.msra.mxu0 0.0
    %729 = vmatprep.mubr.f32.mxu0 0.0
    %730 = vmatmul.mubr.f32.gmra.mxu0 %v654
    %v731 = vpop.f32.mrf.mxu0
    %v732 = vadd.f32 0.0, %v731
    %v733 = vpop.f32.mrf.mxu0
    %734 = vmatprep.mubr.f32.mxu0 0.0
    %735 = vmatmul.mubr.f32.gmra.mxu0 %v657
    %v736 = vpop.f32.mrf.mxu0
    %v737 = vadd.f32 0.0, %v736
    %v738 = vpop.f32.mrf.mxu0
    %739 = vmatprep.mubr.f32.mxu0 0.0
    %740 = vmatmul.mubr.f32.gmra.mxu0 %v660
    %v741 = vpop.f32.mrf.mxu0
    %v742 = vadd.f32 0.0, %v741
    %v743 = vpop.f32.mrf.mxu0
    %744 = vmatprep.mubr.f32.mxu0 0.0
    %745 = vmatmul.mubr.f32.gmra.mxu0 %v663
    %v746 = vpop.f32.mrf.mxu0
    %v747 = vadd.f32 0.0, %v746
    %v748 = vpop.f32.mrf.mxu0
    %749 = vdwg.mxu0
    %750 = vrot.lane.b32.xlu0 %v195, 112
    %v751 = vpop.permute.xlu0 %750
    %752 = vrot.lane.b32.xlu0 %v200, 112
    %v753 = vpop.permute.xlu0 %752
    %754 = vrot.lane.b32.xlu0 %v205, 112
    %v755 = vpop.permute.xlu0 %754
    %756 = vrot.lane.b32.xlu0 %v210, 112
    %v757 = vpop.permute.xlu0 %756
    %758 = vrot.lane.b32.xlu0 %v195, 80
    %v759 = vpop.permute.xlu0 %758
    %760 = vrot.lane.b32.xlu0 %v200, 80
    %v761 = vpop.permute.xlu0 %760
    %762 = vrot.lane.b32.xlu0 %v205, 80
    %v763 = vpop.permute.xlu0 %762
    %764 = vrot.lane.b32.xlu0 %v210, 80
    %v765 = vpop.permute.xlu0 %764
    %v766 = vsel %vm225, %v751, 0
    %v768 = vsel %vm225, %v753, 0
    %v770 = vsel %vm225, %v755, 0
    %v772 = vsel %vm225, %v757, 0
    %v774 = vsel %vm225, %v759, 0
    %v776 = vsel %vm225, %v761, 0
    %v778 = vsel %vm225, %v763, 0
    %v780 = vsel %vm225, %v765, 0
    %782 = vmatprep.subr.mxu0 0.0
    %783 = vmatpush1.xpose.msra.mxu0 0.0
    %784 = vmatprep.subr.mxu0 0.0
    %785 = vmatpush1.xpose.msra.mxu0 0.0
    %786 = vmatprep.subr.mxu0 0.0
    %787 = vmatpush1.xpose.msra.mxu0 0.0
    %788 = vmatprep.subr.mxu0 0.0
    %789 = vmatpush1.xpose.msra.mxu0 0.0
    %790 = vmatprep.subr.mxu0 0.0
    %791 = vmatpush1.xpose.msra.mxu0 0.0
    %792 = vmatprep.subr.mxu0 0.0
    %793 = vmatpush1.xpose.msra.mxu0 0.0
    %794 = vmatprep.subr.mxu0 0.0
    %795 = vmatpush1.xpose.msra.mxu0 0.0
    %796 = vmatprep.subr.mxu0 0.0
    %797 = vmatpush1.xpose.msra.mxu0 0.0
    %798 = vmatprep.subr.mxu0 0.0
    %799 = vmatpush1.xpose.msra.mxu0 0.0
    %800 = vmatprep.subr.mxu0 0.0
    %801 = vmatpush1.xpose.msra.mxu0 0.0
    %802 = vmatprep.subr.mxu0 0.0
    %803 = vmatpush1.xpose.msra.mxu0 0.0
    %804 = vmatprep.subr.mxu0 0.0
    %805 = vmatpush1.xpose.msra.mxu0 0.0
    %806 = vmatprep.subr.mxu0 0.0
    %807 = vmatpush1.xpose.msra.mxu0 %v780
    %808 = vmatprep.subr.mxu0 0.0
    %809 = vmatpush1.xpose.msra.mxu0 %v778
    %810 = vmatprep.subr.mxu0 0.0
    %811 = vmatpush1.xpose.msra.mxu0 %v776
    %812 = vmatprep.subr.mxu0 0.0
    %813 = vmatpush1.xpose.msra.mxu0 %v774
    %814 = vmatprep.subr.mxu0 0.0
    %815 = vmatpush2.xpose.msra.mxu0 0.0
    %816 = vmatprep.subr.mxu0 0.0
    %817 = vmatpush2.xpose.msra.mxu0 0.0
    %818 = vmatprep.subr.mxu0 0.0
    %819 = vmatpush2.xpose.msra.mxu0 0.0
    %820 = vmatprep.subr.mxu0 0.0
    %821 = vmatpush2.xpose.msra.mxu0 0.0
    %822 = vmatprep.subr.mxu0 0.0
    %823 = vmatpush2.xpose.msra.mxu0 0.0
    %824 = vmatprep.subr.mxu0 0.0
    %825 = vmatpush2.xpose.msra.mxu0 0.0
    %826 = vmatprep.subr.mxu0 0.0
    %827 = vmatpush2.xpose.msra.mxu0 0.0
    %828 = vmatprep.subr.mxu0 0.0
    %829 = vmatpush2.xpose.msra.mxu0 0.0
    %830 = vmatprep.subr.mxu0 0.0
    %831 = vmatpush2.xpose.msra.mxu0 0.0
    %832 = vmatprep.subr.mxu0 0.0
    %833 = vmatpush2.xpose.msra.mxu0 0.0
    %834 = vmatprep.subr.mxu0 0.0
    %835 = vmatpush2.xpose.msra.mxu0 0.0
    %836 = vmatprep.subr.mxu0 0.0
    %837 = vmatpush2.xpose.msra.mxu0 0.0
    %838 = vmatprep.subr.mxu0 0.0
    %839 = vmatpush2.xpose.msra.mxu0 0.0
    %840 = vmatprep.subr.mxu0 0.0
    %841 = vmatpush2.xpose.msra.mxu0 0.0
    %842 = vmatprep.subr.mxu0 0.0
    %843 = vmatpush2.xpose.msra.mxu0 0.0
    %844 = vmatprep.subr.mxu0 0.0
    %845 = vmatpush2.xpose.msra.mxu0 0.0
    %846 = vmatprep.mubr.f32.mxu0 0.0
    %847 = vmatmul.mubr.f32.gmra.mxu0 %v766
    %v848 = vpop.f32.mrf.mxu0
    %v849 = vadd.f32 %v27, %v848
    %v850 = vpop.f32.mrf.mxu0
    %851 = vmatprep.mubr.f32.mxu0 0.0
    %852 = vmatmul.mubr.f32.gmra.mxu0 %v768
    %v853 = vpop.f32.mrf.mxu0
    %v854 = vadd.f32 %v28, %v853
    %v855 = vpop.f32.mrf.mxu0
    %856 = vmatprep.mubr.f32.mxu0 0.0
    %857 = vmatmul.mubr.f32.gmra.mxu0 %v770
    %v858 = vpop.f32.mrf.mxu0
    %v859 = vadd.f32 %v29, %v858
    %v860 = vpop.f32.mrf.mxu0
    %861 = vmatprep.mubr.f32.mxu0 0.0
    %862 = vmatmul.mubr.f32.gmra.mxu0 %v772
    %v863 = vpop.f32.mrf.mxu0
    %v864 = vadd.f32 %v30, %v863
    %v865 = vpop.f32.mrf.mxu0
    %866 = vdwg.mxu0
    %v867 = vsel %vm46, %v849, -inf
    %868 = vmax.xlane.f32.xlu0 %v867
    %v869 = vpop.xlane.xlu0 %868
    %v870 = vsel %vm46, %v854, -inf
    %871 = vmax.xlane.f32.xlu0 %v870
    %v872 = vpop.xlane.xlu0 %871
    %v873 = vsel %vm46, %v859, -inf
    %874 = vmax.xlane.f32.xlu0 %v873
    %v875 = vpop.xlane.xlu0 %874
    %v876 = vsel %vm46, %v864, -inf
    %877 = vmax.xlane.f32.xlu0 %v876
    %v878 = vpop.xlane.xlu0 %877
    %v879 = vsub.f32 %v849, %v869
    %v880 = vsub.f32 %v854, %v872
    %v881 = vsub.f32 %v859, %v875
    %v882 = vsub.f32 %v864, %v878
    %v883 = vmul.f32 %v879, 1.442695
    %v884 = vpow.pop %v883
    %v885 = vmul.f32 %v880, 1.442695
    %v886 = vpow.pop %v885
    %v887 = vmul.f32 %v881, 1.442695
    %v888 = vpow.pop %v887
    %v889 = vmul.f32 %v882, 1.442695
    %v890 = vpow.pop %v889
    %v891 = vsel %vm46, %v884, 0.0
    %892 = vadd.xlane.f32.xlu0 %v891
    %v893 = vpop.xlane.xlu0 %892
    %v894 = vsel %vm46, %v886, 0.0
    %895 = vadd.xlane.f32.xlu0 %v894
    %v896 = vpop.xlane.xlu0 %895
    %v897 = vsel %vm46, %v888, 0.0
    %898 = vadd.xlane.f32.xlu0 %v897
    %v899 = vpop.xlane.xlu0 %898
    %v900 = vsel %vm46, %v890, 0.0
    %901 = vadd.xlane.f32.xlu0 %v900
    %v902 = vpop.xlane.xlu0 %901
    %v903 = vrcp.pop %v893
    %v904 = vmul.f32 %v884, %v903
    %v905 = vrcp.pop %v896
    %v906 = vmul.f32 %v886, %v905
    %v907 = vrcp.pop %v899
    %v908 = vmul.f32 %v888, %v907
    %v909 = vrcp.pop %v902
    %v910 = vmul.f32 %v890, %v909
    %911 = vrot.lane.b32.xlu0 %v195, 48
    %v912 = vpop.permute.xlu0 %911
    %913 = vrot.lane.b32.xlu0 %v200, 48
    %v914 = vpop.permute.xlu0 %913
    %915 = vrot.lane.b32.xlu0 %v205, 48
    %v916 = vpop.permute.xlu0 %915
    %917 = vrot.lane.b32.xlu0 %v210, 48
    %v918 = vpop.permute.xlu0 %917
    %v924 = vsel %vm46, %v904, 0
    %v927 = vsel %vm46, %v906, 0
    %v930 = vsel %vm46, %v908, 0
    %v933 = vsel %vm46, %v910, 0
    %935 = vmatprep.subr.mxu0 0.0
    %936 = vmatpush1.msra.mxu0 0.0
    %937 = vmatprep.subr.mxu0 0.0
    %938 = vmatpush1.msra.mxu0 0.0
    %939 = vmatprep.subr.mxu0 0.0
    %940 = vmatpush1.msra.mxu0 0.0
    %941 = vmatprep.subr.mxu0 0.0
    %942 = vmatpush1.msra.mxu0 0.0
    %943 = vmatprep.subr.mxu0 0.0
    %944 = vmatpush1.msra.mxu0 0.0
    %945 = vmatprep.subr.mxu0 0.0
    %946 = vmatpush1.msra.mxu0 0.0
    %947 = vmatprep.subr.mxu0 0.0
    %948 = vmatpush1.msra.mxu0 0.0
    %949 = vmatprep.subr.mxu0 0.0
    %950 = vmatpush1.msra.mxu0 0.0
    %951 = vmatprep.subr.mxu0 0.0
    %952 = vmatpush1.msra.mxu0 0.0
    %953 = vmatprep.subr.mxu0 0.0
    %954 = vmatpush1.msra.mxu0 0.0
    %955 = vmatprep.subr.mxu0 0.0
    %956 = vmatpush1.msra.mxu0 0.0
    %957 = vmatprep.subr.mxu0 0.0
    %958 = vmatpush1.msra.mxu0 0.0
    %959 = vmatprep.subr.mxu0 0.0
    %960 = vmatpush1.msra.mxu0 %v918
    %961 = vmatprep.subr.mxu0 0.0
    %962 = vmatpush1.msra.mxu0 %v916
    %963 = vmatprep.subr.mxu0 0.0
    %964 = vmatpush1.msra.mxu0 %v914
    %965 = vmatprep.subr.mxu0 0.0
    %966 = vmatpush1.msra.mxu0 %v912
    %967 = vmatprep.subr.mxu0 0.0
    %968 = vmatpush2.msra.mxu0 0.0
    %969 = vmatprep.subr.mxu0 0.0
    %970 = vmatpush2.msra.mxu0 0.0
    %971 = vmatprep.subr.mxu0 0.0
    %972 = vmatpush2.msra.mxu0 0.0
    %973 = vmatprep.subr.mxu0 0.0
    %974 = vmatpush2.msra.mxu0 0.0
    %975 = vmatprep.subr.mxu0 0.0
    %976 = vmatpush2.msra.mxu0 0.0
    %977 = vmatprep.subr.mxu0 0.0
    %978 = vmatpush2.msra.mxu0 0.0
    %979 = vmatprep.subr.mxu0 0.0
    %980 = vmatpush2.msra.mxu0 0.0
    %981 = vmatprep.subr.mxu0 0.0
    %982 = vmatpush2.msra.mxu0 0.0
    %983 = vmatprep.subr.mxu0 0.0
    %984 = vmatpush2.msra.mxu0 0.0
    %985 = vmatprep.subr.mxu0 0.0
    %986 = vmatpush2.msra.mxu0 0.0
    %987 = vmatprep.subr.mxu0 0.0
    %988 = vmatpush2.msra.mxu0 0.0
    %989 = vmatprep.subr.mxu0 0.0
    %990 = vmatpush2.msra.mxu0 0.0
    %991 = vmatprep.subr.mxu0 0.0
    %992 = vmatpush2.msra.mxu0 0.0
    %993 = vmatprep.subr.mxu0 0.0
    %994 = vmatpush2.msra.mxu0 0.0
    %995 = vmatprep.subr.mxu0 0.0
    %996 = vmatpush2.msra.mxu0 0.0
    %997 = vmatprep.subr.mxu0 0.0
    %998 = vmatpush2.msra.mxu0 0.0
    %999 = vmatprep.mubr.f32.mxu0 0.0
    %1000 = vmatmul.mubr.f32.gmra.mxu0 %v924
    %v1001 = vpop.f32.mrf.mxu0
    %v1002 = vadd.f32 0.0, %v1001
    %v1003 = vpop.f32.mrf.mxu0
    %1004 = vmatprep.mubr.f32.mxu0 0.0
    %1005 = vmatmul.mubr.f32.gmra.mxu0 %v927
    %v1006 = vpop.f32.mrf.mxu0
    %v1007 = vadd.f32 0.0, %v1006
    %v1008 = vpop.f32.mrf.mxu0
    %1009 = vmatprep.mubr.f32.mxu0 0.0
    %1010 = vmatmul.mubr.f32.gmra.mxu0 %v930
    %v1011 = vpop.f32.mrf.mxu0
    %v1012 = vadd.f32 0.0, %v1011
    %v1013 = vpop.f32.mrf.mxu0
    %1014 = vmatprep.mubr.f32.mxu0 0.0
    %1015 = vmatmul.mubr.f32.gmra.mxu0 %v933
    %v1016 = vpop.f32.mrf.mxu0
    %v1017 = vadd.f32 0.0, %v1016
    %v1018 = vpop.f32.mrf.mxu0
    %1019 = vdwg.mxu0
    %1020 = vrot.lane.b32.xlu0 %v195, 104
    %v1021 = vpop.permute.xlu0 %1020
    %1022 = vrot.lane.b32.xlu0 %v200, 104
    %v1023 = vpop.permute.xlu0 %1022
    %1024 = vrot.lane.b32.xlu0 %v205, 104
    %v1025 = vpop.permute.xlu0 %1024
    %1026 = vrot.lane.b32.xlu0 %v210, 104
    %v1027 = vpop.permute.xlu0 %1026
    %1028 = vrot.lane.b32.xlu0 %v195, 72
    %v1029 = vpop.permute.xlu0 %1028
    %1030 = vrot.lane.b32.xlu0 %v200, 72
    %v1031 = vpop.permute.xlu0 %1030
    %1032 = vrot.lane.b32.xlu0 %v205, 72
    %v1033 = vpop.permute.xlu0 %1032
    %1034 = vrot.lane.b32.xlu0 %v210, 72
    %v1035 = vpop.permute.xlu0 %1034
    %v1036 = vsel %vm225, %v1021, 0
    %v1038 = vsel %vm225, %v1023, 0
    %v1040 = vsel %vm225, %v1025, 0
    %v1042 = vsel %vm225, %v1027, 0
    %v1044 = vsel %vm225, %v1029, 0
    %v1046 = vsel %vm225, %v1031, 0
    %v1048 = vsel %vm225, %v1033, 0
    %v1050 = vsel %vm225, %v1035, 0
    %1052 = vmatprep.subr.mxu0 0.0
    %1053 = vmatpush1.xpose.msra.mxu0 0.0
    %1054 = vmatprep.subr.mxu0 0.0
    %1055 = vmatpush1.xpose.msra.mxu0 0.0
    %1056 = vmatprep.subr.mxu0 0.0
    %1057 = vmatpush1.xpose.msra.mxu0 0.0
    %1058 = vmatprep.subr.mxu0 0.0
    %1059 = vmatpush1.xpose.msra.mxu0 0.0
    %1060 = vmatprep.subr.mxu0 0.0
    %1061 = vmatpush1.xpose.msra.mxu0 0.0
    %1062 = vmatprep.subr.mxu0 0.0
    %1063 = vmatpush1.xpose.msra.mxu0 0.0
    %1064 = vmatprep.subr.mxu0 0.0
    %1065 = vmatpush1.xpose.msra.mxu0 0.0
    %1066 = vmatprep.subr.mxu0 0.0
    %1067 = vmatpush1.xpose.msra.mxu0 0.0
    %1068 = vmatprep.subr.mxu0 0.0
    %1069 = vmatpush1.xpose.msra.mxu0 0.0
    %1070 = vmatprep.subr.mxu0 0.0
    %1071 = vmatpush1.xpose.msra.mxu0 0.0
    %1072 = vmatprep.subr.mxu0 0.0
    %1073 = vmatpush1.xpose.msra.mxu0 0.0
    %1074 = vmatprep.subr.mxu0 0.0
    %1075 = vmatpush1.xpose.msra.mxu0 0.0
    %1076 = vmatprep.subr.mxu0 0.0
    %1077 = vmatpush1.xpose.msra.mxu0 %v1050
    %1078 = vmatprep.subr.mxu0 0.0
    %1079 = vmatpush1.xpose.msra.mxu0 %v1048
    %1080 = vmatprep.subr.mxu0 0.0
    %1081 = vmatpush1.xpose.msra.mxu0 %v1046
    %1082 = vmatprep.subr.mxu0 0.0
    %1083 = vmatpush1.xpose.msra.mxu0 %v1044
    %1084 = vmatprep.subr.mxu0 0.0
    %1085 = vmatpush2.xpose.msra.mxu0 0.0
    %1086 = vmatprep.subr.mxu0 0.0
    %1087 = vmatpush2.xpose.msra.mxu0 0.0
    %1088 = vmatprep.subr.mxu0 0.0
    %1089 = vmatpush2.xpose.msra.mxu0 0.0
    %1090 = vmatprep.subr.mxu0 0.0
    %1091 = vmatpush2.xpose.msra.mxu0 0.0
    %1092 = vmatprep.subr.mxu0 0.0
    %1093 = vmatpush2.xpose.msra.mxu0 0.0
    %1094 = vmatprep.subr.mxu0 0.0
    %1095 = vmatpush2.xpose.msra.mxu0 0.0
    %1096 = vmatprep.subr.mxu0 0.0
    %1097 = vmatpush2.xpose.msra.mxu0 0.0
    %1098 = vmatprep.subr.mxu0 0.0
    %1099 = vmatpush2.xpose.msra.mxu0 0.0
    %1100 = vmatprep.subr.mxu0 0.0
    %1101 = vmatpush2.xpose.msra.mxu0 0.0
    %1102 = vmatprep.subr.mxu0 0.0
    %1103 = vmatpush2.xpose.msra.mxu0 0.0
    %1104 = vmatprep.subr.mxu0 0.0
    %1105 = vmatpush2.xpose.msra.mxu0 0.0
    %1106 = vmatprep.subr.mxu0 0.0
    %1107 = vmatpush2.xpose.msra.mxu0 0.0
    %1108 = vmatprep.subr.mxu0 0.0
    %1109 = vmatpush2.xpose.msra.mxu0 0.0
    %1110 = vmatprep.subr.mxu0 0.0
    %1111 = vmatpush2.xpose.msra.mxu0 0.0
    %1112 = vmatprep.subr.mxu0 0.0
    %1113 = vmatpush2.xpose.msra.mxu0 0.0
    %1114 = vmatprep.subr.mxu0 0.0
    %1115 = vmatpush2.xpose.msra.mxu0 0.0
    %1116 = vmatprep.mubr.f32.mxu0 0.0
    %1117 = vmatmul.mubr.f32.gmra.mxu0 %v1036
    %v1118 = vpop.f32.mrf.mxu0
    %v1119 = vadd.f32 %v27, %v1118
    %v1120 = vpop.f32.mrf.mxu0
    %1121 = vmatprep.mubr.f32.mxu0 0.0
    %1122 = vmatmul.mubr.f32.gmra.mxu0 %v1038
    %v1123 = vpop.f32.mrf.mxu0
    %v1124 = vadd.f32 %v28, %v1123
    %v1125 = vpop.f32.mrf.mxu0
    %1126 = vmatprep.mubr.f32.mxu0 0.0
    %1127 = vmatmul.mubr.f32.gmra.mxu0 %v1040
    %v1128 = vpop.f32.mrf.mxu0
    %v1129 = vadd.f32 %v29, %v1128
    %v1130 = vpop.f32.mrf.mxu0
    %1131 = vmatprep.mubr.f32.mxu0 0.0
    %1132 = vmatmul.mubr.f32.gmra.mxu0 %v1042
    %v1133 = vpop.f32.mrf.mxu0
    %v1134 = vadd.f32 %v30, %v1133
    %v1135 = vpop.f32.mrf.mxu0
    %1136 = vdwg.mxu0
    %v1137 = vsel %vm46, %v1119, -inf
    %1138 = vmax.xlane.f32.xlu0 %v1137
    %v1139 = vpop.xlane.xlu0 %1138
    %v1140 = vsel %vm46, %v1124, -inf
    %1141 = vmax.xlane.f32.xlu0 %v1140
    %v1142 = vpop.xlane.xlu0 %1141
    %v1143 = vsel %vm46, %v1129, -inf
    %1144 = vmax.xlane.f32.xlu0 %v1143
    %v1145 = vpop.xlane.xlu0 %1144
    %v1146 = vsel %vm46, %v1134, -inf
    %1147 = vmax.xlane.f32.xlu0 %v1146
    %v1148 = vpop.xlane.xlu0 %1147
    %v1149 = vsub.f32 %v1119, %v1139
    %v1150 = vsub.f32 %v1124, %v1142
    %v1151 = vsub.f32 %v1129, %v1145
    %v1152 = vsub.f32 %v1134, %v1148
    %v1153 = vmul.f32 %v1149, 1.442695
    %v1154 = vpow.pop %v1153
    %v1155 = vmul.f32 %v1150, 1.442695
    %v1156 = vpow.pop %v1155
    %v1157 = vmul.f32 %v1151, 1.442695
    %v1158 = vpow.pop %v1157
    %v1159 = vmul.f32 %v1152, 1.442695
    %v1160 = vpow.pop %v1159
    %v1161 = vsel %vm46, %v1154, 0.0
    %1162 = vadd.xlane.f32.xlu0 %v1161
    %v1163 = vpop.xlane.xlu0 %1162
    %v1164 = vsel %vm46, %v1156, 0.0
    %1165 = vadd.xlane.f32.xlu0 %v1164
    %v1166 = vpop.xlane.xlu0 %1165
    %v1167 = vsel %vm46, %v1158, 0.0
    %1168 = vadd.xlane.f32.xlu0 %v1167
    %v1169 = vpop.xlane.xlu0 %1168
    %v1170 = vsel %vm46, %v1160, 0.0
    %1171 = vadd.xlane.f32.xlu0 %v1170
    %v1172 = vpop.xlane.xlu0 %1171
    %v1173 = vrcp.pop %v1163
    %v1174 = vmul.f32 %v1154, %v1173
    %v1175 = vrcp.pop %v1166
    %v1176 = vmul.f32 %v1156, %v1175
    %v1177 = vrcp.pop %v1169
    %v1178 = vmul.f32 %v1158, %v1177
    %v1179 = vrcp.pop %v1172
    %v1180 = vmul.f32 %v1160, %v1179
    %1181 = vrot.lane.b32.xlu0 %v195, 40
    %v1182 = vpop.permute.xlu0 %1181
    %1183 = vrot.lane.b32.xlu0 %v200, 40
    %v1184 = vpop.permute.xlu0 %1183
    %1185 = vrot.lane.b32.xlu0 %v205, 40
    %v1186 = vpop.permute.xlu0 %1185
    %1187 = vrot.lane.b32.xlu0 %v210, 40
    %v1188 = vpop.permute.xlu0 %1187
    %v1194 = vsel %vm46, %v1174, 0
    %v1197 = vsel %vm46, %v1176, 0
    %v1200 = vsel %vm46, %v1178, 0
    %v1203 = vsel %vm46, %v1180, 0
    %1205 = vmatprep.subr.mxu0 0.0
    %1206 = vmatpush1.msra.mxu0 0.0
    %1207 = vmatprep.subr.mxu0 0.0
    %1208 = vmatpush1.msra.mxu0 0.0
    %1209 = vmatprep.subr.mxu0 0.0
    %1210 = vmatpush1.msra.mxu0 0.0
    %1211 = vmatprep.subr.mxu0 0.0
    %1212 = vmatpush1.msra.mxu0 0.0
    %1213 = vmatprep.subr.mxu0 0.0
    %1214 = vmatpush1.msra.mxu0 0.0
    %1215 = vmatprep.subr.mxu0 0.0
    %1216 = vmatpush1.msra.mxu0 0.0
    %1217 = vmatprep.subr.mxu0 0.0
    %1218 = vmatpush1.msra.mxu0 0.0
    %1219 = vmatprep.subr.mxu0 0.0
    %1220 = vmatpush1.msra.mxu0 0.0
    %1221 = vmatprep.subr.mxu0 0.0
    %1222 = vmatpush1.msra.mxu0 0.0
    %1223 = vmatprep.subr.mxu0 0.0
    %1224 = vmatpush1.msra.mxu0 0.0
    %1225 = vmatprep.subr.mxu0 0.0
    %1226 = vmatpush1.msra.mxu0 0.0
    %1227 = vmatprep.subr.mxu0 0.0
    %1228 = vmatpush1.msra.mxu0 0.0
    %1229 = vmatprep.subr.mxu0 0.0
    %1230 = vmatpush1.msra.mxu0 %v1188
    %1231 = vmatprep.subr.mxu0 0.0
    %1232 = vmatpush1.msra.mxu0 %v1186
    %1233 = vmatprep.subr.mxu0 0.0
    %1234 = vmatpush1.msra.mxu0 %v1184
    %1235 = vmatprep.subr.mxu0 0.0
    %1236 = vmatpush1.msra.mxu0 %v1182
    %1237 = vmatprep.subr.mxu0 0.0
    %1238 = vmatpush2.msra.mxu0 0.0
    %1239 = vmatprep.subr.mxu0 0.0
    %1240 = vmatpush2.msra.mxu0 0.0
    %1241 = vmatprep.subr.mxu0 0.0
    %1242 = vmatpush2.msra.mxu0 0.0
    %1243 = vmatprep.subr.mxu0 0.0
    %1244 = vmatpush2.msra.mxu0 0.0
    %1245 = vmatprep.subr.mxu0 0.0
    %1246 = vmatpush2.msra.mxu0 0.0
    %1247 = vmatprep.subr.mxu0 0.0
    %1248 = vmatpush2.msra.mxu0 0.0
    %1249 = vmatprep.subr.mxu0 0.0
    %1250 = vmatpush2.msra.mxu0 0.0
    %1251 = vmatprep.subr.mxu0 0.0
    %1252 = vmatpush2.msra.mxu0 0.0
    %1253 = vmatprep.subr.mxu0 0.0
    %1254 = vmatpush2.msra.mxu0 0.0
    %1255 = vmatprep.subr.mxu0 0.0
    %1256 = vmatpush2.msra.mxu0 0.0
    %1257 = vmatprep.subr.mxu0 0.0
    %1258 = vmatpush2.msra.mxu0 0.0
    %1259 = vmatprep.subr.mxu0 0.0
    %1260 = vmatpush2.msra.mxu0 0.0
    %1261 = vmatprep.subr.mxu0 0.0
    %1262 = vmatpush2.msra.mxu0 0.0
    %1263 = vmatprep.subr.mxu0 0.0
    %1264 = vmatpush2.msra.mxu0 0.0
    %1265 = vmatprep.subr.mxu0 0.0
    %1266 = vmatpush2.msra.mxu0 0.0
    %1267 = vmatprep.subr.mxu0 0.0
    %1268 = vmatpush2.msra.mxu0 0.0
    %1269 = vmatprep.mubr.f32.mxu0 0.0
    %1270 = vmatmul.mubr.f32.gmra.mxu0 %v1194
    %v1271 = vpop.f32.mrf.mxu0
    %v1272 = vadd.f32 0.0, %v1271
    %v1273 = vpop.f32.mrf.mxu0
    %1274 = vmatprep.mubr.f32.mxu0 0.0
    %1275 = vmatmul.mubr.f32.gmra.mxu0 %v1197
    %v1276 = vpop.f32.mrf.mxu0
    %v1277 = vadd.f32 0.0, %v1276
    %v1278 = vpop.f32.mrf.mxu0
    %1279 = vmatprep.mubr.f32.mxu0 0.0
    %1280 = vmatmul.mubr.f32.gmra.mxu0 %v1200
    %v1281 = vpop.f32.mrf.mxu0
    %v1282 = vadd.f32 0.0, %v1281
    %v1283 = vpop.f32.mrf.mxu0
    %1284 = vmatprep.mubr.f32.mxu0 0.0
    %1285 = vmatmul.mubr.f32.gmra.mxu0 %v1203
    %v1286 = vpop.f32.mrf.mxu0
    %v1287 = vadd.f32 0.0, %v1286
    %v1288 = vpop.f32.mrf.mxu0
    %1289 = vdwg.mxu0
    %1294 = vrot.lane.b32.xlu0 %v732, 8
    %v1295 = vpop.permute.xlu0 %1294
    %1296 = vrot.lane.b32.xlu0 %v737, 8
    %v1297 = vpop.permute.xlu0 %1296
    %1298 = vrot.lane.b32.xlu0 %v742, 8
    %v1299 = vpop.permute.xlu0 %1298
    %1300 = vrot.lane.b32.xlu0 %v747, 8
    %v1301 = vpop.permute.xlu0 %1300
    %1310 = vrot.lane.b32.xlu0 %v1002, 16
    %v1311 = vpop.permute.xlu0 %1310
    %1312 = vrot.lane.b32.xlu0 %v1007, 16
    %v1313 = vpop.permute.xlu0 %1312
    %1314 = vrot.lane.b32.xlu0 %v1012, 16
    %v1315 = vpop.permute.xlu0 %1314
    %1316 = vrot.lane.b32.xlu0 %v1017, 16
    %v1317 = vpop.permute.xlu0 %1316
    %1326 = vrot.lane.b32.xlu0 %v1272, 24
    %v1327 = vpop.permute.xlu0 %1326
    %1328 = vrot.lane.b32.xlu0 %v1277, 24
    %v1329 = vpop.permute.xlu0 %1328
    %1330 = vrot.lane.b32.xlu0 %v1282, 24
    %v1331 = vpop.permute.xlu0 %1330
    %1332 = vrot.lane.b32.xlu0 %v1287, 24
    %v1333 = vpop.permute.xlu0 %1332
    %v1338 = vsel %vm225, %v462, %v1295
    %v1339 = vsel %vm225, %v467, %v1297
    %v1340 = vsel %vm225, %v472, %v1299
    %v1341 = vsel %vm225, %v477, %v1301
    %vm1342 = vcmask 130048
    %v1343 = vsel %vm1342, %v1338, %v1311
    %v1344 = vsel %vm1342, %v1339, %v1313
    %v1345 = vsel %vm1342, %v1340, %v1315
    %v1346 = vsel %vm1342, %v1341, %v1317
    %vm1347 = vcmask 195584
    %v1348 = vsel %vm1347, %v1343, %v1327
    %v1349 = vsel %vm1347, %v1344, %v1329
    %v1350 = vsel %vm1347, %v1345, %v1331
    %v1351 = vsel %vm1347, %v1346, %v1333
    %1356 = vrot.lane.b32.xlu0 %v42, 32
    %v1357 = vpop.permute.xlu0 %1356
    %1358 = vrot.lane.b32.xlu0 %v43, 32
    %v1359 = vpop.permute.xlu0 %1358
    %1360 = vrot.lane.b32.xlu0 %v44, 32
    %v1361 = vpop.permute.xlu0 %1360
    %1362 = vrot.lane.b32.xlu0 %v45, 32
    %v1363 = vpop.permute.xlu0 %1362
    %v1369 = vsel %vm46, %v1348, 0
    %v1372 = vsel %vm46, %v1349, 0
    %v1375 = vsel %vm46, %v1350, 0
    %v1378 = vsel %vm46, %v1351, 0
    %1380 = vmatprep.subr.mxu0 0.0
    %1381 = vmatpush1.msra.mxu0 0.0
    %1382 = vmatprep.subr.mxu0 0.0
    %1383 = vmatpush1.msra.mxu0 0.0
    %1384 = vmatprep.subr.mxu0 0.0
    %1385 = vmatpush1.msra.mxu0 0.0
    %1386 = vmatprep.subr.mxu0 0.0
    %1387 = vmatpush1.msra.mxu0 0.0
    %1388 = vmatprep.subr.mxu0 0.0
    %1389 = vmatpush1.msra.mxu0 0.0
    %1390 = vmatprep.subr.mxu0 0.0
    %1391 = vmatpush1.msra.mxu0 0.0
    %1392 = vmatprep.subr.mxu0 0.0
    %1393 = vmatpush1.msra.mxu0 0.0
    %1394 = vmatprep.subr.mxu0 0.0
    %1395 = vmatpush1.msra.mxu0 0.0
    %1396 = vmatprep.subr.mxu0 0.0
    %1397 = vmatpush1.msra.mxu0 0.0
    %1398 = vmatprep.subr.mxu0 0.0
    %1399 = vmatpush1.msra.mxu0 0.0
    %1400 = vmatprep.subr.mxu0 0.0
    %1401 = vmatpush1.msra.mxu0 0.0
    %1402 = vmatprep.subr.mxu0 0.0
    %1403 = vmatpush1.msra.mxu0 0.0
    %1404 = vmatprep.subr.mxu0 0.0
    %1405 = vmatpush1.msra.mxu0 %v1363
    %1406 = vmatprep.subr.mxu0 0.0
    %1407 = vmatpush1.msra.mxu0 %v1361
    %1408 = vmatprep.subr.mxu0 0.0
    %1409 = vmatpush1.msra.mxu0 %v1359
    %1410 = vmatprep.subr.mxu0 0.0
    %1411 = vmatpush1.msra.mxu0 %v1357
    %1412 = vmatprep.subr.mxu0 0.0
    %1413 = vmatpush2.msra.mxu0 0.0
    %1414 = vmatprep.subr.mxu0 0.0
    %1415 = vmatpush2.msra.mxu0 0.0
    %1416 = vmatprep.subr.mxu0 0.0
    %1417 = vmatpush2.msra.mxu0 0.0
    %1418 = vmatprep.subr.mxu0 0.0
    %1419 = vmatpush2.msra.mxu0 0.0
    %1420 = vmatprep.subr.mxu0 0.0
    %1421 = vmatpush2.msra.mxu0 0.0
    %1422 = vmatprep.subr.mxu0 0.0
    %1423 = vmatpush2.msra.mxu0 0.0
    %1424 = vmatprep.subr.mxu0 0.0
    %1425 = vmatpush2.msra.mxu0 0.0
    %1426 = vmatprep.subr.mxu0 0.0
    %1427 = vmatpush2.msra.mxu0 0.0
    %1428 = vmatprep.subr.mxu0 0.0
    %1429 = vmatpush2.msra.mxu0 0.0
    %1430 = vmatprep.subr.mxu0 0.0
    %1431 = vmatpush2.msra.mxu0 0.0
    %1432 = vmatprep.subr.mxu0 0.0
    %1433 = vmatpush2.msra.mxu0 0.0
    %1434 = vmatprep.subr.mxu0 0.0
    %1435 = vmatpush2.msra.mxu0 0.0
    %1436 = vmatprep.subr.mxu0 0.0
    %1437 = vmatpush2.msra.mxu0 0.0
    %1438 = vmatprep.subr.mxu0 0.0
    %1439 = vmatpush2.msra.mxu0 0.0
    %1440 = vmatprep.subr.mxu0 0.0
    %1441 = vmatpush2.msra.mxu0 0.0
    %1442 = vmatprep.subr.mxu0 0.0
    %1443 = vmatpush2.msra.mxu0 0.0
    %1444 = vmatprep.mubr.f32.mxu0 0.0
    %1445 = vmatmul.mubr.f32.gmra.mxu0 %v1369
    %v1446 = vpop.f32.mrf.mxu0
    %v1447 = vadd.f32 0.0, %v1446
    %v1448 = vpop.f32.mrf.mxu0
    %1449 = vmatprep.mubr.f32.mxu0 0.0
    %1450 = vmatmul.mubr.f32.gmra.mxu0 %v1372
    %v1451 = vpop.f32.mrf.mxu0
    %v1452 = vadd.f32 0.0, %v1451
    %v1453 = vpop.f32.mrf.mxu0
    %1454 = vmatprep.mubr.f32.mxu0 0.0
    %1455 = vmatmul.mubr.f32.gmra.mxu0 %v1375
    %v1456 = vpop.f32.mrf.mxu0
    %v1457 = vadd.f32 0.0, %v1456
    %v1458 = vpop.f32.mrf.mxu0
    %1459 = vmatprep.mubr.f32.mxu0 0.0
    %1460 = vmatmul.mubr.f32.gmra.mxu0 %v1378
    %v1461 = vpop.f32.mrf.mxu0
    %v1462 = vadd.f32 0.0, %v1461
    %v1463 = vpop.f32.mrf.mxu0
    %1464 = vdwg.mxu0
    %v1465 = vadd.f32 %v35, %v1447
    %v1466 = vadd.f32 %v36, %v1452
    %v1467 = vadd.f32 %v37, %v1457
    %v1468 = vadd.f32 %v38, %v1462
    %v1469 = vlaneseq
    %v1470 = vshrl.u32 %v1469, 7
    %v1471 = vsub.s32 0, %v1470
    %v1472 = vrot.slane %v41, %v1471
    %v1473 = vadd.f32 %v1465, %v1472
    %v1474 = vadd.f32 %v1466, %v1472
    %v1475 = vadd.f32 %v1467, %v1472
    %v1476 = vadd.f32 %v1468, %v1472
    %v1477 = vld [vmem:[%s5 + $0x12] sm:$0x1]
    %v1478 = vld [vmem:[%s5 + $0x13] sm:$0x1]
    %v1479 = vld [vmem:[%s5 + $0x14] sm:$0x1]
    %v1480 = vld [vmem:[%s5 + $0x15] sm:$0x1]
    %v1481 = vld [vmem:[%s3] sm:$0xff]
    %v1482 = vld [vmem:[%s3 + $0x8] sm:$0xff]
    %v1483 = vld [vmem:[%s3 + $0x10] sm:$0xff]
    %v1484 = vld [vmem:[%s3 + $0x18] sm:$0xff]
    %v1485 = vld [vmem:[%s4] sm:$0xff]
    %v1486 = vld [vmem:[%s4 + $0x8] sm:$0xff]
    %v1487 = vld [vmem:[%s4 + $0x10] sm:$0xff]
    %v1488 = vld [vmem:[%s4 + $0x18] sm:$0xff]
    %v1489 = vld [vmem:[%s4 + $0x20] sm:$0xff]
    %v1490 = vld [vmem:[%s4 + $0x28] sm:$0xff]
    %v1491 = vld [vmem:[%s4 + $0x30] sm:$0xff]
    %v1492 = vld [vmem:[%s4 + $0x38] sm:$0xff]
    %v1493 = vsel %vm46, %v1473, 0.0
    %1494 = vadd.xlane.f32.xlu0 %v1493
    %v1495 = vpop.xlane.xlu0 %1494
    %v1496 = vsel %vm46, %v1474, 0.0
    %1497 = vadd.xlane.f32.xlu0 %v1496
    %v1498 = vpop.xlane.xlu0 %1497
    %v1499 = vsel %vm46, %v1475, 0.0
    %1500 = vadd.xlane.f32.xlu0 %v1499
    %v1501 = vpop.xlane.xlu0 %1500
    %v1502 = vsel %vm46, %v1476, 0.0
    %1503 = vadd.xlane.f32.xlu0 %v1502
    %v1504 = vpop.xlane.xlu0 %1503
    %v1505 = vmul.f32 %v1495, %v59
    %v1506 = vmul.f32 %v1498, %v59
    %v1507 = vmul.f32 %v1501, %v59
    %v1508 = vmul.f32 %v1504, %v59
    %v1509 = vsub.f32 %v1473, %v1505
    %v1510 = vsub.f32 %v1474, %v1506
    %v1511 = vsub.f32 %v1475, %v1507
    %v1512 = vsub.f32 %v1476, %v1508
    %v1513 = vmul.f32 %v1509, %v1509
    %v1514 = vmul.f32 %v1510, %v1510
    %v1515 = vmul.f32 %v1511, %v1511
    %v1516 = vmul.f32 %v1512, %v1512
    %v1517 = vsel %vm46, %v1513, 0.0
    %1518 = vadd.xlane.f32.xlu0 %v1517
    %v1519 = vpop.xlane.xlu0 %1518
    %v1520 = vsel %vm46, %v1514, 0.0
    %1521 = vadd.xlane.f32.xlu0 %v1520
    %v1522 = vpop.xlane.xlu0 %1521
    %v1523 = vsel %vm46, %v1515, 0.0
    %1524 = vadd.xlane.f32.xlu0 %v1523
    %v1525 = vpop.xlane.xlu0 %1524
    %v1526 = vsel %vm46, %v1516, 0.0
    %1527 = vadd.xlane.f32.xlu0 %v1526
    %v1528 = vpop.xlane.xlu0 %1527
    %v1529 = vmul.f32 %v1519, %v59
    %v1530 = vmul.f32 %v1522, %v59
    %v1531 = vmul.f32 %v1525, %v59
    %v1532 = vmul.f32 %v1528, %v59
    %v1533 = vadd.f32 %v1529, 1e-05
    %v1534 = vadd.f32 %v1530, 1e-05
    %v1535 = vadd.f32 %v1531, 1e-05
    %v1536 = vadd.f32 %v1532, 1e-05
    %v1537 = vrsqrt.pop %v1533
    %v1538 = vrsqrt.pop %v1534
    %v1539 = vrsqrt.pop %v1535
    %v1540 = vrsqrt.pop %v1536
    %v1541 = vmul.f32 %v1509, %v1537
    %v1542 = vmul.f32 %v1510, %v1538
    %v1543 = vmul.f32 %v1511, %v1539
    %v1544 = vmul.f32 %v1512, %v1540
    %v1545 = vlaneseq
    %v1546 = vshrl.u32 %v1545, 7
    %v1547 = vsub.s32 0, %v1546
    %v1548 = vrot.slane %v1477, %v1547
    %v1549 = vmul.f32 %v1541, %v1548
    %v1550 = vmul.f32 %v1542, %v1548
    %v1551 = vmul.f32 %v1543, %v1548
    %v1552 = vmul.f32 %v1544, %v1548
    %v1553 = vlaneseq
    %v1554 = vshrl.u32 %v1553, 7
    %v1555 = vsub.s32 0, %v1554
    %v1556 = vrot.slane %v1478, %v1555
    %v1557 = vadd.f32 %v1549, %v1556
    %v1558 = vadd.f32 %v1550, %v1556
    %v1559 = vadd.f32 %v1551, %v1556
    %v1560 = vadd.f32 %v1552, %v1556
    %v1561 = vlaneseq
    %v1562 = vshrl.u32 %v1561, 7
    %v1563 = vsub.s32 0, %v1562
    %v1564 = vrot.slane %v1479, %v1563
    %v1566 = vsel %vm46, %v1557, 0
    %v1569 = vsel %vm46, %v1558, 0
    %v1572 = vsel %vm46, %v1559, 0
    %v1575 = vsel %vm46, %v1560, 0
    %1577 = vmatprep.subr.mxu0 0.0
    %1578 = vmatpush1.msra.mxu0 0.0
    %1579 = vmatprep.subr.mxu0 0.0
    %1580 = vmatpush1.msra.mxu0 0.0
    %1581 = vmatprep.subr.mxu0 0.0
    %1582 = vmatpush1.msra.mxu0 0.0
    %1583 = vmatprep.subr.mxu0 0.0
    %1584 = vmatpush1.msra.mxu0 0.0
    %1585 = vmatprep.subr.mxu0 0.0
    %1586 = vmatpush1.msra.mxu0 0.0
    %1587 = vmatprep.subr.mxu0 0.0
    %1588 = vmatpush1.msra.mxu0 0.0
    %1589 = vmatprep.subr.mxu0 0.0
    %1590 = vmatpush1.msra.mxu0 0.0
    %1591 = vmatprep.subr.mxu0 0.0
    %1592 = vmatpush1.msra.mxu0 0.0
    %1593 = vmatprep.subr.mxu0 0.0
    %1594 = vmatpush1.msra.mxu0 0.0
    %1595 = vmatprep.subr.mxu0 0.0
    %1596 = vmatpush1.msra.mxu0 0.0
    %1597 = vmatprep.subr.mxu0 0.0
    %1598 = vmatpush1.msra.mxu0 0.0
    %1599 = vmatprep.subr.mxu0 0.0
    %1600 = vmatpush1.msra.mxu0 0.0
    %1601 = vmatprep.subr.mxu0 0.0
    %1602 = vmatpush1.msra.mxu0 %v1484
    %1603 = vmatprep.subr.mxu0 0.0
    %1604 = vmatpush1.msra.mxu0 %v1483
    %1605 = vmatprep.subr.mxu0 0.0
    %1606 = vmatpush1.msra.mxu0 %v1482
    %1607 = vmatprep.subr.mxu0 0.0
    %1608 = vmatpush1.msra.mxu0 %v1481
    %1609 = vmatprep.subr.mxu0 0.0
    %1610 = vmatpush2.msra.mxu0 0.0
    %1611 = vmatprep.subr.mxu0 0.0
    %1612 = vmatpush2.msra.mxu0 0.0
    %1613 = vmatprep.subr.mxu0 0.0
    %1614 = vmatpush2.msra.mxu0 0.0
    %1615 = vmatprep.subr.mxu0 0.0
    %1616 = vmatpush2.msra.mxu0 0.0
    %1617 = vmatprep.subr.mxu0 0.0
    %1618 = vmatpush2.msra.mxu0 0.0
    %1619 = vmatprep.subr.mxu0 0.0
    %1620 = vmatpush2.msra.mxu0 0.0
    %1621 = vmatprep.subr.mxu0 0.0
    %1622 = vmatpush2.msra.mxu0 0.0
    %1623 = vmatprep.subr.mxu0 0.0
    %1624 = vmatpush2.msra.mxu0 0.0
    %1625 = vmatprep.subr.mxu0 0.0
    %1626 = vmatpush2.msra.mxu0 0.0
    %1627 = vmatprep.subr.mxu0 0.0
    %1628 = vmatpush2.msra.mxu0 0.0
    %1629 = vmatprep.subr.mxu0 0.0
    %1630 = vmatpush2.msra.mxu0 0.0
    %1631 = vmatprep.subr.mxu0 0.0
    %1632 = vmatpush2.msra.mxu0 0.0
    %1633 = vmatprep.subr.mxu0 0.0
    %1634 = vmatpush2.msra.mxu0 0.0
    %1635 = vmatprep.subr.mxu0 0.0
    %1636 = vmatpush2.msra.mxu0 0.0
    %1637 = vmatprep.subr.mxu0 0.0
    %1638 = vmatpush2.msra.mxu0 0.0
    %1639 = vmatprep.subr.mxu0 0.0
    %1640 = vmatpush2.msra.mxu0 0.0
    %1641 = vmatprep.mubr.f32.mxu0 0.0
    %1642 = vmatmul.mubr.f32.gmra.mxu0 %v1566
    %v1643 = vpop.f32.mrf.mxu0
    %v1644 = vadd.f32 %v1564, %v1643
    %v1645 = vpop.f32.mrf.mxu0
    %1646 = vmatprep.mubr.f32.mxu0 0.0
    %1647 = vmatmul.mubr.f32.gmra.mxu0 %v1569
    %v1648 = vpop.f32.mrf.mxu0
    %v1649 = vadd.f32 %v1564, %v1648
    %v1650 = vpop.f32.mrf.mxu0
    %1651 = vmatprep.mubr.f32.mxu0 0.0
    %1652 = vmatmul.mubr.f32.gmra.mxu0 %v1572
    %v1653 = vpop.f32.mrf.mxu0
    %v1654 = vadd.f32 %v1564, %v1653
    %v1655 = vpop.f32.mrf.mxu0
    %1656 = vmatprep.mubr.f32.mxu0 0.0
    %1657 = vmatmul.mubr.f32.gmra.mxu0 %v1575
    %v1658 = vpop.f32.mrf.mxu0
    %v1659 = vadd.f32 %v1564, %v1658
    %v1660 = vpop.f32.mrf.mxu0
    %1661 = vdwg.mxu0
    %v1662 = vmul.f32 %v1644, 0.5
    %v1663 = vmul.f32 %v1649, 0.5
    %v1664 = vmul.f32 %v1654, 0.5
    %v1665 = vmul.f32 %v1659, 0.5
    %v1666 = vmul.f32 %v1644, 0.70710677
    %v1667 = vmul.f32 %v1649, 0.70710677
    %v1668 = vmul.f32 %v1654, 0.70710677
    %v1669 = vmul.f32 %v1659, 0.70710677
    %v1670 = verf.f32.pop %v1666
    %v1671 = verf.f32.pop %v1667
    %v1672 = verf.f32.pop %v1668
    %v1673 = verf.f32.pop %v1669
    %v1674 = vadd.f32 %v1670, 1.0
    %v1675 = vadd.f32 %v1671, 1.0
    %v1676 = vadd.f32 %v1672, 1.0
    %v1677 = vadd.f32 %v1673, 1.0
    %v1678 = vmul.f32 %v1662, %v1674
    %v1679 = vmul.f32 %v1663, %v1675
    %v1680 = vmul.f32 %v1664, %v1676
    %v1681 = vmul.f32 %v1665, %v1677
    %vm1682 = vcmask 523264
    %v1684 = vsel %vm1682, %v1678, 0
    %v1687 = vsel %vm1682, %v1679, 0
    %v1690 = vsel %vm1682, %v1680, 0
    %v1693 = vsel %vm1682, %v1681, 0
    %1695 = vmatprep.subr.mxu0 0.0
    %1696 = vmatpush1.msra.mxu0 0.0
    %1697 = vmatprep.subr.mxu0 0.0
    %1698 = vmatpush1.msra.mxu0 0.0
    %1699 = vmatprep.subr.mxu0 0.0
    %1700 = vmatpush1.msra.mxu0 0.0
    %1701 = vmatprep.subr.mxu0 0.0
    %1702 = vmatpush1.msra.mxu0 0.0
    %1703 = vmatprep.subr.mxu0 0.0
    %1704 = vmatpush1.msra.mxu0 0.0
    %1705 = vmatprep.subr.mxu0 0.0
    %1706 = vmatpush1.msra.mxu0 0.0
    %1707 = vmatprep.subr.mxu0 0.0
    %1708 = vmatpush1.msra.mxu0 0.0
    %1709 = vmatprep.subr.mxu0 0.0
    %1710 = vmatpush1.msra.mxu0 0.0
    %1711 = vmatprep.subr.mxu0 0.0
    %1712 = vmatpush1.msra.mxu0 %v1492
    %1713 = vmatprep.subr.mxu0 0.0
    %1714 = vmatpush1.msra.mxu0 %v1491
    %1715 = vmatprep.subr.mxu0 0.0
    %1716 = vmatpush1.msra.mxu0 %v1490
    %1717 = vmatprep.subr.mxu0 0.0
    %1718 = vmatpush1.msra.mxu0 %v1489
    %1719 = vmatprep.subr.mxu0 0.0
    %1720 = vmatpush1.msra.mxu0 %v1488
    %1721 = vmatprep.subr.mxu0 0.0
    %1722 = vmatpush1.msra.mxu0 %v1487
    %1723 = vmatprep.subr.mxu0 0.0
    %1724 = vmatpush1.msra.mxu0 %v1486
    %1725 = vmatprep.subr.mxu0 0.0
    %1726 = vmatpush1.msra.mxu0 %v1485
    %1727 = vmatprep.subr.mxu0 0.0
    %1728 = vmatpush2.msra.mxu0 0.0
    %1729 = vmatprep.subr.mxu0 0.0
    %1730 = vmatpush2.msra.mxu0 0.0
    %1731 = vmatprep.subr.mxu0 0.0
    %1732 = vmatpush2.msra.mxu0 0.0
    %1733 = vmatprep.subr.mxu0 0.0
    %1734 = vmatpush2.msra.mxu0 0.0
    %1735 = vmatprep.subr.mxu0 0.0
    %1736 = vmatpush2.msra.mxu0 0.0
    %1737 = vmatprep.subr.mxu0 0.0
    %1738 = vmatpush2.msra.mxu0 0.0
    %1739 = vmatprep.subr.mxu0 0.0
    %1740 = vmatpush2.msra.mxu0 0.0
    %1741 = vmatprep.subr.mxu0 0.0
    %1742 = vmatpush2.msra.mxu0 0.0
    %1743 = vmatprep.subr.mxu0 0.0
    %1744 = vmatpush2.msra.mxu0 0.0
    %1745 = vmatprep.subr.mxu0 0.0
    %1746 = vmatpush2.msra.mxu0 0.0
    %1747 = vmatprep.subr.mxu0 0.0
    %1748 = vmatpush2.msra.mxu0 0.0
    %1749 = vmatprep.subr.mxu0 0.0
    %1750 = vmatpush2.msra.mxu0 0.0
    %1751 = vmatprep.subr.mxu0 0.0
    %1752 = vmatpush2.msra.mxu0 0.0
    %1753 = vmatprep.subr.mxu0 0.0
    %1754 = vmatpush2.msra.mxu0 0.0
    %1755 = vmatprep.subr.mxu0 0.0
    %1756 = vmatpush2.msra.mxu0 0.0
    %1757 = vmatprep.subr.mxu0 0.0
    %1758 = vmatpush2.msra.mxu0 0.0
    %1759 = vmatprep.mubr.f32.mxu0 0.0
    %1760 = vmatmul.mubr.f32.gmra.mxu0 %v1684
    %v1761 = vpop.f32.mrf.mxu0
    %v1762 = vadd.f32 0.0, %v1761
    %v1763 = vpop.f32.mrf.mxu0
    %1764 = vmatprep.mubr.f32.mxu0 0.0
    %1765 = vmatmul.mubr.f32.gmra.mxu0 %v1687
    %v1766 = vpop.f32.mrf.mxu0
    %v1767 = vadd.f32 0.0, %v1766
    %v1768 = vpop.f32.mrf.mxu0
    %1769 = vmatprep.mubr.f32.mxu0 0.0
    %1770 = vmatmul.mubr.f32.gmra.mxu0 %v1690
    %v1771 = vpop.f32.mrf.mxu0
    %v1772 = vadd.f32 0.0, %v1771
    %v1773 = vpop.f32.mrf.mxu0
    %1774 = vmatprep.mubr.f32.mxu0 0.0
    %1775 = vmatmul.mubr.f32.gmra.mxu0 %v1693
    %v1776 = vpop.f32.mrf.mxu0
    %v1777 = vadd.f32 0.0, %v1776
    %v1778 = vpop.f32.mrf.mxu0
    %1779 = vdwg.mxu0
    %v1780 = vadd.f32 %v1473, %v1762
    %v1781 = vadd.f32 %v1474, %v1767
    %v1782 = vadd.f32 %v1475, %v1772
    %v1783 = vadd.f32 %v1476, %v1777
    %v1784 = vlaneseq
    %v1785 = vshrl.u32 %v1784, 7
    %v1786 = vsub.s32 0, %v1785
    %v1787 = vrot.slane %v1480, %v1786
    %v1788 = vadd.f32 %v1780, %v1787
    %v1789 = vadd.f32 %v1781, %v1787
    %v1790 = vadd.f32 %v1782, %v1787
    %v1791 = vadd.f32 %v1783, %v1787
    %v1792 = vld [vmem:[%s5 + $0x3] sm:$0x1]
    %v1793 = vld [vmem:[%s5 + $0x4] sm:$0x1]
    %v1794 = vld [vmem:[%s5 + $0x5] sm:$0x1]
    %s1795 = scalar_lea.vmem %s2, 32
    %v1796 = vld [vmem:[%s1795] sm:$0xff]
    %v1797 = vld [vmem:[%s1795 + $0x8] sm:$0xff]
    %v1798 = vld [vmem:[%s1795 + $0x10] sm:$0xff]
    %v1799 = vld [vmem:[%s1795 + $0x18] sm:$0xff]
    %v1800 = vsel %vm46, %v1788, 0.0
    %1801 = vadd.xlane.f32.xlu0 %v1800
    %v1802 = vpop.xlane.xlu0 %1801
    %v1803 = vsel %vm46, %v1789, 0.0
    %1804 = vadd.xlane.f32.xlu0 %v1803
    %v1805 = vpop.xlane.xlu0 %1804
    %v1806 = vsel %vm46, %v1790, 0.0
    %1807 = vadd.xlane.f32.xlu0 %v1806
    %v1808 = vpop.xlane.xlu0 %1807
    %v1809 = vsel %vm46, %v1791, 0.0
    %1810 = vadd.xlane.f32.xlu0 %v1809
    %v1811 = vpop.xlane.xlu0 %1810
    %v1812 = vmul.f32 %v1802, %v59
    %v1813 = vmul.f32 %v1805, %v59
    %v1814 = vmul.f32 %v1808, %v59
    %v1815 = vmul.f32 %v1811, %v59
    %v1816 = vsub.f32 %v1788, %v1812
    %v1817 = vsub.f32 %v1789, %v1813
    %v1818 = vsub.f32 %v1790, %v1814
    %v1819 = vsub.f32 %v1791, %v1815
    %v1820 = vmul.f32 %v1816, %v1816
    %v1821 = vmul.f32 %v1817, %v1817
    %v1822 = vmul.f32 %v1818, %v1818
    %v1823 = vmul.f32 %v1819, %v1819
    %v1824 = vsel %vm46, %v1820, 0.0
    %1825 = vadd.xlane.f32.xlu0 %v1824
    %v1826 = vpop.xlane.xlu0 %1825
    %v1827 = vsel %vm46, %v1821, 0.0
    %1828 = vadd.xlane.f32.xlu0 %v1827
    %v1829 = vpop.xlane.xlu0 %1828
    %v1830 = vsel %vm46, %v1822, 0.0
    %1831 = vadd.xlane.f32.xlu0 %v1830
    %v1832 = vpop.xlane.xlu0 %1831
    %v1833 = vsel %vm46, %v1823, 0.0
    %1834 = vadd.xlane.f32.xlu0 %v1833
    %v1835 = vpop.xlane.xlu0 %1834
    %v1836 = vmul.f32 %v1826, %v59
    %v1837 = vmul.f32 %v1829, %v59
    %v1838 = vmul.f32 %v1832, %v59
    %v1839 = vmul.f32 %v1835, %v59
    %v1840 = vadd.f32 %v1836, 1e-05
    %v1841 = vadd.f32 %v1837, 1e-05
    %v1842 = vadd.f32 %v1838, 1e-05
    %v1843 = vadd.f32 %v1839, 1e-05
    %v1844 = vrsqrt.pop %v1840
    %v1845 = vrsqrt.pop %v1841
    %v1846 = vrsqrt.pop %v1842
    %v1847 = vrsqrt.pop %v1843
    %v1848 = vmul.f32 %v1816, %v1844
    %v1849 = vmul.f32 %v1817, %v1845
    %v1850 = vmul.f32 %v1818, %v1846
    %v1851 = vmul.f32 %v1819, %v1847
    %v1852 = vlaneseq
    %v1853 = vshrl.u32 %v1852, 7
    %v1854 = vsub.s32 0, %v1853
    %v1855 = vrot.slane %v1792, %v1854
    %v1856 = vmul.f32 %v1848, %v1855
    %v1857 = vmul.f32 %v1849, %v1855
    %v1858 = vmul.f32 %v1850, %v1855
    %v1859 = vmul.f32 %v1851, %v1855
    %v1860 = vlaneseq
    %v1861 = vshrl.u32 %v1860, 7
    %v1862 = vsub.s32 0, %v1861
    %v1863 = vrot.slane %v1793, %v1862
    %v1864 = vadd.f32 %v1856, %v1863
    %v1865 = vadd.f32 %v1857, %v1863
    %v1866 = vadd.f32 %v1858, %v1863
    %v1867 = vadd.f32 %v1859, %v1863
    %v1869 = vsel %vm46, %v1864, 0
    %v1872 = vsel %vm46, %v1865, 0
    %v1875 = vsel %vm46, %v1866, 0
    %v1878 = vsel %vm46, %v1867, 0
    %1880 = vmatprep.subr.mxu0 0.0
    %1881 = vmatpush1.msra.mxu0 0.0
    %1882 = vmatprep.subr.mxu0 0.0
    %1883 = vmatpush1.msra.mxu0 0.0
    %1884 = vmatprep.subr.mxu0 0.0
    %1885 = vmatpush1.msra.mxu0 0.0
    %1886 = vmatprep.subr.mxu0 0.0
    %1887 = vmatpush1.msra.mxu0 0.0
    %1888 = vmatprep.subr.mxu0 0.0
    %1889 = vmatpush1.msra.mxu0 0.0
    %1890 = vmatprep.subr.mxu0 0.0
    %1891 = vmatpush1.msra.mxu0 0.0
    %1892 = vmatprep.subr.mxu0 0.0
    %1893 = vmatpush1.msra.mxu0 0.0
    %1894 = vmatprep.subr.mxu0 0.0
    %1895 = vmatpush1.msra.mxu0 0.0
    %1896 = vmatprep.subr.mxu0 0.0
    %1897 = vmatpush1.msra.mxu0 0.0
    %1898 = vmatprep.subr.mxu0 0.0
    %1899 = vmatpush1.msra.mxu0 0.0
    %1900 = vmatprep.subr.mxu0 0.0
    %1901 = vmatpush1.msra.mxu0 0.0
    %1902 = vmatprep.subr.mxu0 0.0
    %1903 = vmatpush1.msra.mxu0 0.0
    %1904 = vmatprep.subr.mxu0 0.0
    %1905 = vmatpush1.msra.mxu0 %v1799
    %1906 = vmatprep.subr.mxu0 0.0
    %1907 = vmatpush1.msra.mxu0 %v1798
    %1908 = vmatprep.subr.mxu0 0.0
    %1909 = vmatpush1.msra.mxu0 %v1797
    %1910 = vmatprep.subr.mxu0 0.0
    %1911 = vmatpush1.msra.mxu0 %v1796
    %1912 = vmatprep.subr.mxu0 0.0
    %1913 = vmatpush2.msra.mxu0 0.0
    %1914 = vmatprep.subr.mxu0 0.0
    %1915 = vmatpush2.msra.mxu0 0.0
    %1916 = vmatprep.subr.mxu0 0.0
    %1917 = vmatpush2.msra.mxu0 0.0
    %1918 = vmatprep.subr.mxu0 0.0
    %1919 = vmatpush2.msra.mxu0 0.0
    %1920 = vmatprep.subr.mxu0 0.0
    %1921 = vmatpush2.msra.mxu0 0.0
    %1922 = vmatprep.subr.mxu0 0.0
    %1923 = vmatpush2.msra.mxu0 0.0
    %1924 = vmatprep.subr.mxu0 0.0
    %1925 = vmatpush2.msra.mxu0 0.0
    %1926 = vmatprep.subr.mxu0 0.0
    %1927 = vmatpush2.msra.mxu0 0.0
    %1928 = vmatprep.subr.mxu0 0.0
    %1929 = vmatpush2.msra.mxu0 0.0
    %1930 = vmatprep.subr.mxu0 0.0
    %1931 = vmatpush2.msra.mxu0 0.0
    %1932 = vmatprep.subr.mxu0 0.0
    %1933 = vmatpush2.msra.mxu0 0.0
    %1934 = vmatprep.subr.mxu0 0.0
    %1935 = vmatpush2.msra.mxu0 0.0
    %1936 = vmatprep.subr.mxu0 0.0
    %1937 = vmatpush2.msra.mxu0 0.0
    %1938 = vmatprep.subr.mxu0 0.0
    %1939 = vmatpush2.msra.mxu0 0.0
    %1940 = vmatprep.subr.mxu0 0.0
    %1941 = vmatpush2.msra.mxu0 0.0
    %1942 = vmatprep.subr.mxu0 0.0
    %1943 = vmatpush2.msra.mxu0 0.0
    %1944 = vmatprep.mubr.f32.mxu0 0.0
    %1945 = vmatmul.mubr.f32.gmra.mxu0 %v1869
    %v1946 = vpop.f32.mrf.mxu0
    %v1947 = vadd.f32 0.0, %v1946
    %v1948 = vpop.f32.mrf.mxu0
    %1949 = vmatprep.mubr.f32.mxu0 0.0
    %1950 = vmatmul.mubr.f32.gmra.mxu0 %v1872
    %v1951 = vpop.f32.mrf.mxu0
    %v1952 = vadd.f32 0.0, %v1951
    %v1953 = vpop.f32.mrf.mxu0
    %1954 = vmatprep.mubr.f32.mxu0 0.0
    %1955 = vmatmul.mubr.f32.gmra.mxu0 %v1875
    %v1956 = vpop.f32.mrf.mxu0
    %v1957 = vadd.f32 0.0, %v1956
    %v1958 = vpop.f32.mrf.mxu0
    %1959 = vmatprep.mubr.f32.mxu0 0.0
    %1960 = vmatmul.mubr.f32.gmra.mxu0 %v1878
    %v1961 = vpop.f32.mrf.mxu0
    %v1962 = vadd.f32 0.0, %v1961
    %v1963 = vpop.f32.mrf.mxu0
    %1964 = vdwg.mxu0
    %1969 = vrot.lane.b32.xlu0 %v1947, 96
    %v1970 = vpop.permute.xlu0 %1969
    %1971 = vrot.lane.b32.xlu0 %v1952, 96
    %v1972 = vpop.permute.xlu0 %1971
    %1973 = vrot.lane.b32.xlu0 %v1957, 96
    %v1974 = vpop.permute.xlu0 %1973
    %1975 = vrot.lane.b32.xlu0 %v1962, 96
    %v1976 = vpop.permute.xlu0 %1975
    %v1977 = vsel %vm225, %v1947, 0
    %v1979 = vsel %vm225, %v1952, 0
    %v1981 = vsel %vm225, %v1957, 0
    %v1983 = vsel %vm225, %v1962, 0
    %v1985 = vsel %vm225, %v1970, 0
    %v1987 = vsel %vm225, %v1972, 0
    %v1989 = vsel %vm225, %v1974, 0
    %v1991 = vsel %vm225, %v1976, 0
    %1993 = vmatprep.subr.mxu0 0.0
    %1994 = vmatpush1.xpose.msra.mxu0 0.0
    %1995 = vmatprep.subr.mxu0 0.0
    %1996 = vmatpush1.xpose.msra.mxu0 0.0
    %1997 = vmatprep.subr.mxu0 0.0
    %1998 = vmatpush1.xpose.msra.mxu0 0.0
    %1999 = vmatprep.subr.mxu0 0.0
    %2000 = vmatpush1.xpose.msra.mxu0 0.0
    %2001 = vmatprep.subr.mxu0 0.0
    %2002 = vmatpush1.xpose.msra.mxu0 0.0
    %2003 = vmatprep.subr.mxu0 0.0
    %2004 = vmatpush1.xpose.msra.mxu0 0.0
    %2005 = vmatprep.subr.mxu0 0.0
    %2006 = vmatpush1.xpose.msra.mxu0 0.0
    %2007 = vmatprep.subr.mxu0 0.0
    %2008 = vmatpush1.xpose.msra.mxu0 0.0
    %2009 = vmatprep.subr.mxu0 0.0
    %2010 = vmatpush1.xpose.msra.mxu0 0.0
    %2011 = vmatprep.subr.mxu0 0.0
    %2012 = vmatpush1.xpose.msra.mxu0 0.0
    %2013 = vmatprep.subr.mxu0 0.0
    %2014 = vmatpush1.xpose.msra.mxu0 0.0
    %2015 = vmatprep.subr.mxu0 0.0
    %2016 = vmatpush1.xpose.msra.mxu0 0.0
    %2017 = vmatprep.subr.mxu0 0.0
    %2018 = vmatpush1.xpose.msra.mxu0 %v1991
    %2019 = vmatprep.subr.mxu0 0.0
    %2020 = vmatpush1.xpose.msra.mxu0 %v1989
    %2021 = vmatprep.subr.mxu0 0.0
    %2022 = vmatpush1.xpose.msra.mxu0 %v1987
    %2023 = vmatprep.subr.mxu0 0.0
    %2024 = vmatpush1.xpose.msra.mxu0 %v1985
    %2025 = vmatprep.subr.mxu0 0.0
    %2026 = vmatpush2.xpose.msra.mxu0 0.0
    %2027 = vmatprep.subr.mxu0 0.0
    %2028 = vmatpush2.xpose.msra.mxu0 0.0
    %2029 = vmatprep.subr.mxu0 0.0
    %2030 = vmatpush2.xpose.msra.mxu0 0.0
    %2031 = vmatprep.subr.mxu0 0.0
    %2032 = vmatpush2.xpose.msra.mxu0 0.0
    %2033 = vmatprep.subr.mxu0 0.0
    %2034 = vmatpush2.xpose.msra.mxu0 0.0
    %2035 = vmatprep.subr.mxu0 0.0
    %2036 = vmatpush2.xpose.msra.mxu0 0.0
    %2037 = vmatprep.subr.mxu0 0.0
    %2038 = vmatpush2.xpose.msra.mxu0 0.0
    %2039 = vmatprep.subr.mxu0 0.0
    %2040 = vmatpush2.xpose.msra.mxu0 0.0
    %2041 = vmatprep.subr.mxu0 0.0
    %2042 = vmatpush2.xpose.msra.mxu0 0.0
    %2043 = vmatprep.subr.mxu0 0.0
    %2044 = vmatpush2.xpose.msra.mxu0 0.0
    %2045 = vmatprep.subr.mxu0 0.0
    %2046 = vmatpush2.xpose.msra.mxu0 0.0
    %2047 = vmatprep.subr.mxu0 0.0
    %2048 = vmatpush2.xpose.msra.mxu0 0.0
    %2049 = vmatprep.subr.mxu0 0.0
    %2050 = vmatpush2.xpose.msra.mxu0 0.0
    %2051 = vmatprep.subr.mxu0 0.0
    %2052 = vmatpush2.xpose.msra.mxu0 0.0
    %2053 = vmatprep.subr.mxu0 0.0
    %2054 = vmatpush2.xpose.msra.mxu0 0.0
    %2055 = vmatprep.subr.mxu0 0.0
    %2056 = vmatpush2.xpose.msra.mxu0 0.0
    %2057 = vmatprep.mubr.f32.mxu0 0.0
    %2058 = vmatmul.mubr.f32.gmra.mxu0 %v1977
    %v2059 = vpop.f32.mrf.mxu0
    %v2060 = vadd.f32 %v27, %v2059
    %v2061 = vpop.f32.mrf.mxu0
    %2062 = vmatprep.mubr.f32.mxu0 0.0
    %2063 = vmatmul.mubr.f32.gmra.mxu0 %v1979
    %v2064 = vpop.f32.mrf.mxu0
    %v2065 = vadd.f32 %v28, %v2064
    %v2066 = vpop.f32.mrf.mxu0
    %2067 = vmatprep.mubr.f32.mxu0 0.0
    %2068 = vmatmul.mubr.f32.gmra.mxu0 %v1981
    %v2069 = vpop.f32.mrf.mxu0
    %v2070 = vadd.f32 %v29, %v2069
    %v2071 = vpop.f32.mrf.mxu0
    %2072 = vmatprep.mubr.f32.mxu0 0.0
    %2073 = vmatmul.mubr.f32.gmra.mxu0 %v1983
    %v2074 = vpop.f32.mrf.mxu0
    %v2075 = vadd.f32 %v30, %v2074
    %v2076 = vpop.f32.mrf.mxu0
    %2077 = vdwg.mxu0
    %v2078 = vsel %vm46, %v2060, -inf
    %2079 = vmax.xlane.f32.xlu0 %v2078
    %v2080 = vpop.xlane.xlu0 %2079
    %v2081 = vsel %vm46, %v2065, -inf
    %2082 = vmax.xlane.f32.xlu0 %v2081
    %v2083 = vpop.xlane.xlu0 %2082
    %v2084 = vsel %vm46, %v2070, -inf
    %2085 = vmax.xlane.f32.xlu0 %v2084
    %v2086 = vpop.xlane.xlu0 %2085
    %v2087 = vsel %vm46, %v2075, -inf
    %2088 = vmax.xlane.f32.xlu0 %v2087
    %v2089 = vpop.xlane.xlu0 %2088
    %v2090 = vsub.f32 %v2060, %v2080
    %v2091 = vsub.f32 %v2065, %v2083
    %v2092 = vsub.f32 %v2070, %v2086
    %v2093 = vsub.f32 %v2075, %v2089
    %v2094 = vmul.f32 %v2090, 1.442695
    %v2095 = vpow.pop %v2094
    %v2096 = vmul.f32 %v2091, 1.442695
    %v2097 = vpow.pop %v2096
    %v2098 = vmul.f32 %v2092, 1.442695
    %v2099 = vpow.pop %v2098
    %v2100 = vmul.f32 %v2093, 1.442695
    %v2101 = vpow.pop %v2100
    %v2102 = vsel %vm46, %v2095, 0.0
    %2103 = vadd.xlane.f32.xlu0 %v2102
    %v2104 = vpop.xlane.xlu0 %2103
    %v2105 = vsel %vm46, %v2097, 0.0
    %2106 = vadd.xlane.f32.xlu0 %v2105
    %v2107 = vpop.xlane.xlu0 %2106
    %v2108 = vsel %vm46, %v2099, 0.0
    %2109 = vadd.xlane.f32.xlu0 %v2108
    %v2110 = vpop.xlane.xlu0 %2109
    %v2111 = vsel %vm46, %v2101, 0.0
    %2112 = vadd.xlane.f32.xlu0 %v2111
    %v2113 = vpop.xlane.xlu0 %2112
    %v2114 = vrcp.pop %v2104
    %v2115 = vmul.f32 %v2095, %v2114
    %v2116 = vrcp.pop %v2107
    %v2117 = vmul.f32 %v2097, %v2116
    %v2118 = vrcp.pop %v2110
    %v2119 = vmul.f32 %v2099, %v2118
    %v2120 = vrcp.pop %v2113
    %v2121 = vmul.f32 %v2101, %v2120
    %2122 = vrot.lane.b32.xlu0 %v1947, 64
    %v2123 = vpop.permute.xlu0 %2122
    %2124 = vrot.lane.b32.xlu0 %v1952, 64
    %v2125 = vpop.permute.xlu0 %2124
    %2126 = vrot.lane.b32.xlu0 %v1957, 64
    %v2127 = vpop.permute.xlu0 %2126
    %2128 = vrot.lane.b32.xlu0 %v1962, 64
    %v2129 = vpop.permute.xlu0 %2128
    %v2135 = vsel %vm46, %v2115, 0
    %v2138 = vsel %vm46, %v2117, 0
    %v2141 = vsel %vm46, %v2119, 0
    %v2144 = vsel %vm46, %v2121, 0
    %2146 = vmatprep.subr.mxu0 0.0
    %2147 = vmatpush1.msra.mxu0 0.0
    %2148 = vmatprep.subr.mxu0 0.0
    %2149 = vmatpush1.msra.mxu0 0.0
    %2150 = vmatprep.subr.mxu0 0.0
    %2151 = vmatpush1.msra.mxu0 0.0
    %2152 = vmatprep.subr.mxu0 0.0
    %2153 = vmatpush1.msra.mxu0 0.0
    %2154 = vmatprep.subr.mxu0 0.0
    %2155 = vmatpush1.msra.mxu0 0.0
    %2156 = vmatprep.subr.mxu0 0.0
    %2157 = vmatpush1.msra.mxu0 0.0
    %2158 = vmatprep.subr.mxu0 0.0
    %2159 = vmatpush1.msra.mxu0 0.0
    %2160 = vmatprep.subr.mxu0 0.0
    %2161 = vmatpush1.msra.mxu0 0.0
    %2162 = vmatprep.subr.mxu0 0.0
    %2163 = vmatpush1.msra.mxu0 0.0
    %2164 = vmatprep.subr.mxu0 0.0
    %2165 = vmatpush1.msra.mxu0 0.0
    %2166 = vmatprep.subr.mxu0 0.0
    %2167 = vmatpush1.msra.mxu0 0.0
    %2168 = vmatprep.subr.mxu0 0.0
    %2169 = vmatpush1.msra.mxu0 0.0
    %2170 = vmatprep.subr.mxu0 0.0
    %2171 = vmatpush1.msra.mxu0 %v2129
    %2172 = vmatprep.subr.mxu0 0.0
    %2173 = vmatpush1.msra.mxu0 %v2127
    %2174 = vmatprep.subr.mxu0 0.0
    %2175 = vmatpush1.msra.mxu0 %v2125
    %2176 = vmatprep.subr.mxu0 0.0
    %2177 = vmatpush1.msra.mxu0 %v2123
    %2178 = vmatprep.subr.mxu0 0.0
    %2179 = vmatpush2.msra.mxu0 0.0
    %2180 = vmatprep.subr.mxu0 0.0
    %2181 = vmatpush2.msra.mxu0 0.0
    %2182 = vmatprep.subr.mxu0 0.0
    %2183 = vmatpush2.msra.mxu0 0.0
    %2184 = vmatprep.subr.mxu0 0.0
    %2185 = vmatpush2.msra.mxu0 0.0
    %2186 = vmatprep.subr.mxu0 0.0
    %2187 = vmatpush2.msra.mxu0 0.0
    %2188 = vmatprep.subr.mxu0 0.0
    %2189 = vmatpush2.msra.mxu0 0.0
    %2190 = vmatprep.subr.mxu0 0.0
    %2191 = vmatpush2.msra.mxu0 0.0
    %2192 = vmatprep.subr.mxu0 0.0
    %2193 = vmatpush2.msra.mxu0 0.0
    %2194 = vmatprep.subr.mxu0 0.0
    %2195 = vmatpush2.msra.mxu0 0.0
    %2196 = vmatprep.subr.mxu0 0.0
    %2197 = vmatpush2.msra.mxu0 0.0
    %2198 = vmatprep.subr.mxu0 0.0
    %2199 = vmatpush2.msra.mxu0 0.0
    %2200 = vmatprep.subr.mxu0 0.0
    %2201 = vmatpush2.msra.mxu0 0.0
    %2202 = vmatprep.subr.mxu0 0.0
    %2203 = vmatpush2.msra.mxu0 0.0
    %2204 = vmatprep.subr.mxu0 0.0
    %2205 = vmatpush2.msra.mxu0 0.0
    %2206 = vmatprep.subr.mxu0 0.0
    %2207 = vmatpush2.msra.mxu0 0.0
    %2208 = vmatprep.subr.mxu0 0.0
    %2209 = vmatpush2.msra.mxu0 0.0
    %2210 = vmatprep.mubr.f32.mxu0 0.0
    %2211 = vmatmul.mubr.f32.gmra.mxu0 %v2135
    %v2212 = vpop.f32.mrf.mxu0
    %v2213 = vadd.f32 0.0, %v2212
    %v2214 = vpop.f32.mrf.mxu0
    %2215 = vmatprep.mubr.f32.mxu0 0.0
    %2216 = vmatmul.mubr.f32.gmra.mxu0 %v2138
    %v2217 = vpop.f32.mrf.mxu0
    %v2218 = vadd.f32 0.0, %v2217
    %v2219 = vpop.f32.mrf.mxu0
    %2220 = vmatprep.mubr.f32.mxu0 0.0
    %2221 = vmatmul.mubr.f32.gmra.mxu0 %v2141
    %v2222 = vpop.f32.mrf.mxu0
    %v2223 = vadd.f32 0.0, %v2222
    %v2224 = vpop.f32.mrf.mxu0
    %2225 = vmatprep.mubr.f32.mxu0 0.0
    %2226 = vmatmul.mubr.f32.gmra.mxu0 %v2144
    %v2227 = vpop.f32.mrf.mxu0
    %v2228 = vadd.f32 0.0, %v2227
    %v2229 = vpop.f32.mrf.mxu0
    %2230 = vdwg.mxu0
    %2231 = vrot.lane.b32.xlu0 %v1947, 120
    %v2232 = vpop.permute.xlu0 %2231
    %2233 = vrot.lane.b32.xlu0 %v1952, 120
    %v2234 = vpop.permute.xlu0 %2233
    %2235 = vrot.lane.b32.xlu0 %v1957, 120
    %v2236 = vpop.permute.xlu0 %2235
    %2237 = vrot.lane.b32.xlu0 %v1962, 120
    %v2238 = vpop.permute.xlu0 %2237
    %2239 = vrot.lane.b32.xlu0 %v1947, 88
    %v2240 = vpop.permute.xlu0 %2239
    %2241 = vrot.lane.b32.xlu0 %v1952, 88
    %v2242 = vpop.permute.xlu0 %2241
    %2243 = vrot.lane.b32.xlu0 %v1957, 88
    %v2244 = vpop.permute.xlu0 %2243
    %2245 = vrot.lane.b32.xlu0 %v1962, 88
    %v2246 = vpop.permute.xlu0 %2245
    %v2247 = vsel %vm225, %v2232, 0
    %v2249 = vsel %vm225, %v2234, 0
    %v2251 = vsel %vm225, %v2236, 0
    %v2253 = vsel %vm225, %v2238, 0
    %v2255 = vsel %vm225, %v2240, 0
    %v2257 = vsel %vm225, %v2242, 0
    %v2259 = vsel %vm225, %v2244, 0
    %v2261 = vsel %vm225, %v2246, 0
    %2263 = vmatprep.subr.mxu0 0.0
    %2264 = vmatpush1.xpose.msra.mxu0 0.0
    %2265 = vmatprep.subr.mxu0 0.0
    %2266 = vmatpush1.xpose.msra.mxu0 0.0
    %2267 = vmatprep.subr.mxu0 0.0
    %2268 = vmatpush1.xpose.msra.mxu0 0.0
    %2269 = vmatprep.subr.mxu0 0.0
    %2270 = vmatpush1.xpose.msra.mxu0 0.0
    %2271 = vmatprep.subr.mxu0 0.0
    %2272 = vmatpush1.xpose.msra.mxu0 0.0
    %2273 = vmatprep.subr.mxu0 0.0
    %2274 = vmatpush1.xpose.msra.mxu0 0.0
    %2275 = vmatprep.subr.mxu0 0.0
    %2276 = vmatpush1.xpose.msra.mxu0 0.0
    %2277 = vmatprep.subr.mxu0 0.0
    %2278 = vmatpush1.xpose.msra.mxu0 0.0
    %2279 = vmatprep.subr.mxu0 0.0
    %2280 = vmatpush1.xpose.msra.mxu0 0.0
    %2281 = vmatprep.subr.mxu0 0.0
    %2282 = vmatpush1.xpose.msra.mxu0 0.0
    %2283 = vmatprep.subr.mxu0 0.0
    %2284 = vmatpush1.xpose.msra.mxu0 0.0
    %2285 = vmatprep.subr.mxu0 0.0
    %2286 = vmatpush1.xpose.msra.mxu0 0.0
    %2287 = vmatprep.subr.mxu0 0.0
    %2288 = vmatpush1.xpose.msra.mxu0 %v2261
    %2289 = vmatprep.subr.mxu0 0.0
    %2290 = vmatpush1.xpose.msra.mxu0 %v2259
    %2291 = vmatprep.subr.mxu0 0.0
    %2292 = vmatpush1.xpose.msra.mxu0 %v2257
    %2293 = vmatprep.subr.mxu0 0.0
    %2294 = vmatpush1.xpose.msra.mxu0 %v2255
    %2295 = vmatprep.subr.mxu0 0.0
    %2296 = vmatpush2.xpose.msra.mxu0 0.0
    %2297 = vmatprep.subr.mxu0 0.0
    %2298 = vmatpush2.xpose.msra.mxu0 0.0
    %2299 = vmatprep.subr.mxu0 0.0
    %2300 = vmatpush2.xpose.msra.mxu0 0.0
    %2301 = vmatprep.subr.mxu0 0.0
    %2302 = vmatpush2.xpose.msra.mxu0 0.0
    %2303 = vmatprep.subr.mxu0 0.0
    %2304 = vmatpush2.xpose.msra.mxu0 0.0
    %2305 = vmatprep.subr.mxu0 0.0
    %2306 = vmatpush2.xpose.msra.mxu0 0.0
    %2307 = vmatprep.subr.mxu0 0.0
    %2308 = vmatpush2.xpose.msra.mxu0 0.0
    %2309 = vmatprep.subr.mxu0 0.0
    %2310 = vmatpush2.xpose.msra.mxu0 0.0
    %2311 = vmatprep.subr.mxu0 0.0
    %2312 = vmatpush2.xpose.msra.mxu0 0.0
    %2313 = vmatprep.subr.mxu0 0.0
    %2314 = vmatpush2.xpose.msra.mxu0 0.0
    %2315 = vmatprep.subr.mxu0 0.0
    %2316 = vmatpush2.xpose.msra.mxu0 0.0
    %2317 = vmatprep.subr.mxu0 0.0
    %2318 = vmatpush2.xpose.msra.mxu0 0.0
    %2319 = vmatprep.subr.mxu0 0.0
    %2320 = vmatpush2.xpose.msra.mxu0 0.0
    %2321 = vmatprep.subr.mxu0 0.0
    %2322 = vmatpush2.xpose.msra.mxu0 0.0
    %2323 = vmatprep.subr.mxu0 0.0
    %2324 = vmatpush2.xpose.msra.mxu0 0.0
    %2325 = vmatprep.subr.mxu0 0.0
    %2326 = vmatpush2.xpose.msra.mxu0 0.0
    %2327 = vmatprep.mubr.f32.mxu0 0.0
    %2328 = vmatmul.mubr.f32.gmra.mxu0 %v2247
    %v2329 = vpop.f32.mrf.mxu0
    %v2330 = vadd.f32 %v27, %v2329
    %v2331 = vpop.f32.mrf.mxu0
    %2332 = vmatprep.mubr.f32.mxu0 0.0
    %2333 = vmatmul.mubr.f32.gmra.mxu0 %v2249
    %v2334 = vpop.f32.mrf.mxu0
    %v2335 = vadd.f32 %v28, %v2334
    %v2336 = vpop.f32.mrf.mxu0
    %2337 = vmatprep.mubr.f32.mxu0 0.0
    %2338 = vmatmul.mubr.f32.gmra.mxu0 %v2251
    %v2339 = vpop.f32.mrf.mxu0
    %v2340 = vadd.f32 %v29, %v2339
    %v2341 = vpop.f32.mrf.mxu0
    %2342 = vmatprep.mubr.f32.mxu0 0.0
    %2343 = vmatmul.mubr.f32.gmra.mxu0 %v2253
    %v2344 = vpop.f32.mrf.mxu0
    %v2345 = vadd.f32 %v30, %v2344
    %v2346 = vpop.f32.mrf.mxu0
    %2347 = vdwg.mxu0
    %v2348 = vsel %vm46, %v2330, -inf
    %2349 = vmax.xlane.f32.xlu0 %v2348
    %v2350 = vpop.xlane.xlu0 %2349
    %v2351 = vsel %vm46, %v2335, -inf
    %2352 = vmax.xlane.f32.xlu0 %v2351
    %v2353 = vpop.xlane.xlu0 %2352
    %v2354 = vsel %vm46, %v2340, -inf
    %2355 = vmax.xlane.f32.xlu0 %v2354
    %v2356 = vpop.xlane.xlu0 %2355
    %v2357 = vsel %vm46, %v2345, -inf
    %2358 = vmax.xlane.f32.xlu0 %v2357
    %v2359 = vpop.xlane.xlu0 %2358
    %v2360 = vsub.f32 %v2330, %v2350
    %v2361 = vsub.f32 %v2335, %v2353
    %v2362 = vsub.f32 %v2340, %v2356
    %v2363 = vsub.f32 %v2345, %v2359
    %v2364 = vmul.f32 %v2360, 1.442695
    %v2365 = vpow.pop %v2364
    %v2366 = vmul.f32 %v2361, 1.442695
    %v2367 = vpow.pop %v2366
    %v2368 = vmul.f32 %v2362, 1.442695
    %v2369 = vpow.pop %v2368
    %v2370 = vmul.f32 %v2363, 1.442695
    %v2371 = vpow.pop %v2370
    %v2372 = vsel %vm46, %v2365, 0.0
    %2373 = vadd.xlane.f32.xlu0 %v2372
    %v2374 = vpop.xlane.xlu0 %2373
    %v2375 = vsel %vm46, %v2367, 0.0
    %2376 = vadd.xlane.f32.xlu0 %v2375
    %v2377 = vpop.xlane.xlu0 %2376
    %v2378 = vsel %vm46, %v2369, 0.0
    %2379 = vadd.xlane.f32.xlu0 %v2378
    %v2380 = vpop.xlane.xlu0 %2379
    %v2381 = vsel %vm46, %v2371, 0.0
    %2382 = vadd.xlane.f32.xlu0 %v2381
    %v2383 = vpop.xlane.xlu0 %2382
    %v2384 = vrcp.pop %v2374
    %v2385 = vmul.f32 %v2365, %v2384
    %v2386 = vrcp.pop %v2377
    %v2387 = vmul.f32 %v2367, %v2386
    %v2388 = vrcp.pop %v2380
    %v2389 = vmul.f32 %v2369, %v2388
    %v2390 = vrcp.pop %v2383
    %v2391 = vmul.f32 %v2371, %v2390
    %2392 = vrot.lane.b32.xlu0 %v1947, 56
    %v2393 = vpop.permute.xlu0 %2392
    %2394 = vrot.lane.b32.xlu0 %v1952, 56
    %v2395 = vpop.permute.xlu0 %2394
    %2396 = vrot.lane.b32.xlu0 %v1957, 56
    %v2397 = vpop.permute.xlu0 %2396
    %2398 = vrot.lane.b32.xlu0 %v1962, 56
    %v2399 = vpop.permute.xlu0 %2398
    %v2405 = vsel %vm46, %v2385, 0
    %v2408 = vsel %vm46, %v2387, 0
    %v2411 = vsel %vm46, %v2389, 0
    %v2414 = vsel %vm46, %v2391, 0
    %2416 = vmatprep.subr.mxu0 0.0
    %2417 = vmatpush1.msra.mxu0 0.0
    %2418 = vmatprep.subr.mxu0 0.0
    %2419 = vmatpush1.msra.mxu0 0.0
    %2420 = vmatprep.subr.mxu0 0.0
    %2421 = vmatpush1.msra.mxu0 0.0
    %2422 = vmatprep.subr.mxu0 0.0
    %2423 = vmatpush1.msra.mxu0 0.0
    %2424 = vmatprep.subr.mxu0 0.0
    %2425 = vmatpush1.msra.mxu0 0.0
    %2426 = vmatprep.subr.mxu0 0.0
    %2427 = vmatpush1.msra.mxu0 0.0
    %2428 = vmatprep.subr.mxu0 0.0
    %2429 = vmatpush1.msra.mxu0 0.0
    %2430 = vmatprep.subr.mxu0 0.0
    %2431 = vmatpush1.msra.mxu0 0.0
    %2432 = vmatprep.subr.mxu0 0.0
    %2433 = vmatpush1.msra.mxu0 0.0
    %2434 = vmatprep.subr.mxu0 0.0
    %2435 = vmatpush1.msra.mxu0 0.0
    %2436 = vmatprep.subr.mxu0 0.0
    %2437 = vmatpush1.msra.mxu0 0.0
    %2438 = vmatprep.subr.mxu0 0.0
    %2439 = vmatpush1.msra.mxu0 0.0
    %2440 = vmatprep.subr.mxu0 0.0
    %2441 = vmatpush1.msra.mxu0 %v2399
    %2442 = vmatprep.subr.mxu0 0.0
    %2443 = vmatpush1.msra.mxu0 %v2397
    %2444 = vmatprep.subr.mxu0 0.0
    %2445 = vmatpush1.msra.mxu0 %v2395
    %2446 = vmatprep.subr.mxu0 0.0
    %2447 = vmatpush1.msra.mxu0 %v2393
    %2448 = vmatprep.subr.mxu0 0.0
    %2449 = vmatpush2.msra.mxu0 0.0
    %2450 = vmatprep.subr.mxu0 0.0
    %2451 = vmatpush2.msra.mxu0 0.0
    %2452 = vmatprep.subr.mxu0 0.0
    %2453 = vmatpush2.msra.mxu0 0.0
    %2454 = vmatprep.subr.mxu0 0.0
    %2455 = vmatpush2.msra.mxu0 0.0
    %2456 = vmatprep.subr.mxu0 0.0
    %2457 = vmatpush2.msra.mxu0 0.0
    %2458 = vmatprep.subr.mxu0 0.0
    %2459 = vmatpush2.msra.mxu0 0.0
    %2460 = vmatprep.subr.mxu0 0.0
    %2461 = vmatpush2.msra.mxu0 0.0
    %2462 = vmatprep.subr.mxu0 0.0
    %2463 = vmatpush2.msra.mxu0 0.0
    %2464 = vmatprep.subr.mxu0 0.0
    %2465 = vmatpush2.msra.mxu0 0.0
    %2466 = vmatprep.subr.mxu0 0.0
    %2467 = vmatpush2.msra.mxu0 0.0
    %2468 = vmatprep.subr.mxu0 0.0
    %2469 = vmatpush2.msra.mxu0 0.0
    %2470 = vmatprep.subr.mxu0 0.0
    %2471 = vmatpush2.msra.mxu0 0.0
    %2472 = vmatprep.subr.mxu0 0.0
    %2473 = vmatpush2.msra.mxu0 0.0
    %2474 = vmatprep.subr.mxu0 0.0
    %2475 = vmatpush2.msra.mxu0 0.0
    %2476 = vmatprep.subr.mxu0 0.0
    %2477 = vmatpush2.msra.mxu0 0.0
    %2478 = vmatprep.subr.mxu0 0.0
    %2479 = vmatpush2.msra.mxu0 0.0
    %2480 = vmatprep.mubr.f32.mxu0 0.0
    %2481 = vmatmul.mubr.f32.gmra.mxu0 %v2405
    %v2482 = vpop.f32.mrf.mxu0
    %v2483 = vadd.f32 0.0, %v2482
    %v2484 = vpop.f32.mrf.mxu0
    %2485 = vmatprep.mubr.f32.mxu0 0.0
    %2486 = vmatmul.mubr.f32.gmra.mxu0 %v2408
    %v2487 = vpop.f32.mrf.mxu0
    %v2488 = vadd.f32 0.0, %v2487
    %v2489 = vpop.f32.mrf.mxu0
    %2490 = vmatprep.mubr.f32.mxu0 0.0
    %2491 = vmatmul.mubr.f32.gmra.mxu0 %v2411
    %v2492 = vpop.f32.mrf.mxu0
    %v2493 = vadd.f32 0.0, %v2492
    %v2494 = vpop.f32.mrf.mxu0
    %2495 = vmatprep.mubr.f32.mxu0 0.0
    %2496 = vmatmul.mubr.f32.gmra.mxu0 %v2414
    %v2497 = vpop.f32.mrf.mxu0
    %v2498 = vadd.f32 0.0, %v2497
    %v2499 = vpop.f32.mrf.mxu0
    %2500 = vdwg.mxu0
    %2501 = vrot.lane.b32.xlu0 %v1947, 112
    %v2502 = vpop.permute.xlu0 %2501
    %2503 = vrot.lane.b32.xlu0 %v1952, 112
    %v2504 = vpop.permute.xlu0 %2503
    %2505 = vrot.lane.b32.xlu0 %v1957, 112
    %v2506 = vpop.permute.xlu0 %2505
    %2507 = vrot.lane.b32.xlu0 %v1962, 112
    %v2508 = vpop.permute.xlu0 %2507
    %2509 = vrot.lane.b32.xlu0 %v1947, 80
    %v2510 = vpop.permute.xlu0 %2509
    %2511 = vrot.lane.b32.xlu0 %v1952, 80
    %v2512 = vpop.permute.xlu0 %2511
    %2513 = vrot.lane.b32.xlu0 %v1957, 80
    %v2514 = vpop.permute.xlu0 %2513
    %2515 = vrot.lane.b32.xlu0 %v1962, 80
    %v2516 = vpop.permute.xlu0 %2515
    %v2517 = vsel %vm225, %v2502, 0
    %v2519 = vsel %vm225, %v2504, 0
    %v2521 = vsel %vm225, %v2506, 0
    %v2523 = vsel %vm225, %v2508, 0
    %v2525 = vsel %vm225, %v2510, 0
    %v2527 = vsel %vm225, %v2512, 0
    %v2529 = vsel %vm225, %v2514, 0
    %v2531 = vsel %vm225, %v2516, 0
    %2533 = vmatprep.subr.mxu0 0.0
    %2534 = vmatpush1.xpose.msra.mxu0 0.0
    %2535 = vmatprep.subr.mxu0 0.0
    %2536 = vmatpush1.xpose.msra.mxu0 0.0
    %2537 = vmatprep.subr.mxu0 0.0
    %2538 = vmatpush1.xpose.msra.mxu0 0.0
    %2539 = vmatprep.subr.mxu0 0.0
    %2540 = vmatpush1.xpose.msra.mxu0 0.0
    %2541 = vmatprep.subr.mxu0 0.0
    %2542 = vmatpush1.xpose.msra.mxu0 0.0
    %2543 = vmatprep.subr.mxu0 0.0
    %2544 = vmatpush1.xpose.msra.mxu0 0.0
    %2545 = vmatprep.subr.mxu0 0.0
    %2546 = vmatpush1.xpose.msra.mxu0 0.0
    %2547 = vmatprep.subr.mxu0 0.0
    %2548 = vmatpush1.xpose.msra.mxu0 0.0
    %2549 = vmatprep.subr.mxu0 0.0
    %2550 = vmatpush1.xpose.msra.mxu0 0.0
    %2551 = vmatprep.subr.mxu0 0.0
    %2552 = vmatpush1.xpose.msra.mxu0 0.0
    %2553 = vmatprep.subr.mxu0 0.0
    %2554 = vmatpush1.xpose.msra.mxu0 0.0
    %2555 = vmatprep.subr.mxu0 0.0
    %2556 = vmatpush1.xpose.msra.mxu0 0.0
    %2557 = vmatprep.subr.mxu0 0.0
    %2558 = vmatpush1.xpose.msra.mxu0 %v2531
    %2559 = vmatprep.subr.mxu0 0.0
    %2560 = vmatpush1.xpose.msra.mxu0 %v2529
    %2561 = vmatprep.subr.mxu0 0.0
    %2562 = vmatpush1.xpose.msra.mxu0 %v2527
    %2563 = vmatprep.subr.mxu0 0.0
    %2564 = vmatpush1.xpose.msra.mxu0 %v2525
    %2565 = vmatprep.subr.mxu0 0.0
    %2566 = vmatpush2.xpose.msra.mxu0 0.0
    %2567 = vmatprep.subr.mxu0 0.0
    %2568 = vmatpush2.xpose.msra.mxu0 0.0
    %2569 = vmatprep.subr.mxu0 0.0
    %2570 = vmatpush2.xpose.msra.mxu0 0.0
    %2571 = vmatprep.subr.mxu0 0.0
    %2572 = vmatpush2.xpose.msra.mxu0 0.0
    %2573 = vmatprep.subr.mxu0 0.0
    %2574 = vmatpush2.xpose.msra.mxu0 0.0
    %2575 = vmatprep.subr.mxu0 0.0
    %2576 = vmatpush2.xpose.msra.mxu0 0.0
    %2577 = vmatprep.subr.mxu0 0.0
    %2578 = vmatpush2.xpose.msra.mxu0 0.0
    %2579 = vmatprep.subr.mxu0 0.0
    %2580 = vmatpush2.xpose.msra.mxu0 0.0
    %2581 = vmatprep.subr.mxu0 0.0
    %2582 = vmatpush2.xpose.msra.mxu0 0.0
    %2583 = vmatprep.subr.mxu0 0.0
    %2584 = vmatpush2.xpose.msra.mxu0 0.0
    %2585 = vmatprep.subr.mxu0 0.0
    %2586 = vmatpush2.xpose.msra.mxu0 0.0
    %2587 = vmatprep.subr.mxu0 0.0
    %2588 = vmatpush2.xpose.msra.mxu0 0.0
    %2589 = vmatprep.subr.mxu0 0.0
    %2590 = vmatpush2.xpose.msra.mxu0 0.0
    %2591 = vmatprep.subr.mxu0 0.0
    %2592 = vmatpush2.xpose.msra.mxu0 0.0
    %2593 = vmatprep.subr.mxu0 0.0
    %2594 = vmatpush2.xpose.msra.mxu0 0.0
    %2595 = vmatprep.subr.mxu0 0.0
    %2596 = vmatpush2.xpose.msra.mxu0 0.0
    %2597 = vmatprep.mubr.f32.mxu0 0.0
    %2598 = vmatmul.mubr.f32.gmra.mxu0 %v2517
    %v2599 = vpop.f32.mrf.mxu0
    %v2600 = vadd.f32 %v27, %v2599
    %v2601 = vpop.f32.mrf.mxu0
    %2602 = vmatprep.mubr.f32.mxu0 0.0
    %2603 = vmatmul.mubr.f32.gmra.mxu0 %v2519
    %v2604 = vpop.f32.mrf.mxu0
    %v2605 = vadd.f32 %v28, %v2604
    %v2606 = vpop.f32.mrf.mxu0
    %2607 = vmatprep.mubr.f32.mxu0 0.0
    %2608 = vmatmul.mubr.f32.gmra.mxu0 %v2521
    %v2609 = vpop.f32.mrf.mxu0
    %v2610 = vadd.f32 %v29, %v2609
    %v2611 = vpop.f32.mrf.mxu0
    %2612 = vmatprep.mubr.f32.mxu0 0.0
    %2613 = vmatmul.mubr.f32.gmra.mxu0 %v2523
    %v2614 = vpop.f32.mrf.mxu0
    %v2615 = vadd.f32 %v30, %v2614
    %v2616 = vpop.f32.mrf.mxu0
    %2617 = vdwg.mxu0
    %v2618 = vsel %vm46, %v2600, -inf
    %2619 = vmax.xlane.f32.xlu0 %v2618
    %v2620 = vpop.xlane.xlu0 %2619
    %v2621 = vsel %vm46, %v2605, -inf
    %2622 = vmax.xlane.f32.xlu0 %v2621
    %v2623 = vpop.xlane.xlu0 %2622
    %v2624 = vsel %vm46, %v2610, -inf
    %2625 = vmax.xlane.f32.xlu0 %v2624
    %v2626 = vpop.xlane.xlu0 %2625
    %v2627 = vsel %vm46, %v2615, -inf
    %2628 = vmax.xlane.f32.xlu0 %v2627
    %v2629 = vpop.xlane.xlu0 %2628
    %v2630 = vsub.f32 %v2600, %v2620
    %v2631 = vsub.f32 %v2605, %v2623
    %v2632 = vsub.f32 %v2610, %v2626
    %v2633 = vsub.f32 %v2615, %v2629
    %v2634 = vmul.f32 %v2630, 1.442695
    %v2635 = vpow.pop %v2634
    %v2636 = vmul.f32 %v2631, 1.442695
    %v2637 = vpow.pop %v2636
    %v2638 = vmul.f32 %v2632, 1.442695
    %v2639 = vpow.pop %v2638
    %v2640 = vmul.f32 %v2633, 1.442695
    %v2641 = vpow.pop %v2640
    %v2642 = vsel %vm46, %v2635, 0.0
    %2643 = vadd.xlane.f32.xlu0 %v2642
    %v2644 = vpop.xlane.xlu0 %2643
    %v2645 = vsel %vm46, %v2637, 0.0
    %2646 = vadd.xlane.f32.xlu0 %v2645
    %v2647 = vpop.xlane.xlu0 %2646
    %v2648 = vsel %vm46, %v2639, 0.0
    %2649 = vadd.xlane.f32.xlu0 %v2648
    %v2650 = vpop.xlane.xlu0 %2649
    %v2651 = vsel %vm46, %v2641, 0.0
    %2652 = vadd.xlane.f32.xlu0 %v2651
    %v2653 = vpop.xlane.xlu0 %2652
    %v2654 = vrcp.pop %v2644
    %v2655 = vmul.f32 %v2635, %v2654
    %v2656 = vrcp.pop %v2647
    %v2657 = vmul.f32 %v2637, %v2656
    %v2658 = vrcp.pop %v2650
    %v2659 = vmul.f32 %v2639, %v2658
    %v2660 = vrcp.pop %v2653
    %v2661 = vmul.f32 %v2641, %v2660
    %2662 = vrot.lane.b32.xlu0 %v1947, 48
    %v2663 = vpop.permute.xlu0 %2662
    %2664 = vrot.lane.b32.xlu0 %v1952, 48
    %v2665 = vpop.permute.xlu0 %2664
    %2666 = vrot.lane.b32.xlu0 %v1957, 48
    %v2667 = vpop.permute.xlu0 %2666
    %2668 = vrot.lane.b32.xlu0 %v1962, 48
    %v2669 = vpop.permute.xlu0 %2668
    %v2675 = vsel %vm46, %v2655, 0
    %v2678 = vsel %vm46, %v2657, 0
    %v2681 = vsel %vm46, %v2659, 0
    %v2684 = vsel %vm46, %v2661, 0
    %2686 = vmatprep.subr.mxu0 0.0
    %2687 = vmatpush1.msra.mxu0 0.0
    %2688 = vmatprep.subr.mxu0 0.0
    %2689 = vmatpush1.msra.mxu0 0.0
    %2690 = vmatprep.subr.mxu0 0.0
    %2691 = vmatpush1.msra.mxu0 0.0
    %2692 = vmatprep.subr.mxu0 0.0
    %2693 = vmatpush1.msra.mxu0 0.0
    %2694 = vmatprep.subr.mxu0 0.0
    %2695 = vmatpush1.msra.mxu0 0.0
    %2696 = vmatprep.subr.mxu0 0.0
    %2697 = vmatpush1.msra.mxu0 0.0
    %2698 = vmatprep.subr.mxu0 0.0
    %2699 = vmatpush1.msra.mxu0 0.0
    %2700 = vmatprep.subr.mxu0 0.0
    %2701 = vmatpush1.msra.mxu0 0.0
    %2702 = vmatprep.subr.mxu0 0.0
    %2703 = vmatpush1.msra.mxu0 0.0
    %2704 = vmatprep.subr.mxu0 0.0
    %2705 = vmatpush1.msra.mxu0 0.0
    %2706 = vmatprep.subr.mxu0 0.0
    %2707 = vmatpush1.msra.mxu0 0.0
    %2708 = vmatprep.subr.mxu0 0.0
    %2709 = vmatpush1.msra.mxu0 0.0
    %2710 = vmatprep.subr.mxu0 0.0
    %2711 = vmatpush1.msra.mxu0 %v2669
    %2712 = vmatprep.subr.mxu0 0.0
    %2713 = vmatpush1.msra.mxu0 %v2667
    %2714 = vmatprep.subr.mxu0 0.0
    %2715 = vmatpush1.msra.mxu0 %v2665
    %2716 = vmatprep.subr.mxu0 0.0
    %2717 = vmatpush1.msra.mxu0 %v2663
    %2718 = vmatprep.subr.mxu0 0.0
    %2719 = vmatpush2.msra.mxu0 0.0
    %2720 = vmatprep.subr.mxu0 0.0
    %2721 = vmatpush2.msra.mxu0 0.0
    %2722 = vmatprep.subr.mxu0 0.0
    %2723 = vmatpush2.msra.mxu0 0.0
    %2724 = vmatprep.subr.mxu0 0.0
    %2725 = vmatpush2.msra.mxu0 0.0
    %2726 = vmatprep.subr.mxu0 0.0
    %2727 = vmatpush2.msra.mxu0 0.0
    %2728 = vmatprep.subr.mxu0 0.0
    %2729 = vmatpush2.msra.mxu0 0.0
    %2730 = vmatprep.subr.mxu0 0.0
    %2731 = vmatpush2.msra.mxu0 0.0
    %2732 = vmatprep.subr.mxu0 0.0
    %2733 = vmatpush2.msra.mxu0 0.0
    %2734 = vmatprep.subr.mxu0 0.0
    %2735 = vmatpush2.msra.mxu0 0.0
    %2736 = vmatprep.subr.mxu0 0.0
    %2737 = vmatpush2.msra.mxu0 0.0
    %2738 = vmatprep.subr.mxu0 0.0
    %2739 = vmatpush2.msra.mxu0 0.0
    %2740 = vmatprep.subr.mxu0 0.0
    %2741 = vmatpush2.msra.mxu0 0.0
    %2742 = vmatprep.subr.mxu0 0.0
    %2743 = vmatpush2.msra.mxu0 0.0
    %2744 = vmatprep.subr.mxu0 0.0
    %2745 = vmatpush2.msra.mxu0 0.0
    %2746 = vmatprep.subr.mxu0 0.0
    %2747 = vmatpush2.msra.mxu0 0.0
    %2748 = vmatprep.subr.mxu0 0.0
    %2749 = vmatpush2.msra.mxu0 0.0
    %2750 = vmatprep.mubr.f32.mxu0 0.0
    %2751 = vmatmul.mubr.f32.gmra.mxu0 %v2675
    %v2752 = vpop.f32.mrf.mxu0
    %v2753 = vadd.f32 0.0, %v2752
    %v2754 = vpop.f32.mrf.mxu0
    %2755 = vmatprep.mubr.f32.mxu0 0.0
    %2756 = vmatmul.mubr.f32.gmra.mxu0 %v2678
    %v2757 = vpop.f32.mrf.mxu0
    %v2758 = vadd.f32 0.0, %v2757
    %v2759 = vpop.f32.mrf.mxu0
    %2760 = vmatprep.mubr.f32.mxu0 0.0
    %2761 = vmatmul.mubr.f32.gmra.mxu0 %v2681
    %v2762 = vpop.f32.mrf.mxu0
    %v2763 = vadd.f32 0.0, %v2762
    %v2764 = vpop.f32.mrf.mxu0
    %2765 = vmatprep.mubr.f32.mxu0 0.0
    %2766 = vmatmul.mubr.f32.gmra.mxu0 %v2684
    %v2767 = vpop.f32.mrf.mxu0
    %v2768 = vadd.f32 0.0, %v2767
    %v2769 = vpop.f32.mrf.mxu0
    %2770 = vdwg.mxu0
    %2771 = vrot.lane.b32.xlu0 %v1947, 104
    %v2772 = vpop.permute.xlu0 %2771
    %2773 = vrot.lane.b32.xlu0 %v1952, 104
    %v2774 = vpop.permute.xlu0 %2773
    %2775 = vrot.lane.b32.xlu0 %v1957, 104
    %v2776 = vpop.permute.xlu0 %2775
    %2777 = vrot.lane.b32.xlu0 %v1962, 104
    %v2778 = vpop.permute.xlu0 %2777
    %2779 = vrot.lane.b32.xlu0 %v1947, 72
    %v2780 = vpop.permute.xlu0 %2779
    %2781 = vrot.lane.b32.xlu0 %v1952, 72
    %v2782 = vpop.permute.xlu0 %2781
    %2783 = vrot.lane.b32.xlu0 %v1957, 72
    %v2784 = vpop.permute.xlu0 %2783
    %2785 = vrot.lane.b32.xlu0 %v1962, 72
    %v2786 = vpop.permute.xlu0 %2785
    %v2787 = vsel %vm225, %v2772, 0
    %v2789 = vsel %vm225, %v2774, 0
    %v2791 = vsel %vm225, %v2776, 0
    %v2793 = vsel %vm225, %v2778, 0
    %v2795 = vsel %vm225, %v2780, 0
    %v2797 = vsel %vm225, %v2782, 0
    %v2799 = vsel %vm225, %v2784, 0
    %v2801 = vsel %vm225, %v2786, 0
    %2803 = vmatprep.subr.mxu0 0.0
    %2804 = vmatpush1.xpose.msra.mxu0 0.0
    %2805 = vmatprep.subr.mxu0 0.0
    %2806 = vmatpush1.xpose.msra.mxu0 0.0
    %2807 = vmatprep.subr.mxu0 0.0
    %2808 = vmatpush1.xpose.msra.mxu0 0.0
    %2809 = vmatprep.subr.mxu0 0.0
    %2810 = vmatpush1.xpose.msra.mxu0 0.0
    %2811 = vmatprep.subr.mxu0 0.0
    %2812 = vmatpush1.xpose.msra.mxu0 0.0
    %2813 = vmatprep.subr.mxu0 0.0
    %2814 = vmatpush1.xpose.msra.mxu0 0.0
    %2815 = vmatprep.subr.mxu0 0.0
    %2816 = vmatpush1.xpose.msra.mxu0 0.0
    %2817 = vmatprep.subr.mxu0 0.0
    %2818 = vmatpush1.xpose.msra.mxu0 0.0
    %2819 = vmatprep.subr.mxu0 0.0
    %2820 = vmatpush1.xpose.msra.mxu0 0.0
    %2821 = vmatprep.subr.mxu0 0.0
    %2822 = vmatpush1.xpose.msra.mxu0 0.0
    %2823 = vmatprep.subr.mxu0 0.0
    %2824 = vmatpush1.xpose.msra.mxu0 0.0
    %2825 = vmatprep.subr.mxu0 0.0
    %2826 = vmatpush1.xpose.msra.mxu0 0.0
    %2827 = vmatprep.subr.mxu0 0.0
    %2828 = vmatpush1.xpose.msra.mxu0 %v2801
    %2829 = vmatprep.subr.mxu0 0.0
    %2830 = vmatpush1.xpose.msra.mxu0 %v2799
    %2831 = vmatprep.subr.mxu0 0.0
    %2832 = vmatpush1.xpose.msra.mxu0 %v2797
    %2833 = vmatprep.subr.mxu0 0.0
    %2834 = vmatpush1.xpose.msra.mxu0 %v2795
    %2835 = vmatprep.subr.mxu0 0.0
    %2836 = vmatpush2.xpose.msra.mxu0 0.0
    %2837 = vmatprep.subr.mxu0 0.0
    %2838 = vmatpush2.xpose.msra.mxu0 0.0
    %2839 = vmatprep.subr.mxu0 0.0
    %2840 = vmatpush2.xpose.msra.mxu0 0.0
    %2841 = vmatprep.subr.mxu0 0.0
    %2842 = vmatpush2.xpose.msra.mxu0 0.0
    %2843 = vmatprep.subr.mxu0 0.0
    %2844 = vmatpush2.xpose.msra.mxu0 0.0
    %2845 = vmatprep.subr.mxu0 0.0
    %2846 = vmatpush2.xpose.msra.mxu0 0.0
    %2847 = vmatprep.subr.mxu0 0.0
    %2848 = vmatpush2.xpose.msra.mxu0 0.0
    %2849 = vmatprep.subr.mxu0 0.0
    %2850 = vmatpush2.xpose.msra.mxu0 0.0
    %2851 = vmatprep.subr.mxu0 0.0
    %2852 = vmatpush2.xpose.msra.mxu0 0.0
    %2853 = vmatprep.subr.mxu0 0.0
    %2854 = vmatpush2.xpose.msra.mxu0 0.0
    %2855 = vmatprep.subr.mxu0 0.0
    %2856 = vmatpush2.xpose.msra.mxu0 0.0
    %2857 = vmatprep.subr.mxu0 0.0
    %2858 = vmatpush2.xpose.msra.mxu0 0.0
    %2859 = vmatprep.subr.mxu0 0.0
    %2860 = vmatpush2.xpose.msra.mxu0 0.0
    %2861 = vmatprep.subr.mxu0 0.0
    %2862 = vmatpush2.xpose.msra.mxu0 0.0
    %2863 = vmatprep.subr.mxu0 0.0
    %2864 = vmatpush2.xpose.msra.mxu0 0.0
    %2865 = vmatprep.subr.mxu0 0.0
    %2866 = vmatpush2.xpose.msra.mxu0 0.0
    %2867 = vmatprep.mubr.f32.mxu0 0.0
    %2868 = vmatmul.mubr.f32.gmra.mxu0 %v2787
    %v2869 = vpop.f32.mrf.mxu0
    %v2870 = vadd.f32 %v27, %v2869
    %v2871 = vpop.f32.mrf.mxu0
    %2872 = vmatprep.mubr.f32.mxu0 0.0
    %2873 = vmatmul.mubr.f32.gmra.mxu0 %v2789
    %v2874 = vpop.f32.mrf.mxu0
    %v2875 = vadd.f32 %v28, %v2874
    %v2876 = vpop.f32.mrf.mxu0
    %2877 = vmatprep.mubr.f32.mxu0 0.0
    %2878 = vmatmul.mubr.f32.gmra.mxu0 %v2791
    %v2879 = vpop.f32.mrf.mxu0
    %v2880 = vadd.f32 %v29, %v2879
    %v2881 = vpop.f32.mrf.mxu0
    %2882 = vmatprep.mubr.f32.mxu0 0.0
    %2883 = vmatmul.mubr.f32.gmra.mxu0 %v2793
    %v2884 = vpop.f32.mrf.mxu0
    %v2885 = vadd.f32 %v30, %v2884
    %v2886 = vpop.f32.mrf.mxu0
    %2887 = vdwg.mxu0
    %v2888 = vsel %vm46, %v2870, -inf
    %2889 = vmax.xlane.f32.xlu0 %v2888
    %v2890 = vpop.xlane.xlu0 %2889
    %v2891 = vsel %vm46, %v2875, -inf
    %2892 = vmax.xlane.f32.xlu0 %v2891
    %v2893 = vpop.xlane.xlu0 %2892
    %v2894 = vsel %vm46, %v2880, -inf
    %2895 = vmax.xlane.f32.xlu0 %v2894
    %v2896 = vpop.xlane.xlu0 %2895
    %v2897 = vsel %vm46, %v2885, -inf
    %2898 = vmax.xlane.f32.xlu0 %v2897
    %v2899 = vpop.xlane.xlu0 %2898
    %v2900 = vsub.f32 %v2870, %v2890
    %v2901 = vsub.f32 %v2875, %v2893
    %v2902 = vsub.f32 %v2880, %v2896
    %v2903 = vsub.f32 %v2885, %v2899
    %v2904 = vmul.f32 %v2900, 1.442695
    %v2905 = vpow.pop %v2904
    %v2906 = vmul.f32 %v2901, 1.442695
    %v2907 = vpow.pop %v2906
    %v2908 = vmul.f32 %v2902, 1.442695
    %v2909 = vpow.pop %v2908
    %v2910 = vmul.f32 %v2903, 1.442695
    %v2911 = vpow.pop %v2910
    %v2912 = vsel %vm46, %v2905, 0.0
    %2913 = vadd.xlane.f32.xlu0 %v2912
    %v2914 = vpop.xlane.xlu0 %2913
    %v2915 = vsel %vm46, %v2907, 0.0
    %2916 = vadd.xlane.f32.xlu0 %v2915
    %v2917 = vpop.xlane.xlu0 %2916
    %v2918 = vsel %vm46, %v2909, 0.0
    %2919 = vadd.xlane.f32.xlu0 %v2918
    %v2920 = vpop.xlane.xlu0 %2919
    %v2921 = vsel %vm46, %v2911, 0.0
    %2922 = vadd.xlane.f32.xlu0 %v2921
    %v2923 = vpop.xlane.xlu0 %2922
    %v2924 = vrcp.pop %v2914
    %v2925 = vmul.f32 %v2905, %v2924
    %v2926 = vrcp.pop %v2917
    %v2927 = vmul.f32 %v2907, %v2926
    %v2928 = vrcp.pop %v2920
    %v2929 = vmul.f32 %v2909, %v2928
    %v2930 = vrcp.pop %v2923
    %v2931 = vmul.f32 %v2911, %v2930
    %2932 = vrot.lane.b32.xlu0 %v1947, 40
    %v2933 = vpop.permute.xlu0 %2932
    %2934 = vrot.lane.b32.xlu0 %v1952, 40
    %v2935 = vpop.permute.xlu0 %2934
    %2936 = vrot.lane.b32.xlu0 %v1957, 40
    %v2937 = vpop.permute.xlu0 %2936
    %2938 = vrot.lane.b32.xlu0 %v1962, 40
    %v2939 = vpop.permute.xlu0 %2938
    %v2945 = vsel %vm46, %v2925, 0
    %v2948 = vsel %vm46, %v2927, 0
    %v2951 = vsel %vm46, %v2929, 0
    %v2954 = vsel %vm46, %v2931, 0
    %2956 = vmatprep.subr.mxu0 0.0
    %2957 = vmatpush1.msra.mxu0 0.0
    %2958 = vmatprep.subr.mxu0 0.0
    %2959 = vmatpush1.msra.mxu0 0.0
    %2960 = vmatprep.subr.mxu0 0.0
    %2961 = vmatpush1.msra.mxu0 0.0
    %2962 = vmatprep.subr.mxu0 0.0
    %2963 = vmatpush1.msra.mxu0 0.0
    %2964 = vmatprep.subr.mxu0 0.0
    %2965 = vmatpush1.msra.mxu0 0.0
    %2966 = vmatprep.subr.mxu0 0.0
    %2967 = vmatpush1.msra.mxu0 0.0
    %2968 = vmatprep.subr.mxu0 0.0
    %2969 = vmatpush1.msra.mxu0 0.0
    %2970 = vmatprep.subr.mxu0 0.0
    %2971 = vmatpush1.msra.mxu0 0.0
    %2972 = vmatprep.subr.mxu0 0.0
    %2973 = vmatpush1.msra.mxu0 0.0
    %2974 = vmatprep.subr.mxu0 0.0
    %2975 = vmatpush1.msra.mxu0 0.0
    %2976 = vmatprep.subr.mxu0 0.0
    %2977 = vmatpush1.msra.mxu0 0.0
    %2978 = vmatprep.subr.mxu0 0.0
    %2979 = vmatpush1.msra.mxu0 0.0
    %2980 = vmatprep.subr.mxu0 0.0
    %2981 = vmatpush1.msra.mxu0 %v2939
    %2982 = vmatprep.subr.mxu0 0.0
    %2983 = vmatpush1.msra.mxu0 %v2937
    %2984 = vmatprep.subr.mxu0 0.0
    %2985 = vmatpush1.msra.mxu0 %v2935
    %2986 = vmatprep.subr.mxu0 0.0
    %2987 = vmatpush1.msra.mxu0 %v2933
    %2988 = vmatprep.subr.mxu0 0.0
    %2989 = vmatpush2.msra.mxu0 0.0
    %2990 = vmatprep.subr.mxu0 0.0
    %2991 = vmatpush2.msra.mxu0 0.0
    %2992 = vmatprep.subr.mxu0 0.0
    %2993 = vmatpush2.msra.mxu0 0.0
    %2994 = vmatprep.subr.mxu0 0.0
    %2995 = vmatpush2.msra.mxu0 0.0
    %2996 = vmatprep.subr.mxu0 0.0
    %2997 = vmatpush2.msra.mxu0 0.0
    %2998 = vmatprep.subr.mxu0 0.0
    %2999 = vmatpush2.msra.mxu0 0.0
    %3000 = vmatprep.subr.mxu0 0.0
    %3001 = vmatpush2.msra.mxu0 0.0
    %3002 = vmatprep.subr.mxu0 0.0
    %3003 = vmatpush2.msra.mxu0 0.0
    %3004 = vmatprep.subr.mxu0 0.0
    %3005 = vmatpush2.msra.mxu0 0.0
    %3006 = vmatprep.subr.mxu0 0.0
    %3007 = vmatpush2.msra.mxu0 0.0
    %3008 = vmatprep.subr.mxu0 0.0
    %3009 = vmatpush2.msra.mxu0 0.0
    %3010 = vmatprep.subr.mxu0 0.0
    %3011 = vmatpush2.msra.mxu0 0.0
    %3012 = vmatprep.subr.mxu0 0.0
    %3013 = vmatpush2.msra.mxu0 0.0
    %3014 = vmatprep.subr.mxu0 0.0
    %3015 = vmatpush2.msra.mxu0 0.0
    %3016 = vmatprep.subr.mxu0 0.0
    %3017 = vmatpush2.msra.mxu0 0.0
    %3018 = vmatprep.subr.mxu0 0.0
    %3019 = vmatpush2.msra.mxu0 0.0
    %3020 = vmatprep.mubr.f32.mxu0 0.0
    %3021 = vmatmul.mubr.f32.gmra.mxu0 %v2945
    %v3022 = vpop.f32.mrf.mxu0
    %v3023 = vadd.f32 0.0, %v3022
    %v3024 = vpop.f32.mrf.mxu0
    %3025 = vmatprep.mubr.f32.mxu0 0.0
    %3026 = vmatmul.mubr.f32.gmra.mxu0 %v2948
    %v3027 = vpop.f32.mrf.mxu0
    %v3028 = vadd.f32 0.0, %v3027
    %v3029 = vpop.f32.mrf.mxu0
    %3030 = vmatprep.mubr.f32.mxu0 0.0
    %3031 = vmatmul.mubr.f32.gmra.mxu0 %v2951
    %v3032 = vpop.f32.mrf.mxu0
    %v3033 = vadd.f32 0.0, %v3032
    %v3034 = vpop.f32.mrf.mxu0
    %3035 = vmatprep.mubr.f32.mxu0 0.0
    %3036 = vmatmul.mubr.f32.gmra.mxu0 %v2954
    %v3037 = vpop.f32.mrf.mxu0
    %v3038 = vadd.f32 0.0, %v3037
    %v3039 = vpop.f32.mrf.mxu0
    %3040 = vdwg.mxu0
    %3045 = vrot.lane.b32.xlu0 %v2483, 8
    %v3046 = vpop.permute.xlu0 %3045
    %3047 = vrot.lane.b32.xlu0 %v2488, 8
    %v3048 = vpop.permute.xlu0 %3047
    %3049 = vrot.lane.b32.xlu0 %v2493, 8
    %v3050 = vpop.permute.xlu0 %3049
    %3051 = vrot.lane.b32.xlu0 %v2498, 8
    %v3052 = vpop.permute.xlu0 %3051
    %3061 = vrot.lane.b32.xlu0 %v2753, 16
    %v3062 = vpop.permute.xlu0 %3061
    %3063 = vrot.lane.b32.xlu0 %v2758, 16
    %v3064 = vpop.permute.xlu0 %3063
    %3065 = vrot.lane.b32.xlu0 %v2763, 16
    %v3066 = vpop.permute.xlu0 %3065
    %3067 = vrot.lane.b32.xlu0 %v2768, 16
    %v3068 = vpop.permute.xlu0 %3067
    %3077 = vrot.lane.b32.xlu0 %v3023, 24
    %v3078 = vpop.permute.xlu0 %3077
    %3079 = vrot.lane.b32.xlu0 %v3028, 24
    %v3080 = vpop.permute.xlu0 %3079
    %3081 = vrot.lane.b32.xlu0 %v3033, 24
    %v3082 = vpop.permute.xlu0 %3081
    %3083 = vrot.lane.b32.xlu0 %v3038, 24
    %v3084 = vpop.permute.xlu0 %3083
    %v3089 = vsel %vm225, %v2213, %v3046
    %v3090 = vsel %vm225, %v2218, %v3048
    %v3091 = vsel %vm225, %v2223, %v3050
    %v3092 = vsel %vm225, %v2228, %v3052
    %v3093 = vsel %vm1342, %v3089, %v3062
    %v3094 = vsel %vm1342, %v3090, %v3064
    %v3095 = vsel %vm1342, %v3091, %v3066
    %v3096 = vsel %vm1342, %v3092, %v3068
    %v3097 = vsel %vm1347, %v3093, %v3078
    %v3098 = vsel %vm1347, %v3094, %v3080
    %v3099 = vsel %vm1347, %v3095, %v3082
    %v3100 = vsel %vm1347, %v3096, %v3084
    %3105 = vrot.lane.b32.xlu0 %v1796, 32
    %v3106 = vpop.permute.xlu0 %3105
    %3107 = vrot.lane.b32.xlu0 %v1797, 32
    %v3108 = vpop.permute.xlu0 %3107
    %3109 = vrot.lane.b32.xlu0 %v1798, 32
    %v3110 = vpop.permute.xlu0 %3109
    %3111 = vrot.lane.b32.xlu0 %v1799, 32
    %v3112 = vpop.permute.xlu0 %3111
    %v3118 = vsel %vm46, %v3097, 0
    %v3121 = vsel %vm46, %v3098, 0
    %v3124 = vsel %vm46, %v3099, 0
    %v3127 = vsel %vm46, %v3100, 0
    %3129 = vmatprep.subr.mxu0 0.0
    %3130 = vmatpush1.msra.mxu0 0.0
    %3131 = vmatprep.subr.mxu0 0.0
    %3132 = vmatpush1.msra.mxu0 0.0
    %3133 = vmatprep.subr.mxu0 0.0
    %3134 = vmatpush1.msra.mxu0 0.0
    %3135 = vmatprep.subr.mxu0 0.0
    %3136 = vmatpush1.msra.mxu0 0.0
    %3137 = vmatprep.subr.mxu0 0.0
    %3138 = vmatpush1.msra.mxu0 0.0
    %3139 = vmatprep.subr.mxu0 0.0
    %3140 = vmatpush1.msra.mxu0 0.0
    %3141 = vmatprep.subr.mxu0 0.0
    %3142 = vmatpush1.msra.mxu0 0.0
    %3143 = vmatprep.subr.mxu0 0.0
    %3144 = vmatpush1.msra.mxu0 0.0
    %3145 = vmatprep.subr.mxu0 0.0
    %3146 = vmatpush1.msra.mxu0 0.0
    %3147 = vmatprep.subr.mxu0 0.0
    %3148 = vmatpush1.msra.mxu0 0.0
    %3149 = vmatprep.subr.mxu0 0.0
    %3150 = vmatpush1.msra.mxu0 0.0
    %3151 = vmatprep.subr.mxu0 0.0
    %3152 = vmatpush1.msra.mxu0 0.0
    %3153 = vmatprep.subr.mxu0 0.0
    %3154 = vmatpush1.msra.mxu0 %v3112
    %3155 = vmatprep.subr.mxu0 0.0
    %3156 = vmatpush1.msra.mxu0 %v3110
    %3157 = vmatprep.subr.mxu0 0.0
    %3158 = vmatpush1.msra.mxu0 %v3108
    %3159 = vmatprep.subr.mxu0 0.0
    %3160 = vmatpush1.msra.mxu0 %v3106
    %3161 = vmatprep.subr.mxu0 0.0
    %3162 = vmatpush2.msra.mxu0 0.0
    %3163 = vmatprep.subr.mxu0 0.0
    %3164 = vmatpush2.msra.mxu0 0.0
    %3165 = vmatprep.subr.mxu0 0.0
    %3166 = vmatpush2.msra.mxu0 0.0
    %3167 = vmatprep.subr.mxu0 0.0
    %3168 = vmatpush2.msra.mxu0 0.0
    %3169 = vmatprep.subr.mxu0 0.0
    %3170 = vmatpush2.msra.mxu0 0.0
    %3171 = vmatprep.subr.mxu0 0.0
    %3172 = vmatpush2.msra.mxu0 0.0
    %3173 = vmatprep.subr.mxu0 0.0
    %3174 = vmatpush2.msra.mxu0 0.0
    %3175 = vmatprep.subr.mxu0 0.0
    %3176 = vmatpush2.msra.mxu0 0.0
    %3177 = vmatprep.subr.mxu0 0.0
    %3178 = vmatpush2.msra.mxu0 0.0
    %3179 = vmatprep.subr.mxu0 0.0
    %3180 = vmatpush2.msra.mxu0 0.0
    %3181 = vmatprep.subr.mxu0 0.0
    %3182 = vmatpush2.msra.mxu0 0.0
    %3183 = vmatprep.subr.mxu0 0.0
    %3184 = vmatpush2.msra.mxu0 0.0
    %3185 = vmatprep.subr.mxu0 0.0
    %3186 = vmatpush2.msra.mxu0 0.0
    %3187 = vmatprep.subr.mxu0 0.0
    %3188 = vmatpush2.msra.mxu0 0.0
    %3189 = vmatprep.subr.mxu0 0.0
    %3190 = vmatpush2.msra.mxu0 0.0
    %3191 = vmatprep.subr.mxu0 0.0
    %3192 = vmatpush2.msra.mxu0 0.0
    %3193 = vmatprep.mubr.f32.mxu0 0.0
    %3194 = vmatmul.mubr.f32.gmra.mxu0 %v3118
    %v3195 = vpop.f32.mrf.mxu0
    %v3196 = vadd.f32 0.0, %v3195
    %v3197 = vpop.f32.mrf.mxu0
    %3198 = vmatprep.mubr.f32.mxu0 0.0
    %3199 = vmatmul.mubr.f32.gmra.mxu0 %v3121
    %v3200 = vpop.f32.mrf.mxu0
    %v3201 = vadd.f32 0.0, %v3200
    %v3202 = vpop.f32.mrf.mxu0
    %3203 = vmatprep.mubr.f32.mxu0 0.0
    %3204 = vmatmul.mubr.f32.gmra.mxu0 %v3124
    %v3205 = vpop.f32.mrf.mxu0
    %v3206 = vadd.f32 0.0, %v3205
    %v3207 = vpop.f32.mrf.mxu0
    %3208 = vmatprep.mubr.f32.mxu0 0.0
    %3209 = vmatmul.mubr.f32.gmra.mxu0 %v3127
    %v3210 = vpop.f32.mrf.mxu0
    %v3211 = vadd.f32 0.0, %v3210
    %v3212 = vpop.f32.mrf.mxu0
    %3213 = vdwg.mxu0
    %v3214 = vadd.f32 %v1788, %v3196
    %v3215 = vadd.f32 %v1789, %v3201
    %v3216 = vadd.f32 %v1790, %v3206
    %v3217 = vadd.f32 %v1791, %v3211
    %v3218 = vlaneseq
    %v3219 = vshrl.u32 %v3218, 7
    %v3220 = vsub.s32 0, %v3219
    %v3221 = vrot.slane %v1794, %v3220
    %v3222 = vadd.f32 %v3214, %v3221
    %v3223 = vadd.f32 %v3215, %v3221
    %v3224 = vadd.f32 %v3216, %v3221
    %v3225 = vadd.f32 %v3217, %v3221
    %v3226 = vld [vmem:[%s5 + $0x16] sm:$0x1]
    %v3227 = vld [vmem:[%s5 + $0x17] sm:$0x1]
    %v3228 = vld [vmem:[%s5 + $0x18] sm:$0x1]
    %v3229 = vld [vmem:[%s5 + $0x19] sm:$0x1]
    %s3230 = scalar_lea.vmem %s3, 32
    %v3231 = vld [vmem:[%s3230] sm:$0xff]
    %v3232 = vld [vmem:[%s3230 + $0x8] sm:$0xff]
    %v3233 = vld [vmem:[%s3230 + $0x10] sm:$0xff]
    %v3234 = vld [vmem:[%s3230 + $0x18] sm:$0xff]
    %s3235 = scalar_lea.vmem %s4, 64
    %v3236 = vld [vmem:[%s3235] sm:$0xff]
    %v3237 = vld [vmem:[%s3235 + $0x8] sm:$0xff]
    %v3238 = vld [vmem:[%s3235 + $0x10] sm:$0xff]
    %v3239 = vld [vmem:[%s3235 + $0x18] sm:$0xff]
    %v3240 = vld [vmem:[%s3235 + $0x20] sm:$0xff]
    %v3241 = vld [vmem:[%s3235 + $0x28] sm:$0xff]
    %v3242 = vld [vmem:[%s3235 + $0x30] sm:$0xff]
    %v3243 = vld [vmem:[%s3235 + $0x38] sm:$0xff]
    %v3244 = vsel %vm46, %v3222, 0.0
    %3245 = vadd.xlane.f32.xlu0 %v3244
    %v3246 = vpop.xlane.xlu0 %3245
    %v3247 = vsel %vm46, %v3223, 0.0
    %3248 = vadd.xlane.f32.xlu0 %v3247
    %v3249 = vpop.xlane.xlu0 %3248
    %v3250 = vsel %vm46, %v3224, 0.0
    %3251 = vadd.xlane.f32.xlu0 %v3250
    %v3252 = vpop.xlane.xlu0 %3251
    %v3253 = vsel %vm46, %v3225, 0.0
    %3254 = vadd.xlane.f32.xlu0 %v3253
    %v3255 = vpop.xlane.xlu0 %3254
    %v3256 = vmul.f32 %v3246, %v59
    %v3257 = vmul.f32 %v3249, %v59
    %v3258 = vmul.f32 %v3252, %v59
    %v3259 = vmul.f32 %v3255, %v59
    %v3260 = vsub.f32 %v3222, %v3256
    %v3261 = vsub.f32 %v3223, %v3257
    %v3262 = vsub.f32 %v3224, %v3258
    %v3263 = vsub.f32 %v3225, %v3259
    %v3264 = vmul.f32 %v3260, %v3260
    %v3265 = vmul.f32 %v3261, %v3261
    %v3266 = vmul.f32 %v3262, %v3262
    %v3267 = vmul.f32 %v3263, %v3263
    %v3268 = vsel %vm46, %v3264, 0.0
    %3269 = vadd.xlane.f32.xlu0 %v3268
    %v3270 = vpop.xlane.xlu0 %3269
    %v3271 = vsel %vm46, %v3265, 0.0
    %3272 = vadd.xlane.f32.xlu0 %v3271
    %v3273 = vpop.xlane.xlu0 %3272
    %v3274 = vsel %vm46, %v3266, 0.0
    %3275 = vadd.xlane.f32.xlu0 %v3274
    %v3276 = vpop.xlane.xlu0 %3275
    %v3277 = vsel %vm46, %v3267, 0.0
    %3278 = vadd.xlane.f32.xlu0 %v3277
    %v3279 = vpop.xlane.xlu0 %3278
    %v3280 = vmul.f32 %v3270, %v59
    %v3281 = vmul.f32 %v3273, %v59
    %v3282 = vmul.f32 %v3276, %v59
    %v3283 = vmul.f32 %v3279, %v59
    %v3284 = vadd.f32 %v3280, 1e-05
    %v3285 = vadd.f32 %v3281, 1e-05
    %v3286 = vadd.f32 %v3282, 1e-05
    %v3287 = vadd.f32 %v3283, 1e-05
    %v3288 = vrsqrt.pop %v3284
    %v3289 = vrsqrt.pop %v3285
    %v3290 = vrsqrt.pop %v3286
    %v3291 = vrsqrt.pop %v3287
    %v3292 = vmul.f32 %v3260, %v3288
    %v3293 = vmul.f32 %v3261, %v3289
    %v3294 = vmul.f32 %v3262, %v3290
    %v3295 = vmul.f32 %v3263, %v3291
    %v3296 = vlaneseq
    %v3297 = vshrl.u32 %v3296, 7
    %v3298 = vsub.s32 0, %v3297
    %v3299 = vrot.slane %v3226, %v3298
    %v3300 = vmul.f32 %v3292, %v3299
    %v3301 = vmul.f32 %v3293, %v3299
    %v3302 = vmul.f32 %v3294, %v3299
    %v3303 = vmul.f32 %v3295, %v3299
    %v3304 = vlaneseq
    %v3305 = vshrl.u32 %v3304, 7
    %v3306 = vsub.s32 0, %v3305
    %v3307 = vrot.slane %v3227, %v3306
    %v3308 = vadd.f32 %v3300, %v3307
    %v3309 = vadd.f32 %v3301, %v3307
    %v3310 = vadd.f32 %v3302, %v3307
    %v3311 = vadd.f32 %v3303, %v3307
    %v3312 = vlaneseq
    %v3313 = vshrl.u32 %v3312, 7
    %v3314 = vsub.s32 0, %v3313
    %v3315 = vrot.slane %v3228, %v3314
    %v3317 = vsel %vm46, %v3308, 0
    %v3320 = vsel %vm46, %v3309, 0
    %v3323 = vsel %vm46, %v3310, 0
    %v3326 = vsel %vm46, %v3311, 0
    %3328 = vmatprep.subr.mxu0 0.0
    %3329 = vmatpush1.msra.mxu0 0.0
    %3330 = vmatprep.subr.mxu0 0.0
    %3331 = vmatpush1.msra.mxu0 0.0
    %3332 = vmatprep.subr.mxu0 0.0
    %3333 = vmatpush1.msra.mxu0 0.0
    %3334 = vmatprep.subr.mxu0 0.0
    %3335 = vmatpush1.msra.mxu0 0.0
    %3336 = vmatprep.subr.mxu0 0.0
    %3337 = vmatpush1.msra.mxu0 0.0
    %3338 = vmatprep.subr.mxu0 0.0
    %3339 = vmatpush1.msra.mxu0 0.0
    %3340 = vmatprep.subr.mxu0 0.0
    %3341 = vmatpush1.msra.mxu0 0.0
    %3342 = vmatprep.subr.mxu0 0.0
    %3343 = vmatpush1.msra.mxu0 0.0
    %3344 = vmatprep.subr.mxu0 0.0
    %3345 = vmatpush1.msra.mxu0 0.0
    %3346 = vmatprep.subr.mxu0 0.0
    %3347 = vmatpush1.msra.mxu0 0.0
    %3348 = vmatprep.subr.mxu0 0.0
    %3349 = vmatpush1.msra.mxu0 0.0
    %3350 = vmatprep.subr.mxu0 0.0
    %3351 = vmatpush1.msra.mxu0 0.0
    %3352 = vmatprep.subr.mxu0 0.0
    %3353 = vmatpush1.msra.mxu0 %v3234
    %3354 = vmatprep.subr.mxu0 0.0
    %3355 = vmatpush1.msra.mxu0 %v3233
    %3356 = vmatprep.subr.mxu0 0.0
    %3357 = vmatpush1.msra.mxu0 %v3232
    %3358 = vmatprep.subr.mxu0 0.0
    %3359 = vmatpush1.msra.mxu0 %v3231
    %3360 = vmatprep.subr.mxu0 0.0
    %3361 = vmatpush2.msra.mxu0 0.0
    %3362 = vmatprep.subr.mxu0 0.0
    %3363 = vmatpush2.msra.mxu0 0.0
    %3364 = vmatprep.subr.mxu0 0.0
    %3365 = vmatpush2.msra.mxu0 0.0
    %3366 = vmatprep.subr.mxu0 0.0
    %3367 = vmatpush2.msra.mxu0 0.0
    %3368 = vmatprep.subr.mxu0 0.0
    %3369 = vmatpush2.msra.mxu0 0.0
    %3370 = vmatprep.subr.mxu0 0.0
    %3371 = vmatpush2.msra.mxu0 0.0
    %3372 = vmatprep.subr.mxu0 0.0
    %3373 = vmatpush2.msra.mxu0 0.0
    %3374 = vmatprep.subr.mxu0 0.0
    %3375 = vmatpush2.msra.mxu0 0.0
    %3376 = vmatprep.subr.mxu0 0.0
    %3377 = vmatpush2.msra.mxu0 0.0
    %3378 = vmatprep.subr.mxu0 0.0
    %3379 = vmatpush2.msra.mxu0 0.0
    %3380 = vmatprep.subr.mxu0 0.0
    %3381 = vmatpush2.msra.mxu0 0.0
    %3382 = vmatprep.subr.mxu0 0.0
    %3383 = vmatpush2.msra.mxu0 0.0
    %3384 = vmatprep.subr.mxu0 0.0
    %3385 = vmatpush2.msra.mxu0 0.0
    %3386 = vmatprep.subr.mxu0 0.0
    %3387 = vmatpush2.msra.mxu0 0.0
    %3388 = vmatprep.subr.mxu0 0.0
    %3389 = vmatpush2.msra.mxu0 0.0
    %3390 = vmatprep.subr.mxu0 0.0
    %3391 = vmatpush2.msra.mxu0 0.0
    %3392 = vmatprep.mubr.f32.mxu0 0.0
    %3393 = vmatmul.mubr.f32.gmra.mxu0 %v3317
    %v3394 = vpop.f32.mrf.mxu0
    %v3395 = vadd.f32 %v3315, %v3394
    %v3396 = vpop.f32.mrf.mxu0
    %3397 = vmatprep.mubr.f32.mxu0 0.0
    %3398 = vmatmul.mubr.f32.gmra.mxu0 %v3320
    %v3399 = vpop.f32.mrf.mxu0
    %v3400 = vadd.f32 %v3315, %v3399
    %v3401 = vpop.f32.mrf.mxu0
    %3402 = vmatprep.mubr.f32.mxu0 0.0
    %3403 = vmatmul.mubr.f32.gmra.mxu0 %v3323
    %v3404 = vpop.f32.mrf.mxu0
    %v3405 = vadd.f32 %v3315, %v3404
    %v3406 = vpop.f32.mrf.mxu0
    %3407 = vmatprep.mubr.f32.mxu0 0.0
    %3408 = vmatmul.mubr.f32.gmra.mxu0 %v3326
    %v3409 = vpop.f32.mrf.mxu0
    %v3410 = vadd.f32 %v3315, %v3409
    %v3411 = vpop.f32.mrf.mxu0
    %3412 = vdwg.mxu0
    %v3413 = vmul.f32 %v3395, 0.5
    %v3414 = vmul.f32 %v3400, 0.5
    %v3415 = vmul.f32 %v3405, 0.5
    %v3416 = vmul.f32 %v3410, 0.5
    %v3417 = vmul.f32 %v3395, 0.70710677
    %v3418 = vmul.f32 %v3400, 0.70710677
    %v3419 = vmul.f32 %v3405, 0.70710677
    %v3420 = vmul.f32 %v3410, 0.70710677
    %v3421 = verf.f32.pop %v3417
    %v3422 = verf.f32.pop %v3418
    %v3423 = verf.f32.pop %v3419
    %v3424 = verf.f32.pop %v3420
    %v3425 = vadd.f32 %v3421, 1.0
    %v3426 = vadd.f32 %v3422, 1.0
    %v3427 = vadd.f32 %v3423, 1.0
    %v3428 = vadd.f32 %v3424, 1.0
    %v3429 = vmul.f32 %v3413, %v3425
    %v3430 = vmul.f32 %v3414, %v3426
    %v3431 = vmul.f32 %v3415, %v3427
    %v3432 = vmul.f32 %v3416, %v3428
    %v3434 = vsel %vm1682, %v3429, 0
    %v3437 = vsel %vm1682, %v3430, 0
    %v3440 = vsel %vm1682, %v3431, 0
    %v3443 = vsel %vm1682, %v3432, 0
    %3445 = vmatprep.subr.mxu0 0.0
    %3446 = vmatpush1.msra.mxu0 0.0
    %3447 = vmatprep.subr.mxu0 0.0
    %3448 = vmatpush1.msra.mxu0 0.0
    %3449 = vmatprep.subr.mxu0 0.0
    %3450 = vmatpush1.msra.mxu0 0.0
    %3451 = vmatprep.subr.mxu0 0.0
    %3452 = vmatpush1.msra.mxu0 0.0
    %3453 = vmatprep.subr.mxu0 0.0
    %3454 = vmatpush1.msra.mxu0 0.0
    %3455 = vmatprep.subr.mxu0 0.0
    %3456 = vmatpush1.msra.mxu0 0.0
    %3457 = vmatprep.subr.mxu0 0.0
    %3458 = vmatpush1.msra.mxu0 0.0
    %3459 = vmatprep.subr.mxu0 0.0
    %3460 = vmatpush1.msra.mxu0 0.0
    %3461 = vmatprep.subr.mxu0 0.0
    %3462 = vmatpush1.msra.mxu0 %v3243
    %3463 = vmatprep.subr.mxu0 0.0
    %3464 = vmatpush1.msra.mxu0 %v3242
    %3465 = vmatprep.subr.mxu0 0.0
    %3466 = vmatpush1.msra.mxu0 %v3241
    %3467 = vmatprep.subr.mxu0 0.0
    %3468 = vmatpush1.msra.mxu0 %v3240
    %3469 = vmatprep.subr.mxu0 0.0
    %3470 = vmatpush1.msra.mxu0 %v3239
    %3471 = vmatprep.subr.mxu0 0.0
    %3472 = vmatpush1.msra.mxu0 %v3238
    %3473 = vmatprep.subr.mxu0 0.0
    %3474 = vmatpush1.msra.mxu0 %v3237
    %3475 = vmatprep.subr.mxu0 0.0
    %3476 = vmatpush1.msra.mxu0 %v3236
    %3477 = vmatprep.subr.mxu0 0.0
    %3478 = vmatpush2.msra.mxu0 0.0
    %3479 = vmatprep.subr.mxu0 0.0
    %3480 = vmatpush2.msra.mxu0 0.0
    %3481 = vmatprep.subr.mxu0 0.0
    %3482 = vmatpush2.msra.mxu0 0.0
    %3483 = vmatprep.subr.mxu0 0.0
    %3484 = vmatpush2.msra.mxu0 0.0
    %3485 = vmatprep.subr.mxu0 0.0
    %3486 = vmatpush2.msra.mxu0 0.0
    %3487 = vmatprep.subr.mxu0 0.0
    %3488 = vmatpush2.msra.mxu0 0.0
    %3489 = vmatprep.subr.mxu0 0.0
    %3490 = vmatpush2.msra.mxu0 0.0
    %3491 = vmatprep.subr.mxu0 0.0
    %3492 = vmatpush2.msra.mxu0 0.0
    %3493 = vmatprep.subr.mxu0 0.0
    %3494 = vmatpush2.msra.mxu0 0.0
    %3495 = vmatprep.subr.mxu0 0.0
    %3496 = vmatpush2.msra.mxu0 0.0
    %3497 = vmatprep.subr.mxu0 0.0
    %3498 = vmatpush2.msra.mxu0 0.0
    %3499 = vmatprep.subr.mxu0 0.0
    %3500 = vmatpush2.msra.mxu0 0.0
    %3501 = vmatprep.subr.mxu0 0.0
    %3502 = vmatpush2.msra.mxu0 0.0
    %3503 = vmatprep.subr.mxu0 0.0
    %3504 = vmatpush2.msra.mxu0 0.0
    %3505 = vmatprep.subr.mxu0 0.0
    %3506 = vmatpush2.msra.mxu0 0.0
    %3507 = vmatprep.subr.mxu0 0.0
    %3508 = vmatpush2.msra.mxu0 0.0
    %3509 = vmatprep.mubr.f32.mxu0 0.0
    %3510 = vmatmul.mubr.f32.gmra.mxu0 %v3434
    %v3511 = vpop.f32.mrf.mxu0
    %v3512 = vadd.f32 0.0, %v3511
    %v3513 = vpop.f32.mrf.mxu0
    %3514 = vmatprep.mubr.f32.mxu0 0.0
    %3515 = vmatmul.mubr.f32.gmra.mxu0 %v3437
    %v3516 = vpop.f32.mrf.mxu0
    %v3517 = vadd.f32 0.0, %v3516
    %v3518 = vpop.f32.mrf.mxu0
    %3519 = vmatprep.mubr.f32.mxu0 0.0
    %3520 = vmatmul.mubr.f32.gmra.mxu0 %v3440
    %v3521 = vpop.f32.mrf.mxu0
    %v3522 = vadd.f32 0.0, %v3521
    %v3523 = vpop.f32.mrf.mxu0
    %3524 = vmatprep.mubr.f32.mxu0 0.0
    %3525 = vmatmul.mubr.f32.gmra.mxu0 %v3443
    %v3526 = vpop.f32.mrf.mxu0
    %v3527 = vadd.f32 0.0, %v3526
    %v3528 = vpop.f32.mrf.mxu0
    %3529 = vdwg.mxu0
    %v3530 = vadd.f32 %v3222, %v3512
    %v3531 = vadd.f32 %v3223, %v3517
    %v3532 = vadd.f32 %v3224, %v3522
    %v3533 = vadd.f32 %v3225, %v3527
    %v3534 = vlaneseq
    %v3535 = vshrl.u32 %v3534, 7
    %v3536 = vsub.s32 0, %v3535
    %v3537 = vrot.slane %v3229, %v3536
    %v3538 = vadd.f32 %v3530, %v3537
    %v3539 = vadd.f32 %v3531, %v3537
    %v3540 = vadd.f32 %v3532, %v3537
    %v3541 = vadd.f32 %v3533, %v3537
    %v3542 = vld [vmem:[%s1] sm:$0xff]
    %v3543 = vld [vmem:[%s1 + $0x8] sm:$0xff]
    %v3544 = vld [vmem:[%s5 + $0x6] sm:$0x1]
    %v3545 = vld [vmem:[%s5 + $0x7] sm:$0x1]
    %v3546 = vld [vmem:[%s5 + $0x8] sm:$0x1]
    %s3547 = scalar_lea.vmem %s2, 64
    %v3548 = vld [vmem:[%s3547] sm:$0xff]
    %v3549 = vld [vmem:[%s3547 + $0x8] sm:$0xff]
    %v3550 = vld [vmem:[%s3547 + $0x10] sm:$0xff]
    %v3551 = vld [vmem:[%s3547 + $0x18] sm:$0xff]
    %v3552 = vsel %vm46, %v3542, 0.0
    %3553 = vadd.xlane.f32.xlu0 %v3552
    %v3554 = vpop.xlane.xlu0 %3553
    %v3555 = vsel %vm46, %v3543, 0.0
    %3556 = vadd.xlane.f32.xlu0 %v3555
    %v3557 = vpop.xlane.xlu0 %3556
    %v3558 = vmul.f32 %v3554, %v59
    %v3559 = vmul.f32 %v3557, %v59
    %v3560 = vsub.f32 %v3542, %v3558
    %v3561 = vsub.f32 %v3543, %v3559
    %v3562 = vmul.f32 %v3560, %v3560
    %v3563 = vmul.f32 %v3561, %v3561
    %v3564 = vsel %vm46, %v3562, 0.0
    %3565 = vadd.xlane.f32.xlu0 %v3564
    %v3566 = vpop.xlane.xlu0 %3565
    %v3567 = vsel %vm46, %v3563, 0.0
    %3568 = vadd.xlane.f32.xlu0 %v3567
    %v3569 = vpop.xlane.xlu0 %3568
    %v3570 = vmul.f32 %v3566, %v59
    %v3571 = vmul.f32 %v3569, %v59
    %v3572 = vadd.f32 %v3570, 1e-05
    %v3573 = vadd.f32 %v3571, 1e-05
    %v3574 = vrsqrt.pop %v3572
    %v3575 = vrsqrt.pop %v3573
    %v3576 = vmul.f32 %v3560, %v3574
    %v3577 = vmul.f32 %v3561, %v3575
    %v3578 = vlaneseq
    %v3579 = vshrl.u32 %v3578, 7
    %v3580 = vsub.s32 0, %v3579
    %v3581 = vrot.slane %v3544, %v3580
    %v3582 = vmul.f32 %v3576, %v3581
    %v3583 = vmul.f32 %v3577, %v3581
    %v3584 = vlaneseq
    %v3585 = vshrl.u32 %v3584, 7
    %v3586 = vsub.s32 0, %v3585
    %v3587 = vrot.slane %v3545, %v3586
    %v3588 = vadd.f32 %v3582, %v3587
    %v3589 = vadd.f32 %v3583, %v3587
    %v3591 = vsel %vm46, %v3588, 0
    %v3594 = vsel %vm46, %v3589, 0
    %3596 = vmatprep.subr.mxu0 0.0
    %3597 = vmatpush1.msra.mxu0 0.0
    %3598 = vmatprep.subr.mxu0 0.0
    %3599 = vmatpush1.msra.mxu0 0.0
    %3600 = vmatprep.subr.mxu0 0.0
    %3601 = vmatpush1.msra.mxu0 0.0
    %3602 = vmatprep.subr.mxu0 0.0
    %3603 = vmatpush1.msra.mxu0 0.0
    %3604 = vmatprep.subr.mxu0 0.0
    %3605 = vmatpush1.msra.mxu0 0.0
    %3606 = vmatprep.subr.mxu0 0.0
    %3607 = vmatpush1.msra.mxu0 0.0
    %3608 = vmatprep.subr.mxu0 0.0
    %3609 = vmatpush1.msra.mxu0 0.0
    %3610 = vmatprep.subr.mxu0 0.0
    %3611 = vmatpush1.msra.mxu0 0.0
    %3612 = vmatprep.subr.mxu0 0.0
    %3613 = vmatpush1.msra.mxu0 0.0
    %3614 = vmatprep.subr.mxu0 0.0
    %3615 = vmatpush1.msra.mxu0 0.0
    %3616 = vmatprep.subr.mxu0 0.0
    %3617 = vmatpush1.msra.mxu0 0.0
    %3618 = vmatprep.subr.mxu0 0.0
    %3619 = vmatpush1.msra.mxu0 0.0
    %3620 = vmatprep.subr.mxu0 0.0
    %3621 = vmatpush1.msra.mxu0 %v3551
    %3622 = vmatprep.subr.mxu0 0.0
    %3623 = vmatpush1.msra.mxu0 %v3550
    %3624 = vmatprep.subr.mxu0 0.0
    %3625 = vmatpush1.msra.mxu0 %v3549
    %3626 = vmatprep.subr.mxu0 0.0
    %3627 = vmatpush1.msra.mxu0 %v3548
    %3628 = vmatprep.subr.mxu0 0.0
    %3629 = vmatpush2.msra.mxu0 0.0
    %3630 = vmatprep.subr.mxu0 0.0
    %3631 = vmatpush2.msra.mxu0 0.0
    %3632 = vmatprep.subr.mxu0 0.0
    %3633 = vmatpush2.msra.mxu0 0.0
    %3634 = vmatprep.subr.mxu0 0.0
    %3635 = vmatpush2.msra.mxu0 0.0
    %3636 = vmatprep.subr.mxu0 0.0
    %3637 = vmatpush2.msra.mxu0 0.0
    %3638 = vmatprep.subr.mxu0 0.0
    %3639 = vmatpush2.msra.mxu0 0.0
    %3640 = vmatprep.subr.mxu0 0.0
    %3641 = vmatpush2.msra.mxu0 0.0
    %3642 = vmatprep.subr.mxu0 0.0
    %3643 = vmatpush2.msra.mxu0 0.0
    %3644 = vmatprep.subr.mxu0 0.0
    %3645 = vmatpush2.msra.mxu0 0.0
    %3646 = vmatprep.subr.mxu0 0.0
    %3647 = vmatpush2.msra.mxu0 0.0
    %3648 = vmatprep.subr.mxu0 0.0
    %3649 = vmatpush2.msra.mxu0 0.0
    %3650 = vmatprep.subr.mxu0 0.0
    %3651 = vmatpush2.msra.mxu0 0.0
    %3652 = vmatprep.subr.mxu0 0.0
    %3653 = vmatpush2.msra.mxu0 0.0
    %3654 = vmatprep.subr.mxu0 0.0
    %3655 = vmatpush2.msra.mxu0 0.0
    %3656 = vmatprep.subr.mxu0 0.0
    %3657 = vmatpush2.msra.mxu0 0.0
    %3658 = vmatprep.subr.mxu0 0.0
    %3659 = vmatpush2.msra.mxu0 0.0
    %3660 = vmatprep.mubr.f32.mxu0 0.0
    %3661 = vmatmul.mubr.f32.gmra.mxu0 %v3591
    %v3662 = vpop.f32.mrf.mxu0
    %v3663 = vadd.f32 0.0, %v3662
    %v3664 = vpop.f32.mrf.mxu0
    %3665 = vmatprep.mubr.f32.mxu0 0.0
    %3666 = vmatmul.mubr.f32.gmra.mxu0 %v3594
    %v3667 = vpop.f32.mrf.mxu0
    %v3668 = vadd.f32 0.0, %v3667
    %v3669 = vpop.f32.mrf.mxu0
    %3670 = vdwg.mxu0
    %3673 = vrot.lane.b32.xlu0 %v3663, 96
    %v3674 = vpop.permute.xlu0 %3673
    %3675 = vrot.lane.b32.xlu0 %v3668, 96
    %v3676 = vpop.permute.xlu0 %3675
    %v3677 = vsel %vm225, %v3663, 0
    %v3679 = vsel %vm225, %v3668, 0
    %v3681 = vsel %vm225, %v3674, 0
    %v3683 = vsel %vm225, %v3676, 0
    %3685 = vmatprep.subr.mxu0 0.0
    %3686 = vmatpush1.xpose.msra.mxu0 0.0
    %3687 = vmatprep.subr.mxu0 0.0
    %3688 = vmatpush1.xpose.msra.mxu0 0.0
    %3689 = vmatprep.subr.mxu0 0.0
    %3690 = vmatpush1.xpose.msra.mxu0 0.0
    %3691 = vmatprep.subr.mxu0 0.0
    %3692 = vmatpush1.xpose.msra.mxu0 0.0
    %3693 = vmatprep.subr.mxu0 0.0
    %3694 = vmatpush1.xpose.msra.mxu0 0.0
    %3695 = vmatprep.subr.mxu0 0.0
    %3696 = vmatpush1.xpose.msra.mxu0 0.0
    %3697 = vmatprep.subr.mxu0 0.0
    %3698 = vmatpush1.xpose.msra.mxu0 0.0
    %3699 = vmatprep.subr.mxu0 0.0
    %3700 = vmatpush1.xpose.msra.mxu0 0.0
    %3701 = vmatprep.subr.mxu0 0.0
    %3702 = vmatpush1.xpose.msra.mxu0 0.0
    %3703 = vmatprep.subr.mxu0 0.0
    %3704 = vmatpush1.xpose.msra.mxu0 0.0
    %3705 = vmatprep.subr.mxu0 0.0
    %3706 = vmatpush1.xpose.msra.mxu0 0.0
    %3707 = vmatprep.subr.mxu0 0.0
    %3708 = vmatpush1.xpose.msra.mxu0 0.0
    %3709 = vmatprep.subr.mxu0 0.0
    %3710 = vmatpush1.xpose.msra.mxu0 0.0
    %3711 = vmatprep.subr.mxu0 0.0
    %3712 = vmatpush1.xpose.msra.mxu0 0.0
    %3713 = vmatprep.subr.mxu0 0.0
    %3714 = vmatpush1.xpose.msra.mxu0 %v3683
    %3715 = vmatprep.subr.mxu0 0.0
    %3716 = vmatpush1.xpose.msra.mxu0 %v3681
    %3717 = vmatprep.subr.mxu0 0.0
    %3718 = vmatpush2.xpose.msra.mxu0 0.0
    %3719 = vmatprep.subr.mxu0 0.0
    %3720 = vmatpush2.xpose.msra.mxu0 0.0
    %3721 = vmatprep.subr.mxu0 0.0
    %3722 = vmatpush2.xpose.msra.mxu0 0.0
    %3723 = vmatprep.subr.mxu0 0.0
    %3724 = vmatpush2.xpose.msra.mxu0 0.0
    %3725 = vmatprep.subr.mxu0 0.0
    %3726 = vmatpush2.xpose.msra.mxu0 0.0
    %3727 = vmatprep.subr.mxu0 0.0
    %3728 = vmatpush2.xpose.msra.mxu0 0.0
    %3729 = vmatprep.subr.mxu0 0.0
    %3730 = vmatpush2.xpose.msra.mxu0 0.0
    %3731 = vmatprep.subr.mxu0 0.0
    %3732 = vmatpush2.xpose.msra.mxu0 0.0
    %3733 = vmatprep.subr.mxu0 0.0
    %3734 = vmatpush2.xpose.msra.mxu0 0.0
    %3735 = vmatprep.subr.mxu0 0.0
    %3736 = vmatpush2.xpose.msra.mxu0 0.0
    %3737 = vmatprep.subr.mxu0 0.0
    %3738 = vmatpush2.xpose.msra.mxu0 0.0
    %3739 = vmatprep.subr.mxu0 0.0
    %3740 = vmatpush2.xpose.msra.mxu0 0.0
    %3741 = vmatprep.subr.mxu0 0.0
    %3742 = vmatpush2.xpose.msra.mxu0 0.0
    %3743 = vmatprep.subr.mxu0 0.0
    %3744 = vmatpush2.xpose.msra.mxu0 0.0
    %3745 = vmatprep.subr.mxu0 0.0
    %3746 = vmatpush2.xpose.msra.mxu0 0.0
    %3747 = vmatprep.subr.mxu0 0.0
    %3748 = vmatpush2.xpose.msra.mxu0 0.0
    %3749 = vmatprep.mubr.f32.mxu0 0.0
    %3750 = vmatmul.mubr.f32.gmra.mxu0 %v3677
    %v3751 = vpop.f32.mrf.mxu0
    %v3752 = vadd.f32 %v31, %v3751
    %v3753 = vpop.f32.mrf.mxu0
    %3754 = vmatprep.mubr.f32.mxu0 0.0
    %3755 = vmatmul.mubr.f32.gmra.mxu0 %v3679
    %v3756 = vpop.f32.mrf.mxu0
    %v3757 = vadd.f32 %v32, %v3756
    %v3758 = vpop.f32.mrf.mxu0
    %3759 = vdwg.mxu0
    %v3760 = vsel %vm1342, %v3752, -inf
    %3761 = vmax.xlane.f32.xlu0 %v3760
    %v3762 = vpop.xlane.xlu0 %3761
    %v3763 = vsel %vm1342, %v3757, -inf
    %3764 = vmax.xlane.f32.xlu0 %v3763
    %v3765 = vpop.xlane.xlu0 %3764
    %v3766 = vsub.f32 %v3752, %v3762
    %v3767 = vsub.f32 %v3757, %v3765
    %v3768 = vmul.f32 %v3766, 1.442695
    %v3769 = vpow.pop %v3768
    %v3770 = vmul.f32 %v3767, 1.442695
    %v3771 = vpow.pop %v3770
    %v3772 = vsel %vm1342, %v3769, 0.0
    %3773 = vadd.xlane.f32.xlu0 %v3772
    %v3774 = vpop.xlane.xlu0 %3773
    %v3775 = vsel %vm1342, %v3771, 0.0
    %3776 = vadd.xlane.f32.xlu0 %v3775
    %v3777 = vpop.xlane.xlu0 %3776
    %v3778 = vrcp.pop %v3774
    %v3779 = vmul.f32 %v3769, %v3778
    %v3780 = vrcp.pop %v3777
    %v3781 = vmul.f32 %v3771, %v3780
    %3782 = vrot.lane.b32.xlu0 %v3663, 64
    %v3783 = vpop.permute.xlu0 %3782
    %3784 = vrot.lane.b32.xlu0 %v3668, 64
    %v3785 = vpop.permute.xlu0 %3784
    %v3789 = vsel %vm1342, %v3779, 0
    %v3792 = vsel %vm1342, %v3781, 0
    %3794 = vmatprep.subr.mxu0 0.0
    %3795 = vmatpush1.msra.mxu0 0.0
    %3796 = vmatprep.subr.mxu0 0.0
    %3797 = vmatpush1.msra.mxu0 0.0
    %3798 = vmatprep.subr.mxu0 0.0
    %3799 = vmatpush1.msra.mxu0 0.0
    %3800 = vmatprep.subr.mxu0 0.0
    %3801 = vmatpush1.msra.mxu0 0.0
    %3802 = vmatprep.subr.mxu0 0.0
    %3803 = vmatpush1.msra.mxu0 0.0
    %3804 = vmatprep.subr.mxu0 0.0
    %3805 = vmatpush1.msra.mxu0 0.0
    %3806 = vmatprep.subr.mxu0 0.0
    %3807 = vmatpush1.msra.mxu0 0.0
    %3808 = vmatprep.subr.mxu0 0.0
    %3809 = vmatpush1.msra.mxu0 0.0
    %3810 = vmatprep.subr.mxu0 0.0
    %3811 = vmatpush1.msra.mxu0 0.0
    %3812 = vmatprep.subr.mxu0 0.0
    %3813 = vmatpush1.msra.mxu0 0.0
    %3814 = vmatprep.subr.mxu0 0.0
    %3815 = vmatpush1.msra.mxu0 0.0
    %3816 = vmatprep.subr.mxu0 0.0
    %3817 = vmatpush1.msra.mxu0 0.0
    %3818 = vmatprep.subr.mxu0 0.0
    %3819 = vmatpush1.msra.mxu0 0.0
    %3820 = vmatprep.subr.mxu0 0.0
    %3821 = vmatpush1.msra.mxu0 0.0
    %3822 = vmatprep.subr.mxu0 0.0
    %3823 = vmatpush1.msra.mxu0 %v3785
    %3824 = vmatprep.subr.mxu0 0.0
    %3825 = vmatpush1.msra.mxu0 %v3783
    %3826 = vmatprep.subr.mxu0 0.0
    %3827 = vmatpush2.msra.mxu0 0.0
    %3828 = vmatprep.subr.mxu0 0.0
    %3829 = vmatpush2.msra.mxu0 0.0
    %3830 = vmatprep.subr.mxu0 0.0
    %3831 = vmatpush2.msra.mxu0 0.0
    %3832 = vmatprep.subr.mxu0 0.0
    %3833 = vmatpush2.msra.mxu0 0.0
    %3834 = vmatprep.subr.mxu0 0.0
    %3835 = vmatpush2.msra.mxu0 0.0
    %3836 = vmatprep.subr.mxu0 0.0
    %3837 = vmatpush2.msra.mxu0 0.0
    %3838 = vmatprep.subr.mxu0 0.0
    %3839 = vmatpush2.msra.mxu0 0.0
    %3840 = vmatprep.subr.mxu0 0.0
    %3841 = vmatpush2.msra.mxu0 0.0
    %3842 = vmatprep.subr.mxu0 0.0
    %3843 = vmatpush2.msra.mxu0 0.0
    %3844 = vmatprep.subr.mxu0 0.0
    %3845 = vmatpush2.msra.mxu0 0.0
    %3846 = vmatprep.subr.mxu0 0.0
    %3847 = vmatpush2.msra.mxu0 0.0
    %3848 = vmatprep.subr.mxu0 0.0
    %3849 = vmatpush2.msra.mxu0 0.0
    %3850 = vmatprep.subr.mxu0 0.0
    %3851 = vmatpush2.msra.mxu0 0.0
    %3852 = vmatprep.subr.mxu0 0.0
    %3853 = vmatpush2.msra.mxu0 0.0
    %3854 = vmatprep.subr.mxu0 0.0
    %3855 = vmatpush2.msra.mxu0 0.0
    %3856 = vmatprep.subr.mxu0 0.0
    %3857 = vmatpush2.msra.mxu0 0.0
    %3858 = vmatprep.mubr.f32.mxu0 0.0
    %3859 = vmatmul.mubr.f32.gmra.mxu0 %v3789
    %v3860 = vpop.f32.mrf.mxu0
    %v3861 = vadd.f32 0.0, %v3860
    %v3862 = vpop.f32.mrf.mxu0
    %3863 = vmatprep.mubr.f32.mxu0 0.0
    %3864 = vmatmul.mubr.f32.gmra.mxu0 %v3792
    %v3865 = vpop.f32.mrf.mxu0
    %v3866 = vadd.f32 0.0, %v3865
    %v3867 = vpop.f32.mrf.mxu0
    %3868 = vdwg.mxu0
    %3869 = vrot.lane.b32.xlu0 %v3663, 120
    %v3870 = vpop.permute.xlu0 %3869
    %3871 = vrot.lane.b32.xlu0 %v3668, 120
    %v3872 = vpop.permute.xlu0 %3871
    %3873 = vrot.lane.b32.xlu0 %v3663, 88
    %v3874 = vpop.permute.xlu0 %3873
    %3875 = vrot.lane.b32.xlu0 %v3668, 88
    %v3876 = vpop.permute.xlu0 %3875
    %v3877 = vsel %vm225, %v3870, 0
    %v3879 = vsel %vm225, %v3872, 0
    %v3881 = vsel %vm225, %v3874, 0
    %v3883 = vsel %vm225, %v3876, 0
    %3885 = vmatprep.subr.mxu0 0.0
    %3886 = vmatpush1.xpose.msra.mxu0 0.0
    %3887 = vmatprep.subr.mxu0 0.0
    %3888 = vmatpush1.xpose.msra.mxu0 0.0
    %3889 = vmatprep.subr.mxu0 0.0
    %3890 = vmatpush1.xpose.msra.mxu0 0.0
    %3891 = vmatprep.subr.mxu0 0.0
    %3892 = vmatpush1.xpose.msra.mxu0 0.0
    %3893 = vmatprep.subr.mxu0 0.0
    %3894 = vmatpush1.xpose.msra.mxu0 0.0
    %3895 = vmatprep.subr.mxu0 0.0
    %3896 = vmatpush1.xpose.msra.mxu0 0.0
    %3897 = vmatprep.subr.mxu0 0.0
    %3898 = vmatpush1.xpose.msra.mxu0 0.0
    %3899 = vmatprep.subr.mxu0 0.0
    %3900 = vmatpush1.xpose.msra.mxu0 0.0
    %3901 = vmatprep.subr.mxu0 0.0
    %3902 = vmatpush1.xpose.msra.mxu0 0.0
    %3903 = vmatprep.subr.mxu0 0.0
    %3904 = vmatpush1.xpose.msra.mxu0 0.0
    %3905 = vmatprep.subr.mxu0 0.0
    %3906 = vmatpush1.xpose.msra.mxu0 0.0
    %3907 = vmatprep.subr.mxu0 0.0
    %3908 = vmatpush1.xpose.msra.mxu0 0.0
    %3909 = vmatprep.subr.mxu0 0.0
    %3910 = vmatpush1.xpose.msra.mxu0 0.0
    %3911 = vmatprep.subr.mxu0 0.0
    %3912 = vmatpush1.xpose.msra.mxu0 0.0
    %3913 = vmatprep.subr.mxu0 0.0
    %3914 = vmatpush1.xpose.msra.mxu0 %v3883
    %3915 = vmatprep.subr.mxu0 0.0
    %3916 = vmatpush1.xpose.msra.mxu0 %v3881
    %3917 = vmatprep.subr.mxu0 0.0
    %3918 = vmatpush2.xpose.msra.mxu0 0.0
    %3919 = vmatprep.subr.mxu0 0.0
    %3920 = vmatpush2.xpose.msra.mxu0 0.0
    %3921 = vmatprep.subr.mxu0 0.0
    %3922 = vmatpush2.xpose.msra.mxu0 0.0
    %3923 = vmatprep.subr.mxu0 0.0
    %3924 = vmatpush2.xpose.msra.mxu0 0.0
    %3925 = vmatprep.subr.mxu0 0.0
    %3926 = vmatpush2.xpose.msra.mxu0 0.0
    %3927 = vmatprep.subr.mxu0 0.0
    %3928 = vmatpush2.xpose.msra.mxu0 0.0
    %3929 = vmatprep.subr.mxu0 0.0
    %3930 = vmatpush2.xpose.msra.mxu0 0.0
    %3931 = vmatprep.subr.mxu0 0.0
    %3932 = vmatpush2.xpose.msra.mxu0 0.0
    %3933 = vmatprep.subr.mxu0 0.0
    %3934 = vmatpush2.xpose.msra.mxu0 0.0
    %3935 = vmatprep.subr.mxu0 0.0
    %3936 = vmatpush2.xpose.msra.mxu0 0.0
    %3937 = vmatprep.subr.mxu0 0.0
    %3938 = vmatpush2.xpose.msra.mxu0 0.0
    %3939 = vmatprep.subr.mxu0 0.0
    %3940 = vmatpush2.xpose.msra.mxu0 0.0
    %3941 = vmatprep.subr.mxu0 0.0
    %3942 = vmatpush2.xpose.msra.mxu0 0.0
    %3943 = vmatprep.subr.mxu0 0.0
    %3944 = vmatpush2.xpose.msra.mxu0 0.0
    %3945 = vmatprep.subr.mxu0 0.0
    %3946 = vmatpush2.xpose.msra.mxu0 0.0
    %3947 = vmatprep.subr.mxu0 0.0
    %3948 = vmatpush2.xpose.msra.mxu0 0.0
    %3949 = vmatprep.mubr.f32.mxu0 0.0
    %3950 = vmatmul.mubr.f32.gmra.mxu0 %v3877
    %v3951 = vpop.f32.mrf.mxu0
    %v3952 = vadd.f32 %v31, %v3951
    %v3953 = vpop.f32.mrf.mxu0
    %3954 = vmatprep.mubr.f32.mxu0 0.0
    %3955 = vmatmul.mubr.f32.gmra.mxu0 %v3879
    %v3956 = vpop.f32.mrf.mxu0
    %v3957 = vadd.f32 %v32, %v3956
    %v3958 = vpop.f32.mrf.mxu0
    %3959 = vdwg.mxu0
    %v3960 = vsel %vm1342, %v3952, -inf
    %3961 = vmax.xlane.f32.xlu0 %v3960
    %v3962 = vpop.xlane.xlu0 %3961
    %v3963 = vsel %vm1342, %v3957, -inf
    %3964 = vmax.xlane.f32.xlu0 %v3963
    %v3965 = vpop.xlane.xlu0 %3964
    %v3966 = vsub.f32 %v3952, %v3962
    %v3967 = vsub.f32 %v3957, %v3965
    %v3968 = vmul.f32 %v3966, 1.442695
    %v3969 = vpow.pop %v3968
    %v3970 = vmul.f32 %v3967, 1.442695
    %v3971 = vpow.pop %v3970
    %v3972 = vsel %vm1342, %v3969, 0.0
    %3973 = vadd.xlane.f32.xlu0 %v3972
    %v3974 = vpop.xlane.xlu0 %3973
    %v3975 = vsel %vm1342, %v3971, 0.0
    %3976 = vadd.xlane.f32.xlu0 %v3975
    %v3977 = vpop.xlane.xlu0 %3976
    %v3978 = vrcp.pop %v3974
    %v3979 = vmul.f32 %v3969, %v3978
    %v3980 = vrcp.pop %v3977
    %v3981 = vmul.f32 %v3971, %v3980
    %3982 = vrot.lane.b32.xlu0 %v3663, 56
    %v3983 = vpop.permute.xlu0 %3982
    %3984 = vrot.lane.b32.xlu0 %v3668, 56
    %v3985 = vpop.permute.xlu0 %3984
    %v3989 = vsel %vm1342, %v3979, 0
    %v3992 = vsel %vm1342, %v3981, 0
    %3994 = vmatprep.subr.mxu0 0.0
    %3995 = vmatpush1.msra.mxu0 0.0
    %3996 = vmatprep.subr.mxu0 0.0
    %3997 = vmatpush1.msra.mxu0 0.0
    %3998 = vmatprep.subr.mxu0 0.0
    %3999 = vmatpush1.msra.mxu0 0.0
    %4000 = vmatprep.subr.mxu0 0.0
    %4001 = vmatpush1.msra.mxu0 0.0
    %4002 = vmatprep.subr.mxu0 0.0
    %4003 = vmatpush1.msra.mxu0 0.0
    %4004 = vmatprep.subr.mxu0 0.0
    %4005 = vmatpush1.msra.mxu0 0.0
    %4006 = vmatprep.subr.mxu0 0.0
    %4007 = vmatpush1.msra.mxu0 0.0
    %4008 = vmatprep.subr.mxu0 0.0
    %4009 = vmatpush1.msra.mxu0 0.0
    %4010 = vmatprep.subr.mxu0 0.0
    %4011 = vmatpush1.msra.mxu0 0.0
    %4012 = vmatprep.subr.mxu0 0.0
    %4013 = vmatpush1.msra.mxu0 0.0
    %4014 = vmatprep.subr.mxu0 0.0
    %4015 = vmatpush1.msra.mxu0 0.0
    %4016 = vmatprep.subr.mxu0 0.0
    %4017 = vmatpush1.msra.mxu0 0.0
    %4018 = vmatprep.subr.mxu0 0.0
    %4019 = vmatpush1.msra.mxu0 0.0
    %4020 = vmatprep.subr.mxu0 0.0
    %4021 = vmatpush1.msra.mxu0 0.0
    %4022 = vmatprep.subr.mxu0 0.0
    %4023 = vmatpush1.msra.mxu0 %v3985
    %4024 = vmatprep.subr.mxu0 0.0
    %4025 = vmatpush1.msra.mxu0 %v3983
    %4026 = vmatprep.subr.mxu0 0.0
    %4027 = vmatpush2.msra.mxu0 0.0
    %4028 = vmatprep.subr.mxu0 0.0
    %4029 = vmatpush2.msra.mxu0 0.0
    %4030 = vmatprep.subr.mxu0 0.0
    %4031 = vmatpush2.msra.mxu0 0.0
    %4032 = vmatprep.subr.mxu0 0.0
    %4033 = vmatpush2.msra.mxu0 0.0
    %4034 = vmatprep.subr.mxu0 0.0
    %4035 = vmatpush2.msra.mxu0 0.0
    %4036 = vmatprep.subr.mxu0 0.0
    %4037 = vmatpush2.msra.mxu0 0.0
    %4038 = vmatprep.subr.mxu0 0.0
    %4039 = vmatpush2.msra.mxu0 0.0
    %4040 = vmatprep.subr.mxu0 0.0
    %4041 = vmatpush2.msra.mxu0 0.0
    %4042 = vmatprep.subr.mxu0 0.0
    %4043 = vmatpush2.msra.mxu0 0.0
    %4044 = vmatprep.subr.mxu0 0.0
    %4045 = vmatpush2.msra.mxu0 0.0
    %4046 = vmatprep.subr.mxu0 0.0
    %4047 = vmatpush2.msra.mxu0 0.0
    %4048 = vmatprep.subr.mxu0 0.0
    %4049 = vmatpush2.msra.mxu0 0.0
    %4050 = vmatprep.subr.mxu0 0.0
    %4051 = vmatpush2.msra.mxu0 0.0
    %4052 = vmatprep.subr.mxu0 0.0
    %4053 = vmatpush2.msra.mxu0 0.0
    %4054 = vmatprep.subr.mxu0 0.0
    %4055 = vmatpush2.msra.mxu0 0.0
    %4056 = vmatprep.subr.mxu0 0.0
    %4057 = vmatpush2.msra.mxu0 0.0
    %4058 = vmatprep.mubr.f32.mxu0 0.0
    %4059 = vmatmul.mubr.f32.gmra.mxu0 %v3989
    %v4060 = vpop.f32.mrf.mxu0
    %v4061 = vadd.f32 0.0, %v4060
    %v4062 = vpop.f32.mrf.mxu0
    %4063 = vmatprep.mubr.f32.mxu0 0.0
    %4064 = vmatmul.mubr.f32.gmra.mxu0 %v3992
    %v4065 = vpop.f32.mrf.mxu0
    %v4066 = vadd.f32 0.0, %v4065
    %v4067 = vpop.f32.mrf.mxu0
    %4068 = vdwg.mxu0
    %4069 = vrot.lane.b32.xlu0 %v3663, 112
    %v4070 = vpop.permute.xlu0 %4069
    %4071 = vrot.lane.b32.xlu0 %v3668, 112
    %v4072 = vpop.permute.xlu0 %4071
    %4073 = vrot.lane.b32.xlu0 %v3663, 80
    %v4074 = vpop.permute.xlu0 %4073
    %4075 = vrot.lane.b32.xlu0 %v3668, 80
    %v4076 = vpop.permute.xlu0 %4075
    %v4077 = vsel %vm225, %v4070, 0
    %v4079 = vsel %vm225, %v4072, 0
    %v4081 = vsel %vm225, %v4074, 0
    %v4083 = vsel %vm225, %v4076, 0
    %4085 = vmatprep.subr.mxu0 0.0
    %4086 = vmatpush1.xpose.msra.mxu0 0.0
    %4087 = vmatprep.subr.mxu0 0.0
    %4088 = vmatpush1.xpose.msra.mxu0 0.0
    %4089 = vmatprep.subr.mxu0 0.0
    %4090 = vmatpush1.xpose.msra.mxu0 0.0
    %4091 = vmatprep.subr.mxu0 0.0
    %4092 = vmatpush1.xpose.msra.mxu0 0.0
    %4093 = vmatprep.subr.mxu0 0.0
    %4094 = vmatpush1.xpose.msra.mxu0 0.0
    %4095 = vmatprep.subr.mxu0 0.0
    %4096 = vmatpush1.xpose.msra.mxu0 0.0
    %4097 = vmatprep.subr.mxu0 0.0
    %4098 = vmatpush1.xpose.msra.mxu0 0.0
    %4099 = vmatprep.subr.mxu0 0.0
    %4100 = vmatpush1.xpose.msra.mxu0 0.0
    %4101 = vmatprep.subr.mxu0 0.0
    %4102 = vmatpush1.xpose.msra.mxu0 0.0
    %4103 = vmatprep.subr.mxu0 0.0
    %4104 = vmatpush1.xpose.msra.mxu0 0.0
    %4105 = vmatprep.subr.mxu0 0.0
    %4106 = vmatpush1.xpose.msra.mxu0 0.0
    %4107 = vmatprep.subr.mxu0 0.0
    %4108 = vmatpush1.xpose.msra.mxu0 0.0
    %4109 = vmatprep.subr.mxu0 0.0
    %4110 = vmatpush1.xpose.msra.mxu0 0.0
    %4111 = vmatprep.subr.mxu0 0.0
    %4112 = vmatpush1.xpose.msra.mxu0 0.0
    %4113 = vmatprep.subr.mxu0 0.0
    %4114 = vmatpush1.xpose.msra.mxu0 %v4083
    %4115 = vmatprep.subr.mxu0 0.0
    %4116 = vmatpush1.xpose.msra.mxu0 %v4081
    %4117 = vmatprep.subr.mxu0 0.0
    %4118 = vmatpush2.xpose.msra.mxu0 0.0
    %4119 = vmatprep.subr.mxu0 0.0
    %4120 = vmatpush2.xpose.msra.mxu0 0.0
    %4121 = vmatprep.subr.mxu0 0.0
    %4122 = vmatpush2.xpose.msra.mxu0 0.0
    %4123 = vmatprep.subr.mxu0 0.0
    %4124 = vmatpush2.xpose.msra.mxu0 0.0
    %4125 = vmatprep.subr.mxu0 0.0
    %4126 = vmatpush2.xpose.msra.mxu0 0.0
    %4127 = vmatprep.subr.mxu0 0.0
    %4128 = vmatpush2.xpose.msra.mxu0 0.0
    %4129 = vmatprep.subr.mxu0 0.0
    %4130 = vmatpush2.xpose.msra.mxu0 0.0
    %4131 = vmatprep.subr.mxu0 0.0
    %4132 = vmatpush2.xpose.msra.mxu0 0.0
    %4133 = vmatprep.subr.mxu0 0.0
    %4134 = vmatpush2.xpose.msra.mxu0 0.0
    %4135 = vmatprep.subr.mxu0 0.0
    %4136 = vmatpush2.xpose.msra.mxu0 0.0
    %4137 = vmatprep.subr.mxu0 0.0
    %4138 = vmatpush2.xpose.msra.mxu0 0.0
    %4139 = vmatprep.subr.mxu0 0.0
    %4140 = vmatpush2.xpose.msra.mxu0 0.0
    %4141 = vmatprep.subr.mxu0 0.0
    %4142 = vmatpush2.xpose.msra.mxu0 0.0
    %4143 = vmatprep.subr.mxu0 0.0
    %4144 = vmatpush2.xpose.msra.mxu0 0.0
    %4145 = vmatprep.subr.mxu0 0.0
    %4146 = vmatpush2.xpose.msra.mxu0 0.0
    %4147 = vmatprep.subr.mxu0 0.0
    %4148 = vmatpush2.xpose.msra.mxu0 0.0
    %4149 = vmatprep.mubr.f32.mxu0 0.0
    %4150 = vmatmul.mubr.f32.gmra.mxu0 %v4077
    %v4151 = vpop.f32.mrf.mxu0
    %v4152 = vadd.f32 %v31, %v4151
    %v4153 = vpop.f32.mrf.mxu0
    %4154 = vmatprep.mubr.f32.mxu0 0.0
    %4155 = vmatmul.mubr.f32.gmra.mxu0 %v4079
    %v4156 = vpop.f32.mrf.mxu0
    %v4157 = vadd.f32 %v32, %v4156
    %v4158 = vpop.f32.mrf.mxu0
    %4159 = vdwg.mxu0
    %v4160 = vsel %vm1342, %v4152, -inf
    %4161 = vmax.xlane.f32.xlu0 %v4160
    %v4162 = vpop.xlane.xlu0 %4161
    %v4163 = vsel %vm1342, %v4157, -inf
    %4164 = vmax.xlane.f32.xlu0 %v4163
    %v4165 = vpop.xlane.xlu0 %4164
    %v4166 = vsub.f32 %v4152, %v4162
    %v4167 = vsub.f32 %v4157, %v4165
    %v4168 = vmul.f32 %v4166, 1.442695
    %v4169 = vpow.pop %v4168
    %v4170 = vmul.f32 %v4167, 1.442695
    %v4171 = vpow.pop %v4170
    %v4172 = vsel %vm1342, %v4169, 0.0
    %4173 = vadd.xlane.f32.xlu0 %v4172
    %v4174 = vpop.xlane.xlu0 %4173
    %v4175 = vsel %vm1342, %v4171, 0.0
    %4176 = vadd.xlane.f32.xlu0 %v4175
    %v4177 = vpop.xlane.xlu0 %4176
    %v4178 = vrcp.pop %v4174
    %v4179 = vmul.f32 %v4169, %v4178
    %v4180 = vrcp.pop %v4177
    %v4181 = vmul.f32 %v4171, %v4180
    %4182 = vrot.lane.b32.xlu0 %v3663, 48
    %v4183 = vpop.permute.xlu0 %4182
    %4184 = vrot.lane.b32.xlu0 %v3668, 48
    %v4185 = vpop.permute.xlu0 %4184
    %v4189 = vsel %vm1342, %v4179, 0
    %v4192 = vsel %vm1342, %v4181, 0
    %4194 = vmatprep.subr.mxu0 0.0
    %4195 = vmatpush1.msra.mxu0 0.0
    %4196 = vmatprep.subr.mxu0 0.0
    %4197 = vmatpush1.msra.mxu0 0.0
    %4198 = vmatprep.subr.mxu0 0.0
    %4199 = vmatpush1.msra.mxu0 0.0
    %4200 = vmatprep.subr.mxu0 0.0
    %4201 = vmatpush1.msra.mxu0 0.0
    %4202 = vmatprep.subr.mxu0 0.0
    %4203 = vmatpush1.msra.mxu0 0.0
    %4204 = vmatprep.subr.mxu0 0.0
    %4205 = vmatpush1.msra.mxu0 0.0
    %4206 = vmatprep.subr.mxu0 0.0
    %4207 = vmatpush1.msra.mxu0 0.0
    %4208 = vmatprep.subr.mxu0 0.0
    %4209 = vmatpush1.msra.mxu0 0.0
    %4210 = vmatprep.subr.mxu0 0.0
    %4211 = vmatpush1.msra.mxu0 0.0
    %4212 = vmatprep.subr.mxu0 0.0
    %4213 = vmatpush1.msra.mxu0 0.0
    %4214 = vmatprep.subr.mxu0 0.0
    %4215 = vmatpush1.msra.mxu0 0.0
    %4216 = vmatprep.subr.mxu0 0.0
    %4217 = vmatpush1.msra.mxu0 0.0
    %4218 = vmatprep.subr.mxu0 0.0
    %4219 = vmatpush1.msra.mxu0 0.0
    %4220 = vmatprep.subr.mxu0 0.0
    %4221 = vmatpush1.msra.mxu0 0.0
    %4222 = vmatprep.subr.mxu0 0.0
    %4223 = vmatpush1.msra.mxu0 %v4185
    %4224 = vmatprep.subr.mxu0 0.0
    %4225 = vmatpush1.msra.mxu0 %v4183
    %4226 = vmatprep.subr.mxu0 0.0
    %4227 = vmatpush2.msra.mxu0 0.0
    %4228 = vmatprep.subr.mxu0 0.0
    %4229 = vmatpush2.msra.mxu0 0.0
    %4230 = vmatprep.subr.mxu0 0.0
    %4231 = vmatpush2.msra.mxu0 0.0
    %4232 = vmatprep.subr.mxu0 0.0
    %4233 = vmatpush2.msra.mxu0 0.0
    %4234 = vmatprep.subr.mxu0 0.0
    %4235 = vmatpush2.msra.mxu0 0.0
    %4236 = vmatprep.subr.mxu0 0.0
    %4237 = vmatpush2.msra.mxu0 0.0
    %4238 = vmatprep.subr.mxu0 0.0
    %4239 = vmatpush2.msra.mxu0 0.0
    %4240 = vmatprep.subr.mxu0 0.0
    %4241 = vmatpush2.msra.mxu0 0.0
    %4242 = vmatprep.subr.mxu0 0.0
    %4243 = vmatpush2.msra.mxu0 0.0
    %4244 = vmatprep.subr.mxu0 0.0
    %4245 = vmatpush2.msra.mxu0 0.0
    %4246 = vmatprep.subr.mxu0 0.0
    %4247 = vmatpush2.msra.mxu0 0.0
    %4248 = vmatprep.subr.mxu0 0.0
    %4249 = vmatpush2.msra.mxu0 0.0
    %4250 = vmatprep.subr.mxu0 0.0
    %4251 = vmatpush2.msra.mxu0 0.0
    %4252 = vmatprep.subr.mxu0 0.0
    %4253 = vmatpush2.msra.mxu0 0.0
    %4254 = vmatprep.subr.mxu0 0.0
    %4255 = vmatpush2.msra.mxu0 0.0
    %4256 = vmatprep.subr.mxu0 0.0
    %4257 = vmatpush2.msra.mxu0 0.0
    %4258 = vmatprep.mubr.f32.mxu0 0.0
    %4259 = vmatmul.mubr.f32.gmra.mxu0 %v4189
    %v4260 = vpop.f32.mrf.mxu0
    %v4261 = vadd.f32 0.0, %v4260
    %v4262 = vpop.f32.mrf.mxu0
    %4263 = vmatprep.mubr.f32.mxu0 0.0
    %4264 = vmatmul.mubr.f32.gmra.mxu0 %v4192
    %v4265 = vpop.f32.mrf.mxu0
    %v4266 = vadd.f32 0.0, %v4265
    %v4267 = vpop.f32.mrf.mxu0
    %4268 = vdwg.mxu0
    %4269 = vrot.lane.b32.xlu0 %v3663, 104
    %v4270 = vpop.permute.xlu0 %4269
    %4271 = vrot.lane.b32.xlu0 %v3668, 104
    %v4272 = vpop.permute.xlu0 %4271
    %4273 = vrot.lane.b32.xlu0 %v3663, 72
    %v4274 = vpop.permute.xlu0 %4273
    %4275 = vrot.lane.b32.xlu0 %v3668, 72
    %v4276 = vpop.permute.xlu0 %4275
    %v4277 = vsel %vm225, %v4270, 0
    %v4279 = vsel %vm225, %v4272, 0
    %v4281 = vsel %vm225, %v4274, 0
    %v4283 = vsel %vm225, %v4276, 0
    %4285 = vmatprep.subr.mxu0 0.0
    %4286 = vmatpush1.xpose.msra.mxu0 0.0
    %4287 = vmatprep.subr.mxu0 0.0
    %4288 = vmatpush1.xpose.msra.mxu0 0.0
    %4289 = vmatprep.subr.mxu0 0.0
    %4290 = vmatpush1.xpose.msra.mxu0 0.0
    %4291 = vmatprep.subr.mxu0 0.0
    %4292 = vmatpush1.xpose.msra.mxu0 0.0
    %4293 = vmatprep.subr.mxu0 0.0
    %4294 = vmatpush1.xpose.msra.mxu0 0.0
    %4295 = vmatprep.subr.mxu0 0.0
    %4296 = vmatpush1.xpose.msra.mxu0 0.0
    %4297 = vmatprep.subr.mxu0 0.0
    %4298 = vmatpush1.xpose.msra.mxu0 0.0
    %4299 = vmatprep.subr.mxu0 0.0
    %4300 = vmatpush1.xpose.msra.mxu0 0.0
    %4301 = vmatprep.subr.mxu0 0.0
    %4302 = vmatpush1.xpose.msra.mxu0 0.0
    %4303 = vmatprep.subr.mxu0 0.0
    %4304 = vmatpush1.xpose.msra.mxu0 0.0
    %4305 = vmatprep.subr.mxu0 0.0
    %4306 = vmatpush1.xpose.msra.mxu0 0.0
    %4307 = vmatprep.subr.mxu0 0.0
    %4308 = vmatpush1.xpose.msra.mxu0 0.0
    %4309 = vmatprep.subr.mxu0 0.0
    %4310 = vmatpush1.xpose.msra.mxu0 0.0
    %4311 = vmatprep.subr.mxu0 0.0
    %4312 = vmatpush1.xpose.msra.mxu0 0.0
    %4313 = vmatprep.subr.mxu0 0.0
    %4314 = vmatpush1.xpose.msra.mxu0 %v4283
    %4315 = vmatprep.subr.mxu0 0.0
    %4316 = vmatpush1.xpose.msra.mxu0 %v4281
    %4317 = vmatprep.subr.mxu0 0.0
    %4318 = vmatpush2.xpose.msra.mxu0 0.0
    %4319 = vmatprep.subr.mxu0 0.0
    %4320 = vmatpush2.xpose.msra.mxu0 0.0
    %4321 = vmatprep.subr.mxu0 0.0
    %4322 = vmatpush2.xpose.msra.mxu0 0.0
    %4323 = vmatprep.subr.mxu0 0.0
    %4324 = vmatpush2.xpose.msra.mxu0 0.0
    %4325 = vmatprep.subr.mxu0 0.0
    %4326 = vmatpush2.xpose.msra.mxu0 0.0
    %4327 = vmatprep.subr.mxu0 0.0
    %4328 = vmatpush2.xpose.msra.mxu0 0.0
    %4329 = vmatprep.subr.mxu0 0.0
    %4330 = vmatpush2.xpose.msra.mxu0 0.0
    %4331 = vmatprep.subr.mxu0 0.0
    %4332 = vmatpush2.xpose.msra.mxu0 0.0
    %4333 = vmatprep.subr.mxu0 0.0
    %4334 = vmatpush2.xpose.msra.mxu0 0.0
    %4335 = vmatprep.subr.mxu0 0.0
    %4336 = vmatpush2.xpose.msra.mxu0 0.0
    %4337 = vmatprep.subr.mxu0 0.0
    %4338 = vmatpush2.xpose.msra.mxu0 0.0
    %4339 = vmatprep.subr.mxu0 0.0
    %4340 = vmatpush2.xpose.msra.mxu0 0.0
    %4341 = vmatprep.subr.mxu0 0.0
    %4342 = vmatpush2.xpose.msra.mxu0 0.0
    %4343 = vmatprep.subr.mxu0 0.0
    %4344 = vmatpush2.xpose.msra.mxu0 0.0
    %4345 = vmatprep.subr.mxu0 0.0
    %4346 = vmatpush2.xpose.msra.mxu0 0.0
    %4347 = vmatprep.subr.mxu0 0.0
    %4348 = vmatpush2.xpose.msra.mxu0 0.0
    %4349 = vmatprep.mubr.f32.mxu0 0.0
    %4350 = vmatmul.mubr.f32.gmra.mxu0 %v4277
    %v4351 = vpop.f32.mrf.mxu0
    %v4352 = vadd.f32 %v31, %v4351
    %v4353 = vpop.f32.mrf.mxu0
    %4354 = vmatprep.mubr.f32.mxu0 0.0
    %4355 = vmatmul.mubr.f32.gmra.mxu0 %v4279
    %v4356 = vpop.f32.mrf.mxu0
    %v4357 = vadd.f32 %v32, %v4356
    %v4358 = vpop.f32.mrf.mxu0
    %4359 = vdwg.mxu0
    %v4360 = vsel %vm1342, %v4352, -inf
    %4361 = vmax.xlane.f32.xlu0 %v4360
    %v4362 = vpop.xlane.xlu0 %4361
    %v4363 = vsel %vm1342, %v4357, -inf
    %4364 = vmax.xlane.f32.xlu0 %v4363
    %v4365 = vpop.xlane.xlu0 %4364
    %v4366 = vsub.f32 %v4352, %v4362
    %v4367 = vsub.f32 %v4357, %v4365
    %v4368 = vmul.f32 %v4366, 1.442695
    %v4369 = vpow.pop %v4368
    %v4370 = vmul.f32 %v4367, 1.442695
    %v4371 = vpow.pop %v4370
    %v4372 = vsel %vm1342, %v4369, 0.0
    %4373 = vadd.xlane.f32.xlu0 %v4372
    %v4374 = vpop.xlane.xlu0 %4373
    %v4375 = vsel %vm1342, %v4371, 0.0
    %4376 = vadd.xlane.f32.xlu0 %v4375
    %v4377 = vpop.xlane.xlu0 %4376
    %v4378 = vrcp.pop %v4374
    %v4379 = vmul.f32 %v4369, %v4378
    %v4380 = vrcp.pop %v4377
    %v4381 = vmul.f32 %v4371, %v4380
    %4382 = vrot.lane.b32.xlu0 %v3663, 40
    %v4383 = vpop.permute.xlu0 %4382
    %4384 = vrot.lane.b32.xlu0 %v3668, 40
    %v4385 = vpop.permute.xlu0 %4384
    %v4389 = vsel %vm1342, %v4379, 0
    %v4392 = vsel %vm1342, %v4381, 0
    %4394 = vmatprep.subr.mxu0 0.0
    %4395 = vmatpush1.msra.mxu0 0.0
    %4396 = vmatprep.subr.mxu0 0.0
    %4397 = vmatpush1.msra.mxu0 0.0
    %4398 = vmatprep.subr.mxu0 0.0
    %4399 = vmatpush1.msra.mxu0 0.0
    %4400 = vmatprep.subr.mxu0 0.0
    %4401 = vmatpush1.msra.mxu0 0.0
    %4402 = vmatprep.subr.mxu0 0.0
    %4403 = vmatpush1.msra.mxu0 0.0
    %4404 = vmatprep.subr.mxu0 0.0
    %4405 = vmatpush1.msra.mxu0 0.0
    %4406 = vmatprep.subr.mxu0 0.0
    %4407 = vmatpush1.msra.mxu0 0.0
    %4408 = vmatprep.subr.mxu0 0.0
    %4409 = vmatpush1.msra.mxu0 0.0
    %4410 = vmatprep.subr.mxu0 0.0
    %4411 = vmatpush1.msra.mxu0 0.0
    %4412 = vmatprep.subr.mxu0 0.0
    %4413 = vmatpush1.msra.mxu0 0.0
    %4414 = vmatprep.subr.mxu0 0.0
    %4415 = vmatpush1.msra.mxu0 0.0
    %4416 = vmatprep.subr.mxu0 0.0
    %4417 = vmatpush1.msra.mxu0 0.0
    %4418 = vmatprep.subr.mxu0 0.0
    %4419 = vmatpush1.msra.mxu0 0.0
    %4420 = vmatprep.subr.mxu0 0.0
    %4421 = vmatpush1.msra.mxu0 0.0
    %4422 = vmatprep.subr.mxu0 0.0
    %4423 = vmatpush1.msra.mxu0 %v4385
    %4424 = vmatprep.subr.mxu0 0.0
    %4425 = vmatpush1.msra.mxu0 %v4383
    %4426 = vmatprep.subr.mxu0 0.0
    %4427 = vmatpush2.msra.mxu0 0.0
    %4428 = vmatprep.subr.mxu0 0.0
    %4429 = vmatpush2.msra.mxu0 0.0
    %4430 = vmatprep.subr.mxu0 0.0
    %4431 = vmatpush2.msra.mxu0 0.0
    %4432 = vmatprep.subr.mxu0 0.0
    %4433 = vmatpush2.msra.mxu0 0.0
    %4434 = vmatprep.subr.mxu0 0.0
    %4435 = vmatpush2.msra.mxu0 0.0
    %4436 = vmatprep.subr.mxu0 0.0
    %4437 = vmatpush2.msra.mxu0 0.0
    %4438 = vmatprep.subr.mxu0 0.0
    %4439 = vmatpush2.msra.mxu0 0.0
    %4440 = vmatprep.subr.mxu0 0.0
    %4441 = vmatpush2.msra.mxu0 0.0
    %4442 = vmatprep.subr.mxu0 0.0
    %4443 = vmatpush2.msra.mxu0 0.0
    %4444 = vmatprep.subr.mxu0 0.0
    %4445 = vmatpush2.msra.mxu0 0.0
    %4446 = vmatprep.subr.mxu0 0.0
    %4447 = vmatpush2.msra.mxu0 0.0
    %4448 = vmatprep.subr.mxu0 0.0
    %4449 = vmatpush2.msra.mxu0 0.0
    %4450 = vmatprep.subr.mxu0 0.0
    %4451 = vmatpush2.msra.mxu0 0.0
    %4452 = vmatprep.subr.mxu0 0.0
    %4453 = vmatpush2.msra.mxu0 0.0
    %4454 = vmatprep.subr.mxu0 0.0
    %4455 = vmatpush2.msra.mxu0 0.0
    %4456 = vmatprep.subr.mxu0 0.0
    %4457 = vmatpush2.msra.mxu0 0.0
    %4458 = vmatprep.mubr.f32.mxu0 0.0
    %4459 = vmatmul.mubr.f32.gmra.mxu0 %v4389
    %v4460 = vpop.f32.mrf.mxu0
    %v4461 = vadd.f32 0.0, %v4460
    %v4462 = vpop.f32.mrf.mxu0
    %4463 = vmatprep.mubr.f32.mxu0 0.0
    %4464 = vmatmul.mubr.f32.gmra.mxu0 %v4392
    %v4465 = vpop.f32.mrf.mxu0
    %v4466 = vadd.f32 0.0, %v4465
    %v4467 = vpop.f32.mrf.mxu0
    %4468 = vdwg.mxu0
    %4471 = vrot.lane.b32.xlu0 %v4061, 8
    %v4472 = vpop.permute.xlu0 %4471
    %4473 = vrot.lane.b32.xlu0 %v4066, 8
    %v4474 = vpop.permute.xlu0 %4473
    %4479 = vrot.lane.b32.xlu0 %v4261, 16
    %v4480 = vpop.permute.xlu0 %4479
    %4481 = vrot.lane.b32.xlu0 %v4266, 16
    %v4482 = vpop.permute.xlu0 %4481
    %4487 = vrot.lane.b32.xlu0 %v4461, 24
    %v4488 = vpop.permute.xlu0 %4487
    %4489 = vrot.lane.b32.xlu0 %v4466, 24
    %v4490 = vpop.permute.xlu0 %4489
    %v4493 = vsel %vm225, %v3861, %v4472
    %v4494 = vsel %vm225, %v3866, %v4474
    %v4495 = vsel %vm1342, %v4493, %v4480
    %v4496 = vsel %vm1342, %v4494, %v4482
    %v4497 = vsel %vm1347, %v4495, %v4488
    %v4498 = vsel %vm1347, %v4496, %v4490
    %4503 = vrot.lane.b32.xlu0 %v3548, 32
    %v4504 = vpop.permute.xlu0 %4503
    %4505 = vrot.lane.b32.xlu0 %v3549, 32
    %v4506 = vpop.permute.xlu0 %4505
    %4507 = vrot.lane.b32.xlu0 %v3550, 32
    %v4508 = vpop.permute.xlu0 %4507
    %4509 = vrot.lane.b32.xlu0 %v3551, 32
    %v4510 = vpop.permute.xlu0 %4509
    %v4516 = vsel %vm46, %v4497, 0
    %v4519 = vsel %vm46, %v4498, 0
    %4521 = vmatprep.subr.mxu0 0.0
    %4522 = vmatpush1.msra.mxu0 0.0
    %4523 = vmatprep.subr.mxu0 0.0
    %4524 = vmatpush1.msra.mxu0 0.0
    %4525 = vmatprep.subr.mxu0 0.0
    %4526 = vmatpush1.msra.mxu0 0.0
    %4527 = vmatprep.subr.mxu0 0.0
    %4528 = vmatpush1.msra.mxu0 0.0
    %4529 = vmatprep.subr.mxu0 0.0
    %4530 = vmatpush1.msra.mxu0 0.0
    %4531 = vmatprep.subr.mxu0 0.0
    %4532 = vmatpush1.msra.mxu0 0.0
    %4533 = vmatprep.subr.mxu0 0.0
    %4534 = vmatpush1.msra.mxu0 0.0
    %4535 = vmatprep.subr.mxu0 0.0
    %4536 = vmatpush1.msra.mxu0 0.0
    %4537 = vmatprep.subr.mxu0 0.0
    %4538 = vmatpush1.msra.mxu0 0.0
    %4539 = vmatprep.subr.mxu0 0.0
    %4540 = vmatpush1.msra.mxu0 0.0
    %4541 = vmatprep.subr.mxu0 0.0
    %4542 = vmatpush1.msra.mxu0 0.0
    %4543 = vmatprep.subr.mxu0 0.0
    %4544 = vmatpush1.msra.mxu0 0.0
    %4545 = vmatprep.subr.mxu0 0.0
    %4546 = vmatpush1.msra.mxu0 %v4510
    %4547 = vmatprep.subr.mxu0 0.0
    %4548 = vmatpush1.msra.mxu0 %v4508
    %4549 = vmatprep.subr.mxu0 0.0
    %4550 = vmatpush1.msra.mxu0 %v4506
    %4551 = vmatprep.subr.mxu0 0.0
    %4552 = vmatpush1.msra.mxu0 %v4504
    %4553 = vmatprep.subr.mxu0 0.0
    %4554 = vmatpush2.msra.mxu0 0.0
    %4555 = vmatprep.subr.mxu0 0.0
    %4556 = vmatpush2.msra.mxu0 0.0
    %4557 = vmatprep.subr.mxu0 0.0
    %4558 = vmatpush2.msra.mxu0 0.0
    %4559 = vmatprep.subr.mxu0 0.0
    %4560 = vmatpush2.msra.mxu0 0.0
    %4561 = vmatprep.subr.mxu0 0.0
    %4562 = vmatpush2.msra.mxu0 0.0
    %4563 = vmatprep.subr.mxu0 0.0
    %4564 = vmatpush2.msra.mxu0 0.0
    %4565 = vmatprep.subr.mxu0 0.0
    %4566 = vmatpush2.msra.mxu0 0.0
    %4567 = vmatprep.subr.mxu0 0.0
    %4568 = vmatpush2.msra.mxu0 0.0
    %4569 = vmatprep.subr.mxu0 0.0
    %4570 = vmatpush2.msra.mxu0 0.0
    %4571 = vmatprep.subr.mxu0 0.0
    %4572 = vmatpush2.msra.mxu0 0.0
    %4573 = vmatprep.subr.mxu0 0.0
    %4574 = vmatpush2.msra.mxu0 0.0
    %4575 = vmatprep.subr.mxu0 0.0
    %4576 = vmatpush2.msra.mxu0 0.0
    %4577 = vmatprep.subr.mxu0 0.0
    %4578 = vmatpush2.msra.mxu0 0.0
    %4579 = vmatprep.subr.mxu0 0.0
    %4580 = vmatpush2.msra.mxu0 0.0
    %4581 = vmatprep.subr.mxu0 0.0
    %4582 = vmatpush2.msra.mxu0 0.0
    %4583 = vmatprep.subr.mxu0 0.0
    %4584 = vmatpush2.msra.mxu0 0.0
    %4585 = vmatprep.mubr.f32.mxu0 0.0
    %4586 = vmatmul.mubr.f32.gmra.mxu0 %v4516
    %v4587 = vpop.f32.mrf.mxu0
    %v4588 = vadd.f32 0.0, %v4587
    %v4589 = vpop.f32.mrf.mxu0
    %4590 = vmatprep.mubr.f32.mxu0 0.0
    %4591 = vmatmul.mubr.f32.gmra.mxu0 %v4519
    %v4592 = vpop.f32.mrf.mxu0
    %v4593 = vadd.f32 0.0, %v4592
    %v4594 = vpop.f32.mrf.mxu0
    %4595 = vdwg.mxu0
    %v4596 = vadd.f32 %v3542, %v4588
    %v4597 = vadd.f32 %v3543, %v4593
    %v4598 = vlaneseq
    %v4599 = vshrl.u32 %v4598, 7
    %v4600 = vsub.s32 0, %v4599
    %v4601 = vrot.slane %v3546, %v4600
    %v4602 = vadd.f32 %v4596, %v4601
    %v4603 = vadd.f32 %v4597, %v4601
    %v4604 = vld [vmem:[%s5 + $0x9] sm:$0x1]
    %v4605 = vld [vmem:[%s5 + $0xa] sm:$0x1]
    %v4606 = vld [vmem:[%s5 + $0xb] sm:$0x1]
    %s4607 = scalar_lea.vmem %s2, 96
    %v4608 = vld [vmem:[%s4607] sm:$0xff]
    %v4609 = vld [vmem:[%s4607 + $0x8] sm:$0xff]
    %v4610 = vld [vmem:[%s4607 + $0x10] sm:$0xff]
    %v4611 = vld [vmem:[%s4607 + $0x18] sm:$0xff]
    %v4612 = vsel %vm46, %v4602, 0.0
    %4613 = vadd.xlane.f32.xlu0 %v4612
    %v4614 = vpop.xlane.xlu0 %4613
    %v4615 = vsel %vm46, %v4603, 0.0
    %4616 = vadd.xlane.f32.xlu0 %v4615
    %v4617 = vpop.xlane.xlu0 %4616
    %v4618 = vmul.f32 %v4614, %v59
    %v4619 = vmul.f32 %v4617, %v59
    %v4620 = vsub.f32 %v4602, %v4618
    %v4621 = vsub.f32 %v4603, %v4619
    %v4622 = vmul.f32 %v4620, %v4620
    %v4623 = vmul.f32 %v4621, %v4621
    %v4624 = vsel %vm46, %v4622, 0.0
    %4625 = vadd.xlane.f32.xlu0 %v4624
    %v4626 = vpop.xlane.xlu0 %4625
    %v4627 = vsel %vm46, %v4623, 0.0
    %4628 = vadd.xlane.f32.xlu0 %v4627
    %v4629 = vpop.xlane.xlu0 %4628
    %v4630 = vmul.f32 %v4626, %v59
    %v4631 = vmul.f32 %v4629, %v59
    %v4632 = vadd.f32 %v4630, 1e-05
    %v4633 = vadd.f32 %v4631, 1e-05
    %v4634 = vrsqrt.pop %v4632
    %v4635 = vrsqrt.pop %v4633
    %v4636 = vmul.f32 %v4620, %v4634
    %v4637 = vmul.f32 %v4621, %v4635
    %v4638 = vlaneseq
    %v4639 = vshrl.u32 %v4638, 7
    %v4640 = vsub.s32 0, %v4639
    %v4641 = vrot.slane %v4604, %v4640
    %v4642 = vmul.f32 %v4636, %v4641
    %v4643 = vmul.f32 %v4637, %v4641
    %v4644 = vlaneseq
    %v4645 = vshrl.u32 %v4644, 7
    %v4646 = vsub.s32 0, %v4645
    %v4647 = vrot.slane %v4605, %v4646
    %v4648 = vadd.f32 %v4642, %v4647
    %v4649 = vadd.f32 %v4643, %v4647
    %v4651 = vsel %vm46, %v4648, 0
    %v4654 = vsel %vm46, %v4649, 0
    %4656 = vmatprep.subr.mxu0 0.0
    %4657 = vmatpush1.msra.mxu0 0.0
    %4658 = vmatprep.subr.mxu0 0.0
    %4659 = vmatpush1.msra.mxu0 0.0
    %4660 = vmatprep.subr.mxu0 0.0
    %4661 = vmatpush1.msra.mxu0 0.0
    %4662 = vmatprep.subr.mxu0 0.0
    %4663 = vmatpush1.msra.mxu0 0.0
    %4664 = vmatprep.subr.mxu0 0.0
    %4665 = vmatpush1.msra.mxu0 0.0
    %4666 = vmatprep.subr.mxu0 0.0
    %4667 = vmatpush1.msra.mxu0 0.0
    %4668 = vmatprep.subr.mxu0 0.0
    %4669 = vmatpush1.msra.mxu0 0.0
    %4670 = vmatprep.subr.mxu0 0.0
    %4671 = vmatpush1.msra.mxu0 0.0
    %4672 = vmatprep.subr.mxu0 0.0
    %4673 = vmatpush1.msra.mxu0 0.0
    %4674 = vmatprep.subr.mxu0 0.0
    %4675 = vmatpush1.msra.mxu0 0.0
    %4676 = vmatprep.subr.mxu0 0.0
    %4677 = vmatpush1.msra.mxu0 0.0
    %4678 = vmatprep.subr.mxu0 0.0
    %4679 = vmatpush1.msra.mxu0 0.0
    %4680 = vmatprep.subr.mxu0 0.0
    %4681 = vmatpush1.msra.mxu0 %v4611
    %4682 = vmatprep.subr.mxu0 0.0
    %4683 = vmatpush1.msra.mxu0 %v4610
    %4684 = vmatprep.subr.mxu0 0.0
    %4685 = vmatpush1.msra.mxu0 %v4609
    %4686 = vmatprep.subr.mxu0 0.0
    %4687 = vmatpush1.msra.mxu0 %v4608
    %4688 = vmatprep.subr.mxu0 0.0
    %4689 = vmatpush2.msra.mxu0 0.0
    %4690 = vmatprep.subr.mxu0 0.0
    %4691 = vmatpush2.msra.mxu0 0.0
    %4692 = vmatprep.subr.mxu0 0.0
    %4693 = vmatpush2.msra.mxu0 0.0
    %4694 = vmatprep.subr.mxu0 0.0
    %4695 = vmatpush2.msra.mxu0 0.0
    %4696 = vmatprep.subr.mxu0 0.0
    %4697 = vmatpush2.msra.mxu0 0.0
    %4698 = vmatprep.subr.mxu0 0.0
    %4699 = vmatpush2.msra.mxu0 0.0
    %4700 = vmatprep.subr.mxu0 0.0
    %4701 = vmatpush2.msra.mxu0 0.0
    %4702 = vmatprep.subr.mxu0 0.0
    %4703 = vmatpush2.msra.mxu0 0.0
    %4704 = vmatprep.subr.mxu0 0.0
    %4705 = vmatpush2.msra.mxu0 0.0
    %4706 = vmatprep.subr.mxu0 0.0
    %4707 = vmatpush2.msra.mxu0 0.0
    %4708 = vmatprep.subr.mxu0 0.0
    %4709 = vmatpush2.msra.mxu0 0.0
    %4710 = vmatprep.subr.mxu0 0.0
    %4711 = vmatpush2.msra.mxu0 0.0
    %4712 = vmatprep.subr.mxu0 0.0
    %4713 = vmatpush2.msra.mxu0 0.0
    %4714 = vmatprep.subr.mxu0 0.0
    %4715 = vmatpush2.msra.mxu0 0.0
    %4716 = vmatprep.subr.mxu0 0.0
    %4717 = vmatpush2.msra.mxu0 0.0
    %4718 = vmatprep.subr.mxu0 0.0
    %4719 = vmatpush2.msra.mxu0 0.0
    %4720 = vmatprep.mubr.f32.mxu0 0.0
    %4721 = vmatmul.mubr.f32.gmra.mxu0 %v4651
    %v4722 = vpop.f32.mrf.mxu0
    %v4723 = vadd.f32 0.0, %v4722
    %v4724 = vpop.f32.mrf.mxu0
    %4725 = vmatprep.mubr.f32.mxu0 0.0
    %4726 = vmatmul.mubr.f32.gmra.mxu0 %v4654
    %v4727 = vpop.f32.mrf.mxu0
    %v4728 = vadd.f32 0.0, %v4727
    %v4729 = vpop.f32.mrf.mxu0
    %4730 = vdwg.mxu0
    %4735 = vrot.lane.b32.xlu0 %v4608, 96
    %v4736 = vpop.permute.xlu0 %4735
    %4737 = vrot.lane.b32.xlu0 %v4609, 96
    %v4738 = vpop.permute.xlu0 %4737
    %4739 = vrot.lane.b32.xlu0 %v4610, 96
    %v4740 = vpop.permute.xlu0 %4739
    %4741 = vrot.lane.b32.xlu0 %v4611, 96
    %v4742 = vpop.permute.xlu0 %4741
    %v4748 = vsel %vm46, %v3538, 0
    %v4751 = vsel %vm46, %v3539, 0
    %v4754 = vsel %vm46, %v3540, 0
    %v4757 = vsel %vm46, %v3541, 0
    %4759 = vmatprep.subr.mxu0 0.0
    %4760 = vmatpush1.msra.mxu0 0.0
    %4761 = vmatprep.subr.mxu0 0.0
    %4762 = vmatpush1.msra.mxu0 0.0
    %4763 = vmatprep.subr.mxu0 0.0
    %4764 = vmatpush1.msra.mxu0 0.0
    %4765 = vmatprep.subr.mxu0 0.0
    %4766 = vmatpush1.msra.mxu0 0.0
    %4767 = vmatprep.subr.mxu0 0.0
    %4768 = vmatpush1.msra.mxu0 0.0
    %4769 = vmatprep.subr.mxu0 0.0
    %4770 = vmatpush1.msra.mxu0 0.0
    %4771 = vmatprep.subr.mxu0 0.0
    %4772 = vmatpush1.msra.mxu0 0.0
    %4773 = vmatprep.subr.mxu0 0.0
    %4774 = vmatpush1.msra.mxu0 0.0
    %4775 = vmatprep.subr.mxu0 0.0
    %4776 = vmatpush1.msra.mxu0 0.0
    %4777 = vmatprep.subr.mxu0 0.0
    %4778 = vmatpush1.msra.mxu0 0.0
    %4779 = vmatprep.subr.mxu0 0.0
    %4780 = vmatpush1.msra.mxu0 0.0
    %4781 = vmatprep.subr.mxu0 0.0
    %4782 = vmatpush1.msra.mxu0 0.0
    %4783 = vmatprep.subr.mxu0 0.0
    %4784 = vmatpush1.msra.mxu0 %v4742
    %4785 = vmatprep.subr.mxu0 0.0
    %4786 = vmatpush1.msra.mxu0 %v4740
    %4787 = vmatprep.subr.mxu0 0.0
    %4788 = vmatpush1.msra.mxu0 %v4738
    %4789 = vmatprep.subr.mxu0 0.0
    %4790 = vmatpush1.msra.mxu0 %v4736
    %4791 = vmatprep.subr.mxu0 0.0
    %4792 = vmatpush2.msra.mxu0 0.0
    %4793 = vmatprep.subr.mxu0 0.0
    %4794 = vmatpush2.msra.mxu0 0.0
    %4795 = vmatprep.subr.mxu0 0.0
    %4796 = vmatpush2.msra.mxu0 0.0
    %4797 = vmatprep.subr.mxu0 0.0
    %4798 = vmatpush2.msra.mxu0 0.0
    %4799 = vmatprep.subr.mxu0 0.0
    %4800 = vmatpush2.msra.mxu0 0.0
    %4801 = vmatprep.subr.mxu0 0.0
    %4802 = vmatpush2.msra.mxu0 0.0
    %4803 = vmatprep.subr.mxu0 0.0
    %4804 = vmatpush2.msra.mxu0 0.0
    %4805 = vmatprep.subr.mxu0 0.0
    %4806 = vmatpush2.msra.mxu0 0.0
    %4807 = vmatprep.subr.mxu0 0.0
    %4808 = vmatpush2.msra.mxu0 0.0
    %4809 = vmatprep.subr.mxu0 0.0
    %4810 = vmatpush2.msra.mxu0 0.0
    %4811 = vmatprep.subr.mxu0 0.0
    %4812 = vmatpush2.msra.mxu0 0.0
    %4813 = vmatprep.subr.mxu0 0.0
    %4814 = vmatpush2.msra.mxu0 0.0
    %4815 = vmatprep.subr.mxu0 0.0
    %4816 = vmatpush2.msra.mxu0 0.0
    %4817 = vmatprep.subr.mxu0 0.0
    %4818 = vmatpush2.msra.mxu0 0.0
    %4819 = vmatprep.subr.mxu0 0.0
    %4820 = vmatpush2.msra.mxu0 0.0
    %4821 = vmatprep.subr.mxu0 0.0
    %4822 = vmatpush2.msra.mxu0 0.0
    %4823 = vmatprep.mubr.f32.mxu0 0.0
    %4824 = vmatmul.mubr.f32.gmra.mxu0 %v4748
    %v4825 = vpop.f32.mrf.mxu0
    %v4826 = vadd.f32 0.0, %v4825
    %v4827 = vpop.f32.mrf.mxu0
    %4828 = vmatprep.mubr.f32.mxu0 0.0
    %4829 = vmatmul.mubr.f32.gmra.mxu0 %v4751
    %v4830 = vpop.f32.mrf.mxu0
    %v4831 = vadd.f32 0.0, %v4830
    %v4832 = vpop.f32.mrf.mxu0
    %4833 = vmatprep.mubr.f32.mxu0 0.0
    %4834 = vmatmul.mubr.f32.gmra.mxu0 %v4754
    %v4835 = vpop.f32.mrf.mxu0
    %v4836 = vadd.f32 0.0, %v4835
    %v4837 = vpop.f32.mrf.mxu0
    %4838 = vmatprep.mubr.f32.mxu0 0.0
    %4839 = vmatmul.mubr.f32.gmra.mxu0 %v4757
    %v4840 = vpop.f32.mrf.mxu0
    %v4841 = vadd.f32 0.0, %v4840
    %v4842 = vpop.f32.mrf.mxu0
    %4843 = vdwg.mxu0
    %v4845 = vsel %vm225, %v4723, 0
    %v4848 = vsel %vm225, %v4728, 0
    %v4851 = vsel %vm225, %v4826, 0
    %v4854 = vsel %vm225, %v4831, 0
    %v4857 = vsel %vm225, %v4836, 0
    %v4860 = vsel %vm225, %v4841, 0
    %4862 = vmatprep.subr.mxu0 0.0
    %4863 = vmatpush1.xpose.msra.mxu0 0.0
    %4864 = vmatprep.subr.mxu0 0.0
    %4865 = vmatpush1.xpose.msra.mxu0 0.0
    %4866 = vmatprep.subr.mxu0 0.0
    %4867 = vmatpush1.xpose.msra.mxu0 0.0
    %4868 = vmatprep.subr.mxu0 0.0
    %4869 = vmatpush1.xpose.msra.mxu0 0.0
    %4870 = vmatprep.subr.mxu0 0.0
    %4871 = vmatpush1.xpose.msra.mxu0 0.0
    %4872 = vmatprep.subr.mxu0 0.0
    %4873 = vmatpush1.xpose.msra.mxu0 0.0
    %4874 = vmatprep.subr.mxu0 0.0
    %4875 = vmatpush1.xpose.msra.mxu0 0.0
    %4876 = vmatprep.subr.mxu0 0.0
    %4877 = vmatpush1.xpose.msra.mxu0 0.0
    %4878 = vmatprep.subr.mxu0 0.0
    %4879 = vmatpush1.xpose.msra.mxu0 0.0
    %4880 = vmatprep.subr.mxu0 0.0
    %4881 = vmatpush1.xpose.msra.mxu0 0.0
    %4882 = vmatprep.subr.mxu0 0.0
    %4883 = vmatpush1.xpose.msra.mxu0 0.0
    %4884 = vmatprep.subr.mxu0 0.0
    %4885 = vmatpush1.xpose.msra.mxu0 0.0
    %4886 = vmatprep.subr.mxu0 0.0
    %4887 = vmatpush1.xpose.msra.mxu0 %v4860
    %4888 = vmatprep.subr.mxu0 0.0
    %4889 = vmatpush1.xpose.msra.mxu0 %v4857
    %4890 = vmatprep.subr.mxu0 0.0
    %4891 = vmatpush1.xpose.msra.mxu0 %v4854
    %4892 = vmatprep.subr.mxu0 0.0
    %4893 = vmatpush1.xpose.msra.mxu0 %v4851
    %4894 = vmatprep.subr.mxu0 0.0
    %4895 = vmatpush2.xpose.msra.mxu0 0.0
    %4896 = vmatprep.subr.mxu0 0.0
    %4897 = vmatpush2.xpose.msra.mxu0 0.0
    %4898 = vmatprep.subr.mxu0 0.0
    %4899 = vmatpush2.xpose.msra.mxu0 0.0
    %4900 = vmatprep.subr.mxu0 0.0
    %4901 = vmatpush2.xpose.msra.mxu0 0.0
    %4902 = vmatprep.subr.mxu0 0.0
    %4903 = vmatpush2.xpose.msra.mxu0 0.0
    %4904 = vmatprep.subr.mxu0 0.0
    %4905 = vmatpush2.xpose.msra.mxu0 0.0
    %4906 = vmatprep.subr.mxu0 0.0
    %4907 = vmatpush2.xpose.msra.mxu0 0.0
    %4908 = vmatprep.subr.mxu0 0.0
    %4909 = vmatpush2.xpose.msra.mxu0 0.0
    %4910 = vmatprep.subr.mxu0 0.0
    %4911 = vmatpush2.xpose.msra.mxu0 0.0
    %4912 = vmatprep.subr.mxu0 0.0
    %4913 = vmatpush2.xpose.msra.mxu0 0.0
    %4914 = vmatprep.subr.mxu0 0.0
    %4915 = vmatpush2.xpose.msra.mxu0 0.0
    %4916 = vmatprep.subr.mxu0 0.0
    %4917 = vmatpush2.xpose.msra.mxu0 0.0
    %4918 = vmatprep.subr.mxu0 0.0
    %4919 = vmatpush2.xpose.msra.mxu0 0.0
    %4920 = vmatprep.subr.mxu0 0.0
    %4921 = vmatpush2.xpose.msra.mxu0 0.0
    %4922 = vmatprep.subr.mxu0 0.0
    %4923 = vmatpush2.xpose.msra.mxu0 0.0
    %4924 = vmatprep.subr.mxu0 0.0
    %4925 = vmatpush2.xpose.msra.mxu0 0.0
    %4926 = vmatprep.mubr.f32.mxu0 0.0
    %4927 = vmatmul.mubr.f32.gmra.mxu0 %v4845
    %v4928 = vpop.f32.mrf.mxu0
    %v4929 = vadd.f32 %v33, %v4928
    %v4930 = vpop.f32.mrf.mxu0
    %4931 = vmatprep.mubr.f32.mxu0 0.0
    %4932 = vmatmul.mubr.f32.gmra.mxu0 %v4848
    %v4933 = vpop.f32.mrf.mxu0
    %v4934 = vadd.f32 %v34, %v4933
    %v4935 = vpop.f32.mrf.mxu0
    %4936 = vdwg.mxu0
    %v4937 = vsel %vm46, %v4929, -inf
    %4938 = vmax.xlane.f32.xlu0 %v4937
    %v4939 = vpop.xlane.xlu0 %4938
    %v4940 = vsel %vm46, %v4934, -inf
    %4941 = vmax.xlane.f32.xlu0 %v4940
    %v4942 = vpop.xlane.xlu0 %4941
    %v4943 = vsub.f32 %v4929, %v4939
    %v4944 = vsub.f32 %v4934, %v4942
    %v4945 = vmul.f32 %v4943, 1.442695
    %v4946 = vpow.pop %v4945
    %v4947 = vmul.f32 %v4944, 1.442695
    %v4948 = vpow.pop %v4947
    %v4949 = vsel %vm46, %v4946, 0.0
    %4950 = vadd.xlane.f32.xlu0 %v4949
    %v4951 = vpop.xlane.xlu0 %4950
    %v4952 = vsel %vm46, %v4948, 0.0
    %4953 = vadd.xlane.f32.xlu0 %v4952
    %v4954 = vpop.xlane.xlu0 %4953
    %v4955 = vrcp.pop %v4951
    %v4956 = vmul.f32 %v4946, %v4955
    %v4957 = vrcp.pop %v4954
    %v4958 = vmul.f32 %v4948, %v4957
    %4959 = vrot.lane.b32.xlu0 %v4826, 96
    %v4960 = vpop.permute.xlu0 %4959
    %4961 = vrot.lane.b32.xlu0 %v4831, 96
    %v4962 = vpop.permute.xlu0 %4961
    %4963 = vrot.lane.b32.xlu0 %v4836, 96
    %v4964 = vpop.permute.xlu0 %4963
    %4965 = vrot.lane.b32.xlu0 %v4841, 96
    %v4966 = vpop.permute.xlu0 %4965
    %v4972 = vsel %vm46, %v4956, 0
    %v4975 = vsel %vm46, %v4958, 0
    %4977 = vmatprep.subr.mxu0 0.0
    %4978 = vmatpush1.msra.mxu0 0.0
    %4979 = vmatprep.subr.mxu0 0.0
    %4980 = vmatpush1.msra.mxu0 0.0
    %4981 = vmatprep.subr.mxu0 0.0
    %4982 = vmatpush1.msra.mxu0 0.0
    %4983 = vmatprep.subr.mxu0 0.0
    %4984 = vmatpush1.msra.mxu0 0.0
    %4985 = vmatprep.subr.mxu0 0.0
    %4986 = vmatpush1.msra.mxu0 0.0
    %4987 = vmatprep.subr.mxu0 0.0
    %4988 = vmatpush1.msra.mxu0 0.0
    %4989 = vmatprep.subr.mxu0 0.0
    %4990 = vmatpush1.msra.mxu0 0.0
    %4991 = vmatprep.subr.mxu0 0.0
    %4992 = vmatpush1.msra.mxu0 0.0
    %4993 = vmatprep.subr.mxu0 0.0
    %4994 = vmatpush1.msra.mxu0 0.0
    %4995 = vmatprep.subr.mxu0 0.0
    %4996 = vmatpush1.msra.mxu0 0.0
    %4997 = vmatprep.subr.mxu0 0.0
    %4998 = vmatpush1.msra.mxu0 0.0
    %4999 = vmatprep.subr.mxu0 0.0
    %5000 = vmatpush1.msra.mxu0 0.0
    %5001 = vmatprep.subr.mxu0 0.0
    %5002 = vmatpush1.msra.mxu0 %v4966
    %5003 = vmatprep.subr.mxu0 0.0
    %5004 = vmatpush1.msra.mxu0 %v4964
    %5005 = vmatprep.subr.mxu0 0.0
    %5006 = vmatpush1.msra.mxu0 %v4962
    %5007 = vmatprep.subr.mxu0 0.0
    %5008 = vmatpush1.msra.mxu0 %v4960
    %5009 = vmatprep.subr.mxu0 0.0
    %5010 = vmatpush2.msra.mxu0 0.0
    %5011 = vmatprep.subr.mxu0 0.0
    %5012 = vmatpush2.msra.mxu0 0.0
    %5013 = vmatprep.subr.mxu0 0.0
    %5014 = vmatpush2.msra.mxu0 0.0
    %5015 = vmatprep.subr.mxu0 0.0
    %5016 = vmatpush2.msra.mxu0 0.0
    %5017 = vmatprep.subr.mxu0 0.0
    %5018 = vmatpush2.msra.mxu0 0.0
    %5019 = vmatprep.subr.mxu0 0.0
    %5020 = vmatpush2.msra.mxu0 0.0
    %5021 = vmatprep.subr.mxu0 0.0
    %5022 = vmatpush2.msra.mxu0 0.0
    %5023 = vmatprep.subr.mxu0 0.0
    %5024 = vmatpush2.msra.mxu0 0.0
    %5025 = vmatprep.subr.mxu0 0.0
    %5026 = vmatpush2.msra.mxu0 0.0
    %5027 = vmatprep.subr.mxu0 0.0
    %5028 = vmatpush2.msra.mxu0 0.0
    %5029 = vmatprep.subr.mxu0 0.0
    %5030 = vmatpush2.msra.mxu0 0.0
    %5031 = vmatprep.subr.mxu0 0.0
    %5032 = vmatpush2.msra.mxu0 0.0
    %5033 = vmatprep.subr.mxu0 0.0
    %5034 = vmatpush2.msra.mxu0 0.0
    %5035 = vmatprep.subr.mxu0 0.0
    %5036 = vmatpush2.msra.mxu0 0.0
    %5037 = vmatprep.subr.mxu0 0.0
    %5038 = vmatpush2.msra.mxu0 0.0
    %5039 = vmatprep.subr.mxu0 0.0
    %5040 = vmatpush2.msra.mxu0 0.0
    %5041 = vmatprep.mubr.f32.mxu0 0.0
    %5042 = vmatmul.mubr.f32.gmra.mxu0 %v4972
    %v5043 = vpop.f32.mrf.mxu0
    %v5044 = vadd.f32 0.0, %v5043
    %v5045 = vpop.f32.mrf.mxu0
    %5046 = vmatprep.mubr.f32.mxu0 0.0
    %5047 = vmatmul.mubr.f32.gmra.mxu0 %v4975
    %v5048 = vpop.f32.mrf.mxu0
    %v5049 = vadd.f32 0.0, %v5048
    %v5050 = vpop.f32.mrf.mxu0
    %5051 = vdwg.mxu0
    %5052 = vrot.lane.b32.xlu0 %v4723, 120
    %v5053 = vpop.permute.xlu0 %5052
    %5054 = vrot.lane.b32.xlu0 %v4728, 120
    %v5055 = vpop.permute.xlu0 %5054
    %5056 = vrot.lane.b32.xlu0 %v4826, 120
    %v5057 = vpop.permute.xlu0 %5056
    %5058 = vrot.lane.b32.xlu0 %v4831, 120
    %v5059 = vpop.permute.xlu0 %5058
    %5060 = vrot.lane.b32.xlu0 %v4836, 120
    %v5061 = vpop.permute.xlu0 %5060
    %5062 = vrot.lane.b32.xlu0 %v4841, 120
    %v5063 = vpop.permute.xlu0 %5062
    %v5064 = vsel %vm225, %v5053, 0
    %v5066 = vsel %vm225, %v5055, 0
    %v5068 = vsel %vm225, %v5057, 0
    %v5070 = vsel %vm225, %v5059, 0
    %v5072 = vsel %vm225, %v5061, 0
    %v5074 = vsel %vm225, %v5063, 0
    %5076 = vmatprep.subr.mxu0 0.0
    %5077 = vmatpush1.xpose.msra.mxu0 0.0
    %5078 = vmatprep.subr.mxu0 0.0
    %5079 = vmatpush1.xpose.msra.mxu0 0.0
    %5080 = vmatprep.subr.mxu0 0.0
    %5081 = vmatpush1.xpose.msra.mxu0 0.0
    %5082 = vmatprep.subr.mxu0 0.0
    %5083 = vmatpush1.xpose.msra.mxu0 0.0
    %5084 = vmatprep.subr.mxu0 0.0
    %5085 = vmatpush1.xpose.msra.mxu0 0.0
    %5086 = vmatprep.subr.mxu0 0.0
    %5087 = vmatpush1.xpose.msra.mxu0 0.0
    %5088 = vmatprep.subr.mxu0 0.0
    %5089 = vmatpush1.xpose.msra.mxu0 0.0
    %5090 = vmatprep.subr.mxu0 0.0
    %5091 = vmatpush1.xpose.msra.mxu0 0.0
    %5092 = vmatprep.subr.mxu0 0.0
    %5093 = vmatpush1.xpose.msra.mxu0 0.0
    %5094 = vmatprep.subr.mxu0 0.0
    %5095 = vmatpush1.xpose.msra.mxu0 0.0
    %5096 = vmatprep.subr.mxu0 0.0
    %5097 = vmatpush1.xpose.msra.mxu0 0.0
    %5098 = vmatprep.subr.mxu0 0.0
    %5099 = vmatpush1.xpose.msra.mxu0 0.0
    %5100 = vmatprep.subr.mxu0 0.0
    %5101 = vmatpush1.xpose.msra.mxu0 %v5074
    %5102 = vmatprep.subr.mxu0 0.0
    %5103 = vmatpush1.xpose.msra.mxu0 %v5072
    %5104 = vmatprep.subr.mxu0 0.0
    %5105 = vmatpush1.xpose.msra.mxu0 %v5070
    %5106 = vmatprep.subr.mxu0 0.0
    %5107 = vmatpush1.xpose.msra.mxu0 %v5068
    %5108 = vmatprep.subr.mxu0 0.0
    %5109 = vmatpush2.xpose.msra.mxu0 0.0
    %5110 = vmatprep.subr.mxu0 0.0
    %5111 = vmatpush2.xpose.msra.mxu0 0.0
    %5112 = vmatprep.subr.mxu0 0.0
    %5113 = vmatpush2.xpose.msra.mxu0 0.0
    %5114 = vmatprep.subr.mxu0 0.0
    %5115 = vmatpush2.xpose.msra.mxu0 0.0
    %5116 = vmatprep.subr.mxu0 0.0
    %5117 = vmatpush2.xpose.msra.mxu0 0.0
    %5118 = vmatprep.subr.mxu0 0.0
    %5119 = vmatpush2.xpose.msra.mxu0 0.0
    %5120 = vmatprep.subr.mxu0 0.0
    %5121 = vmatpush2.xpose.msra.mxu0 0.0
    %5122 = vmatprep.subr.mxu0 0.0
    %5123 = vmatpush2.xpose.msra.mxu0 0.0
    %5124 = vmatprep.subr.mxu0 0.0
    %5125 = vmatpush2.xpose.msra.mxu0 0.0
    %5126 = vmatprep.subr.mxu0 0.0
    %5127 = vmatpush2.xpose.msra.mxu0 0.0
    %5128 = vmatprep.subr.mxu0 0.0
    %5129 = vmatpush2.xpose.msra.mxu0 0.0
    %5130 = vmatprep.subr.mxu0 0.0
    %5131 = vmatpush2.xpose.msra.mxu0 0.0
    %5132 = vmatprep.subr.mxu0 0.0
    %5133 = vmatpush2.xpose.msra.mxu0 0.0
    %5134 = vmatprep.subr.mxu0 0.0
    %5135 = vmatpush2.xpose.msra.mxu0 0.0
    %5136 = vmatprep.subr.mxu0 0.0
    %5137 = vmatpush2.xpose.msra.mxu0 0.0
    %5138 = vmatprep.subr.mxu0 0.0
    %5139 = vmatpush2.xpose.msra.mxu0 0.0
    %5140 = vmatprep.mubr.f32.mxu0 0.0
    %5141 = vmatmul.mubr.f32.gmra.mxu0 %v5064
    %v5142 = vpop.f32.mrf.mxu0
    %v5143 = vadd.f32 %v33, %v5142
    %v5144 = vpop.f32.mrf.mxu0
    %5145 = vmatprep.mubr.f32.mxu0 0.0
    %5146 = vmatmul.mubr.f32.gmra.mxu0 %v5066
    %v5147 = vpop.f32.mrf.mxu0
    %v5148 = vadd.f32 %v34, %v5147
    %v5149 = vpop.f32.mrf.mxu0
    %5150 = vdwg.mxu0
    %v5151 = vsel %vm46, %v5143, -inf
    %5152 = vmax.xlane.f32.xlu0 %v5151
    %v5153 = vpop.xlane.xlu0 %5152
    %v5154 = vsel %vm46, %v5148, -inf
    %5155 = vmax.xlane.f32.xlu0 %v5154
    %v5156 = vpop.xlane.xlu0 %5155
    %v5157 = vsub.f32 %v5143, %v5153
    %v5158 = vsub.f32 %v5148, %v5156
    %v5159 = vmul.f32 %v5157, 1.442695
    %v5160 = vpow.pop %v5159
    %v5161 = vmul.f32 %v5158, 1.442695
    %v5162 = vpow.pop %v5161
    %v5163 = vsel %vm46, %v5160, 0.0
    %5164 = vadd.xlane.f32.xlu0 %v5163
    %v5165 = vpop.xlane.xlu0 %5164
    %v5166 = vsel %vm46, %v5162, 0.0
    %5167 = vadd.xlane.f32.xlu0 %v5166
    %v5168 = vpop.xlane.xlu0 %5167
    %v5169 = vrcp.pop %v5165
    %v5170 = vmul.f32 %v5160, %v5169
    %v5171 = vrcp.pop %v5168
    %v5172 = vmul.f32 %v5162, %v5171
    %5173 = vrot.lane.b32.xlu0 %v4826, 88
    %v5174 = vpop.permute.xlu0 %5173
    %5175 = vrot.lane.b32.xlu0 %v4831, 88
    %v5176 = vpop.permute.xlu0 %5175
    %5177 = vrot.lane.b32.xlu0 %v4836, 88
    %v5178 = vpop.permute.xlu0 %5177
    %5179 = vrot.lane.b32.xlu0 %v4841, 88
    %v5180 = vpop.permute.xlu0 %5179
    %v5186 = vsel %vm46, %v5170, 0
    %v5189 = vsel %vm46, %v5172, 0
    %5191 = vmatprep.subr.mxu0 0.0
    %5192 = vmatpush1.msra.mxu0 0.0
    %5193 = vmatprep.subr.mxu0 0.0
    %5194 = vmatpush1.msra.mxu0 0.0
    %5195 = vmatprep.subr.mxu0 0.0
    %5196 = vmatpush1.msra.mxu0 0.0
    %5197 = vmatprep.subr.mxu0 0.0
    %5198 = vmatpush1.msra.mxu0 0.0
    %5199 = vmatprep.subr.mxu0 0.0
    %5200 = vmatpush1.msra.mxu0 0.0
    %5201 = vmatprep.subr.mxu0 0.0
    %5202 = vmatpush1.msra.mxu0 0.0
    %5203 = vmatprep.subr.mxu0 0.0
    %5204 = vmatpush1.msra.mxu0 0.0
    %5205 = vmatprep.subr.mxu0 0.0
    %5206 = vmatpush1.msra.mxu0 0.0
    %5207 = vmatprep.subr.mxu0 0.0
    %5208 = vmatpush1.msra.mxu0 0.0
    %5209 = vmatprep.subr.mxu0 0.0
    %5210 = vmatpush1.msra.mxu0 0.0
    %5211 = vmatprep.subr.mxu0 0.0
    %5212 = vmatpush1.msra.mxu0 0.0
    %5213 = vmatprep.subr.mxu0 0.0
    %5214 = vmatpush1.msra.mxu0 0.0
    %5215 = vmatprep.subr.mxu0 0.0
    %5216 = vmatpush1.msra.mxu0 %v5180
    %5217 = vmatprep.subr.mxu0 0.0
    %5218 = vmatpush1.msra.mxu0 %v5178
    %5219 = vmatprep.subr.mxu0 0.0
    %5220 = vmatpush1.msra.mxu0 %v5176
    %5221 = vmatprep.subr.mxu0 0.0
    %5222 = vmatpush1.msra.mxu0 %v5174
    %5223 = vmatprep.subr.mxu0 0.0
    %5224 = vmatpush2.msra.mxu0 0.0
    %5225 = vmatprep.subr.mxu0 0.0
    %5226 = vmatpush2.msra.mxu0 0.0
    %5227 = vmatprep.subr.mxu0 0.0
    %5228 = vmatpush2.msra.mxu0 0.0
    %5229 = vmatprep.subr.mxu0 0.0
    %5230 = vmatpush2.msra.mxu0 0.0
    %5231 = vmatprep.subr.mxu0 0.0
    %5232 = vmatpush2.msra.mxu0 0.0
    %5233 = vmatprep.subr.mxu0 0.0
    %5234 = vmatpush2.msra.mxu0 0.0
    %5235 = vmatprep.subr.mxu0 0.0
    %5236 = vmatpush2.msra.mxu0 0.0
    %5237 = vmatprep.subr.mxu0 0.0
    %5238 = vmatpush2.msra.mxu0 0.0
    %5239 = vmatprep.subr.mxu0 0.0
    %5240 = vmatpush2.msra.mxu0 0.0
    %5241 = vmatprep.subr.mxu0 0.0
    %5242 = vmatpush2.msra.mxu0 0.0
    %5243 = vmatprep.subr.mxu0 0.0
    %5244 = vmatpush2.msra.mxu0 0.0
    %5245 = vmatprep.subr.mxu0 0.0
    %5246 = vmatpush2.msra.mxu0 0.0
    %5247 = vmatprep.subr.mxu0 0.0
    %5248 = vmatpush2.msra.mxu0 0.0
    %5249 = vmatprep.subr.mxu0 0.0
    %5250 = vmatpush2.msra.mxu0 0.0
    %5251 = vmatprep.subr.mxu0 0.0
    %5252 = vmatpush2.msra.mxu0 0.0
    %5253 = vmatprep.subr.mxu0 0.0
    %5254 = vmatpush2.msra.mxu0 0.0
    %5255 = vmatprep.mubr.f32.mxu0 0.0
    %5256 = vmatmul.mubr.f32.gmra.mxu0 %v5186
    %v5257 = vpop.f32.mrf.mxu0
    %v5258 = vadd.f32 0.0, %v5257
    %v5259 = vpop.f32.mrf.mxu0
    %5260 = vmatprep.mubr.f32.mxu0 0.0
    %5261 = vmatmul.mubr.f32.gmra.mxu0 %v5189
    %v5262 = vpop.f32.mrf.mxu0
    %v5263 = vadd.f32 0.0, %v5262
    %v5264 = vpop.f32.mrf.mxu0
    %5265 = vdwg.mxu0
    %5266 = vrot.lane.b32.xlu0 %v4723, 112
    %v5267 = vpop.permute.xlu0 %5266
    %5268 = vrot.lane.b32.xlu0 %v4728, 112
    %v5269 = vpop.permute.xlu0 %5268
    %5270 = vrot.lane.b32.xlu0 %v4826, 112
    %v5271 = vpop.permute.xlu0 %5270
    %5272 = vrot.lane.b32.xlu0 %v4831, 112
    %v5273 = vpop.permute.xlu0 %5272
    %5274 = vrot.lane.b32.xlu0 %v4836, 112
    %v5275 = vpop.permute.xlu0 %5274
    %5276 = vrot.lane.b32.xlu0 %v4841, 112
    %v5277 = vpop.permute.xlu0 %5276
    %v5278 = vsel %vm225, %v5267, 0
    %v5280 = vsel %vm225, %v5269, 0
    %v5282 = vsel %vm225, %v5271, 0
    %v5284 = vsel %vm225, %v5273, 0
    %v5286 = vsel %vm225, %v5275, 0
    %v5288 = vsel %vm225, %v5277, 0
    %5290 = vmatprep.subr.mxu0 0.0
    %5291 = vmatpush1.xpose.msra.mxu0 0.0
    %5292 = vmatprep.subr.mxu0 0.0
    %5293 = vmatpush1.xpose.msra.mxu0 0.0
    %5294 = vmatprep.subr.mxu0 0.0
    %5295 = vmatpush1.xpose.msra.mxu0 0.0
    %5296 = vmatprep.subr.mxu0 0.0
    %5297 = vmatpush1.xpose.msra.mxu0 0.0
    %5298 = vmatprep.subr.mxu0 0.0
    %5299 = vmatpush1.xpose.msra.mxu0 0.0
    %5300 = vmatprep.subr.mxu0 0.0
    %5301 = vmatpush1.xpose.msra.mxu0 0.0
    %5302 = vmatprep.subr.mxu0 0.0
    %5303 = vmatpush1.xpose.msra.mxu0 0.0
    %5304 = vmatprep.subr.mxu0 0.0
    %5305 = vmatpush1.xpose.msra.mxu0 0.0
    %5306 = vmatprep.subr.mxu0 0.0
    %5307 = vmatpush1.xpose.msra.mxu0 0.0
    %5308 = vmatprep.subr.mxu0 0.0
    %5309 = vmatpush1.xpose.msra.mxu0 0.0
    %5310 = vmatprep.subr.mxu0 0.0
    %5311 = vmatpush1.xpose.msra.mxu0 0.0
    %5312 = vmatprep.subr.mxu0 0.0
    %5313 = vmatpush1.xpose.msra.mxu0 0.0
    %5314 = vmatprep.subr.mxu0 0.0
    %5315 = vmatpush1.xpose.msra.mxu0 %v5288
    %5316 = vmatprep.subr.mxu0 0.0
    %5317 = vmatpush1.xpose.msra.mxu0 %v5286
    %5318 = vmatprep.subr.mxu0 0.0
    %5319 = vmatpush1.xpose.msra.mxu0 %v5284
    %5320 = vmatprep.subr.mxu0 0.0
    %5321 = vmatpush1.xpose.msra.mxu0 %v5282
    %5322 = vmatprep.subr.mxu0 0.0
    %5323 = vmatpush2.xpose.msra.mxu0 0.0
    %5324 = vmatprep.subr.mxu0 0.0
    %5325 = vmatpush2.xpose.msra.mxu0 0.0
    %5326 = vmatprep.subr.mxu0 0.0
    %5327 = vmatpush2.xpose.msra.mxu0 0.0
    %5328 = vmatprep.subr.mxu0 0.0
    %5329 = vmatpush2.xpose.msra.mxu0 0.0
    %5330 = vmatprep.subr.mxu0 0.0
    %5331 = vmatpush2.xpose.msra.mxu0 0.0
    %5332 = vmatprep.subr.mxu0 0.0
    %5333 = vmatpush2.xpose.msra.mxu0 0.0
    %5334 = vmatprep.subr.mxu0 0.0
    %5335 = vmatpush2.xpose.msra.mxu0 0.0
    %5336 = vmatprep.subr.mxu0 0.0
    %5337 = vmatpush2.xpose.msra.mxu0 0.0
    %5338 = vmatprep.subr.mxu0 0.0
    %5339 = vmatpush2.xpose.msra.mxu0 0.0
    %5340 = vmatprep.subr.mxu0 0.0
    %5341 = vmatpush2.xpose.msra.mxu0 0.0
    %5342 = vmatprep.subr.mxu0 0.0
    %5343 = vmatpush2.xpose.msra.mxu0 0.0
    %5344 = vmatprep.subr.mxu0 0.0
    %5345 = vmatpush2.xpose.msra.mxu0 0.0
    %5346 = vmatprep.subr.mxu0 0.0
    %5347 = vmatpush2.xpose.msra.mxu0 0.0
    %5348 = vmatprep.subr.mxu0 0.0
    %5349 = vmatpush2.xpose.msra.mxu0 0.0
    %5350 = vmatprep.subr.mxu0 0.0
    %5351 = vmatpush2.xpose.msra.mxu0 0.0
    %5352 = vmatprep.subr.mxu0 0.0
    %5353 = vmatpush2.xpose.msra.mxu0 0.0
    %5354 = vmatprep.mubr.f32.mxu0 0.0
    %5355 = vmatmul.mubr.f32.gmra.mxu0 %v5278
    %v5356 = vpop.f32.mrf.mxu0
    %v5357 = vadd.f32 %v33, %v5356
    %v5358 = vpop.f32.mrf.mxu0
    %5359 = vmatprep.mubr.f32.mxu0 0.0
    %5360 = vmatmul.mubr.f32.gmra.mxu0 %v5280
    %v5361 = vpop.f32.mrf.mxu0
    %v5362 = vadd.f32 %v34, %v5361
    %v5363 = vpop.f32.mrf.mxu0
    %5364 = vdwg.mxu0
    %v5365 = vsel %vm46, %v5357, -inf
    %5366 = vmax.xlane.f32.xlu0 %v5365
    %v5367 = vpop.xlane.xlu0 %5366
    %v5368 = vsel %vm46, %v5362, -inf
    %5369 = vmax.xlane.f32.xlu0 %v5368
    %v5370 = vpop.xlane.xlu0 %5369
    %v5371 = vsub.f32 %v5357, %v5367
    %v5372 = vsub.f32 %v5362, %v5370
    %v5373 = vmul.f32 %v5371, 1.442695
    %v5374 = vpow.pop %v5373
    %v5375 = vmul.f32 %v5372, 1.442695
    %v5376 = vpow.pop %v5375
    %v5377 = vsel %vm46, %v5374, 0.0
    %5378 = vadd.xlane.f32.xlu0 %v5377
    %v5379 = vpop.xlane.xlu0 %5378
    %v5380 = vsel %vm46, %v5376, 0.0
    %5381 = vadd.xlane.f32.xlu0 %v5380
    %v5382 = vpop.xlane.xlu0 %5381
    %v5383 = vrcp.pop %v5379
    %v5384 = vmul.f32 %v5374, %v5383
    %v5385 = vrcp.pop %v5382
    %v5386 = vmul.f32 %v5376, %v5385
    %5387 = vrot.lane.b32.xlu0 %v4826, 80
    %v5388 = vpop.permute.xlu0 %5387
    %5389 = vrot.lane.b32.xlu0 %v4831, 80
    %v5390 = vpop.permute.xlu0 %5389
    %5391 = vrot.lane.b32.xlu0 %v4836, 80
    %v5392 = vpop.permute.xlu0 %5391
    %5393 = vrot.lane.b32.xlu0 %v4841, 80
    %v5394 = vpop.permute.xlu0 %5393
    %v5400 = vsel %vm46, %v5384, 0
    %v5403 = vsel %vm46, %v5386, 0
    %5405 = vmatprep.subr.mxu0 0.0
    %5406 = vmatpush1.msra.mxu0 0.0
    %5407 = vmatprep.subr.mxu0 0.0
    %5408 = vmatpush1.msra.mxu0 0.0
    %5409 = vmatprep.subr.mxu0 0.0
    %5410 = vmatpush1.msra.mxu0 0.0
    %5411 = vmatprep.subr.mxu0 0.0
    %5412 = vmatpush1.msra.mxu0 0.0
    %5413 = vmatprep.subr.mxu0 0.0
    %5414 = vmatpush1.msra.mxu0 0.0
    %5415 = vmatprep.subr.mxu0 0.0
    %5416 = vmatpush1.msra.mxu0 0.0
    %5417 = vmatprep.subr.mxu0 0.0
    %5418 = vmatpush1.msra.mxu0 0.0
    %5419 = vmatprep.subr.mxu0 0.0
    %5420 = vmatpush1.msra.mxu0 0.0
    %5421 = vmatprep.subr.mxu0 0.0
    %5422 = vmatpush1.msra.mxu0 0.0
    %5423 = vmatprep.subr.mxu0 0.0
    %5424 = vmatpush1.msra.mxu0 0.0
    %5425 = vmatprep.subr.mxu0 0.0
    %5426 = vmatpush1.msra.mxu0 0.0
    %5427 = vmatprep.subr.mxu0 0.0
    %5428 = vmatpush1.msra.mxu0 0.0
    %5429 = vmatprep.subr.mxu0 0.0
    %5430 = vmatpush1.msra.mxu0 %v5394
    %5431 = vmatprep.subr.mxu0 0.0
    %5432 = vmatpush1.msra.mxu0 %v5392
    %5433 = vmatprep.subr.mxu0 0.0
    %5434 = vmatpush1.msra.mxu0 %v5390
    %5435 = vmatprep.subr.mxu0 0.0
    %5436 = vmatpush1.msra.mxu0 %v5388
    %5437 = vmatprep.subr.mxu0 0.0
    %5438 = vmatpush2.msra.mxu0 0.0
    %5439 = vmatprep.subr.mxu0 0.0
    %5440 = vmatpush2.msra.mxu0 0.0
    %5441 = vmatprep.subr.mxu0 0.0
    %5442 = vmatpush2.msra.mxu0 0.0
    %5443 = vmatprep.subr.mxu0 0.0
    %5444 = vmatpush2.msra.mxu0 0.0
    %5445 = vmatprep.subr.mxu0 0.0
    %5446 = vmatpush2.msra.mxu0 0.0
    %5447 = vmatprep.subr.mxu0 0.0
    %5448 = vmatpush2.msra.mxu0 0.0
    %5449 = vmatprep.subr.mxu0 0.0
    %5450 = vmatpush2.msra.mxu0 0.0
    %5451 = vmatprep.subr.mxu0 0.0
    %5452 = vmatpush2.msra.mxu0 0.0
    %5453 = vmatprep.subr.mxu0 0.0
    %5454 = vmatpush2.msra.mxu0 0.0
    %5455 = vmatprep.subr.mxu0 0.0
    %5456 = vmatpush2.msra.mxu0 0.0
    %5457 = vmatprep.subr.mxu0 0.0
    %5458 = vmatpush2.msra.mxu0 0.0
    %5459 = vmatprep.subr.mxu0 0.0
    %5460 = vmatpush2.msra.mxu0 0.0
    %5461 = vmatprep.subr.mxu0 0.0
    %5462 = vmatpush2.msra.mxu0 0.0
    %5463 = vmatprep.subr.mxu0 0.0
    %5464 = vmatpush2.msra.mxu0 0.0
    %5465 = vmatprep.subr.mxu0 0.0
    %5466 = vmatpush2.msra.mxu0 0.0
    %5467 = vmatprep.subr.mxu0 0.0
    %5468 = vmatpush2.msra.mxu0 0.0
    %5469 = vmatprep.mubr.f32.mxu0 0.0
    %5470 = vmatmul.mubr.f32.gmra.mxu0 %v5400
    %v5471 = vpop.f32.mrf.mxu0
    %v5472 = vadd.f32 0.0, %v5471
    %v5473 = vpop.f32.mrf.mxu0
    %5474 = vmatprep.mubr.f32.mxu0 0.0
    %5475 = vmatmul.mubr.f32.gmra.mxu0 %v5403
    %v5476 = vpop.f32.mrf.mxu0
    %v5477 = vadd.f32 0.0, %v5476
    %v5478 = vpop.f32.mrf.mxu0
    %5479 = vdwg.mxu0
    %5480 = vrot.lane.b32.xlu0 %v4723, 104
    %v5481 = vpop.permute.xlu0 %5480
    %5482 = vrot.lane.b32.xlu0 %v4728, 104
    %v5483 = vpop.permute.xlu0 %5482
    %5484 = vrot.lane.b32.xlu0 %v4826, 104
    %v5485 = vpop.permute.xlu0 %5484
    %5486 = vrot.lane.b32.xlu0 %v4831, 104
    %v5487 = vpop.permute.xlu0 %5486
    %5488 = vrot.lane.b32.xlu0 %v4836, 104
    %v5489 = vpop.permute.xlu0 %5488
    %5490 = vrot.lane.b32.xlu0 %v4841, 104
    %v5491 = vpop.permute.xlu0 %5490
    %v5492 = vsel %vm225, %v5481, 0
    %v5494 = vsel %vm225, %v5483, 0
    %v5496 = vsel %vm225, %v5485, 0
    %v5498 = vsel %vm225, %v5487, 0
    %v5500 = vsel %vm225, %v5489, 0
    %v5502 = vsel %vm225, %v5491, 0
    %5504 = vmatprep.subr.mxu0 0.0
    %5505 = vmatpush1.xpose.msra.mxu0 0.0
    %5506 = vmatprep.subr.mxu0 0.0
    %5507 = vmatpush1.xpose.msra.mxu0 0.0
    %5508 = vmatprep.subr.mxu0 0.0
    %5509 = vmatpush1.xpose.msra.mxu0 0.0
    %5510 = vmatprep.subr.mxu0 0.0
    %5511 = vmatpush1.xpose.msra.mxu0 0.0
    %5512 = vmatprep.subr.mxu0 0.0
    %5513 = vmatpush1.xpose.msra.mxu0 0.0
    %5514 = vmatprep.subr.mxu0 0.0
    %5515 = vmatpush1.xpose.msra.mxu0 0.0
    %5516 = vmatprep.subr.mxu0 0.0
    %5517 = vmatpush1.xpose.msra.mxu0 0.0
    %5518 = vmatprep.subr.mxu0 0.0
    %5519 = vmatpush1.xpose.msra.mxu0 0.0
    %5520 = vmatprep.subr.mxu0 0.0
    %5521 = vmatpush1.xpose.msra.mxu0 0.0
    %5522 = vmatprep.subr.mxu0 0.0
    %5523 = vmatpush1.xpose.msra.mxu0 0.0
    %5524 = vmatprep.subr.mxu0 0.0
    %5525 = vmatpush1.xpose.msra.mxu0 0.0
    %5526 = vmatprep.subr.mxu0 0.0
    %5527 = vmatpush1.xpose.msra.mxu0 0.0
    %5528 = vmatprep.subr.mxu0 0.0
    %5529 = vmatpush1.xpose.msra.mxu0 %v5502
    %5530 = vmatprep.subr.mxu0 0.0
    %5531 = vmatpush1.xpose.msra.mxu0 %v5500
    %5532 = vmatprep.subr.mxu0 0.0
    %5533 = vmatpush1.xpose.msra.mxu0 %v5498
    %5534 = vmatprep.subr.mxu0 0.0
    %5535 = vmatpush1.xpose.msra.mxu0 %v5496
    %5536 = vmatprep.subr.mxu0 0.0
    %5537 = vmatpush2.xpose.msra.mxu0 0.0
    %5538 = vmatprep.subr.mxu0 0.0
    %5539 = vmatpush2.xpose.msra.mxu0 0.0
    %5540 = vmatprep.subr.mxu0 0.0
    %5541 = vmatpush2.xpose.msra.mxu0 0.0
    %5542 = vmatprep.subr.mxu0 0.0
    %5543 = vmatpush2.xpose.msra.mxu0 0.0
    %5544 = vmatprep.subr.mxu0 0.0
    %5545 = vmatpush2.xpose.msra.mxu0 0.0
    %5546 = vmatprep.subr.mxu0 0.0
    %5547 = vmatpush2.xpose.msra.mxu0 0.0
    %5548 = vmatprep.subr.mxu0 0.0
    %5549 = vmatpush2.xpose.msra.mxu0 0.0
    %5550 = vmatprep.subr.mxu0 0.0
    %5551 = vmatpush2.xpose.msra.mxu0 0.0
    %5552 = vmatprep.subr.mxu0 0.0
    %5553 = vmatpush2.xpose.msra.mxu0 0.0
    %5554 = vmatprep.subr.mxu0 0.0
    %5555 = vmatpush2.xpose.msra.mxu0 0.0
    %5556 = vmatprep.subr.mxu0 0.0
    %5557 = vmatpush2.xpose.msra.mxu0 0.0
    %5558 = vmatprep.subr.mxu0 0.0
    %5559 = vmatpush2.xpose.msra.mxu0 0.0
    %5560 = vmatprep.subr.mxu0 0.0
    %5561 = vmatpush2.xpose.msra.mxu0 0.0
    %5562 = vmatprep.subr.mxu0 0.0
    %5563 = vmatpush2.xpose.msra.mxu0 0.0
    %5564 = vmatprep.subr.mxu0 0.0
    %5565 = vmatpush2.xpose.msra.mxu0 0.0
    %5566 = vmatprep.subr.mxu0 0.0
    %5567 = vmatpush2.xpose.msra.mxu0 0.0
    %5568 = vmatprep.mubr.f32.mxu0 0.0
    %5569 = vmatmul.mubr.f32.gmra.mxu0 %v5492
    %v5570 = vpop.f32.mrf.mxu0
    %v5571 = vadd.f32 %v33, %v5570
    %v5572 = vpop.f32.mrf.mxu0
    %5573 = vmatprep.mubr.f32.mxu0 0.0
    %5574 = vmatmul.mubr.f32.gmra.mxu0 %v5494
    %v5575 = vpop.f32.mrf.mxu0
    %v5576 = vadd.f32 %v34, %v5575
    %v5577 = vpop.f32.mrf.mxu0
    %5578 = vdwg.mxu0
    %v5579 = vsel %vm46, %v5571, -inf
    %5580 = vmax.xlane.f32.xlu0 %v5579
    %v5581 = vpop.xlane.xlu0 %5580
    %v5582 = vsel %vm46, %v5576, -inf
    %5583 = vmax.xlane.f32.xlu0 %v5582
    %v5584 = vpop.xlane.xlu0 %5583
    %v5585 = vsub.f32 %v5571, %v5581
    %v5586 = vsub.f32 %v5576, %v5584
    %v5587 = vmul.f32 %v5585, 1.442695
    %v5588 = vpow.pop %v5587
    %v5589 = vmul.f32 %v5586, 1.442695
    %v5590 = vpow.pop %v5589
    %v5591 = vsel %vm46, %v5588, 0.0
    %5592 = vadd.xlane.f32.xlu0 %v5591
    %v5593 = vpop.xlane.xlu0 %5592
    %v5594 = vsel %vm46, %v5590, 0.0
    %5595 = vadd.xlane.f32.xlu0 %v5594
    %v5596 = vpop.xlane.xlu0 %5595
    %v5597 = vrcp.pop %v5593
    %v5598 = vmul.f32 %v5588, %v5597
    %v5599 = vrcp.pop %v5596
    %v5600 = vmul.f32 %v5590, %v5599
    %5601 = vrot.lane.b32.xlu0 %v4826, 72
    %v5602 = vpop.permute.xlu0 %5601
    %5603 = vrot.lane.b32.xlu0 %v4831, 72
    %v5604 = vpop.permute.xlu0 %5603
    %5605 = vrot.lane.b32.xlu0 %v4836, 72
    %v5606 = vpop.permute.xlu0 %5605
    %5607 = vrot.lane.b32.xlu0 %v4841, 72
    %v5608 = vpop.permute.xlu0 %5607
    %v5614 = vsel %vm46, %v5598, 0
    %v5617 = vsel %vm46, %v5600, 0
    %5619 = vmatprep.subr.mxu0 0.0
    %5620 = vmatpush1.msra.mxu0 0.0
    %5621 = vmatprep.subr.mxu0 0.0
    %5622 = vmatpush1.msra.mxu0 0.0
    %5623 = vmatprep.subr.mxu0 0.0
    %5624 = vmatpush1.msra.mxu0 0.0
    %5625 = vmatprep.subr.mxu0 0.0
    %5626 = vmatpush1.msra.mxu0 0.0
    %5627 = vmatprep.subr.mxu0 0.0
    %5628 = vmatpush1.msra.mxu0 0.0
    %5629 = vmatprep.subr.mxu0 0.0
    %5630 = vmatpush1.msra.mxu0 0.0
    %5631 = vmatprep.subr.mxu0 0.0
    %5632 = vmatpush1.msra.mxu0 0.0
    %5633 = vmatprep.subr.mxu0 0.0
    %5634 = vmatpush1.msra.mxu0 0.0
    %5635 = vmatprep.subr.mxu0 0.0
    %5636 = vmatpush1.msra.mxu0 0.0
    %5637 = vmatprep.subr.mxu0 0.0
    %5638 = vmatpush1.msra.mxu0 0.0
    %5639 = vmatprep.subr.mxu0 0.0
    %5640 = vmatpush1.msra.mxu0 0.0
    %5641 = vmatprep.subr.mxu0 0.0
    %5642 = vmatpush1.msra.mxu0 0.0
    %5643 = vmatprep.subr.mxu0 0.0
    %5644 = vmatpush1.msra.mxu0 %v5608
    %5645 = vmatprep.subr.mxu0 0.0
    %5646 = vmatpush1.msra.mxu0 %v5606
    %5647 = vmatprep.subr.mxu0 0.0
    %5648 = vmatpush1.msra.mxu0 %v5604
    %5649 = vmatprep.subr.mxu0 0.0
    %5650 = vmatpush1.msra.mxu0 %v5602
    %5651 = vmatprep.subr.mxu0 0.0
    %5652 = vmatpush2.msra.mxu0 0.0
    %5653 = vmatprep.subr.mxu0 0.0
    %5654 = vmatpush2.msra.mxu0 0.0
    %5655 = vmatprep.subr.mxu0 0.0
    %5656 = vmatpush2.msra.mxu0 0.0
    %5657 = vmatprep.subr.mxu0 0.0
    %5658 = vmatpush2.msra.mxu0 0.0
    %5659 = vmatprep.subr.mxu0 0.0
    %5660 = vmatpush2.msra.mxu0 0.0
    %5661 = vmatprep.subr.mxu0 0.0
    %5662 = vmatpush2.msra.mxu0 0.0
    %5663 = vmatprep.subr.mxu0 0.0
    %5664 = vmatpush2.msra.mxu0 0.0
    %5665 = vmatprep.subr.mxu0 0.0
    %5666 = vmatpush2.msra.mxu0 0.0
    %5667 = vmatprep.subr.mxu0 0.0
    %5668 = vmatpush2.msra.mxu0 0.0
    %5669 = vmatprep.subr.mxu0 0.0
    %5670 = vmatpush2.msra.mxu0 0.0
    %5671 = vmatprep.subr.mxu0 0.0
    %5672 = vmatpush2.msra.mxu0 0.0
    %5673 = vmatprep.subr.mxu0 0.0
    %5674 = vmatpush2.msra.mxu0 0.0
    %5675 = vmatprep.subr.mxu0 0.0
    %5676 = vmatpush2.msra.mxu0 0.0
    %5677 = vmatprep.subr.mxu0 0.0
    %5678 = vmatpush2.msra.mxu0 0.0
    %5679 = vmatprep.subr.mxu0 0.0
    %5680 = vmatpush2.msra.mxu0 0.0
    %5681 = vmatprep.subr.mxu0 0.0
    %5682 = vmatpush2.msra.mxu0 0.0
    %5683 = vmatprep.mubr.f32.mxu0 0.0
    %5684 = vmatmul.mubr.f32.gmra.mxu0 %v5614
    %v5685 = vpop.f32.mrf.mxu0
    %v5686 = vadd.f32 0.0, %v5685
    %v5687 = vpop.f32.mrf.mxu0
    %5688 = vmatprep.mubr.f32.mxu0 0.0
    %5689 = vmatmul.mubr.f32.gmra.mxu0 %v5617
    %v5690 = vpop.f32.mrf.mxu0
    %v5691 = vadd.f32 0.0, %v5690
    %v5692 = vpop.f32.mrf.mxu0
    %5693 = vdwg.mxu0
    %5696 = vrot.lane.b32.xlu0 %v5258, 8
    %v5697 = vpop.permute.xlu0 %5696
    %5698 = vrot.lane.b32.xlu0 %v5263, 8
    %v5699 = vpop.permute.xlu0 %5698
    %5704 = vrot.lane.b32.xlu0 %v5472, 16
    %v5705 = vpop.permute.xlu0 %5704
    %5706 = vrot.lane.b32.xlu0 %v5477, 16
    %v5707 = vpop.permute.xlu0 %5706
    %5712 = vrot.lane.b32.xlu0 %v5686, 24
    %v5713 = vpop.permute.xlu0 %5712
    %5714 = vrot.lane.b32.xlu0 %v5691, 24
    %v5715 = vpop.permute.xlu0 %5714
    %v5718 = vsel %vm225, %v5044, %v5697
    %v5719 = vsel %vm225, %v5049, %v5699
    %v5720 = vsel %vm1342, %v5718, %v5705
    %v5721 = vsel %vm1342, %v5719, %v5707
    %v5722 = vsel %vm1347, %v5720, %v5713
    %v5723 = vsel %vm1347, %v5721, %v5715
    %5724 = vrot.lane.b32.xlu0 %v4608, 32
    %v5725 = vpop.permute.xlu0 %5724
    %5726 = vrot.lane.b32.xlu0 %v4609, 32
    %v5727 = vpop.permute.xlu0 %5726
    %5728 = vrot.lane.b32.xlu0 %v4610, 32
    %v5729 = vpop.permute.xlu0 %5728
    %5730 = vrot.lane.b32.xlu0 %v4611, 32
    %v5731 = vpop.permute.xlu0 %5730
    %v5737 = vsel %vm46, %v5722, 0
    %v5740 = vsel %vm46, %v5723, 0
    %5742 = vmatprep.subr.mxu0 0.0
    %5743 = vmatpush1.msra.mxu0 0.0
    %5744 = vmatprep.subr.mxu0 0.0
    %5745 = vmatpush1.msra.mxu0 0.0
    %5746 = vmatprep.subr.mxu0 0.0
    %5747 = vmatpush1.msra.mxu0 0.0
    %5748 = vmatprep.subr.mxu0 0.0
    %5749 = vmatpush1.msra.mxu0 0.0
    %5750 = vmatprep.subr.mxu0 0.0
    %5751 = vmatpush1.msra.mxu0 0.0
    %5752 = vmatprep.subr.mxu0 0.0
    %5753 = vmatpush1.msra.mxu0 0.0
    %5754 = vmatprep.subr.mxu0 0.0
    %5755 = vmatpush1.msra.mxu0 0.0
    %5756 = vmatprep.subr.mxu0 0.0
    %5757 = vmatpush1.msra.mxu0 0.0
    %5758 = vmatprep.subr.mxu0 0.0
    %5759 = vmatpush1.msra.mxu0 0.0
    %5760 = vmatprep.subr.mxu0 0.0
    %5761 = vmatpush1.msra.mxu0 0.0
    %5762 = vmatprep.subr.mxu0 0.0
    %5763 = vmatpush1.msra.mxu0 0.0
    %5764 = vmatprep.subr.mxu0 0.0
    %5765 = vmatpush1.msra.mxu0 0.0
    %5766 = vmatprep.subr.mxu0 0.0
    %5767 = vmatpush1.msra.mxu0 %v5731
    %5768 = vmatprep.subr.mxu0 0.0
    %5769 = vmatpush1.msra.mxu0 %v5729
    %5770 = vmatprep.subr.mxu0 0.0
    %5771 = vmatpush1.msra.mxu0 %v5727
    %5772 = vmatprep.subr.mxu0 0.0
    %5773 = vmatpush1.msra.mxu0 %v5725
    %5774 = vmatprep.subr.mxu0 0.0
    %5775 = vmatpush2.msra.mxu0 0.0
    %5776 = vmatprep.subr.mxu0 0.0
    %5777 = vmatpush2.msra.mxu0 0.0
    %5778 = vmatprep.subr.mxu0 0.0
    %5779 = vmatpush2.msra.mxu0 0.0
    %5780 = vmatprep.subr.mxu0 0.0
    %5781 = vmatpush2.msra.mxu0 0.0
    %5782 = vmatprep.subr.mxu0 0.0
    %5783 = vmatpush2.msra.mxu0 0.0
    %5784 = vmatprep.subr.mxu0 0.0
    %5785 = vmatpush2.msra.mxu0 0.0
    %5786 = vmatprep.subr.mxu0 0.0
    %5787 = vmatpush2.msra.mxu0 0.0
    %5788 = vmatprep.subr.mxu0 0.0
    %5789 = vmatpush2.msra.mxu0 0.0
    %5790 = vmatprep.subr.mxu0 0.0
    %5791 = vmatpush2.msra.mxu0 0.0
    %5792 = vmatprep.subr.mxu0 0.0
    %5793 = vmatpush2.msra.mxu0 0.0
    %5794 = vmatprep.subr.mxu0 0.0
    %5795 = vmatpush2.msra.mxu0 0.0
    %5796 = vmatprep.subr.mxu0 0.0
    %5797 = vmatpush2.msra.mxu0 0.0
    %5798 = vmatprep.subr.mxu0 0.0
    %5799 = vmatpush2.msra.mxu0 0.0
    %5800 = vmatprep.subr.mxu0 0.0
    %5801 = vmatpush2.msra.mxu0 0.0
    %5802 = vmatprep.subr.mxu0 0.0
    %5803 = vmatpush2.msra.mxu0 0.0
    %5804 = vmatprep.subr.mxu0 0.0
    %5805 = vmatpush2.msra.mxu0 0.0
    %5806 = vmatprep.mubr.f32.mxu0 0.0
    %5807 = vmatmul.mubr.f32.gmra.mxu0 %v5737
    %v5808 = vpop.f32.mrf.mxu0
    %v5809 = vadd.f32 0.0, %v5808
    %v5810 = vpop.f32.mrf.mxu0
    %5811 = vmatprep.mubr.f32.mxu0 0.0
    %5812 = vmatmul.mubr.f32.gmra.mxu0 %v5740
    %v5813 = vpop.f32.mrf.mxu0
    %v5814 = vadd.f32 0.0, %v5813
    %v5815 = vpop.f32.mrf.mxu0
    %5816 = vdwg.mxu0
    %v5817 = vadd.f32 %v4602, %v5809
    %v5818 = vadd.f32 %v4603, %v5814
    %v5819 = vlaneseq
    %v5820 = vshrl.u32 %v5819, 7
    %v5821 = vsub.s32 0, %v5820
    %v5822 = vrot.slane %v4606, %v5821
    %v5823 = vadd.f32 %v5817, %v5822
    %v5824 = vadd.f32 %v5818, %v5822
    %v5825 = vld [vmem:[%s5 + $0x1a] sm:$0x1]
    %v5826 = vld [vmem:[%s5 + $0x1b] sm:$0x1]
    %v5827 = vld [vmem:[%s5 + $0x1c] sm:$0x1]
    %v5828 = vld [vmem:[%s5 + $0x1d] sm:$0x1]
    %s5829 = scalar_lea.vmem %s3, 64
    %v5830 = vld [vmem:[%s5829] sm:$0xff]
    %v5831 = vld [vmem:[%s5829 + $0x8] sm:$0xff]
    %v5832 = vld [vmem:[%s5829 + $0x10] sm:$0xff]
    %v5833 = vld [vmem:[%s5829 + $0x18] sm:$0xff]
    %s5834 = scalar_lea.vmem %s4, 128
    %v5835 = vld [vmem:[%s5834] sm:$0xff]
    %v5836 = vld [vmem:[%s5834 + $0x8] sm:$0xff]
    %v5837 = vld [vmem:[%s5834 + $0x10] sm:$0xff]
    %v5838 = vld [vmem:[%s5834 + $0x18] sm:$0xff]
    %v5839 = vld [vmem:[%s5834 + $0x20] sm:$0xff]
    %v5840 = vld [vmem:[%s5834 + $0x28] sm:$0xff]
    %v5841 = vld [vmem:[%s5834 + $0x30] sm:$0xff]
    %v5842 = vld [vmem:[%s5834 + $0x38] sm:$0xff]
    %v5843 = vsel %vm46, %v5823, 0.0
    %5844 = vadd.xlane.f32.xlu0 %v5843
    %v5845 = vpop.xlane.xlu0 %5844
    %v5846 = vsel %vm46, %v5824, 0.0
    %5847 = vadd.xlane.f32.xlu0 %v5846
    %v5848 = vpop.xlane.xlu0 %5847
    %v5849 = vmul.f32 %v5845, %v59
    %v5850 = vmul.f32 %v5848, %v59
    %v5851 = vsub.f32 %v5823, %v5849
    %v5852 = vsub.f32 %v5824, %v5850
    %v5853 = vmul.f32 %v5851, %v5851
    %v5854 = vmul.f32 %v5852, %v5852
    %v5855 = vsel %vm46, %v5853, 0.0
    %5856 = vadd.xlane.f32.xlu0 %v5855
    %v5857 = vpop.xlane.xlu0 %5856
    %v5858 = vsel %vm46, %v5854, 0.0
    %5859 = vadd.xlane.f32.xlu0 %v5858
    %v5860 = vpop.xlane.xlu0 %5859
    %v5861 = vmul.f32 %v5857, %v59
    %v5862 = vmul.f32 %v5860, %v59
    %v5863 = vadd.f32 %v5861, 1e-05
    %v5864 = vadd.f32 %v5862, 1e-05
    %v5865 = vrsqrt.pop %v5863
    %v5866 = vrsqrt.pop %v5864
    %v5867 = vmul.f32 %v5851, %v5865
    %v5868 = vmul.f32 %v5852, %v5866
    %v5869 = vlaneseq
    %v5870 = vshrl.u32 %v5869, 7
    %v5871 = vsub.s32 0, %v5870
    %v5872 = vrot.slane %v5825, %v5871
    %v5873 = vmul.f32 %v5867, %v5872
    %v5874 = vmul.f32 %v5868, %v5872
    %v5875 = vlaneseq
    %v5876 = vshrl.u32 %v5875, 7
    %v5877 = vsub.s32 0, %v5876
    %v5878 = vrot.slane %v5826, %v5877
    %v5879 = vadd.f32 %v5873, %v5878
    %v5880 = vadd.f32 %v5874, %v5878
    %v5881 = vlaneseq
    %v5882 = vshrl.u32 %v5881, 7
    %v5883 = vsub.s32 0, %v5882
    %v5884 = vrot.slane %v5827, %v5883
    %v5886 = vsel %vm46, %v5879, 0
    %v5889 = vsel %vm46, %v5880, 0
    %5891 = vmatprep.subr.mxu0 0.0
    %5892 = vmatpush1.msra.mxu0 0.0
    %5893 = vmatprep.subr.mxu0 0.0
    %5894 = vmatpush1.msra.mxu0 0.0
    %5895 = vmatprep.subr.mxu0 0.0
    %5896 = vmatpush1.msra.mxu0 0.0
    %5897 = vmatprep.subr.mxu0 0.0
    %5898 = vmatpush1.msra.mxu0 0.0
    %5899 = vmatprep.subr.mxu0 0.0
    %5900 = vmatpush1.msra.mxu0 0.0
    %5901 = vmatprep.subr.mxu0 0.0
    %5902 = vmatpush1.msra.mxu0 0.0
    %5903 = vmatprep.subr.mxu0 0.0
    %5904 = vmatpush1.msra.mxu0 0.0
    %5905 = vmatprep.subr.mxu0 0.0
    %5906 = vmatpush1.msra.mxu0 0.0
    %5907 = vmatprep.subr.mxu0 0.0
    %5908 = vmatpush1.msra.mxu0 0.0
    %5909 = vmatprep.subr.mxu0 0.0
    %5910 = vmatpush1.msra.mxu0 0.0
    %5911 = vmatprep.subr.mxu0 0.0
    %5912 = vmatpush1.msra.mxu0 0.0
    %5913 = vmatprep.subr.mxu0 0.0
    %5914 = vmatpush1.msra.mxu0 0.0
    %5915 = vmatprep.subr.mxu0 0.0
    %5916 = vmatpush1.msra.mxu0 %v5833
    %5917 = vmatprep.subr.mxu0 0.0
    %5918 = vmatpush1.msra.mxu0 %v5832
    %5919 = vmatprep.subr.mxu0 0.0
    %5920 = vmatpush1.msra.mxu0 %v5831
    %5921 = vmatprep.subr.mxu0 0.0
    %5922 = vmatpush1.msra.mxu0 %v5830
    %5923 = vmatprep.subr.mxu0 0.0
    %5924 = vmatpush2.msra.mxu0 0.0
    %5925 = vmatprep.subr.mxu0 0.0
    %5926 = vmatpush2.msra.mxu0 0.0
    %5927 = vmatprep.subr.mxu0 0.0
    %5928 = vmatpush2.msra.mxu0 0.0
    %5929 = vmatprep.subr.mxu0 0.0
    %5930 = vmatpush2.msra.mxu0 0.0
    %5931 = vmatprep.subr.mxu0 0.0
    %5932 = vmatpush2.msra.mxu0 0.0
    %5933 = vmatprep.subr.mxu0 0.0
    %5934 = vmatpush2.msra.mxu0 0.0
    %5935 = vmatprep.subr.mxu0 0.0
    %5936 = vmatpush2.msra.mxu0 0.0
    %5937 = vmatprep.subr.mxu0 0.0
    %5938 = vmatpush2.msra.mxu0 0.0
    %5939 = vmatprep.subr.mxu0 0.0
    %5940 = vmatpush2.msra.mxu0 0.0
    %5941 = vmatprep.subr.mxu0 0.0
    %5942 = vmatpush2.msra.mxu0 0.0
    %5943 = vmatprep.subr.mxu0 0.0
    %5944 = vmatpush2.msra.mxu0 0.0
    %5945 = vmatprep.subr.mxu0 0.0
    %5946 = vmatpush2.msra.mxu0 0.0
    %5947 = vmatprep.subr.mxu0 0.0
    %5948 = vmatpush2.msra.mxu0 0.0
    %5949 = vmatprep.subr.mxu0 0.0
    %5950 = vmatpush2.msra.mxu0 0.0
    %5951 = vmatprep.subr.mxu0 0.0
    %5952 = vmatpush2.msra.mxu0 0.0
    %5953 = vmatprep.subr.mxu0 0.0
    %5954 = vmatpush2.msra.mxu0 0.0
    %5955 = vmatprep.mubr.f32.mxu0 0.0
    %5956 = vmatmul.mubr.f32.gmra.mxu0 %v5886
    %v5957 = vpop.f32.mrf.mxu0
    %v5958 = vadd.f32 %v5884, %v5957
    %v5959 = vpop.f32.mrf.mxu0
    %5960 = vmatprep.mubr.f32.mxu0 0.0
    %5961 = vmatmul.mubr.f32.gmra.mxu0 %v5889
    %v5962 = vpop.f32.mrf.mxu0
    %v5963 = vadd.f32 %v5884, %v5962
    %v5964 = vpop.f32.mrf.mxu0
    %5965 = vdwg.mxu0
    %v5966 = vmul.f32 %v5958, 0.5
    %v5967 = vmul.f32 %v5963, 0.5
    %v5968 = vmul.f32 %v5958, 0.70710677
    %v5969 = vmul.f32 %v5963, 0.70710677
    %v5970 = verf.f32.pop %v5968
    %v5971 = verf.f32.pop %v5969
    %v5972 = vadd.f32 %v5970, 1.0
    %v5973 = vadd.f32 %v5971, 1.0
    %v5974 = vmul.f32 %v5966, %v5972
    %v5975 = vmul.f32 %v5967, %v5973
    %v5977 = vsel %vm1682, %v5974, 0
    %v5980 = vsel %vm1682, %v5975, 0
    %5982 = vmatprep.subr.mxu0 0.0
    %5983 = vmatpush1.msra.mxu0 0.0
    %5984 = vmatprep.subr.mxu0 0.0
    %5985 = vmatpush1.msra.mxu0 0.0
    %5986 = vmatprep.subr.mxu0 0.0
    %5987 = vmatpush1.msra.mxu0 0.0
    %5988 = vmatprep.subr.mxu0 0.0
    %5989 = vmatpush1.msra.mxu0 0.0
    %5990 = vmatprep.subr.mxu0 0.0
    %5991 = vmatpush1.msra.mxu0 0.0
    %5992 = vmatprep.subr.mxu0 0.0
    %5993 = vmatpush1.msra.mxu0 0.0
    %5994 = vmatprep.subr.mxu0 0.0
    %5995 = vmatpush1.msra.mxu0 0.0
    %5996 = vmatprep.subr.mxu0 0.0
    %5997 = vmatpush1.msra.mxu0 0.0
    %5998 = vmatprep.subr.mxu0 0.0
    %5999 = vmatpush1.msra.mxu0 %v5842
    %6000 = vmatprep.subr.mxu0 0.0
    %6001 = vmatpush1.msra.mxu0 %v5841
    %6002 = vmatprep.subr.mxu0 0.0
    %6003 = vmatpush1.msra.mxu0 %v5840
    %6004 = vmatprep.subr.mxu0 0.0
    %6005 = vmatpush1.msra.mxu0 %v5839
    %6006 = vmatprep.subr.mxu0 0.0
    %6007 = vmatpush1.msra.mxu0 %v5838
    %6008 = vmatprep.subr.mxu0 0.0
    %6009 = vmatpush1.msra.mxu0 %v5837
    %6010 = vmatprep.subr.mxu0 0.0
    %6011 = vmatpush1.msra.mxu0 %v5836
    %6012 = vmatprep.subr.mxu0 0.0
    %6013 = vmatpush1.msra.mxu0 %v5835
    %6014 = vmatprep.subr.mxu0 0.0
    %6015 = vmatpush2.msra.mxu0 0.0
    %6016 = vmatprep.subr.mxu0 0.0
    %6017 = vmatpush2.msra.mxu0 0.0
    %6018 = vmatprep.subr.mxu0 0.0
    %6019 = vmatpush2.msra.mxu0 0.0
    %6020 = vmatprep.subr.mxu0 0.0
    %6021 = vmatpush2.msra.mxu0 0.0
    %6022 = vmatprep.subr.mxu0 0.0
    %6023 = vmatpush2.msra.mxu0 0.0
    %6024 = vmatprep.subr.mxu0 0.0
    %6025 = vmatpush2.msra.mxu0 0.0
    %6026 = vmatprep.subr.mxu0 0.0
    %6027 = vmatpush2.msra.mxu0 0.0
    %6028 = vmatprep.subr.mxu0 0.0
    %6029 = vmatpush2.msra.mxu0 0.0
    %6030 = vmatprep.subr.mxu0 0.0
    %6031 = vmatpush2.msra.mxu0 0.0
    %6032 = vmatprep.subr.mxu0 0.0
    %6033 = vmatpush2.msra.mxu0 0.0
    %6034 = vmatprep.subr.mxu0 0.0
    %6035 = vmatpush2.msra.mxu0 0.0
    %6036 = vmatprep.subr.mxu0 0.0
    %6037 = vmatpush2.msra.mxu0 0.0
    %6038 = vmatprep.subr.mxu0 0.0
    %6039 = vmatpush2.msra.mxu0 0.0
    %6040 = vmatprep.subr.mxu0 0.0
    %6041 = vmatpush2.msra.mxu0 0.0
    %6042 = vmatprep.subr.mxu0 0.0
    %6043 = vmatpush2.msra.mxu0 0.0
    %6044 = vmatprep.subr.mxu0 0.0
    %6045 = vmatpush2.msra.mxu0 0.0
    %6046 = vmatprep.mubr.f32.mxu0 0.0
    %6047 = vmatmul.mubr.f32.gmra.mxu0 %v5977
    %v6048 = vpop.f32.mrf.mxu0
    %v6049 = vadd.f32 0.0, %v6048
    %v6050 = vpop.f32.mrf.mxu0
    %6051 = vmatprep.mubr.f32.mxu0 0.0
    %6052 = vmatmul.mubr.f32.gmra.mxu0 %v5980
    %v6053 = vpop.f32.mrf.mxu0
    %v6054 = vadd.f32 0.0, %v6053
    %v6055 = vpop.f32.mrf.mxu0
    %6056 = vdwg.mxu0
    %v6057 = vadd.f32 %v5823, %v6049
    %v6058 = vadd.f32 %v5824, %v6054
    %v6059 = vlaneseq
    %v6060 = vshrl.u32 %v6059, 7
    %v6061 = vsub.s32 0, %v6060
    %v6062 = vrot.slane %v5828, %v6061
    %v6063 = vadd.f32 %v6057, %v6062
    %v6064 = vadd.f32 %v6058, %v6062
    %v6065 = vld [vmem:[%s5 + $0xc] sm:$0x1]
    %v6066 = vld [vmem:[%s5 + $0xd] sm:$0x1]
    %v6067 = vld [vmem:[%s5 + $0xe] sm:$0x1]
    %s6068 = scalar_lea.vmem %s2, 128
    %v6069 = vld [vmem:[%s6068] sm:$0xff]
    %v6070 = vld [vmem:[%s6068 + $0x8] sm:$0xff]
    %v6071 = vld [vmem:[%s6068 + $0x10] sm:$0xff]
    %v6072 = vld [vmem:[%s6068 + $0x18] sm:$0xff]
    %v6073 = vsel %vm46, %v6063, 0.0
    %6074 = vadd.xlane.f32.xlu0 %v6073
    %v6075 = vpop.xlane.xlu0 %6074
    %v6076 = vsel %vm46, %v6064, 0.0
    %6077 = vadd.xlane.f32.xlu0 %v6076
    %v6078 = vpop.xlane.xlu0 %6077
    %v6079 = vmul.f32 %v6075, %v59
    %v6080 = vmul.f32 %v6078, %v59
    %v6081 = vsub.f32 %v6063, %v6079
    %v6082 = vsub.f32 %v6064, %v6080
    %v6083 = vmul.f32 %v6081, %v6081
    %v6084 = vmul.f32 %v6082, %v6082
    %v6085 = vsel %vm46, %v6083, 0.0
    %6086 = vadd.xlane.f32.xlu0 %v6085
    %v6087 = vpop.xlane.xlu0 %6086
    %v6088 = vsel %vm46, %v6084, 0.0
    %6089 = vadd.xlane.f32.xlu0 %v6088
    %v6090 = vpop.xlane.xlu0 %6089
    %v6091 = vmul.f32 %v6087, %v59
    %v6092 = vmul.f32 %v6090, %v59
    %v6093 = vadd.f32 %v6091, 1e-05
    %v6094 = vadd.f32 %v6092, 1e-05
    %v6095 = vrsqrt.pop %v6093
    %v6096 = vrsqrt.pop %v6094
    %v6097 = vmul.f32 %v6081, %v6095
    %v6098 = vmul.f32 %v6082, %v6096
    %v6099 = vlaneseq
    %v6100 = vshrl.u32 %v6099, 7
    %v6101 = vsub.s32 0, %v6100
    %v6102 = vrot.slane %v6065, %v6101
    %v6103 = vmul.f32 %v6097, %v6102
    %v6104 = vmul.f32 %v6098, %v6102
    %v6105 = vlaneseq
    %v6106 = vshrl.u32 %v6105, 7
    %v6107 = vsub.s32 0, %v6106
    %v6108 = vrot.slane %v6066, %v6107
    %v6109 = vadd.f32 %v6103, %v6108
    %v6110 = vadd.f32 %v6104, %v6108
    %v6112 = vsel %vm46, %v6109, 0
    %v6115 = vsel %vm46, %v6110, 0
    %6117 = vmatprep.subr.mxu0 0.0
    %6118 = vmatpush1.msra.mxu0 0.0
    %6119 = vmatprep.subr.mxu0 0.0
    %6120 = vmatpush1.msra.mxu0 0.0
    %6121 = vmatprep.subr.mxu0 0.0
    %6122 = vmatpush1.msra.mxu0 0.0
    %6123 = vmatprep.subr.mxu0 0.0
    %6124 = vmatpush1.msra.mxu0 0.0
    %6125 = vmatprep.subr.mxu0 0.0
    %6126 = vmatpush1.msra.mxu0 0.0
    %6127 = vmatprep.subr.mxu0 0.0
    %6128 = vmatpush1.msra.mxu0 0.0
    %6129 = vmatprep.subr.mxu0 0.0
    %6130 = vmatpush1.msra.mxu0 0.0
    %6131 = vmatprep.subr.mxu0 0.0
    %6132 = vmatpush1.msra.mxu0 0.0
    %6133 = vmatprep.subr.mxu0 0.0
    %6134 = vmatpush1.msra.mxu0 0.0
    %6135 = vmatprep.subr.mxu0 0.0
    %6136 = vmatpush1.msra.mxu0 0.0
    %6137 = vmatprep.subr.mxu0 0.0
    %6138 = vmatpush1.msra.mxu0 0.0
    %6139 = vmatprep.subr.mxu0 0.0
    %6140 = vmatpush1.msra.mxu0 0.0
    %6141 = vmatprep.subr.mxu0 0.0
    %6142 = vmatpush1.msra.mxu0 %v6072
    %6143 = vmatprep.subr.mxu0 0.0
    %6144 = vmatpush1.msra.mxu0 %v6071
    %6145 = vmatprep.subr.mxu0 0.0
    %6146 = vmatpush1.msra.mxu0 %v6070
    %6147 = vmatprep.subr.mxu0 0.0
    %6148 = vmatpush1.msra.mxu0 %v6069
    %6149 = vmatprep.subr.mxu0 0.0
    %6150 = vmatpush2.msra.mxu0 0.0
    %6151 = vmatprep.subr.mxu0 0.0
    %6152 = vmatpush2.msra.mxu0 0.0
    %6153 = vmatprep.subr.mxu0 0.0
    %6154 = vmatpush2.msra.mxu0 0.0
    %6155 = vmatprep.subr.mxu0 0.0
    %6156 = vmatpush2.msra.mxu0 0.0
    %6157 = vmatprep.subr.mxu0 0.0
    %6158 = vmatpush2.msra.mxu0 0.0
    %6159 = vmatprep.subr.mxu0 0.0
    %6160 = vmatpush2.msra.mxu0 0.0
    %6161 = vmatprep.subr.mxu0 0.0
    %6162 = vmatpush2.msra.mxu0 0.0
    %6163 = vmatprep.subr.mxu0 0.0
    %6164 = vmatpush2.msra.mxu0 0.0
    %6165 = vmatprep.subr.mxu0 0.0
    %6166 = vmatpush2.msra.mxu0 0.0
    %6167 = vmatprep.subr.mxu0 0.0
    %6168 = vmatpush2.msra.mxu0 0.0
    %6169 = vmatprep.subr.mxu0 0.0
    %6170 = vmatpush2.msra.mxu0 0.0
    %6171 = vmatprep.subr.mxu0 0.0
    %6172 = vmatpush2.msra.mxu0 0.0
    %6173 = vmatprep.subr.mxu0 0.0
    %6174 = vmatpush2.msra.mxu0 0.0
    %6175 = vmatprep.subr.mxu0 0.0
    %6176 = vmatpush2.msra.mxu0 0.0
    %6177 = vmatprep.subr.mxu0 0.0
    %6178 = vmatpush2.msra.mxu0 0.0
    %6179 = vmatprep.subr.mxu0 0.0
    %6180 = vmatpush2.msra.mxu0 0.0
    %6181 = vmatprep.mubr.f32.mxu0 0.0
    %6182 = vmatmul.mubr.f32.gmra.mxu0 %v6112
    %v6183 = vpop.f32.mrf.mxu0
    %v6184 = vadd.f32 0.0, %v6183
    %v6185 = vpop.f32.mrf.mxu0
    %6186 = vmatprep.mubr.f32.mxu0 0.0
    %6187 = vmatmul.mubr.f32.gmra.mxu0 %v6115
    %v6188 = vpop.f32.mrf.mxu0
    %v6189 = vadd.f32 0.0, %v6188
    %v6190 = vpop.f32.mrf.mxu0
    %6191 = vdwg.mxu0
    %6194 = vrot.lane.b32.xlu0 %v6184, 96
    %v6195 = vpop.permute.xlu0 %6194
    %6196 = vrot.lane.b32.xlu0 %v6189, 96
    %v6197 = vpop.permute.xlu0 %6196
    %v6198 = vsel %vm225, %v6184, 0
    %v6200 = vsel %vm225, %v6189, 0
    %v6202 = vsel %vm225, %v6195, 0
    %v6204 = vsel %vm225, %v6197, 0
    %6206 = vmatprep.subr.mxu0 0.0
    %6207 = vmatpush1.xpose.msra.mxu0 0.0
    %6208 = vmatprep.subr.mxu0 0.0
    %6209 = vmatpush1.xpose.msra.mxu0 0.0
    %6210 = vmatprep.subr.mxu0 0.0
    %6211 = vmatpush1.xpose.msra.mxu0 0.0
    %6212 = vmatprep.subr.mxu0 0.0
    %6213 = vmatpush1.xpose.msra.mxu0 0.0
    %6214 = vmatprep.subr.mxu0 0.0
    %6215 = vmatpush1.xpose.msra.mxu0 0.0
    %6216 = vmatprep.subr.mxu0 0.0
    %6217 = vmatpush1.xpose.msra.mxu0 0.0
    %6218 = vmatprep.subr.mxu0 0.0
    %6219 = vmatpush1.xpose.msra.mxu0 0.0
    %6220 = vmatprep.subr.mxu0 0.0
    %6221 = vmatpush1.xpose.msra.mxu0 0.0
    %6222 = vmatprep.subr.mxu0 0.0
    %6223 = vmatpush1.xpose.msra.mxu0 0.0
    %6224 = vmatprep.subr.mxu0 0.0
    %6225 = vmatpush1.xpose.msra.mxu0 0.0
    %6226 = vmatprep.subr.mxu0 0.0
    %6227 = vmatpush1.xpose.msra.mxu0 0.0
    %6228 = vmatprep.subr.mxu0 0.0
    %6229 = vmatpush1.xpose.msra.mxu0 0.0
    %6230 = vmatprep.subr.mxu0 0.0
    %6231 = vmatpush1.xpose.msra.mxu0 0.0
    %6232 = vmatprep.subr.mxu0 0.0
    %6233 = vmatpush1.xpose.msra.mxu0 0.0
    %6234 = vmatprep.subr.mxu0 0.0
    %6235 = vmatpush1.xpose.msra.mxu0 %v6204
    %6236 = vmatprep.subr.mxu0 0.0
    %6237 = vmatpush1.xpose.msra.mxu0 %v6202
    %6238 = vmatprep.subr.mxu0 0.0
    %6239 = vmatpush2.xpose.msra.mxu0 0.0
    %6240 = vmatprep.subr.mxu0 0.0
    %6241 = vmatpush2.xpose.msra.mxu0 0.0
    %6242 = vmatprep.subr.mxu0 0.0
    %6243 = vmatpush2.xpose.msra.mxu0 0.0
    %6244 = vmatprep.subr.mxu0 0.0
    %6245 = vmatpush2.xpose.msra.mxu0 0.0
    %6246 = vmatprep.subr.mxu0 0.0
    %6247 = vmatpush2.xpose.msra.mxu0 0.0
    %6248 = vmatprep.subr.mxu0 0.0
    %6249 = vmatpush2.xpose.msra.mxu0 0.0
    %6250 = vmatprep.subr.mxu0 0.0
    %6251 = vmatpush2.xpose.msra.mxu0 0.0
    %6252 = vmatprep.subr.mxu0 0.0
    %6253 = vmatpush2.xpose.msra.mxu0 0.0
    %6254 = vmatprep.subr.mxu0 0.0
    %6255 = vmatpush2.xpose.msra.mxu0 0.0
    %6256 = vmatprep.subr.mxu0 0.0
    %6257 = vmatpush2.xpose.msra.mxu0 0.0
    %6258 = vmatprep.subr.mxu0 0.0
    %6259 = vmatpush2.xpose.msra.mxu0 0.0
    %6260 = vmatprep.subr.mxu0 0.0
    %6261 = vmatpush2.xpose.msra.mxu0 0.0
    %6262 = vmatprep.subr.mxu0 0.0
    %6263 = vmatpush2.xpose.msra.mxu0 0.0
    %6264 = vmatprep.subr.mxu0 0.0
    %6265 = vmatpush2.xpose.msra.mxu0 0.0
    %6266 = vmatprep.subr.mxu0 0.0
    %6267 = vmatpush2.xpose.msra.mxu0 0.0
    %6268 = vmatprep.subr.mxu0 0.0
    %6269 = vmatpush2.xpose.msra.mxu0 0.0
    %6270 = vmatprep.mubr.f32.mxu0 0.0
    %6271 = vmatmul.mubr.f32.gmra.mxu0 %v6198
    %v6272 = vpop.f32.mrf.mxu0
    %v6273 = vadd.f32 %v31, %v6272
    %v6274 = vpop.f32.mrf.mxu0
    %6275 = vmatprep.mubr.f32.mxu0 0.0
    %6276 = vmatmul.mubr.f32.gmra.mxu0 %v6200
    %v6277 = vpop.f32.mrf.mxu0
    %v6278 = vadd.f32 %v32, %v6277
    %v6279 = vpop.f32.mrf.mxu0
    %6280 = vdwg.mxu0
    %v6281 = vsel %vm1342, %v6273, -inf
    %6282 = vmax.xlane.f32.xlu0 %v6281
    %v6283 = vpop.xlane.xlu0 %6282
    %v6284 = vsel %vm1342, %v6278, -inf
    %6285 = vmax.xlane.f32.xlu0 %v6284
    %v6286 = vpop.xlane.xlu0 %6285
    %v6287 = vsub.f32 %v6273, %v6283
    %v6288 = vsub.f32 %v6278, %v6286
    %v6289 = vmul.f32 %v6287, 1.442695
    %v6290 = vpow.pop %v6289
    %v6291 = vmul.f32 %v6288, 1.442695
    %v6292 = vpow.pop %v6291
    %v6293 = vsel %vm1342, %v6290, 0.0
    %6294 = vadd.xlane.f32.xlu0 %v6293
    %v6295 = vpop.xlane.xlu0 %6294
    %v6296 = vsel %vm1342, %v6292, 0.0
    %6297 = vadd.xlane.f32.xlu0 %v6296
    %v6298 = vpop.xlane.xlu0 %6297
    %v6299 = vrcp.pop %v6295
    %v6300 = vmul.f32 %v6290, %v6299
    %v6301 = vrcp.pop %v6298
    %v6302 = vmul.f32 %v6292, %v6301
    %6303 = vrot.lane.b32.xlu0 %v6184, 64
    %v6304 = vpop.permute.xlu0 %6303
    %6305 = vrot.lane.b32.xlu0 %v6189, 64
    %v6306 = vpop.permute.xlu0 %6305
    %v6310 = vsel %vm1342, %v6300, 0
    %v6313 = vsel %vm1342, %v6302, 0
    %6315 = vmatprep.subr.mxu0 0.0
    %6316 = vmatpush1.msra.mxu0 0.0
    %6317 = vmatprep.subr.mxu0 0.0
    %6318 = vmatpush1.msra.mxu0 0.0
    %6319 = vmatprep.subr.mxu0 0.0
    %6320 = vmatpush1.msra.mxu0 0.0
    %6321 = vmatprep.subr.mxu0 0.0
    %6322 = vmatpush1.msra.mxu0 0.0
    %6323 = vmatprep.subr.mxu0 0.0
    %6324 = vmatpush1.msra.mxu0 0.0
    %6325 = vmatprep.subr.mxu0 0.0
    %6326 = vmatpush1.msra.mxu0 0.0
    %6327 = vmatprep.subr.mxu0 0.0
    %6328 = vmatpush1.msra.mxu0 0.0
    %6329 = vmatprep.subr.mxu0 0.0
    %6330 = vmatpush1.msra.mxu0 0.0
    %6331 = vmatprep.subr.mxu0 0.0
    %6332 = vmatpush1.msra.mxu0 0.0
    %6333 = vmatprep.subr.mxu0 0.0
    %6334 = vmatpush1.msra.mxu0 0.0
    %6335 = vmatprep.subr.mxu0 0.0
    %6336 = vmatpush1.msra.mxu0 0.0
    %6337 = vmatprep.subr.mxu0 0.0
    %6338 = vmatpush1.msra.mxu0 0.0
    %6339 = vmatprep.subr.mxu0 0.0
    %6340 = vmatpush1.msra.mxu0 0.0
    %6341 = vmatprep.subr.mxu0 0.0
    %6342 = vmatpush1.msra.mxu0 0.0
    %6343 = vmatprep.subr.mxu0 0.0
    %6344 = vmatpush1.msra.mxu0 %v6306
    %6345 = vmatprep.subr.mxu0 0.0
    %6346 = vmatpush1.msra.mxu0 %v6304
    %6347 = vmatprep.subr.mxu0 0.0
    %6348 = vmatpush2.msra.mxu0 0.0
    %6349 = vmatprep.subr.mxu0 0.0
    %6350 = vmatpush2.msra.mxu0 0.0
    %6351 = vmatprep.subr.mxu0 0.0
    %6352 = vmatpush2.msra.mxu0 0.0
    %6353 = vmatprep.subr.mxu0 0.0
    %6354 = vmatpush2.msra.mxu0 0.0
    %6355 = vmatprep.subr.mxu0 0.0
    %6356 = vmatpush2.msra.mxu0 0.0
    %6357 = vmatprep.subr.mxu0 0.0
    %6358 = vmatpush2.msra.mxu0 0.0
    %6359 = vmatprep.subr.mxu0 0.0
    %6360 = vmatpush2.msra.mxu0 0.0
    %6361 = vmatprep.subr.mxu0 0.0
    %6362 = vmatpush2.msra.mxu0 0.0
    %6363 = vmatprep.subr.mxu0 0.0
    %6364 = vmatpush2.msra.mxu0 0.0
    %6365 = vmatprep.subr.mxu0 0.0
    %6366 = vmatpush2.msra.mxu0 0.0
    %6367 = vmatprep.subr.mxu0 0.0
    %6368 = vmatpush2.msra.mxu0 0.0
    %6369 = vmatprep.subr.mxu0 0.0
    %6370 = vmatpush2.msra.mxu0 0.0
    %6371 = vmatprep.subr.mxu0 0.0
    %6372 = vmatpush2.msra.mxu0 0.0
    %6373 = vmatprep.subr.mxu0 0.0
    %6374 = vmatpush2.msra.mxu0 0.0
    %6375 = vmatprep.subr.mxu0 0.0
    %6376 = vmatpush2.msra.mxu0 0.0
    %6377 = vmatprep.subr.mxu0 0.0
    %6378 = vmatpush2.msra.mxu0 0.0
    %6379 = vmatprep.mubr.f32.mxu0 0.0
    %6380 = vmatmul.mubr.f32.gmra.mxu0 %v6310
    %v6381 = vpop.f32.mrf.mxu0
    %v6382 = vadd.f32 0.0, %v6381
    %v6383 = vpop.f32.mrf.mxu0
    %6384 = vmatprep.mubr.f32.mxu0 0.0
    %6385 = vmatmul.mubr.f32.gmra.mxu0 %v6313
    %v6386 = vpop.f32.mrf.mxu0
    %v6387 = vadd.f32 0.0, %v6386
    %v6388 = vpop.f32.mrf.mxu0
    %6389 = vdwg.mxu0
    %6390 = vrot.lane.b32.xlu0 %v6184, 120
    %v6391 = vpop.permute.xlu0 %6390
    %6392 = vrot.lane.b32.xlu0 %v6189, 120
    %v6393 = vpop.permute.xlu0 %6392
    %6394 = vrot.lane.b32.xlu0 %v6184, 88
    %v6395 = vpop.permute.xlu0 %6394
    %6396 = vrot.lane.b32.xlu0 %v6189, 88
    %v6397 = vpop.permute.xlu0 %6396
    %v6398 = vsel %vm225, %v6391, 0
    %v6400 = vsel %vm225, %v6393, 0
    %v6402 = vsel %vm225, %v6395, 0
    %v6404 = vsel %vm225, %v6397, 0
    %6406 = vmatprep.subr.mxu0 0.0
    %6407 = vmatpush1.xpose.msra.mxu0 0.0
    %6408 = vmatprep.subr.mxu0 0.0
    %6409 = vmatpush1.xpose.msra.mxu0 0.0
    %6410 = vmatprep.subr.mxu0 0.0
    %6411 = vmatpush1.xpose.msra.mxu0 0.0
    %6412 = vmatprep.subr.mxu0 0.0
    %6413 = vmatpush1.xpose.msra.mxu0 0.0
    %6414 = vmatprep.subr.mxu0 0.0
    %6415 = vmatpush1.xpose.msra.mxu0 0.0
    %6416 = vmatprep.subr.mxu0 0.0
    %6417 = vmatpush1.xpose.msra.mxu0 0.0
    %6418 = vmatprep.subr.mxu0 0.0
    %6419 = vmatpush1.xpose.msra.mxu0 0.0
    %6420 = vmatprep.subr.mxu0 0.0
    %6421 = vmatpush1.xpose.msra.mxu0 0.0
    %6422 = vmatprep.subr.mxu0 0.0
    %6423 = vmatpush1.xpose.msra.mxu0 0.0
    %6424 = vmatprep.subr.mxu0 0.0
    %6425 = vmatpush1.xpose.msra.mxu0 0.0
    %6426 = vmatprep.subr.mxu0 0.0
    %6427 = vmatpush1.xpose.msra.mxu0 0.0
    %6428 = vmatprep.subr.mxu0 0.0
    %6429 = vmatpush1.xpose.msra.mxu0 0.0
    %6430 = vmatprep.subr.mxu0 0.0
    %6431 = vmatpush1.xpose.msra.mxu0 0.0
    %6432 = vmatprep.subr.mxu0 0.0
    %6433 = vmatpush1.xpose.msra.mxu0 0.0
    %6434 = vmatprep.subr.mxu0 0.0
    %6435 = vmatpush1.xpose.msra.mxu0 %v6404
    %6436 = vmatprep.subr.mxu0 0.0
    %6437 = vmatpush1.xpose.msra.mxu0 %v6402
    %6438 = vmatprep.subr.mxu0 0.0
    %6439 = vmatpush2.xpose.msra.mxu0 0.0
    %6440 = vmatprep.subr.mxu0 0.0
    %6441 = vmatpush2.xpose.msra.mxu0 0.0
    %6442 = vmatprep.subr.mxu0 0.0
    %6443 = vmatpush2.xpose.msra.mxu0 0.0
    %6444 = vmatprep.subr.mxu0 0.0
    %6445 = vmatpush2.xpose.msra.mxu0 0.0
    %6446 = vmatprep.subr.mxu0 0.0
    %6447 = vmatpush2.xpose.msra.mxu0 0.0
    %6448 = vmatprep.subr.mxu0 0.0
    %6449 = vmatpush2.xpose.msra.mxu0 0.0
    %6450 = vmatprep.subr.mxu0 0.0
    %6451 = vmatpush2.xpose.msra.mxu0 0.0
    %6452 = vmatprep.subr.mxu0 0.0
    %6453 = vmatpush2.xpose.msra.mxu0 0.0
    %6454 = vmatprep.subr.mxu0 0.0
    %6455 = vmatpush2.xpose.msra.mxu0 0.0
    %6456 = vmatprep.subr.mxu0 0.0
    %6457 = vmatpush2.xpose.msra.mxu0 0.0
    %6458 = vmatprep.subr.mxu0 0.0
    %6459 = vmatpush2.xpose.msra.mxu0 0.0
    %6460 = vmatprep.subr.mxu0 0.0
    %6461 = vmatpush2.xpose.msra.mxu0 0.0
    %6462 = vmatprep.subr.mxu0 0.0
    %6463 = vmatpush2.xpose.msra.mxu0 0.0
    %6464 = vmatprep.subr.mxu0 0.0
    %6465 = vmatpush2.xpose.msra.mxu0 0.0
    %6466 = vmatprep.subr.mxu0 0.0
    %6467 = vmatpush2.xpose.msra.mxu0 0.0
    %6468 = vmatprep.subr.mxu0 0.0
    %6469 = vmatpush2.xpose.msra.mxu0 0.0
    %6470 = vmatprep.mubr.f32.mxu0 0.0
    %6471 = vmatmul.mubr.f32.gmra.mxu0 %v6398
    %v6472 = vpop.f32.mrf.mxu0
    %v6473 = vadd.f32 %v31, %v6472
    %v6474 = vpop.f32.mrf.mxu0
    %6475 = vmatprep.mubr.f32.mxu0 0.0
    %6476 = vmatmul.mubr.f32.gmra.mxu0 %v6400
    %v6477 = vpop.f32.mrf.mxu0
    %v6478 = vadd.f32 %v32, %v6477
    %v6479 = vpop.f32.mrf.mxu0
    %6480 = vdwg.mxu0
    %v6481 = vsel %vm1342, %v6473, -inf
    %6482 = vmax.xlane.f32.xlu0 %v6481
    %v6483 = vpop.xlane.xlu0 %6482
    %v6484 = vsel %vm1342, %v6478, -inf
    %6485 = vmax.xlane.f32.xlu0 %v6484
    %v6486 = vpop.xlane.xlu0 %6485
    %v6487 = vsub.f32 %v6473, %v6483
    %v6488 = vsub.f32 %v6478, %v6486
    %v6489 = vmul.f32 %v6487, 1.442695
    %v6490 = vpow.pop %v6489
    %v6491 = vmul.f32 %v6488, 1.442695
    %v6492 = vpow.pop %v6491
    %v6493 = vsel %vm1342, %v6490, 0.0
    %6494 = vadd.xlane.f32.xlu0 %v6493
    %v6495 = vpop.xlane.xlu0 %6494
    %v6496 = vsel %vm1342, %v6492, 0.0
    %6497 = vadd.xlane.f32.xlu0 %v6496
    %v6498 = vpop.xlane.xlu0 %6497
    %v6499 = vrcp.pop %v6495
    %v6500 = vmul.f32 %v6490, %v6499
    %v6501 = vrcp.pop %v6498
    %v6502 = vmul.f32 %v6492, %v6501
    %6503 = vrot.lane.b32.xlu0 %v6184, 56
    %v6504 = vpop.permute.xlu0 %6503
    %6505 = vrot.lane.b32.xlu0 %v6189, 56
    %v6506 = vpop.permute.xlu0 %6505
    %v6510 = vsel %vm1342, %v6500, 0
    %v6513 = vsel %vm1342, %v6502, 0
    %6515 = vmatprep.subr.mxu0 0.0
    %6516 = vmatpush1.msra.mxu0 0.0
    %6517 = vmatprep.subr.mxu0 0.0
    %6518 = vmatpush1.msra.mxu0 0.0
    %6519 = vmatprep.subr.mxu0 0.0
    %6520 = vmatpush1.msra.mxu0 0.0
    %6521 = vmatprep.subr.mxu0 0.0
    %6522 = vmatpush1.msra.mxu0 0.0
    %6523 = vmatprep.subr.mxu0 0.0
    %6524 = vmatpush1.msra.mxu0 0.0
    %6525 = vmatprep.subr.mxu0 0.0
    %6526 = vmatpush1.msra.mxu0 0.0
    %6527 = vmatprep.subr.mxu0 0.0
    %6528 = vmatpush1.msra.mxu0 0.0
    %6529 = vmatprep.subr.mxu0 0.0
    %6530 = vmatpush1.msra.mxu0 0.0
    %6531 = vmatprep.subr.mxu0 0.0
    %6532 = vmatpush1.msra.mxu0 0.0
    %6533 = vmatprep.subr.mxu0 0.0
    %6534 = vmatpush1.msra.mxu0 0.0
    %6535 = vmatprep.subr.mxu0 0.0
    %6536 = vmatpush1.msra.mxu0 0.0
    %6537 = vmatprep.subr.mxu0 0.0
    %6538 = vmatpush1.msra.mxu0 0.0
    %6539 = vmatprep.subr.mxu0 0.0
    %6540 = vmatpush1.msra.mxu0 0.0
    %6541 = vmatprep.subr.mxu0 0.0
    %6542 = vmatpush1.msra.mxu0 0.0
    %6543 = vmatprep.subr.mxu0 0.0
    %6544 = vmatpush1.msra.mxu0 %v6506
    %6545 = vmatprep.subr.mxu0 0.0
    %6546 = vmatpush1.msra.mxu0 %v6504
    %6547 = vmatprep.subr.mxu0 0.0
    %6548 = vmatpush2.msra.mxu0 0.0
    %6549 = vmatprep.subr.mxu0 0.0
    %6550 = vmatpush2.msra.mxu0 0.0
    %6551 = vmatprep.subr.mxu0 0.0
    %6552 = vmatpush2.msra.mxu0 0.0
    %6553 = vmatprep.subr.mxu0 0.0
    %6554 = vmatpush2.msra.mxu0 0.0
    %6555 = vmatprep.subr.mxu0 0.0
    %6556 = vmatpush2.msra.mxu0 0.0
    %6557 = vmatprep.subr.mxu0 0.0
    %6558 = vmatpush2.msra.mxu0 0.0
    %6559 = vmatprep.subr.mxu0 0.0
    %6560 = vmatpush2.msra.mxu0 0.0
    %6561 = vmatprep.subr.mxu0 0.0
    %6562 = vmatpush2.msra.mxu0 0.0
    %6563 = vmatprep.subr.mxu0 0.0
    %6564 = vmatpush2.msra.mxu0 0.0
    %6565 = vmatprep.subr.mxu0 0.0
    %6566 = vmatpush2.msra.mxu0 0.0
    %6567 = vmatprep.subr.mxu0 0.0
    %6568 = vmatpush2.msra.mxu0 0.0
    %6569 = vmatprep.subr.mxu0 0.0
    %6570 = vmatpush2.msra.mxu0 0.0
    %6571 = vmatprep.subr.mxu0 0.0
    %6572 = vmatpush2.msra.mxu0 0.0
    %6573 = vmatprep.subr.mxu0 0.0
    %6574 = vmatpush2.msra.mxu0 0.0
    %6575 = vmatprep.subr.mxu0 0.0
    %6576 = vmatpush2.msra.mxu0 0.0
    %6577 = vmatprep.subr.mxu0 0.0
    %6578 = vmatpush2.msra.mxu0 0.0
    %6579 = vmatprep.mubr.f32.mxu0 0.0
    %6580 = vmatmul.mubr.f32.gmra.mxu0 %v6510
    %v6581 = vpop.f32.mrf.mxu0
    %v6582 = vadd.f32 0.0, %v6581
    %v6583 = vpop.f32.mrf.mxu0
    %6584 = vmatprep.mubr.f32.mxu0 0.0
    %6585 = vmatmul.mubr.f32.gmra.mxu0 %v6513
    %v6586 = vpop.f32.mrf.mxu0
    %v6587 = vadd.f32 0.0, %v6586
    %v6588 = vpop.f32.mrf.mxu0
    %6589 = vdwg.mxu0
    %6590 = vrot.lane.b32.xlu0 %v6184, 112
    %v6591 = vpop.permute.xlu0 %6590
    %6592 = vrot.lane.b32.xlu0 %v6189, 112
    %v6593 = vpop.permute.xlu0 %6592
    %6594 = vrot.lane.b32.xlu0 %v6184, 80
    %v6595 = vpop.permute.xlu0 %6594
    %6596 = vrot.lane.b32.xlu0 %v6189, 80
    %v6597 = vpop.permute.xlu0 %6596
    %v6598 = vsel %vm225, %v6591, 0
    %v6600 = vsel %vm225, %v6593, 0
    %v6602 = vsel %vm225, %v6595, 0
    %v6604 = vsel %vm225, %v6597, 0
    %6606 = vmatprep.subr.mxu0 0.0
    %6607 = vmatpush1.xpose.msra.mxu0 0.0
    %6608 = vmatprep.subr.mxu0 0.0
    %6609 = vmatpush1.xpose.msra.mxu0 0.0
    %6610 = vmatprep.subr.mxu0 0.0
    %6611 = vmatpush1.xpose.msra.mxu0 0.0
    %6612 = vmatprep.subr.mxu0 0.0
    %6613 = vmatpush1.xpose.msra.mxu0 0.0
    %6614 = vmatprep.subr.mxu0 0.0
    %6615 = vmatpush1.xpose.msra.mxu0 0.0
    %6616 = vmatprep.subr.mxu0 0.0
    %6617 = vmatpush1.xpose.msra.mxu0 0.0
    %6618 = vmatprep.subr.mxu0 0.0
    %6619 = vmatpush1.xpose.msra.mxu0 0.0
    %6620 = vmatprep.subr.mxu0 0.0
    %6621 = vmatpush1.xpose.msra.mxu0 0.0
    %6622 = vmatprep.subr.mxu0 0.0
    %6623 = vmatpush1.xpose.msra.mxu0 0.0
    %6624 = vmatprep.subr.mxu0 0.0
    %6625 = vmatpush1.xpose.msra.mxu0 0.0
    %6626 = vmatprep.subr.mxu0 0.0
    %6627 = vmatpush1.xpose.msra.mxu0 0.0
    %6628 = vmatprep.subr.mxu0 0.0
    %6629 = vmatpush1.xpose.msra.mxu0 0.0
    %6630 = vmatprep.subr.mxu0 0.0
    %6631 = vmatpush1.xpose.msra.mxu0 0.0
    %6632 = vmatprep.subr.mxu0 0.0
    %6633 = vmatpush1.xpose.msra.mxu0 0.0
    %6634 = vmatprep.subr.mxu0 0.0
    %6635 = vmatpush1.xpose.msra.mxu0 %v6604
    %6636 = vmatprep.subr.mxu0 0.0
    %6637 = vmatpush1.xpose.msra.mxu0 %v6602
    %6638 = vmatprep.subr.mxu0 0.0
    %6639 = vmatpush2.xpose.msra.mxu0 0.0
    %6640 = vmatprep.subr.mxu0 0.0
    %6641 = vmatpush2.xpose.msra.mxu0 0.0
    %6642 = vmatprep.subr.mxu0 0.0
    %6643 = vmatpush2.xpose.msra.mxu0 0.0
    %6644 = vmatprep.subr.mxu0 0.0
    %6645 = vmatpush2.xpose.msra.mxu0 0.0
    %6646 = vmatprep.subr.mxu0 0.0
    %6647 = vmatpush2.xpose.msra.mxu0 0.0
    %6648 = vmatprep.subr.mxu0 0.0
    %6649 = vmatpush2.xpose.msra.mxu0 0.0
    %6650 = vmatprep.subr.mxu0 0.0
    %6651 = vmatpush2.xpose.msra.mxu0 0.0
    %6652 = vmatprep.subr.mxu0 0.0
    %6653 = vmatpush2.xpose.msra.mxu0 0.0
    %6654 = vmatprep.subr.mxu0 0.0
    %6655 = vmatpush2.xpose.msra.mxu0 0.0
    %6656 = vmatprep.subr.mxu0 0.0
    %6657 = vmatpush2.xpose.msra.mxu0 0.0
    %6658 = vmatprep.subr.mxu0 0.0
    %6659 = vmatpush2.xpose.msra.mxu0 0.0
    %6660 = vmatprep.subr.mxu0 0.0
    %6661 = vmatpush2.xpose.msra.mxu0 0.0
    %6662 = vmatprep.subr.mxu0 0.0
    %6663 = vmatpush2.xpose.msra.mxu0 0.0
    %6664 = vmatprep.subr.mxu0 0.0
    %6665 = vmatpush2.xpose.msra.mxu0 0.0
    %6666 = vmatprep.subr.mxu0 0.0
    %6667 = vmatpush2.xpose.msra.mxu0 0.0
    %6668 = vmatprep.subr.mxu0 0.0
    %6669 = vmatpush2.xpose.msra.mxu0 0.0
    %6670 = vmatprep.mubr.f32.mxu0 0.0
    %6671 = vmatmul.mubr.f32.gmra.mxu0 %v6598
    %v6672 = vpop.f32.mrf.mxu0
    %v6673 = vadd.f32 %v31, %v6672
    %v6674 = vpop.f32.mrf.mxu0
    %6675 = vmatprep.mubr.f32.mxu0 0.0
    %6676 = vmatmul.mubr.f32.gmra.mxu0 %v6600
    %v6677 = vpop.f32.mrf.mxu0
    %v6678 = vadd.f32 %v32, %v6677
    %v6679 = vpop.f32.mrf.mxu0
    %6680 = vdwg.mxu0
    %v6681 = vsel %vm1342, %v6673, -inf
    %6682 = vmax.xlane.f32.xlu0 %v6681
    %v6683 = vpop.xlane.xlu0 %6682
    %v6684 = vsel %vm1342, %v6678, -inf
    %6685 = vmax.xlane.f32.xlu0 %v6684
    %v6686 = vpop.xlane.xlu0 %6685
    %v6687 = vsub.f32 %v6673, %v6683
    %v6688 = vsub.f32 %v6678, %v6686
    %v6689 = vmul.f32 %v6687, 1.442695
    %v6690 = vpow.pop %v6689
    %v6691 = vmul.f32 %v6688, 1.442695
    %v6692 = vpow.pop %v6691
    %v6693 = vsel %vm1342, %v6690, 0.0
    %6694 = vadd.xlane.f32.xlu0 %v6693
    %v6695 = vpop.xlane.xlu0 %6694
    %v6696 = vsel %vm1342, %v6692, 0.0
    %6697 = vadd.xlane.f32.xlu0 %v6696
    %v6698 = vpop.xlane.xlu0 %6697
    %v6699 = vrcp.pop %v6695
    %v6700 = vmul.f32 %v6690, %v6699
    %v6701 = vrcp.pop %v6698
    %v6702 = vmul.f32 %v6692, %v6701
    %6703 = vrot.lane.b32.xlu0 %v6184, 48
    %v6704 = vpop.permute.xlu0 %6703
    %6705 = vrot.lane.b32.xlu0 %v6189, 48
    %v6706 = vpop.permute.xlu0 %6705
    %v6710 = vsel %vm1342, %v6700, 0
    %v6713 = vsel %vm1342, %v6702, 0
    %6715 = vmatprep.subr.mxu0 0.0
    %6716 = vmatpush1.msra.mxu0 0.0
    %6717 = vmatprep.subr.mxu0 0.0
    %6718 = vmatpush1.msra.mxu0 0.0
    %6719 = vmatprep.subr.mxu0 0.0
    %6720 = vmatpush1.msra.mxu0 0.0
    %6721 = vmatprep.subr.mxu0 0.0
    %6722 = vmatpush1.msra.mxu0 0.0
    %6723 = vmatprep.subr.mxu0 0.0
    %6724 = vmatpush1.msra.mxu0 0.0
    %6725 = vmatprep.subr.mxu0 0.0
    %6726 = vmatpush1.msra.mxu0 0.0
    %6727 = vmatprep.subr.mxu0 0.0
    %6728 = vmatpush1.msra.mxu0 0.0
    %6729 = vmatprep.subr.mxu0 0.0
    %6730 = vmatpush1.msra.mxu0 0.0
    %6731 = vmatprep.subr.mxu0 0.0
    %6732 = vmatpush1.msra.mxu0 0.0
    %6733 = vmatprep.subr.mxu0 0.0
    %6734 = vmatpush1.msra.mxu0 0.0
    %6735 = vmatprep.subr.mxu0 0.0
    %6736 = vmatpush1.msra.mxu0 0.0
    %6737 = vmatprep.subr.mxu0 0.0
    %6738 = vmatpush1.msra.mxu0 0.0
    %6739 = vmatprep.subr.mxu0 0.0
    %6740 = vmatpush1.msra.mxu0 0.0
    %6741 = vmatprep.subr.mxu0 0.0
    %6742 = vmatpush1.msra.mxu0 0.0
    %6743 = vmatprep.subr.mxu0 0.0
    %6744 = vmatpush1.msra.mxu0 %v6706
    %6745 = vmatprep.subr.mxu0 0.0
    %6746 = vmatpush1.msra.mxu0 %v6704
    %6747 = vmatprep.subr.mxu0 0.0
    %6748 = vmatpush2.msra.mxu0 0.0
    %6749 = vmatprep.subr.mxu0 0.0
    %6750 = vmatpush2.msra.mxu0 0.0
    %6751 = vmatprep.subr.mxu0 0.0
    %6752 = vmatpush2.msra.mxu0 0.0
    %6753 = vmatprep.subr.mxu0 0.0
    %6754 = vmatpush2.msra.mxu0 0.0
    %6755 = vmatprep.subr.mxu0 0.0
    %6756 = vmatpush2.msra.mxu0 0.0
    %6757 = vmatprep.subr.mxu0 0.0
    %6758 = vmatpush2.msra.mxu0 0.0
    %6759 = vmatprep.subr.mxu0 0.0
    %6760 = vmatpush2.msra.mxu0 0.0
    %6761 = vmatprep.subr.mxu0 0.0
    %6762 = vmatpush2.msra.mxu0 0.0
    %6763 = vmatprep.subr.mxu0 0.0
    %6764 = vmatpush2.msra.mxu0 0.0
    %6765 = vmatprep.subr.mxu0 0.0
    %6766 = vmatpush2.msra.mxu0 0.0
    %6767 = vmatprep.subr.mxu0 0.0
    %6768 = vmatpush2.msra.mxu0 0.0
    %6769 = vmatprep.subr.mxu0 0.0
    %6770 = vmatpush2.msra.mxu0 0.0
    %6771 = vmatprep.subr.mxu0 0.0
    %6772 = vmatpush2.msra.mxu0 0.0
    %6773 = vmatprep.subr.mxu0 0.0
    %6774 = vmatpush2.msra.mxu0 0.0
    %6775 = vmatprep.subr.mxu0 0.0
    %6776 = vmatpush2.msra.mxu0 0.0
    %6777 = vmatprep.subr.mxu0 0.0
    %6778 = vmatpush2.msra.mxu0 0.0
    %6779 = vmatprep.mubr.f32.mxu0 0.0
    %6780 = vmatmul.mubr.f32.gmra.mxu0 %v6710
    %v6781 = vpop.f32.mrf.mxu0
    %v6782 = vadd.f32 0.0, %v6781
    %v6783 = vpop.f32.mrf.mxu0
    %6784 = vmatprep.mubr.f32.mxu0 0.0
    %6785 = vmatmul.mubr.f32.gmra.mxu0 %v6713
    %v6786 = vpop.f32.mrf.mxu0
    %v6787 = vadd.f32 0.0, %v6786
    %v6788 = vpop.f32.mrf.mxu0
    %6789 = vdwg.mxu0
    %6790 = vrot.lane.b32.xlu0 %v6184, 104
    %v6791 = vpop.permute.xlu0 %6790
    %6792 = vrot.lane.b32.xlu0 %v6189, 104
    %v6793 = vpop.permute.xlu0 %6792
    %6794 = vrot.lane.b32.xlu0 %v6184, 72
    %v6795 = vpop.permute.xlu0 %6794
    %6796 = vrot.lane.b32.xlu0 %v6189, 72
    %v6797 = vpop.permute.xlu0 %6796
    %v6798 = vsel %vm225, %v6791, 0
    %v6800 = vsel %vm225, %v6793, 0
    %v6802 = vsel %vm225, %v6795, 0
    %v6804 = vsel %vm225, %v6797, 0
    %6806 = vmatprep.subr.mxu0 0.0
    %6807 = vmatpush1.xpose.msra.mxu0 0.0
    %6808 = vmatprep.subr.mxu0 0.0
    %6809 = vmatpush1.xpose.msra.mxu0 0.0
    %6810 = vmatprep.subr.mxu0 0.0
    %6811 = vmatpush1.xpose.msra.mxu0 0.0
    %6812 = vmatprep.subr.mxu0 0.0
    %6813 = vmatpush1.xpose.msra.mxu0 0.0
    %6814 = vmatprep.subr.mxu0 0.0
    %6815 = vmatpush1.xpose.msra.mxu0 0.0
    %6816 = vmatprep.subr.mxu0 0.0
    %6817 = vmatpush1.xpose.msra.mxu0 0.0
    %6818 = vmatprep.subr.mxu0 0.0
    %6819 = vmatpush1.xpose.msra.mxu0 0.0
    %6820 = vmatprep.subr.mxu0 0.0
    %6821 = vmatpush1.xpose.msra.mxu0 0.0
    %6822 = vmatprep.subr.mxu0 0.0
    %6823 = vmatpush1.xpose.msra.mxu0 0.0
    %6824 = vmatprep.subr.mxu0 0.0
    %6825 = vmatpush1.xpose.msra.mxu0 0.0
    %6826 = vmatprep.subr.mxu0 0.0
    %6827 = vmatpush1.xpose.msra.mxu0 0.0
    %6828 = vmatprep.subr.mxu0 0.0
    %6829 = vmatpush1.xpose.msra.mxu0 0.0
    %6830 = vmatprep.subr.mxu0 0.0
    %6831 = vmatpush1.xpose.msra.mxu0 0.0
    %6832 = vmatprep.subr.mxu0 0.0
    %6833 = vmatpush1.xpose.msra.mxu0 0.0
    %6834 = vmatprep.subr.mxu0 0.0
    %6835 = vmatpush1.xpose.msra.mxu0 %v6804
    %6836 = vmatprep.subr.mxu0 0.0
    %6837 = vmatpush1.xpose.msra.mxu0 %v6802
    %6838 = vmatprep.subr.mxu0 0.0
    %6839 = vmatpush2.xpose.msra.mxu0 0.0
    %6840 = vmatprep.subr.mxu0 0.0
    %6841 = vmatpush2.xpose.msra.mxu0 0.0
    %6842 = vmatprep.subr.mxu0 0.0
    %6843 = vmatpush2.xpose.msra.mxu0 0.0
    %6844 = vmatprep.subr.mxu0 0.0
    %6845 = vmatpush2.xpose.msra.mxu0 0.0
    %6846 = vmatprep.subr.mxu0 0.0
    %6847 = vmatpush2.xpose.msra.mxu0 0.0
    %6848 = vmatprep.subr.mxu0 0.0
    %6849 = vmatpush2.xpose.msra.mxu0 0.0
    %6850 = vmatprep.subr.mxu0 0.0
    %6851 = vmatpush2.xpose.msra.mxu0 0.0
    %6852 = vmatprep.subr.mxu0 0.0
    %6853 = vmatpush2.xpose.msra.mxu0 0.0
    %6854 = vmatprep.subr.mxu0 0.0
    %6855 = vmatpush2.xpose.msra.mxu0 0.0
    %6856 = vmatprep.subr.mxu0 0.0
    %6857 = vmatpush2.xpose.msra.mxu0 0.0
    %6858 = vmatprep.subr.mxu0 0.0
    %6859 = vmatpush2.xpose.msra.mxu0 0.0
    %6860 = vmatprep.subr.mxu0 0.0
    %6861 = vmatpush2.xpose.msra.mxu0 0.0
    %6862 = vmatprep.subr.mxu0 0.0
    %6863 = vmatpush2.xpose.msra.mxu0 0.0
    %6864 = vmatprep.subr.mxu0 0.0
    %6865 = vmatpush2.xpose.msra.mxu0 0.0
    %6866 = vmatprep.subr.mxu0 0.0
    %6867 = vmatpush2.xpose.msra.mxu0 0.0
    %6868 = vmatprep.subr.mxu0 0.0
    %6869 = vmatpush2.xpose.msra.mxu0 0.0
    %6870 = vmatprep.mubr.f32.mxu0 0.0
    %6871 = vmatmul.mubr.f32.gmra.mxu0 %v6798
    %v6872 = vpop.f32.mrf.mxu0
    %v6873 = vadd.f32 %v31, %v6872
    %v6874 = vpop.f32.mrf.mxu0
    %6875 = vmatprep.mubr.f32.mxu0 0.0
    %6876 = vmatmul.mubr.f32.gmra.mxu0 %v6800
    %v6877 = vpop.f32.mrf.mxu0
    %v6878 = vadd.f32 %v32, %v6877
    %v6879 = vpop.f32.mrf.mxu0
    %6880 = vdwg.mxu0
    %v6881 = vsel %vm1342, %v6873, -inf
    %6882 = vmax.xlane.f32.xlu0 %v6881
    %v6883 = vpop.xlane.xlu0 %6882
    %v6884 = vsel %vm1342, %v6878, -inf
    %6885 = vmax.xlane.f32.xlu0 %v6884
    %v6886 = vpop.xlane.xlu0 %6885
    %v6887 = vsub.f32 %v6873, %v6883
    %v6888 = vsub.f32 %v6878, %v6886
    %v6889 = vmul.f32 %v6887, 1.442695
    %v6890 = vpow.pop %v6889
    %v6891 = vmul.f32 %v6888, 1.442695
    %v6892 = vpow.pop %v6891
    %v6893 = vsel %vm1342, %v6890, 0.0
    %6894 = vadd.xlane.f32.xlu0 %v6893
    %v6895 = vpop.xlane.xlu0 %6894
    %v6896 = vsel %vm1342, %v6892, 0.0
    %6897 = vadd.xlane.f32.xlu0 %v6896
    %v6898 = vpop.xlane.xlu0 %6897
    %v6899 = vrcp.pop %v6895
    %v6900 = vmul.f32 %v6890, %v6899
    %v6901 = vrcp.pop %v6898
    %v6902 = vmul.f32 %v6892, %v6901
    %6903 = vrot.lane.b32.xlu0 %v6184, 40
    %v6904 = vpop.permute.xlu0 %6903
    %6905 = vrot.lane.b32.xlu0 %v6189, 40
    %v6906 = vpop.permute.xlu0 %6905
    %v6910 = vsel %vm1342, %v6900, 0
    %v6913 = vsel %vm1342, %v6902, 0
    %6915 = vmatprep.subr.mxu0 0.0
    %6916 = vmatpush1.msra.mxu0 0.0
    %6917 = vmatprep.subr.mxu0 0.0
    %6918 = vmatpush1.msra.mxu0 0.0
    %6919 = vmatprep.subr.mxu0 0.0
    %6920 = vmatpush1.msra.mxu0 0.0
    %6921 = vmatprep.subr.mxu0 0.0
    %6922 = vmatpush1.msra.mxu0 0.0
    %6923 = vmatprep.subr.mxu0 0.0
    %6924 = vmatpush1.msra.mxu0 0.0
    %6925 = vmatprep.subr.mxu0 0.0
    %6926 = vmatpush1.msra.mxu0 0.0
    %6927 = vmatprep.subr.mxu0 0.0
    %6928 = vmatpush1.msra.mxu0 0.0
    %6929 = vmatprep.subr.mxu0 0.0
    %6930 = vmatpush1.msra.mxu0 0.0
    %6931 = vmatprep.subr.mxu0 0.0
    %6932 = vmatpush1.msra.mxu0 0.0
    %6933 = vmatprep.subr.mxu0 0.0
    %6934 = vmatpush1.msra.mxu0 0.0
    %6935 = vmatprep.subr.mxu0 0.0
    %6936 = vmatpush1.msra.mxu0 0.0
    %6937 = vmatprep.subr.mxu0 0.0
    %6938 = vmatpush1.msra.mxu0 0.0
    %6939 = vmatprep.subr.mxu0 0.0
    %6940 = vmatpush1.msra.mxu0 0.0
    %6941 = vmatprep.subr.mxu0 0.0
    %6942 = vmatpush1.msra.mxu0 0.0
    %6943 = vmatprep.subr.mxu0 0.0
    %6944 = vmatpush1.msra.mxu0 %v6906
    %6945 = vmatprep.subr.mxu0 0.0
    %6946 = vmatpush1.msra.mxu0 %v6904
    %6947 = vmatprep.subr.mxu0 0.0
    %6948 = vmatpush2.msra.mxu0 0.0
    %6949 = vmatprep.subr.mxu0 0.0
    %6950 = vmatpush2.msra.mxu0 0.0
    %6951 = vmatprep.subr.mxu0 0.0
    %6952 = vmatpush2.msra.mxu0 0.0
    %6953 = vmatprep.subr.mxu0 0.0
    %6954 = vmatpush2.msra.mxu0 0.0
    %6955 = vmatprep.subr.mxu0 0.0
    %6956 = vmatpush2.msra.mxu0 0.0
    %6957 = vmatprep.subr.mxu0 0.0
    %6958 = vmatpush2.msra.mxu0 0.0
    %6959 = vmatprep.subr.mxu0 0.0
    %6960 = vmatpush2.msra.mxu0 0.0
    %6961 = vmatprep.subr.mxu0 0.0
    %6962 = vmatpush2.msra.mxu0 0.0
    %6963 = vmatprep.subr.mxu0 0.0
    %6964 = vmatpush2.msra.mxu0 0.0
    %6965 = vmatprep.subr.mxu0 0.0
    %6966 = vmatpush2.msra.mxu0 0.0
    %6967 = vmatprep.subr.mxu0 0.0
    %6968 = vmatpush2.msra.mxu0 0.0
    %6969 = vmatprep.subr.mxu0 0.0
    %6970 = vmatpush2.msra.mxu0 0.0
    %6971 = vmatprep.subr.mxu0 0.0
    %6972 = vmatpush2.msra.mxu0 0.0
    %6973 = vmatprep.subr.mxu0 0.0
    %6974 = vmatpush2.msra.mxu0 0.0
    %6975 = vmatprep.subr.mxu0 0.0
    %6976 = vmatpush2.msra.mxu0 0.0
    %6977 = vmatprep.subr.mxu0 0.0
    %6978 = vmatpush2.msra.mxu0 0.0
    %6979 = vmatprep.mubr.f32.mxu0 0.0
    %6980 = vmatmul.mubr.f32.gmra.mxu0 %v6910
    %v6981 = vpop.f32.mrf.mxu0
    %v6982 = vadd.f32 0.0, %v6981
    %v6983 = vpop.f32.mrf.mxu0
    %6984 = vmatprep.mubr.f32.mxu0 0.0
    %6985 = vmatmul.mubr.f32.gmra.mxu0 %v6913
    %v6986 = vpop.f32.mrf.mxu0
    %v6987 = vadd.f32 0.0, %v6986
    %v6988 = vpop.f32.mrf.mxu0
    %6989 = vdwg.mxu0
    %6992 = vrot.lane.b32.xlu0 %v6582, 8
    %v6993 = vpop.permute.xlu0 %6992
    %6994 = vrot.lane.b32.xlu0 %v6587, 8
    %v6995 = vpop.permute.xlu0 %6994
    %7000 = vrot.lane.b32.xlu0 %v6782, 16
    %v7001 = vpop.permute.xlu0 %7000
    %7002 = vrot.lane.b32.xlu0 %v6787, 16
    %v7003 = vpop.permute.xlu0 %7002
    %7008 = vrot.lane.b32.xlu0 %v6982, 24
    %v7009 = vpop.permute.xlu0 %7008
    %7010 = vrot.lane.b32.xlu0 %v6987, 24
    %v7011 = vpop.permute.xlu0 %7010
    %v7014 = vsel %vm225, %v6382, %v6993
    %v7015 = vsel %vm225, %v6387, %v6995
    %v7016 = vsel %vm1342, %v7014, %v7001
    %v7017 = vsel %vm1342, %v7015, %v7003
    %v7018 = vsel %vm1347, %v7016, %v7009
    %v7019 = vsel %vm1347, %v7017, %v7011
    %7024 = vrot.lane.b32.xlu0 %v6069, 32
    %v7025 = vpop.permute.xlu0 %7024
    %7026 = vrot.lane.b32.xlu0 %v6070, 32
    %v7027 = vpop.permute.xlu0 %7026
    %7028 = vrot.lane.b32.xlu0 %v6071, 32
    %v7029 = vpop.permute.xlu0 %7028
    %7030 = vrot.lane.b32.xlu0 %v6072, 32
    %v7031 = vpop.permute.xlu0 %7030
    %v7037 = vsel %vm46, %v7018, 0
    %v7040 = vsel %vm46, %v7019, 0
    %7042 = vmatprep.subr.mxu0 0.0
    %7043 = vmatpush1.msra.mxu0 0.0
    %7044 = vmatprep.subr.mxu0 0.0
    %7045 = vmatpush1.msra.mxu0 0.0
    %7046 = vmatprep.subr.mxu0 0.0
    %7047 = vmatpush1.msra.mxu0 0.0
    %7048 = vmatprep.subr.mxu0 0.0
    %7049 = vmatpush1.msra.mxu0 0.0
    %7050 = vmatprep.subr.mxu0 0.0
    %7051 = vmatpush1.msra.mxu0 0.0
    %7052 = vmatprep.subr.mxu0 0.0
    %7053 = vmatpush1.msra.mxu0 0.0
    %7054 = vmatprep.subr.mxu0 0.0
    %7055 = vmatpush1.msra.mxu0 0.0
    %7056 = vmatprep.subr.mxu0 0.0
    %7057 = vmatpush1.msra.mxu0 0.0
    %7058 = vmatprep.subr.mxu0 0.0
    %7059 = vmatpush1.msra.mxu0 0.0
    %7060 = vmatprep.subr.mxu0 0.0
    %7061 = vmatpush1.msra.mxu0 0.0
    %7062 = vmatprep.subr.mxu0 0.0
    %7063 = vmatpush1.msra.mxu0 0.0
    %7064 = vmatprep.subr.mxu0 0.0
    %7065 = vmatpush1.msra.mxu0 0.0
    %7066 = vmatprep.subr.mxu0 0.0
    %7067 = vmatpush1.msra.mxu0 %v7031
    %7068 = vmatprep.subr.mxu0 0.0
    %7069 = vmatpush1.msra.mxu0 %v7029
    %7070 = vmatprep.subr.mxu0 0.0
    %7071 = vmatpush1.msra.mxu0 %v7027
    %7072 = vmatprep.subr.mxu0 0.0
    %7073 = vmatpush1.msra.mxu0 %v7025
    %7074 = vmatprep.subr.mxu0 0.0
    %7075 = vmatpush2.msra.mxu0 0.0
    %7076 = vmatprep.subr.mxu0 0.0
    %7077 = vmatpush2.msra.mxu0 0.0
    %7078 = vmatprep.subr.mxu0 0.0
    %7079 = vmatpush2.msra.mxu0 0.0
    %7080 = vmatprep.subr.mxu0 0.0
    %7081 = vmatpush2.msra.mxu0 0.0
    %7082 = vmatprep.subr.mxu0 0.0
    %7083 = vmatpush2.msra.mxu0 0.0
    %7084 = vmatprep.subr.mxu0 0.0
    %7085 = vmatpush2.msra.mxu0 0.0
    %7086 = vmatprep.subr.mxu0 0.0
    %7087 = vmatpush2.msra.mxu0 0.0
    %7088 = vmatprep.subr.mxu0 0.0
    %7089 = vmatpush2.msra.mxu0 0.0
    %7090 = vmatprep.subr.mxu0 0.0
    %7091 = vmatpush2.msra.mxu0 0.0
    %7092 = vmatprep.subr.mxu0 0.0
    %7093 = vmatpush2.msra.mxu0 0.0
    %7094 = vmatprep.subr.mxu0 0.0
    %7095 = vmatpush2.msra.mxu0 0.0
    %7096 = vmatprep.subr.mxu0 0.0
    %7097 = vmatpush2.msra.mxu0 0.0
    %7098 = vmatprep.subr.mxu0 0.0
    %7099 = vmatpush2.msra.mxu0 0.0
    %7100 = vmatprep.subr.mxu0 0.0
    %7101 = vmatpush2.msra.mxu0 0.0
    %7102 = vmatprep.subr.mxu0 0.0
    %7103 = vmatpush2.msra.mxu0 0.0
    %7104 = vmatprep.subr.mxu0 0.0
    %7105 = vmatpush2.msra.mxu0 0.0
    %7106 = vmatprep.mubr.f32.mxu0 0.0
    %7107 = vmatmul.mubr.f32.gmra.mxu0 %v7037
    %v7108 = vpop.f32.mrf.mxu0
    %v7109 = vadd.f32 0.0, %v7108
    %v7110 = vpop.f32.mrf.mxu0
    %7111 = vmatprep.mubr.f32.mxu0 0.0
    %7112 = vmatmul.mubr.f32.gmra.mxu0 %v7040
    %v7113 = vpop.f32.mrf.mxu0
    %v7114 = vadd.f32 0.0, %v7113
    %v7115 = vpop.f32.mrf.mxu0
    %7116 = vdwg.mxu0
    %v7117 = vadd.f32 %v6063, %v7109
    %v7118 = vadd.f32 %v6064, %v7114
    %v7119 = vlaneseq
    %v7120 = vshrl.u32 %v7119, 7
    %v7121 = vsub.s32 0, %v7120
    %v7122 = vrot.slane %v6067, %v7121
    %v7123 = vadd.f32 %v7117, %v7122
    %v7124 = vadd.f32 %v7118, %v7122
    %v7125 = vld [vmem:[%s5 + $0xf] sm:$0x1]
    %v7126 = vld [vmem:[%s5 + $0x10] sm:$0x1]
    %v7127 = vld [vmem:[%s5 + $0x11] sm:$0x1]
    %s7128 = scalar_lea.vmem %s2, 160
    %v7129 = vld [vmem:[%s7128] sm:$0xff]
    %v7130 = vld [vmem:[%s7128 + $0x8] sm:$0xff]
    %v7131 = vld [vmem:[%s7128 + $0x10] sm:$0xff]
    %v7132 = vld [vmem:[%s7128 + $0x18] sm:$0xff]
    %v7133 = vsel %vm46, %v7123, 0.0
    %7134 = vadd.xlane.f32.xlu0 %v7133
    %v7135 = vpop.xlane.xlu0 %7134
    %v7136 = vsel %vm46, %v7124, 0.0
    %7137 = vadd.xlane.f32.xlu0 %v7136
    %v7138 = vpop.xlane.xlu0 %7137
    %v7139 = vmul.f32 %v7135, %v59
    %v7140 = vmul.f32 %v7138, %v59
    %v7141 = vsub.f32 %v7123, %v7139
    %v7142 = vsub.f32 %v7124, %v7140
    %v7143 = vmul.f32 %v7141, %v7141
    %v7144 = vmul.f32 %v7142, %v7142
    %v7145 = vsel %vm46, %v7143, 0.0
    %7146 = vadd.xlane.f32.xlu0 %v7145
    %v7147 = vpop.xlane.xlu0 %7146
    %v7148 = vsel %vm46, %v7144, 0.0
    %7149 = vadd.xlane.f32.xlu0 %v7148
    %v7150 = vpop.xlane.xlu0 %7149
    %v7151 = vmul.f32 %v7147, %v59
    %v7152 = vmul.f32 %v7150, %v59
    %v7153 = vadd.f32 %v7151, 1e-05
    %v7154 = vadd.f32 %v7152, 1e-05
    %v7155 = vrsqrt.pop %v7153
    %v7156 = vrsqrt.pop %v7154
    %v7157 = vmul.f32 %v7141, %v7155
    %v7158 = vmul.f32 %v7142, %v7156
    %v7159 = vlaneseq
    %v7160 = vshrl.u32 %v7159, 7
    %v7161 = vsub.s32 0, %v7160
    %v7162 = vrot.slane %v7125, %v7161
    %v7163 = vmul.f32 %v7157, %v7162
    %v7164 = vmul.f32 %v7158, %v7162
    %v7165 = vlaneseq
    %v7166 = vshrl.u32 %v7165, 7
    %v7167 = vsub.s32 0, %v7166
    %v7168 = vrot.slane %v7126, %v7167
    %v7169 = vadd.f32 %v7163, %v7168
    %v7170 = vadd.f32 %v7164, %v7168
    %v7172 = vsel %vm46, %v7169, 0
    %v7175 = vsel %vm46, %v7170, 0
    %7177 = vmatprep.subr.mxu0 0.0
    %7178 = vmatpush1.msra.mxu0 0.0
    %7179 = vmatprep.subr.mxu0 0.0
    %7180 = vmatpush1.msra.mxu0 0.0
    %7181 = vmatprep.subr.mxu0 0.0
    %7182 = vmatpush1.msra.mxu0 0.0
    %7183 = vmatprep.subr.mxu0 0.0
    %7184 = vmatpush1.msra.mxu0 0.0
    %7185 = vmatprep.subr.mxu0 0.0
    %7186 = vmatpush1.msra.mxu0 0.0
    %7187 = vmatprep.subr.mxu0 0.0
    %7188 = vmatpush1.msra.mxu0 0.0
    %7189 = vmatprep.subr.mxu0 0.0
    %7190 = vmatpush1.msra.mxu0 0.0
    %7191 = vmatprep.subr.mxu0 0.0
    %7192 = vmatpush1.msra.mxu0 0.0
    %7193 = vmatprep.subr.mxu0 0.0
    %7194 = vmatpush1.msra.mxu0 0.0
    %7195 = vmatprep.subr.mxu0 0.0
    %7196 = vmatpush1.msra.mxu0 0.0
    %7197 = vmatprep.subr.mxu0 0.0
    %7198 = vmatpush1.msra.mxu0 0.0
    %7199 = vmatprep.subr.mxu0 0.0
    %7200 = vmatpush1.msra.mxu0 0.0
    %7201 = vmatprep.subr.mxu0 0.0
    %7202 = vmatpush1.msra.mxu0 %v7132
    %7203 = vmatprep.subr.mxu0 0.0
    %7204 = vmatpush1.msra.mxu0 %v7131
    %7205 = vmatprep.subr.mxu0 0.0
    %7206 = vmatpush1.msra.mxu0 %v7130
    %7207 = vmatprep.subr.mxu0 0.0
    %7208 = vmatpush1.msra.mxu0 %v7129
    %7209 = vmatprep.subr.mxu0 0.0
    %7210 = vmatpush2.msra.mxu0 0.0
    %7211 = vmatprep.subr.mxu0 0.0
    %7212 = vmatpush2.msra.mxu0 0.0
    %7213 = vmatprep.subr.mxu0 0.0
    %7214 = vmatpush2.msra.mxu0 0.0
    %7215 = vmatprep.subr.mxu0 0.0
    %7216 = vmatpush2.msra.mxu0 0.0
    %7217 = vmatprep.subr.mxu0 0.0
    %7218 = vmatpush2.msra.mxu0 0.0
    %7219 = vmatprep.subr.mxu0 0.0
    %7220 = vmatpush2.msra.mxu0 0.0
    %7221 = vmatprep.subr.mxu0 0.0
    %7222 = vmatpush2.msra.mxu0 0.0
    %7223 = vmatprep.subr.mxu0 0.0
    %7224 = vmatpush2.msra.mxu0 0.0
    %7225 = vmatprep.subr.mxu0 0.0
    %7226 = vmatpush2.msra.mxu0 0.0
    %7227 = vmatprep.subr.mxu0 0.0
    %7228 = vmatpush2.msra.mxu0 0.0
    %7229 = vmatprep.subr.mxu0 0.0
    %7230 = vmatpush2.msra.mxu0 0.0
    %7231 = vmatprep.subr.mxu0 0.0
    %7232 = vmatpush2.msra.mxu0 0.0
    %7233 = vmatprep.subr.mxu0 0.0
    %7234 = vmatpush2.msra.mxu0 0.0
    %7235 = vmatprep.subr.mxu0 0.0
    %7236 = vmatpush2.msra.mxu0 0.0
    %7237 = vmatprep.subr.mxu0 0.0
    %7238 = vmatpush2.msra.mxu0 0.0
    %7239 = vmatprep.subr.mxu0 0.0
    %7240 = vmatpush2.msra.mxu0 0.0
    %7241 = vmatprep.mubr.f32.mxu0 0.0
    %7242 = vmatmul.mubr.f32.gmra.mxu0 %v7172
    %v7243 = vpop.f32.mrf.mxu0
    %v7244 = vadd.f32 0.0, %v7243
    %v7245 = vpop.f32.mrf.mxu0
    %7246 = vmatprep.mubr.f32.mxu0 0.0
    %7247 = vmatmul.mubr.f32.gmra.mxu0 %v7175
    %v7248 = vpop.f32.mrf.mxu0
    %v7249 = vadd.f32 0.0, %v7248
    %v7250 = vpop.f32.mrf.mxu0
    %7251 = vdwg.mxu0
    %7256 = vrot.lane.b32.xlu0 %v7129, 96
    %v7257 = vpop.permute.xlu0 %7256
    %7258 = vrot.lane.b32.xlu0 %v7130, 96
    %v7259 = vpop.permute.xlu0 %7258
    %7260 = vrot.lane.b32.xlu0 %v7131, 96
    %v7261 = vpop.permute.xlu0 %7260
    %7262 = vrot.lane.b32.xlu0 %v7132, 96
    %v7263 = vpop.permute.xlu0 %7262
    %7268 = vmatprep.subr.mxu0 0.0
    %7269 = vmatpush1.msra.mxu0 0.0
    %7270 = vmatprep.subr.mxu0 0.0
    %7271 = vmatpush1.msra.mxu0 0.0
    %7272 = vmatprep.subr.mxu0 0.0
    %7273 = vmatpush1.msra.mxu0 0.0
    %7274 = vmatprep.subr.mxu0 0.0
    %7275 = vmatpush1.msra.mxu0 0.0
    %7276 = vmatprep.subr.mxu0 0.0
    %7277 = vmatpush1.msra.mxu0 0.0
    %7278 = vmatprep.subr.mxu0 0.0
    %7279 = vmatpush1.msra.mxu0 0.0
    %7280 = vmatprep.subr.mxu0 0.0
    %7281 = vmatpush1.msra.mxu0 0.0
    %7282 = vmatprep.subr.mxu0 0.0
    %7283 = vmatpush1.msra.mxu0 0.0
    %7284 = vmatprep.subr.mxu0 0.0
    %7285 = vmatpush1.msra.mxu0 0.0
    %7286 = vmatprep.subr.mxu0 0.0
    %7287 = vmatpush1.msra.mxu0 0.0
    %7288 = vmatprep.subr.mxu0 0.0
    %7289 = vmatpush1.msra.mxu0 0.0
    %7290 = vmatprep.subr.mxu0 0.0
    %7291 = vmatpush1.msra.mxu0 0.0
    %7292 = vmatprep.subr.mxu0 0.0
    %7293 = vmatpush1.msra.mxu0 %v7263
    %7294 = vmatprep.subr.mxu0 0.0
    %7295 = vmatpush1.msra.mxu0 %v7261
    %7296 = vmatprep.subr.mxu0 0.0
    %7297 = vmatpush1.msra.mxu0 %v7259
    %7298 = vmatprep.subr.mxu0 0.0
    %7299 = vmatpush1.msra.mxu0 %v7257
    %7300 = vmatprep.subr.mxu0 0.0
    %7301 = vmatpush2.msra.mxu0 0.0
    %7302 = vmatprep.subr.mxu0 0.0
    %7303 = vmatpush2.msra.mxu0 0.0
    %7304 = vmatprep.subr.mxu0 0.0
    %7305 = vmatpush2.msra.mxu0 0.0
    %7306 = vmatprep.subr.mxu0 0.0
    %7307 = vmatpush2.msra.mxu0 0.0
    %7308 = vmatprep.subr.mxu0 0.0
    %7309 = vmatpush2.msra.mxu0 0.0
    %7310 = vmatprep.subr.mxu0 0.0
    %7311 = vmatpush2.msra.mxu0 0.0
    %7312 = vmatprep.subr.mxu0 0.0
    %7313 = vmatpush2.msra.mxu0 0.0
    %7314 = vmatprep.subr.mxu0 0.0
    %7315 = vmatpush2.msra.mxu0 0.0
    %7316 = vmatprep.subr.mxu0 0.0
    %7317 = vmatpush2.msra.mxu0 0.0
    %7318 = vmatprep.subr.mxu0 0.0
    %7319 = vmatpush2.msra.mxu0 0.0
    %7320 = vmatprep.subr.mxu0 0.0
    %7321 = vmatpush2.msra.mxu0 0.0
    %7322 = vmatprep.subr.mxu0 0.0
    %7323 = vmatpush2.msra.mxu0 0.0
    %7324 = vmatprep.subr.mxu0 0.0
    %7325 = vmatpush2.msra.mxu0 0.0
    %7326 = vmatprep.subr.mxu0 0.0
    %7327 = vmatpush2.msra.mxu0 0.0
    %7328 = vmatprep.subr.mxu0 0.0
    %7329 = vmatpush2.msra.mxu0 0.0
    %7330 = vmatprep.subr.mxu0 0.0
    %7331 = vmatpush2.msra.mxu0 0.0
    %7332 = vmatprep.mubr.f32.mxu0 0.0
    %7333 = vmatmul.mubr.f32.gmra.mxu0 %v4748
    %v7334 = vpop.f32.mrf.mxu0
    %v7335 = vadd.f32 0.0, %v7334
    %v7336 = vpop.f32.mrf.mxu0
    %7337 = vmatprep.mubr.f32.mxu0 0.0
    %7338 = vmatmul.mubr.f32.gmra.mxu0 %v4751
    %v7339 = vpop.f32.mrf.mxu0
    %v7340 = vadd.f32 0.0, %v7339
    %v7341 = vpop.f32.mrf.mxu0
    %7342 = vmatprep.mubr.f32.mxu0 0.0
    %7343 = vmatmul.mubr.f32.gmra.mxu0 %v4754
    %v7344 = vpop.f32.mrf.mxu0
    %v7345 = vadd.f32 0.0, %v7344
    %v7346 = vpop.f32.mrf.mxu0
    %7347 = vmatprep.mubr.f32.mxu0 0.0
    %7348 = vmatmul.mubr.f32.gmra.mxu0 %v4757
    %v7349 = vpop.f32.mrf.mxu0
    %v7350 = vadd.f32 0.0, %v7349
    %v7351 = vpop.f32.mrf.mxu0
    %7352 = vdwg.mxu0
    %v7354 = vsel %vm225, %v7244, 0
    %v7357 = vsel %vm225, %v7249, 0
    %v7360 = vsel %vm225, %v7335, 0
    %v7363 = vsel %vm225, %v7340, 0
    %v7366 = vsel %vm225, %v7345, 0
    %v7369 = vsel %vm225, %v7350, 0
    %7371 = vmatprep.subr.mxu0 0.0
    %7372 = vmatpush1.xpose.msra.mxu0 0.0
    %7373 = vmatprep.subr.mxu0 0.0
    %7374 = vmatpush1.xpose.msra.mxu0 0.0
    %7375 = vmatprep.subr.mxu0 0.0
    %7376 = vmatpush1.xpose.msra.mxu0 0.0
    %7377 = vmatprep.subr.mxu0 0.0
    %7378 = vmatpush1.xpose.msra.mxu0 0.0
    %7379 = vmatprep.subr.mxu0 0.0
    %7380 = vmatpush1.xpose.msra.mxu0 0.0
    %7381 = vmatprep.subr.mxu0 0.0
    %7382 = vmatpush1.xpose.msra.mxu0 0.0
    %7383 = vmatprep.subr.mxu0 0.0
    %7384 = vmatpush1.xpose.msra.mxu0 0.0
    %7385 = vmatprep.subr.mxu0 0.0
    %7386 = vmatpush1.xpose.msra.mxu0 0.0
    %7387 = vmatprep.subr.mxu0 0.0
    %7388 = vmatpush1.xpose.msra.mxu0 0.0
    %7389 = vmatprep.subr.mxu0 0.0
    %7390 = vmatpush1.xpose.msra.mxu0 0.0
    %7391 = vmatprep.subr.mxu0 0.0
    %7392 = vmatpush1.xpose.msra.mxu0 0.0
    %7393 = vmatprep.subr.mxu0 0.0
    %7394 = vmatpush1.xpose.msra.mxu0 0.0
    %7395 = vmatprep.subr.mxu0 0.0
    %7396 = vmatpush1.xpose.msra.mxu0 %v7369
    %7397 = vmatprep.subr.mxu0 0.0
    %7398 = vmatpush1.xpose.msra.mxu0 %v7366
    %7399 = vmatprep.subr.mxu0 0.0
    %7400 = vmatpush1.xpose.msra.mxu0 %v7363
    %7401 = vmatprep.subr.mxu0 0.0
    %7402 = vmatpush1.xpose.msra.mxu0 %v7360
    %7403 = vmatprep.subr.mxu0 0.0
    %7404 = vmatpush2.xpose.msra.mxu0 0.0
    %7405 = vmatprep.subr.mxu0 0.0
    %7406 = vmatpush2.xpose.msra.mxu0 0.0
    %7407 = vmatprep.subr.mxu0 0.0
    %7408 = vmatpush2.xpose.msra.mxu0 0.0
    %7409 = vmatprep.subr.mxu0 0.0
    %7410 = vmatpush2.xpose.msra.mxu0 0.0
    %7411 = vmatprep.subr.mxu0 0.0
    %7412 = vmatpush2.xpose.msra.mxu0 0.0
    %7413 = vmatprep.subr.mxu0 0.0
    %7414 = vmatpush2.xpose.msra.mxu0 0.0
    %7415 = vmatprep.subr.mxu0 0.0
    %7416 = vmatpush2.xpose.msra.mxu0 0.0
    %7417 = vmatprep.subr.mxu0 0.0
    %7418 = vmatpush2.xpose.msra.mxu0 0.0
    %7419 = vmatprep.subr.mxu0 0.0
    %7420 = vmatpush2.xpose.msra.mxu0 0.0
    %7421 = vmatprep.subr.mxu0 0.0
    %7422 = vmatpush2.xpose.msra.mxu0 0.0
    %7423 = vmatprep.subr.mxu0 0.0
    %7424 = vmatpush2.xpose.msra.mxu0 0.0
    %7425 = vmatprep.subr.mxu0 0.0
    %7426 = vmatpush2.xpose.msra.mxu0 0.0
    %7427 = vmatprep.subr.mxu0 0.0
    %7428 = vmatpush2.xpose.msra.mxu0 0.0
    %7429 = vmatprep.subr.mxu0 0.0
    %7430 = vmatpush2.xpose.msra.mxu0 0.0
    %7431 = vmatprep.subr.mxu0 0.0
    %7432 = vmatpush2.xpose.msra.mxu0 0.0
    %7433 = vmatprep.subr.mxu0 0.0
    %7434 = vmatpush2.xpose.msra.mxu0 0.0
    %7435 = vmatprep.mubr.f32.mxu0 0.0
    %7436 = vmatmul.mubr.f32.gmra.mxu0 %v7354
    %v7437 = vpop.f32.mrf.mxu0
    %v7438 = vadd.f32 %v33, %v7437
    %v7439 = vpop.f32.mrf.mxu0
    %7440 = vmatprep.mubr.f32.mxu0 0.0
    %7441 = vmatmul.mubr.f32.gmra.mxu0 %v7357
    %v7442 = vpop.f32.mrf.mxu0
    %v7443 = vadd.f32 %v34, %v7442
    %v7444 = vpop.f32.mrf.mxu0
    %7445 = vdwg.mxu0
    %v7446 = vsel %vm46, %v7438, -inf
    %7447 = vmax.xlane.f32.xlu0 %v7446
    %v7448 = vpop.xlane.xlu0 %7447
    %v7449 = vsel %vm46, %v7443, -inf
    %7450 = vmax.xlane.f32.xlu0 %v7449
    %v7451 = vpop.xlane.xlu0 %7450
    %v7452 = vsub.f32 %v7438, %v7448
    %v7453 = vsub.f32 %v7443, %v7451
    %v7454 = vmul.f32 %v7452, 1.442695
    %v7455 = vpow.pop %v7454
    %v7456 = vmul.f32 %v7453, 1.442695
    %v7457 = vpow.pop %v7456
    %v7458 = vsel %vm46, %v7455, 0.0
    %7459 = vadd.xlane.f32.xlu0 %v7458
    %v7460 = vpop.xlane.xlu0 %7459
    %v7461 = vsel %vm46, %v7457, 0.0
    %7462 = vadd.xlane.f32.xlu0 %v7461
    %v7463 = vpop.xlane.xlu0 %7462
    %v7464 = vrcp.pop %v7460
    %v7465 = vmul.f32 %v7455, %v7464
    %v7466 = vrcp.pop %v7463
    %v7467 = vmul.f32 %v7457, %v7466
    %7468 = vrot.lane.b32.xlu0 %v7335, 96
    %v7469 = vpop.permute.xlu0 %7468
    %7470 = vrot.lane.b32.xlu0 %v7340, 96
    %v7471 = vpop.permute.xlu0 %7470
    %7472 = vrot.lane.b32.xlu0 %v7345, 96
    %v7473 = vpop.permute.xlu0 %7472
    %7474 = vrot.lane.b32.xlu0 %v7350, 96
    %v7475 = vpop.permute.xlu0 %7474
    %v7481 = vsel %vm46, %v7465, 0
    %v7484 = vsel %vm46, %v7467, 0
    %7486 = vmatprep.subr.mxu0 0.0
    %7487 = vmatpush1.msra.mxu0 0.0
    %7488 = vmatprep.subr.mxu0 0.0
    %7489 = vmatpush1.msra.mxu0 0.0
    %7490 = vmatprep.subr.mxu0 0.0
    %7491 = vmatpush1.msra.mxu0 0.0
    %7492 = vmatprep.subr.mxu0 0.0
    %7493 = vmatpush1.msra.mxu0 0.0
    %7494 = vmatprep.subr.mxu0 0.0
    %7495 = vmatpush1.msra.mxu0 0.0
    %7496 = vmatprep.subr.mxu0 0.0
    %7497 = vmatpush1.msra.mxu0 0.0
    %7498 = vmatprep.subr.mxu0 0.0
    %7499 = vmatpush1.msra.mxu0 0.0
    %7500 = vmatprep.subr.mxu0 0.0
    %7501 = vmatpush1.msra.mxu0 0.0
    %7502 = vmatprep.subr.mxu0 0.0
    %7503 = vmatpush1.msra.mxu0 0.0
    %7504 = vmatprep.subr.mxu0 0.0
    %7505 = vmatpush1.msra.mxu0 0.0
    %7506 = vmatprep.subr.mxu0 0.0
    %7507 = vmatpush1.msra.mxu0 0.0
    %7508 = vmatprep.subr.mxu0 0.0
    %7509 = vmatpush1.msra.mxu0 0.0
    %7510 = vmatprep.subr.mxu0 0.0
    %7511 = vmatpush1.msra.mxu0 %v7475
    %7512 = vmatprep.subr.mxu0 0.0
    %7513 = vmatpush1.msra.mxu0 %v7473
    %7514 = vmatprep.subr.mxu0 0.0
    %7515 = vmatpush1.msra.mxu0 %v7471
    %7516 = vmatprep.subr.mxu0 0.0
    %7517 = vmatpush1.msra.mxu0 %v7469
    %7518 = vmatprep.subr.mxu0 0.0
    %7519 = vmatpush2.msra.mxu0 0.0
    %7520 = vmatprep.subr.mxu0 0.0
    %7521 = vmatpush2.msra.mxu0 0.0
    %7522 = vmatprep.subr.mxu0 0.0
    %7523 = vmatpush2.msra.mxu0 0.0
    %7524 = vmatprep.subr.mxu0 0.0
    %7525 = vmatpush2.msra.mxu0 0.0
    %7526 = vmatprep.subr.mxu0 0.0
    %7527 = vmatpush2.msra.mxu0 0.0
    %7528 = vmatprep.subr.mxu0 0.0
    %7529 = vmatpush2.msra.mxu0 0.0
    %7530 = vmatprep.subr.mxu0 0.0
    %7531 = vmatpush2.msra.mxu0 0.0
    %7532 = vmatprep.subr.mxu0 0.0
    %7533 = vmatpush2.msra.mxu0 0.0
    %7534 = vmatprep.subr.mxu0 0.0
    %7535 = vmatpush2.msra.mxu0 0.0
    %7536 = vmatprep.subr.mxu0 0.0
    %7537 = vmatpush2.msra.mxu0 0.0
    %7538 = vmatprep.subr.mxu0 0.0
    %7539 = vmatpush2.msra.mxu0 0.0
    %7540 = vmatprep.subr.mxu0 0.0
    %7541 = vmatpush2.msra.mxu0 0.0
    %7542 = vmatprep.subr.mxu0 0.0
    %7543 = vmatpush2.msra.mxu0 0.0
    %7544 = vmatprep.subr.mxu0 0.0
    %7545 = vmatpush2.msra.mxu0 0.0
    %7546 = vmatprep.subr.mxu0 0.0
    %7547 = vmatpush2.msra.mxu0 0.0
    %7548 = vmatprep.subr.mxu0 0.0
    %7549 = vmatpush2.msra.mxu0 0.0
    %7550 = vmatprep.mubr.f32.mxu0 0.0
    %7551 = vmatmul.mubr.f32.gmra.mxu0 %v7481
    %v7552 = vpop.f32.mrf.mxu0
    %v7553 = vadd.f32 0.0, %v7552
    %v7554 = vpop.f32.mrf.mxu0
    %7555 = vmatprep.mubr.f32.mxu0 0.0
    %7556 = vmatmul.mubr.f32.gmra.mxu0 %v7484
    %v7557 = vpop.f32.mrf.mxu0
    %v7558 = vadd.f32 0.0, %v7557
    %v7559 = vpop.f32.mrf.mxu0
    %7560 = vdwg.mxu0
    %7561 = vrot.lane.b32.xlu0 %v7244, 120
    %v7562 = vpop.permute.xlu0 %7561
    %7563 = vrot.lane.b32.xlu0 %v7249, 120
    %v7564 = vpop.permute.xlu0 %7563
    %7565 = vrot.lane.b32.xlu0 %v7335, 120
    %v7566 = vpop.permute.xlu0 %7565
    %7567 = vrot.lane.b32.xlu0 %v7340, 120
    %v7568 = vpop.permute.xlu0 %7567
    %7569 = vrot.lane.b32.xlu0 %v7345, 120
    %v7570 = vpop.permute.xlu0 %7569
    %7571 = vrot.lane.b32.xlu0 %v7350, 120
    %v7572 = vpop.permute.xlu0 %7571
    %v7573 = vsel %vm225, %v7562, 0
    %v7575 = vsel %vm225, %v7564, 0
    %v7577 = vsel %vm225, %v7566, 0
    %v7579 = vsel %vm225, %v7568, 0
    %v7581 = vsel %vm225, %v7570, 0
    %v7583 = vsel %vm225, %v7572, 0
    %7585 = vmatprep.subr.mxu0 0.0
    %7586 = vmatpush1.xpose.msra.mxu0 0.0
    %7587 = vmatprep.subr.mxu0 0.0
    %7588 = vmatpush1.xpose.msra.mxu0 0.0
    %7589 = vmatprep.subr.mxu0 0.0
    %7590 = vmatpush1.xpose.msra.mxu0 0.0
    %7591 = vmatprep.subr.mxu0 0.0
    %7592 = vmatpush1.xpose.msra.mxu0 0.0
    %7593 = vmatprep.subr.mxu0 0.0
    %7594 = vmatpush1.xpose.msra.mxu0 0.0
    %7595 = vmatprep.subr.mxu0 0.0
    %7596 = vmatpush1.xpose.msra.mxu0 0.0
    %7597 = vmatprep.subr.mxu0 0.0
    %7598 = vmatpush1.xpose.msra.mxu0 0.0
    %7599 = vmatprep.subr.mxu0 0.0
    %7600 = vmatpush1.xpose.msra.mxu0 0.0
    %7601 = vmatprep.subr.mxu0 0.0
    %7602 = vmatpush1.xpose.msra.mxu0 0.0
    %7603 = vmatprep.subr.mxu0 0.0
    %7604 = vmatpush1.xpose.msra.mxu0 0.0
    %7605 = vmatprep.subr.mxu0 0.0
    %7606 = vmatpush1.xpose.msra.mxu0 0.0
    %7607 = vmatprep.subr.mxu0 0.0
    %7608 = vmatpush1.xpose.msra.mxu0 0.0
    %7609 = vmatprep.subr.mxu0 0.0
    %7610 = vmatpush1.xpose.msra.mxu0 %v7583
    %7611 = vmatprep.subr.mxu0 0.0
    %7612 = vmatpush1.xpose.msra.mxu0 %v7581
    %7613 = vmatprep.subr.mxu0 0.0
    %7614 = vmatpush1.xpose.msra.mxu0 %v7579
    %7615 = vmatprep.subr.mxu0 0.0
    %7616 = vmatpush1.xpose.msra.mxu0 %v7577
    %7617 = vmatprep.subr.mxu0 0.0
    %7618 = vmatpush2.xpose.msra.mxu0 0.0
    %7619 = vmatprep.subr.mxu0 0.0
    %7620 = vmatpush2.xpose.msra.mxu0 0.0
    %7621 = vmatprep.subr.mxu0 0.0
    %7622 = vmatpush2.xpose.msra.mxu0 0.0
    %7623 = vmatprep.subr.mxu0 0.0
    %7624 = vmatpush2.xpose.msra.mxu0 0.0
    %7625 = vmatprep.subr.mxu0 0.0
    %7626 = vmatpush2.xpose.msra.mxu0 0.0
    %7627 = vmatprep.subr.mxu0 0.0
    %7628 = vmatpush2.xpose.msra.mxu0 0.0
    %7629 = vmatprep.subr.mxu0 0.0
    %7630 = vmatpush2.xpose.msra.mxu0 0.0
    %7631 = vmatprep.subr.mxu0 0.0
    %7632 = vmatpush2.xpose.msra.mxu0 0.0
    %7633 = vmatprep.subr.mxu0 0.0
    %7634 = vmatpush2.xpose.msra.mxu0 0.0
    %7635 = vmatprep.subr.mxu0 0.0
    %7636 = vmatpush2.xpose.msra.mxu0 0.0
    %7637 = vmatprep.subr.mxu0 0.0
    %7638 = vmatpush2.xpose.msra.mxu0 0.0
    %7639 = vmatprep.subr.mxu0 0.0
    %7640 = vmatpush2.xpose.msra.mxu0 0.0
    %7641 = vmatprep.subr.mxu0 0.0
    %7642 = vmatpush2.xpose.msra.mxu0 0.0
    %7643 = vmatprep.subr.mxu0 0.0
    %7644 = vmatpush2.xpose.msra.mxu0 0.0
    %7645 = vmatprep.subr.mxu0 0.0
    %7646 = vmatpush2.xpose.msra.mxu0 0.0
    %7647 = vmatprep.subr.mxu0 0.0
    %7648 = vmatpush2.xpose.msra.mxu0 0.0
    %7649 = vmatprep.mubr.f32.mxu0 0.0
    %7650 = vmatmul.mubr.f32.gmra.mxu0 %v7573
    %v7651 = vpop.f32.mrf.mxu0
    %v7652 = vadd.f32 %v33, %v7651
    %v7653 = vpop.f32.mrf.mxu0
    %7654 = vmatprep.mubr.f32.mxu0 0.0
    %7655 = vmatmul.mubr.f32.gmra.mxu0 %v7575
    %v7656 = vpop.f32.mrf.mxu0
    %v7657 = vadd.f32 %v34, %v7656
    %v7658 = vpop.f32.mrf.mxu0
    %7659 = vdwg.mxu0
    %v7660 = vsel %vm46, %v7652, -inf
    %7661 = vmax.xlane.f32.xlu0 %v7660
    %v7662 = vpop.xlane.xlu0 %7661
    %v7663 = vsel %vm46, %v7657, -inf
    %7664 = vmax.xlane.f32.xlu0 %v7663
    %v7665 = vpop.xlane.xlu0 %7664
    %v7666 = vsub.f32 %v7652, %v7662
    %v7667 = vsub.f32 %v7657, %v7665
    %v7668 = vmul.f32 %v7666, 1.442695
    %v7669 = vpow.pop %v7668
    %v7670 = vmul.f32 %v7667, 1.442695
    %v7671 = vpow.pop %v7670
    %v7672 = vsel %vm46, %v7669, 0.0
    %7673 = vadd.xlane.f32.xlu0 %v7672
    %v7674 = vpop.xlane.xlu0 %7673
    %v7675 = vsel %vm46, %v7671, 0.0
    %7676 = vadd.xlane.f32.xlu0 %v7675
    %v7677 = vpop.xlane.xlu0 %7676
    %v7678 = vrcp.pop %v7674
    %v7679 = vmul.f32 %v7669, %v7678
    %v7680 = vrcp.pop %v7677
    %v7681 = vmul.f32 %v7671, %v7680
    %7682 = vrot.lane.b32.xlu0 %v7335, 88
    %v7683 = vpop.permute.xlu0 %7682
    %7684 = vrot.lane.b32.xlu0 %v7340, 88
    %v7685 = vpop.permute.xlu0 %7684
    %7686 = vrot.lane.b32.xlu0 %v7345, 88
    %v7687 = vpop.permute.xlu0 %7686
    %7688 = vrot.lane.b32.xlu0 %v7350, 88
    %v7689 = vpop.permute.xlu0 %7688
    %v7695 = vsel %vm46, %v7679, 0
    %v7698 = vsel %vm46, %v7681, 0
    %7700 = vmatprep.subr.mxu0 0.0
    %7701 = vmatpush1.msra.mxu0 0.0
    %7702 = vmatprep.subr.mxu0 0.0
    %7703 = vmatpush1.msra.mxu0 0.0
    %7704 = vmatprep.subr.mxu0 0.0
    %7705 = vmatpush1.msra.mxu0 0.0
    %7706 = vmatprep.subr.mxu0 0.0
    %7707 = vmatpush1.msra.mxu0 0.0
    %7708 = vmatprep.subr.mxu0 0.0
    %7709 = vmatpush1.msra.mxu0 0.0
    %7710 = vmatprep.subr.mxu0 0.0
    %7711 = vmatpush1.msra.mxu0 0.0
    %7712 = vmatprep.subr.mxu0 0.0
    %7713 = vmatpush1.msra.mxu0 0.0
    %7714 = vmatprep.subr.mxu0 0.0
    %7715 = vmatpush1.msra.mxu0 0.0
    %7716 = vmatprep.subr.mxu0 0.0
    %7717 = vmatpush1.msra.mxu0 0.0
    %7718 = vmatprep.subr.mxu0 0.0
    %7719 = vmatpush1.msra.mxu0 0.0
    %7720 = vmatprep.subr.mxu0 0.0
    %7721 = vmatpush1.msra.mxu0 0.0
    %7722 = vmatprep.subr.mxu0 0.0
    %7723 = vmatpush1.msra.mxu0 0.0
    %7724 = vmatprep.subr.mxu0 0.0
    %7725 = vmatpush1.msra.mxu0 %v7689
    %7726 = vmatprep.subr.mxu0 0.0
    %7727 = vmatpush1.msra.mxu0 %v7687
    %7728 = vmatprep.subr.mxu0 0.0
    %7729 = vmatpush1.msra.mxu0 %v7685
    %7730 = vmatprep.subr.mxu0 0.0
    %7731 = vmatpush1.msra.mxu0 %v7683
    %7732 = vmatprep.subr.mxu0 0.0
    %7733 = vmatpush2.msra.mxu0 0.0
    %7734 = vmatprep.subr.mxu0 0.0
    %7735 = vmatpush2.msra.mxu0 0.0
    %7736 = vmatprep.subr.mxu0 0.0
    %7737 = vmatpush2.msra.mxu0 0.0
    %7738 = vmatprep.subr.mxu0 0.0
    %7739 = vmatpush2.msra.mxu0 0.0
    %7740 = vmatprep.subr.mxu0 0.0
    %7741 = vmatpush2.msra.mxu0 0.0
    %7742 = vmatprep.subr.mxu0 0.0
    %7743 = vmatpush2.msra.mxu0 0.0
    %7744 = vmatprep.subr.mxu0 0.0
    %7745 = vmatpush2.msra.mxu0 0.0
    %7746 = vmatprep.subr.mxu0 0.0
    %7747 = vmatpush2.msra.mxu0 0.0
    %7748 = vmatprep.subr.mxu0 0.0
    %7749 = vmatpush2.msra.mxu0 0.0
    %7750 = vmatprep.subr.mxu0 0.0
    %7751 = vmatpush2.msra.mxu0 0.0
    %7752 = vmatprep.subr.mxu0 0.0
    %7753 = vmatpush2.msra.mxu0 0.0
    %7754 = vmatprep.subr.mxu0 0.0
    %7755 = vmatpush2.msra.mxu0 0.0
    %7756 = vmatprep.subr.mxu0 0.0
    %7757 = vmatpush2.msra.mxu0 0.0
    %7758 = vmatprep.subr.mxu0 0.0
    %7759 = vmatpush2.msra.mxu0 0.0
    %7760 = vmatprep.subr.mxu0 0.0
    %7761 = vmatpush2.msra.mxu0 0.0
    %7762 = vmatprep.subr.mxu0 0.0
    %7763 = vmatpush2.msra.mxu0 0.0
    %7764 = vmatprep.mubr.f32.mxu0 0.0
    %7765 = vmatmul.mubr.f32.gmra.mxu0 %v7695
    %v7766 = vpop.f32.mrf.mxu0
    %v7767 = vadd.f32 0.0, %v7766
    %v7768 = vpop.f32.mrf.mxu0
    %7769 = vmatprep.mubr.f32.mxu0 0.0
    %7770 = vmatmul.mubr.f32.gmra.mxu0 %v7698
    %v7771 = vpop.f32.mrf.mxu0
    %v7772 = vadd.f32 0.0, %v7771
    %v7773 = vpop.f32.mrf.mxu0
    %7774 = vdwg.mxu0
    %7775 = vrot.lane.b32.xlu0 %v7244, 112
    %v7776 = vpop.permute.xlu0 %7775
    %7777 = vrot.lane.b32.xlu0 %v7249, 112
    %v7778 = vpop.permute.xlu0 %7777
    %7779 = vrot.lane.b32.xlu0 %v7335, 112
    %v7780 = vpop.permute.xlu0 %7779
    %7781 = vrot.lane.b32.xlu0 %v7340, 112
    %v7782 = vpop.permute.xlu0 %7781
    %7783 = vrot.lane.b32.xlu0 %v7345, 112
    %v7784 = vpop.permute.xlu0 %7783
    %7785 = vrot.lane.b32.xlu0 %v7350, 112
    %v7786 = vpop.permute.xlu0 %7785
    %v7787 = vsel %vm225, %v7776, 0
    %v7789 = vsel %vm225, %v7778, 0
    %v7791 = vsel %vm225, %v7780, 0
    %v7793 = vsel %vm225, %v7782, 0
    %v7795 = vsel %vm225, %v7784, 0
    %v7797 = vsel %vm225, %v7786, 0
    %7799 = vmatprep.subr.mxu0 0.0
    %7800 = vmatpush1.xpose.msra.mxu0 0.0
    %7801 = vmatprep.subr.mxu0 0.0
    %7802 = vmatpush1.xpose.msra.mxu0 0.0
    %7803 = vmatprep.subr.mxu0 0.0
    %7804 = vmatpush1.xpose.msra.mxu0 0.0
    %7805 = vmatprep.subr.mxu0 0.0
    %7806 = vmatpush1.xpose.msra.mxu0 0.0
    %7807 = vmatprep.subr.mxu0 0.0
    %7808 = vmatpush1.xpose.msra.mxu0 0.0
    %7809 = vmatprep.subr.mxu0 0.0
    %7810 = vmatpush1.xpose.msra.mxu0 0.0
    %7811 = vmatprep.subr.mxu0 0.0
    %7812 = vmatpush1.xpose.msra.mxu0 0.0
    %7813 = vmatprep.subr.mxu0 0.0
    %7814 = vmatpush1.xpose.msra.mxu0 0.0
    %7815 = vmatprep.subr.mxu0 0.0
    %7816 = vmatpush1.xpose.msra.mxu0 0.0
    %7817 = vmatprep.subr.mxu0 0.0
    %7818 = vmatpush1.xpose.msra.mxu0 0.0
    %7819 = vmatprep.subr.mxu0 0.0
    %7820 = vmatpush1.xpose.msra.mxu0 0.0
    %7821 = vmatprep.subr.mxu0 0.0
    %7822 = vmatpush1.xpose.msra.mxu0 0.0
    %7823 = vmatprep.subr.mxu0 0.0
    %7824 = vmatpush1.xpose.msra.mxu0 %v7797
    %7825 = vmatprep.subr.mxu0 0.0
    %7826 = vmatpush1.xpose.msra.mxu0 %v7795
    %7827 = vmatprep.subr.mxu0 0.0
    %7828 = vmatpush1.xpose.msra.mxu0 %v7793
    %7829 = vmatprep.subr.mxu0 0.0
    %7830 = vmatpush1.xpose.msra.mxu0 %v7791
    %7831 = vmatprep.subr.mxu0 0.0
    %7832 = vmatpush2.xpose.msra.mxu0 0.0
    %7833 = vmatprep.subr.mxu0 0.0
    %7834 = vmatpush2.xpose.msra.mxu0 0.0
    %7835 = vmatprep.subr.mxu0 0.0
    %7836 = vmatpush2.xpose.msra.mxu0 0.0
    %7837 = vmatprep.subr.mxu0 0.0
    %7838 = vmatpush2.xpose.msra.mxu0 0.0
    %7839 = vmatprep.subr.mxu0 0.0
    %7840 = vmatpush2.xpose.msra.mxu0 0.0
    %7841 = vmatprep.subr.mxu0 0.0
    %7842 = vmatpush2.xpose.msra.mxu0 0.0
    %7843 = vmatprep.subr.mxu0 0.0
    %7844 = vmatpush2.xpose.msra.mxu0 0.0
    %7845 = vmatprep.subr.mxu0 0.0
    %7846 = vmatpush2.xpose.msra.mxu0 0.0
    %7847 = vmatprep.subr.mxu0 0.0
    %7848 = vmatpush2.xpose.msra.mxu0 0.0
    %7849 = vmatprep.subr.mxu0 0.0
    %7850 = vmatpush2.xpose.msra.mxu0 0.0
    %7851 = vmatprep.subr.mxu0 0.0
    %7852 = vmatpush2.xpose.msra.mxu0 0.0
    %7853 = vmatprep.subr.mxu0 0.0
    %7854 = vmatpush2.xpose.msra.mxu0 0.0
    %7855 = vmatprep.subr.mxu0 0.0
    %7856 = vmatpush2.xpose.msra.mxu0 0.0
    %7857 = vmatprep.subr.mxu0 0.0
    %7858 = vmatpush2.xpose.msra.mxu0 0.0
    %7859 = vmatprep.subr.mxu0 0.0
    %7860 = vmatpush2.xpose.msra.mxu0 0.0
    %7861 = vmatprep.subr.mxu0 0.0
    %7862 = vmatpush2.xpose.msra.mxu0 0.0
    %7863 = vmatprep.mubr.f32.mxu0 0.0
    %7864 = vmatmul.mubr.f32.gmra.mxu0 %v7787
    %v7865 = vpop.f32.mrf.mxu0
    %v7866 = vadd.f32 %v33, %v7865
    %v7867 = vpop.f32.mrf.mxu0
    %7868 = vmatprep.mubr.f32.mxu0 0.0
    %7869 = vmatmul.mubr.f32.gmra.mxu0 %v7789
    %v7870 = vpop.f32.mrf.mxu0
    %v7871 = vadd.f32 %v34, %v7870
    %v7872 = vpop.f32.mrf.mxu0
    %7873 = vdwg.mxu0
    %v7874 = vsel %vm46, %v7866, -inf
    %7875 = vmax.xlane.f32.xlu0 %v7874
    %v7876 = vpop.xlane.xlu0 %7875
    %v7877 = vsel %vm46, %v7871, -inf
    %7878 = vmax.xlane.f32.xlu0 %v7877
    %v7879 = vpop.xlane.xlu0 %7878
    %v7880 = vsub.f32 %v7866, %v7876
    %v7881 = vsub.f32 %v7871, %v7879
    %v7882 = vmul.f32 %v7880, 1.442695
    %v7883 = vpow.pop %v7882
    %v7884 = vmul.f32 %v7881, 1.442695
    %v7885 = vpow.pop %v7884
    %v7886 = vsel %vm46, %v7883, 0.0
    %7887 = vadd.xlane.f32.xlu0 %v7886
    %v7888 = vpop.xlane.xlu0 %7887
    %v7889 = vsel %vm46, %v7885, 0.0
    %7890 = vadd.xlane.f32.xlu0 %v7889
    %v7891 = vpop.xlane.xlu0 %7890
    %v7892 = vrcp.pop %v7888
    %v7893 = vmul.f32 %v7883, %v7892
    %v7894 = vrcp.pop %v7891
    %v7895 = vmul.f32 %v7885, %v7894
    %7896 = vrot.lane.b32.xlu0 %v7335, 80
    %v7897 = vpop.permute.xlu0 %7896
    %7898 = vrot.lane.b32.xlu0 %v7340, 80
    %v7899 = vpop.permute.xlu0 %7898
    %7900 = vrot.lane.b32.xlu0 %v7345, 80
    %v7901 = vpop.permute.xlu0 %7900
    %7902 = vrot.lane.b32.xlu0 %v7350, 80
    %v7903 = vpop.permute.xlu0 %7902
    %v7909 = vsel %vm46, %v7893, 0
    %v7912 = vsel %vm46, %v7895, 0
    %7914 = vmatprep.subr.mxu0 0.0
    %7915 = vmatpush1.msra.mxu0 0.0
    %7916 = vmatprep.subr.mxu0 0.0
    %7917 = vmatpush1.msra.mxu0 0.0
    %7918 = vmatprep.subr.mxu0 0.0
    %7919 = vmatpush1.msra.mxu0 0.0
    %7920 = vmatprep.subr.mxu0 0.0
    %7921 = vmatpush1.msra.mxu0 0.0
    %7922 = vmatprep.subr.mxu0 0.0
    %7923 = vmatpush1.msra.mxu0 0.0
    %7924 = vmatprep.subr.mxu0 0.0
    %7925 = vmatpush1.msra.mxu0 0.0
    %7926 = vmatprep.subr.mxu0 0.0
    %7927 = vmatpush1.msra.mxu0 0.0
    %7928 = vmatprep.subr.mxu0 0.0
    %7929 = vmatpush1.msra.mxu0 0.0
    %7930 = vmatprep.subr.mxu0 0.0
    %7931 = vmatpush1.msra.mxu0 0.0
    %7932 = vmatprep.subr.mxu0 0.0
    %7933 = vmatpush1.msra.mxu0 0.0
    %7934 = vmatprep.subr.mxu0 0.0
    %7935 = vmatpush1.msra.mxu0 0.0
    %7936 = vmatprep.subr.mxu0 0.0
    %7937 = vmatpush1.msra.mxu0 0.0
    %7938 = vmatprep.subr.mxu0 0.0
    %7939 = vmatpush1.msra.mxu0 %v7903
    %7940 = vmatprep.subr.mxu0 0.0
    %7941 = vmatpush1.msra.mxu0 %v7901
    %7942 = vmatprep.subr.mxu0 0.0
    %7943 = vmatpush1.msra.mxu0 %v7899
    %7944 = vmatprep.subr.mxu0 0.0
    %7945 = vmatpush1.msra.mxu0 %v7897
    %7946 = vmatprep.subr.mxu0 0.0
    %7947 = vmatpush2.msra.mxu0 0.0
    %7948 = vmatprep.subr.mxu0 0.0
    %7949 = vmatpush2.msra.mxu0 0.0
    %7950 = vmatprep.subr.mxu0 0.0
    %7951 = vmatpush2.msra.mxu0 0.0
    %7952 = vmatprep.subr.mxu0 0.0
    %7953 = vmatpush2.msra.mxu0 0.0
    %7954 = vmatprep.subr.mxu0 0.0
    %7955 = vmatpush2.msra.mxu0 0.0
    %7956 = vmatprep.subr.mxu0 0.0
    %7957 = vmatpush2.msra.mxu0 0.0
    %7958 = vmatprep.subr.mxu0 0.0
    %7959 = vmatpush2.msra.mxu0 0.0
    %7960 = vmatprep.subr.mxu0 0.0
    %7961 = vmatpush2.msra.mxu0 0.0
    %7962 = vmatprep.subr.mxu0 0.0
    %7963 = vmatpush2.msra.mxu0 0.0
    %7964 = vmatprep.subr.mxu0 0.0
    %7965 = vmatpush2.msra.mxu0 0.0
    %7966 = vmatprep.subr.mxu0 0.0
    %7967 = vmatpush2.msra.mxu0 0.0
    %7968 = vmatprep.subr.mxu0 0.0
    %7969 = vmatpush2.msra.mxu0 0.0
    %7970 = vmatprep.subr.mxu0 0.0
    %7971 = vmatpush2.msra.mxu0 0.0
    %7972 = vmatprep.subr.mxu0 0.0
    %7973 = vmatpush2.msra.mxu0 0.0
    %7974 = vmatprep.subr.mxu0 0.0
    %7975 = vmatpush2.msra.mxu0 0.0
    %7976 = vmatprep.subr.mxu0 0.0
    %7977 = vmatpush2.msra.mxu0 0.0
    %7978 = vmatprep.mubr.f32.mxu0 0.0
    %7979 = vmatmul.mubr.f32.gmra.mxu0 %v7909
    %v7980 = vpop.f32.mrf.mxu0
    %v7981 = vadd.f32 0.0, %v7980
    %v7982 = vpop.f32.mrf.mxu0
    %7983 = vmatprep.mubr.f32.mxu0 0.0
    %7984 = vmatmul.mubr.f32.gmra.mxu0 %v7912
    %v7985 = vpop.f32.mrf.mxu0
    %v7986 = vadd.f32 0.0, %v7985
    %v7987 = vpop.f32.mrf.mxu0
    %7988 = vdwg.mxu0
    %7989 = vrot.lane.b32.xlu0 %v7244, 104
    %v7990 = vpop.permute.xlu0 %7989
    %7991 = vrot.lane.b32.xlu0 %v7249, 104
    %v7992 = vpop.permute.xlu0 %7991
    %7993 = vrot.lane.b32.xlu0 %v7335, 104
    %v7994 = vpop.permute.xlu0 %7993
    %7995 = vrot.lane.b32.xlu0 %v7340, 104
    %v7996 = vpop.permute.xlu0 %7995
    %7997 = vrot.lane.b32.xlu0 %v7345, 104
    %v7998 = vpop.permute.xlu0 %7997
    %7999 = vrot.lane.b32.xlu0 %v7350, 104
    %v8000 = vpop.permute.xlu0 %7999
    %v8001 = vsel %vm225, %v7990, 0
    %v8003 = vsel %vm225, %v7992, 0
    %v8005 = vsel %vm225, %v7994, 0
    %v8007 = vsel %vm225, %v7996, 0
    %v8009 = vsel %vm225, %v7998, 0
    %v8011 = vsel %vm225, %v8000, 0
    %8013 = vmatprep.subr.mxu0 0.0
    %8014 = vmatpush1.xpose.msra.mxu0 0.0
    %8015 = vmatprep.subr.mxu0 0.0
    %8016 = vmatpush1.xpose.msra.mxu0 0.0
    %8017 = vmatprep.subr.mxu0 0.0
    %8018 = vmatpush1.xpose.msra.mxu0 0.0
    %8019 = vmatprep.subr.mxu0 0.0
    %8020 = vmatpush1.xpose.msra.mxu0 0.0
    %8021 = vmatprep.subr.mxu0 0.0
    %8022 = vmatpush1.xpose.msra.mxu0 0.0
    %8023 = vmatprep.subr.mxu0 0.0
    %8024 = vmatpush1.xpose.msra.mxu0 0.0
    %8025 = vmatprep.subr.mxu0 0.0
    %8026 = vmatpush1.xpose.msra.mxu0 0.0
    %8027 = vmatprep.subr.mxu0 0.0
    %8028 = vmatpush1.xpose.msra.mxu0 0.0
    %8029 = vmatprep.subr.mxu0 0.0
    %8030 = vmatpush1.xpose.msra.mxu0 0.0
    %8031 = vmatprep.subr.mxu0 0.0
    %8032 = vmatpush1.xpose.msra.mxu0 0.0
    %8033 = vmatprep.subr.mxu0 0.0
    %8034 = vmatpush1.xpose.msra.mxu0 0.0
    %8035 = vmatprep.subr.mxu0 0.0
    %8036 = vmatpush1.xpose.msra.mxu0 0.0
    %8037 = vmatprep.subr.mxu0 0.0
    %8038 = vmatpush1.xpose.msra.mxu0 %v8011
    %8039 = vmatprep.subr.mxu0 0.0
    %8040 = vmatpush1.xpose.msra.mxu0 %v8009
    %8041 = vmatprep.subr.mxu0 0.0
    %8042 = vmatpush1.xpose.msra.mxu0 %v8007
    %8043 = vmatprep.subr.mxu0 0.0
    %8044 = vmatpush1.xpose.msra.mxu0 %v8005
    %8045 = vmatprep.subr.mxu0 0.0
    %8046 = vmatpush2.xpose.msra.mxu0 0.0
    %8047 = vmatprep.subr.mxu0 0.0
    %8048 = vmatpush2.xpose.msra.mxu0 0.0
    %8049 = vmatprep.subr.mxu0 0.0
    %8050 = vmatpush2.xpose.msra.mxu0 0.0
    %8051 = vmatprep.subr.mxu0 0.0
    %8052 = vmatpush2.xpose.msra.mxu0 0.0
    %8053 = vmatprep.subr.mxu0 0.0
    %8054 = vmatpush2.xpose.msra.mxu0 0.0
    %8055 = vmatprep.subr.mxu0 0.0
    %8056 = vmatpush2.xpose.msra.mxu0 0.0
    %8057 = vmatprep.subr.mxu0 0.0
    %8058 = vmatpush2.xpose.msra.mxu0 0.0
    %8059 = vmatprep.subr.mxu0 0.0
    %8060 = vmatpush2.xpose.msra.mxu0 0.0
    %8061 = vmatprep.subr.mxu0 0.0
    %8062 = vmatpush2.xpose.msra.mxu0 0.0
    %8063 = vmatprep.subr.mxu0 0.0
    %8064 = vmatpush2.xpose.msra.mxu0 0.0
    %8065 = vmatprep.subr.mxu0 0.0
    %8066 = vmatpush2.xpose.msra.mxu0 0.0
    %8067 = vmatprep.subr.mxu0 0.0
    %8068 = vmatpush2.xpose.msra.mxu0 0.0
    %8069 = vmatprep.subr.mxu0 0.0
    %8070 = vmatpush2.xpose.msra.mxu0 0.0
    %8071 = vmatprep.subr.mxu0 0.0
    %8072 = vmatpush2.xpose.msra.mxu0 0.0
    %8073 = vmatprep.subr.mxu0 0.0
    %8074 = vmatpush2.xpose.msra.mxu0 0.0
    %8075 = vmatprep.subr.mxu0 0.0
    %8076 = vmatpush2.xpose.msra.mxu0 0.0
    %8077 = vmatprep.mubr.f32.mxu0 0.0
    %8078 = vmatmul.mubr.f32.gmra.mxu0 %v8001
    %v8079 = vpop.f32.mrf.mxu0
    %v8080 = vadd.f32 %v33, %v8079
    %v8081 = vpop.f32.mrf.mxu0
    %8082 = vmatprep.mubr.f32.mxu0 0.0
    %8083 = vmatmul.mubr.f32.gmra.mxu0 %v8003
    %v8084 = vpop.f32.mrf.mxu0
    %v8085 = vadd.f32 %v34, %v8084
    %v8086 = vpop.f32.mrf.mxu0
    %8087 = vdwg.mxu0
    %v8088 = vsel %vm46, %v8080, -inf
    %8089 = vmax.xlane.f32.xlu0 %v8088
    %v8090 = vpop.xlane.xlu0 %8089
    %v8091 = vsel %vm46, %v8085, -inf
    %8092 = vmax.xlane.f32.xlu0 %v8091
    %v8093 = vpop.xlane.xlu0 %8092
    %v8094 = vsub.f32 %v8080, %v8090
    %v8095 = vsub.f32 %v8085, %v8093
    %v8096 = vmul.f32 %v8094, 1.442695
    %v8097 = vpow.pop %v8096
    %v8098 = vmul.f32 %v8095, 1.442695
    %v8099 = vpow.pop %v8098
    %v8100 = vsel %vm46, %v8097, 0.0
    %8101 = vadd.xlane.f32.xlu0 %v8100
    %v8102 = vpop.xlane.xlu0 %8101
    %v8103 = vsel %vm46, %v8099, 0.0
    %8104 = vadd.xlane.f32.xlu0 %v8103
    %v8105 = vpop.xlane.xlu0 %8104
    %v8106 = vrcp.pop %v8102
    %v8107 = vmul.f32 %v8097, %v8106
    %v8108 = vrcp.pop %v8105
    %v8109 = vmul.f32 %v8099, %v8108
    %8110 = vrot.lane.b32.xlu0 %v7335, 72
    %v8111 = vpop.permute.xlu0 %8110
    %8112 = vrot.lane.b32.xlu0 %v7340, 72
    %v8113 = vpop.permute.xlu0 %8112
    %8114 = vrot.lane.b32.xlu0 %v7345, 72
    %v8115 = vpop.permute.xlu0 %8114
    %8116 = vrot.lane.b32.xlu0 %v7350, 72
    %v8117 = vpop.permute.xlu0 %8116
    %v8123 = vsel %vm46, %v8107, 0
    %v8126 = vsel %vm46, %v8109, 0
    %8128 = vmatprep.subr.mxu0 0.0
    %8129 = vmatpush1.msra.mxu0 0.0
    %8130 = vmatprep.subr.mxu0 0.0
    %8131 = vmatpush1.msra.mxu0 0.0
    %8132 = vmatprep.subr.mxu0 0.0
    %8133 = vmatpush1.msra.mxu0 0.0
    %8134 = vmatprep.subr.mxu0 0.0
    %8135 = vmatpush1.msra.mxu0 0.0
    %8136 = vmatprep.subr.mxu0 0.0
    %8137 = vmatpush1.msra.mxu0 0.0
    %8138 = vmatprep.subr.mxu0 0.0
    %8139 = vmatpush1.msra.mxu0 0.0
    %8140 = vmatprep.subr.mxu0 0.0
    %8141 = vmatpush1.msra.mxu0 0.0
    %8142 = vmatprep.subr.mxu0 0.0
    %8143 = vmatpush1.msra.mxu0 0.0
    %8144 = vmatprep.subr.mxu0 0.0
    %8145 = vmatpush1.msra.mxu0 0.0
    %8146 = vmatprep.subr.mxu0 0.0
    %8147 = vmatpush1.msra.mxu0 0.0
    %8148 = vmatprep.subr.mxu0 0.0
    %8149 = vmatpush1.msra.mxu0 0.0
    %8150 = vmatprep.subr.mxu0 0.0
    %8151 = vmatpush1.msra.mxu0 0.0
    %8152 = vmatprep.subr.mxu0 0.0
    %8153 = vmatpush1.msra.mxu0 %v8117
    %8154 = vmatprep.subr.mxu0 0.0
    %8155 = vmatpush1.msra.mxu0 %v8115
    %8156 = vmatprep.subr.mxu0 0.0
    %8157 = vmatpush1.msra.mxu0 %v8113
    %8158 = vmatprep.subr.mxu0 0.0
    %8159 = vmatpush1.msra.mxu0 %v8111
    %8160 = vmatprep.subr.mxu0 0.0
    %8161 = vmatpush2.msra.mxu0 0.0
    %8162 = vmatprep.subr.mxu0 0.0
    %8163 = vmatpush2.msra.mxu0 0.0
    %8164 = vmatprep.subr.mxu0 0.0
    %8165 = vmatpush2.msra.mxu0 0.0
    %8166 = vmatprep.subr.mxu0 0.0
    %8167 = vmatpush2.msra.mxu0 0.0
    %8168 = vmatprep.subr.mxu0 0.0
    %8169 = vmatpush2.msra.mxu0 0.0
    %8170 = vmatprep.subr.mxu0 0.0
    %8171 = vmatpush2.msra.mxu0 0.0
    %8172 = vmatprep.subr.mxu0 0.0
    %8173 = vmatpush2.msra.mxu0 0.0
    %8174 = vmatprep.subr.mxu0 0.0
    %8175 = vmatpush2.msra.mxu0 0.0
    %8176 = vmatprep.subr.mxu0 0.0
    %8177 = vmatpush2.msra.mxu0 0.0
    %8178 = vmatprep.subr.mxu0 0.0
    %8179 = vmatpush2.msra.mxu0 0.0
    %8180 = vmatprep.subr.mxu0 0.0
    %8181 = vmatpush2.msra.mxu0 0.0
    %8182 = vmatprep.subr.mxu0 0.0
    %8183 = vmatpush2.msra.mxu0 0.0
    %8184 = vmatprep.subr.mxu0 0.0
    %8185 = vmatpush2.msra.mxu0 0.0
    %8186 = vmatprep.subr.mxu0 0.0
    %8187 = vmatpush2.msra.mxu0 0.0
    %8188 = vmatprep.subr.mxu0 0.0
    %8189 = vmatpush2.msra.mxu0 0.0
    %8190 = vmatprep.subr.mxu0 0.0
    %8191 = vmatpush2.msra.mxu0 0.0
    %8192 = vmatprep.mubr.f32.mxu0 0.0
    %8193 = vmatmul.mubr.f32.gmra.mxu0 %v8123
    %v8194 = vpop.f32.mrf.mxu0
    %v8195 = vadd.f32 0.0, %v8194
    %v8196 = vpop.f32.mrf.mxu0
    %8197 = vmatprep.mubr.f32.mxu0 0.0
    %8198 = vmatmul.mubr.f32.gmra.mxu0 %v8126
    %v8199 = vpop.f32.mrf.mxu0
    %v8200 = vadd.f32 0.0, %v8199
    %v8201 = vpop.f32.mrf.mxu0
    %8202 = vdwg.mxu0
    %8205 = vrot.lane.b32.xlu0 %v7767, 8
    %v8206 = vpop.permute.xlu0 %8205
    %8207 = vrot.lane.b32.xlu0 %v7772, 8
    %v8208 = vpop.permute.xlu0 %8207
    %8213 = vrot.lane.b32.xlu0 %v7981, 16
    %v8214 = vpop.permute.xlu0 %8213
    %8215 = vrot.lane.b32.xlu0 %v7986, 16
    %v8216 = vpop.permute.xlu0 %8215
    %8221 = vrot.lane.b32.xlu0 %v8195, 24
    %v8222 = vpop.permute.xlu0 %8221
    %8223 = vrot.lane.b32.xlu0 %v8200, 24
    %v8224 = vpop.permute.xlu0 %8223
    %v8227 = vsel %vm225, %v7553, %v8206
    %v8228 = vsel %vm225, %v7558, %v8208
    %v8229 = vsel %vm1342, %v8227, %v8214
    %v8230 = vsel %vm1342, %v8228, %v8216
    %v8231 = vsel %vm1347, %v8229, %v8222
    %v8232 = vsel %vm1347, %v8230, %v8224
    %8233 = vrot.lane.b32.xlu0 %v7129, 32
    %v8234 = vpop.permute.xlu0 %8233
    %8235 = vrot.lane.b32.xlu0 %v7130, 32
    %v8236 = vpop.permute.xlu0 %8235
    %8237 = vrot.lane.b32.xlu0 %v7131, 32
    %v8238 = vpop.permute.xlu0 %8237
    %8239 = vrot.lane.b32.xlu0 %v7132, 32
    %v8240 = vpop.permute.xlu0 %8239
    %v8246 = vsel %vm46, %v8231, 0
    %v8249 = vsel %vm46, %v8232, 0
    %8251 = vmatprep.subr.mxu0 0.0
    %8252 = vmatpush1.msra.mxu0 0.0
    %8253 = vmatprep.subr.mxu0 0.0
    %8254 = vmatpush1.msra.mxu0 0.0
    %8255 = vmatprep.subr.mxu0 0.0
    %8256 = vmatpush1.msra.mxu0 0.0
    %8257 = vmatprep.subr.mxu0 0.0
    %8258 = vmatpush1.msra.mxu0 0.0
    %8259 = vmatprep.subr.mxu0 0.0
    %8260 = vmatpush1.msra.mxu0 0.0
    %8261 = vmatprep.subr.mxu0 0.0
    %8262 = vmatpush1.msra.mxu0 0.0
    %8263 = vmatprep.subr.mxu0 0.0
    %8264 = vmatpush1.msra.mxu0 0.0
    %8265 = vmatprep.subr.mxu0 0.0
    %8266 = vmatpush1.msra.mxu0 0.0
    %8267 = vmatprep.subr.mxu0 0.0
    %8268 = vmatpush1.msra.mxu0 0.0
    %8269 = vmatprep.subr.mxu0 0.0
    %8270 = vmatpush1.msra.mxu0 0.0
    %8271 = vmatprep.subr.mxu0 0.0
    %8272 = vmatpush1.msra.mxu0 0.0
    %8273 = vmatprep.subr.mxu0 0.0
    %8274 = vmatpush1.msra.mxu0 0.0
    %8275 = vmatprep.subr.mxu0 0.0
    %8276 = vmatpush1.msra.mxu0 %v8240
    %8277 = vmatprep.subr.mxu0 0.0
    %8278 = vmatpush1.msra.mxu0 %v8238
    %8279 = vmatprep.subr.mxu0 0.0
    %8280 = vmatpush1.msra.mxu0 %v8236
    %8281 = vmatprep.subr.mxu0 0.0
    %8282 = vmatpush1.msra.mxu0 %v8234
    %8283 = vmatprep.subr.mxu0 0.0
    %8284 = vmatpush2.msra.mxu0 0.0
    %8285 = vmatprep.subr.mxu0 0.0
    %8286 = vmatpush2.msra.mxu0 0.0
    %8287 = vmatprep.subr.mxu0 0.0
    %8288 = vmatpush2.msra.mxu0 0.0
    %8289 = vmatprep.subr.mxu0 0.0
    %8290 = vmatpush2.msra.mxu0 0.0
    %8291 = vmatprep.subr.mxu0 0.0
    %8292 = vmatpush2.msra.mxu0 0.0
    %8293 = vmatprep.subr.mxu0 0.0
    %8294 = vmatpush2.msra.mxu0 0.0
    %8295 = vmatprep.subr.mxu0 0.0
    %8296 = vmatpush2.msra.mxu0 0.0
    %8297 = vmatprep.subr.mxu0 0.0
    %8298 = vmatpush2.msra.mxu0 0.0
    %8299 = vmatprep.subr.mxu0 0.0
    %8300 = vmatpush2.msra.mxu0 0.0
    %8301 = vmatprep.subr.mxu0 0.0
    %8302 = vmatpush2.msra.mxu0 0.0
    %8303 = vmatprep.subr.mxu0 0.0
    %8304 = vmatpush2.msra.mxu0 0.0
    %8305 = vmatprep.subr.mxu0 0.0
    %8306 = vmatpush2.msra.mxu0 0.0
    %8307 = vmatprep.subr.mxu0 0.0
    %8308 = vmatpush2.msra.mxu0 0.0
    %8309 = vmatprep.subr.mxu0 0.0
    %8310 = vmatpush2.msra.mxu0 0.0
    %8311 = vmatprep.subr.mxu0 0.0
    %8312 = vmatpush2.msra.mxu0 0.0
    %8313 = vmatprep.subr.mxu0 0.0
    %8314 = vmatpush2.msra.mxu0 0.0
    %8315 = vmatprep.mubr.f32.mxu0 0.0
    %8316 = vmatmul.mubr.f32.gmra.mxu0 %v8246
    %v8317 = vpop.f32.mrf.mxu0
    %v8318 = vadd.f32 0.0, %v8317
    %v8319 = vpop.f32.mrf.mxu0
    %8320 = vmatprep.mubr.f32.mxu0 0.0
    %8321 = vmatmul.mubr.f32.gmra.mxu0 %v8249
    %v8322 = vpop.f32.mrf.mxu0
    %v8323 = vadd.f32 0.0, %v8322
    %v8324 = vpop.f32.mrf.mxu0
    %8325 = vdwg.mxu0
    %v8326 = vadd.f32 %v7123, %v8318
    %v8327 = vadd.f32 %v7124, %v8323
    %v8328 = vlaneseq
    %v8329 = vshrl.u32 %v8328, 7
    %v8330 = vsub.s32 0, %v8329
    %v8331 = vrot.slane %v7127, %v8330
    %v8332 = vadd.f32 %v8326, %v8331
    %v8333 = vadd.f32 %v8327, %v8331
    %v8334 = vld [vmem:[%s5 + $0x1e] sm:$0x1]
    %v8335 = vld [vmem:[%s5 + $0x1f] sm:$0x1]
    %v8336 = vld [vmem:[%s5 + $0x20] sm:$0x1]
    %v8337 = vld [vmem:[%s5 + $0x21] sm:$0x1]
    %s8338 = scalar_lea.vmem %s3, 96
    %v8339 = vld [vmem:[%s8338] sm:$0xff]
    %v8340 = vld [vmem:[%s8338 + $0x8] sm:$0xff]
    %v8341 = vld [vmem:[%s8338 + $0x10] sm:$0xff]
    %v8342 = vld [vmem:[%s8338 + $0x18] sm:$0xff]
    %s8343 = scalar_lea.vmem %s4, 192
    %v8344 = vld [vmem:[%s8343] sm:$0xff]
    %v8345 = vld [vmem:[%s8343 + $0x8] sm:$0xff]
    %v8346 = vld [vmem:[%s8343 + $0x10] sm:$0xff]
    %v8347 = vld [vmem:[%s8343 + $0x18] sm:$0xff]
    %v8348 = vld [vmem:[%s8343 + $0x20] sm:$0xff]
    %v8349 = vld [vmem:[%s8343 + $0x28] sm:$0xff]
    %v8350 = vld [vmem:[%s8343 + $0x30] sm:$0xff]
    %v8351 = vld [vmem:[%s8343 + $0x38] sm:$0xff]
    %v8352 = vsel %vm46, %v8332, 0.0
    %8353 = vadd.xlane.f32.xlu0 %v8352
    %v8354 = vpop.xlane.xlu0 %8353
    %v8355 = vsel %vm46, %v8333, 0.0
    %8356 = vadd.xlane.f32.xlu0 %v8355
    %v8357 = vpop.xlane.xlu0 %8356
    %v8358 = vmul.f32 %v8354, %v59
    %v8359 = vmul.f32 %v8357, %v59
    %v8360 = vsub.f32 %v8332, %v8358
    %v8361 = vsub.f32 %v8333, %v8359
    %v8362 = vmul.f32 %v8360, %v8360
    %v8363 = vmul.f32 %v8361, %v8361
    %v8364 = vsel %vm46, %v8362, 0.0
    %8365 = vadd.xlane.f32.xlu0 %v8364
    %v8366 = vpop.xlane.xlu0 %8365
    %v8367 = vsel %vm46, %v8363, 0.0
    %8368 = vadd.xlane.f32.xlu0 %v8367
    %v8369 = vpop.xlane.xlu0 %8368
    %v8370 = vmul.f32 %v8366, %v59
    %v8371 = vmul.f32 %v8369, %v59
    %v8372 = vadd.f32 %v8370, 1e-05
    %v8373 = vadd.f32 %v8371, 1e-05
    %v8374 = vrsqrt.pop %v8372
    %v8375 = vrsqrt.pop %v8373
    %v8376 = vmul.f32 %v8360, %v8374
    %v8377 = vmul.f32 %v8361, %v8375
    %v8378 = vlaneseq
    %v8379 = vshrl.u32 %v8378, 7
    %v8380 = vsub.s32 0, %v8379
    %v8381 = vrot.slane %v8334, %v8380
    %v8382 = vmul.f32 %v8376, %v8381
    %v8383 = vmul.f32 %v8377, %v8381
    %v8384 = vlaneseq
    %v8385 = vshrl.u32 %v8384, 7
    %v8386 = vsub.s32 0, %v8385
    %v8387 = vrot.slane %v8335, %v8386
    %v8388 = vadd.f32 %v8382, %v8387
    %v8389 = vadd.f32 %v8383, %v8387
    %v8390 = vlaneseq
    %v8391 = vshrl.u32 %v8390, 7
    %v8392 = vsub.s32 0, %v8391
    %v8393 = vrot.slane %v8336, %v8392
    %v8395 = vsel %vm46, %v8388, 0
    %v8398 = vsel %vm46, %v8389, 0
    %8400 = vmatprep.subr.mxu0 0.0
    %8401 = vmatpush1.msra.mxu0 0.0
    %8402 = vmatprep.subr.mxu0 0.0
    %8403 = vmatpush1.msra.mxu0 0.0
    %8404 = vmatprep.subr.mxu0 0.0
    %8405 = vmatpush1.msra.mxu0 0.0
    %8406 = vmatprep.subr.mxu0 0.0
    %8407 = vmatpush1.msra.mxu0 0.0
    %8408 = vmatprep.subr.mxu0 0.0
    %8409 = vmatpush1.msra.mxu0 0.0
    %8410 = vmatprep.subr.mxu0 0.0
    %8411 = vmatpush1.msra.mxu0 0.0
    %8412 = vmatprep.subr.mxu0 0.0
    %8413 = vmatpush1.msra.mxu0 0.0
    %8414 = vmatprep.subr.mxu0 0.0
    %8415 = vmatpush1.msra.mxu0 0.0
    %8416 = vmatprep.subr.mxu0 0.0
    %8417 = vmatpush1.msra.mxu0 0.0
    %8418 = vmatprep.subr.mxu0 0.0
    %8419 = vmatpush1.msra.mxu0 0.0
    %8420 = vmatprep.subr.mxu0 0.0
    %8421 = vmatpush1.msra.mxu0 0.0
    %8422 = vmatprep.subr.mxu0 0.0
    %8423 = vmatpush1.msra.mxu0 0.0
    %8424 = vmatprep.subr.mxu0 0.0
    %8425 = vmatpush1.msra.mxu0 %v8342
    %8426 = vmatprep.subr.mxu0 0.0
    %8427 = vmatpush1.msra.mxu0 %v8341
    %8428 = vmatprep.subr.mxu0 0.0
    %8429 = vmatpush1.msra.mxu0 %v8340
    %8430 = vmatprep.subr.mxu0 0.0
    %8431 = vmatpush1.msra.mxu0 %v8339
    %8432 = vmatprep.subr.mxu0 0.0
    %8433 = vmatpush2.msra.mxu0 0.0
    %8434 = vmatprep.subr.mxu0 0.0
    %8435 = vmatpush2.msra.mxu0 0.0
    %8436 = vmatprep.subr.mxu0 0.0
    %8437 = vmatpush2.msra.mxu0 0.0
    %8438 = vmatprep.subr.mxu0 0.0
    %8439 = vmatpush2.msra.mxu0 0.0
    %8440 = vmatprep.subr.mxu0 0.0
    %8441 = vmatpush2.msra.mxu0 0.0
    %8442 = vmatprep.subr.mxu0 0.0
    %8443 = vmatpush2.msra.mxu0 0.0
    %8444 = vmatprep.subr.mxu0 0.0
    %8445 = vmatpush2.msra.mxu0 0.0
    %8446 = vmatprep.subr.mxu0 0.0
    %8447 = vmatpush2.msra.mxu0 0.0
    %8448 = vmatprep.subr.mxu0 0.0
    %8449 = vmatpush2.msra.mxu0 0.0
    %8450 = vmatprep.subr.mxu0 0.0
    %8451 = vmatpush2.msra.mxu0 0.0
    %8452 = vmatprep.subr.mxu0 0.0
    %8453 = vmatpush2.msra.mxu0 0.0
    %8454 = vmatprep.subr.mxu0 0.0
    %8455 = vmatpush2.msra.mxu0 0.0
    %8456 = vmatprep.subr.mxu0 0.0
    %8457 = vmatpush2.msra.mxu0 0.0
    %8458 = vmatprep.subr.mxu0 0.0
    %8459 = vmatpush2.msra.mxu0 0.0
    %8460 = vmatprep.subr.mxu0 0.0
    %8461 = vmatpush2.msra.mxu0 0.0
    %8462 = vmatprep.subr.mxu0 0.0
    %8463 = vmatpush2.msra.mxu0 0.0
    %8464 = vmatprep.mubr.f32.mxu0 0.0
    %8465 = vmatmul.mubr.f32.gmra.mxu0 %v8395
    %v8466 = vpop.f32.mrf.mxu0
    %v8467 = vadd.f32 %v8393, %v8466
    %v8468 = vpop.f32.mrf.mxu0
    %8469 = vmatprep.mubr.f32.mxu0 0.0
    %8470 = vmatmul.mubr.f32.gmra.mxu0 %v8398
    %v8471 = vpop.f32.mrf.mxu0
    %v8472 = vadd.f32 %v8393, %v8471
    %v8473 = vpop.f32.mrf.mxu0
    %8474 = vdwg.mxu0
    %v8475 = vmul.f32 %v8467, 0.5
    %v8476 = vmul.f32 %v8472, 0.5
    %v8477 = vmul.f32 %v8467, 0.70710677
    %v8478 = vmul.f32 %v8472, 0.70710677
    %v8479 = verf.f32.pop %v8477
    %v8480 = verf.f32.pop %v8478
    %v8481 = vadd.f32 %v8479, 1.0
    %v8482 = vadd.f32 %v8480, 1.0
    %v8483 = vmul.f32 %v8475, %v8481
    %v8484 = vmul.f32 %v8476, %v8482
    %v8486 = vsel %vm1682, %v8483, 0
    %v8489 = vsel %vm1682, %v8484, 0
    %8491 = vmatprep.subr.mxu0 0.0
    %8492 = vmatpush1.msra.mxu0 0.0
    %8493 = vmatprep.subr.mxu0 0.0
    %8494 = vmatpush1.msra.mxu0 0.0
    %8495 = vmatprep.subr.mxu0 0.0
    %8496 = vmatpush1.msra.mxu0 0.0
    %8497 = vmatprep.subr.mxu0 0.0
    %8498 = vmatpush1.msra.mxu0 0.0
    %8499 = vmatprep.subr.mxu0 0.0
    %8500 = vmatpush1.msra.mxu0 0.0
    %8501 = vmatprep.subr.mxu0 0.0
    %8502 = vmatpush1.msra.mxu0 0.0
    %8503 = vmatprep.subr.mxu0 0.0
    %8504 = vmatpush1.msra.mxu0 0.0
    %8505 = vmatprep.subr.mxu0 0.0
    %8506 = vmatpush1.msra.mxu0 0.0
    %8507 = vmatprep.subr.mxu0 0.0
    %8508 = vmatpush1.msra.mxu0 %v8351
    %8509 = vmatprep.subr.mxu0 0.0
    %8510 = vmatpush1.msra.mxu0 %v8350
    %8511 = vmatprep.subr.mxu0 0.0
    %8512 = vmatpush1.msra.mxu0 %v8349
    %8513 = vmatprep.subr.mxu0 0.0
    %8514 = vmatpush1.msra.mxu0 %v8348
    %8515 = vmatprep.subr.mxu0 0.0
    %8516 = vmatpush1.msra.mxu0 %v8347
    %8517 = vmatprep.subr.mxu0 0.0
    %8518 = vmatpush1.msra.mxu0 %v8346
    %8519 = vmatprep.subr.mxu0 0.0
    %8520 = vmatpush1.msra.mxu0 %v8345
    %8521 = vmatprep.subr.mxu0 0.0
    %8522 = vmatpush1.msra.mxu0 %v8344
    %8523 = vmatprep.subr.mxu0 0.0
    %8524 = vmatpush2.msra.mxu0 0.0
    %8525 = vmatprep.subr.mxu0 0.0
    %8526 = vmatpush2.msra.mxu0 0.0
    %8527 = vmatprep.subr.mxu0 0.0
    %8528 = vmatpush2.msra.mxu0 0.0
    %8529 = vmatprep.subr.mxu0 0.0
    %8530 = vmatpush2.msra.mxu0 0.0
    %8531 = vmatprep.subr.mxu0 0.0
    %8532 = vmatpush2.msra.mxu0 0.0
    %8533 = vmatprep.subr.mxu0 0.0
    %8534 = vmatpush2.msra.mxu0 0.0
    %8535 = vmatprep.subr.mxu0 0.0
    %8536 = vmatpush2.msra.mxu0 0.0
    %8537 = vmatprep.subr.mxu0 0.0
    %8538 = vmatpush2.msra.mxu0 0.0
    %8539 = vmatprep.subr.mxu0 0.0
    %8540 = vmatpush2.msra.mxu0 0.0
    %8541 = vmatprep.subr.mxu0 0.0
    %8542 = vmatpush2.msra.mxu0 0.0
    %8543 = vmatprep.subr.mxu0 0.0
    %8544 = vmatpush2.msra.mxu0 0.0
    %8545 = vmatprep.subr.mxu0 0.0
    %8546 = vmatpush2.msra.mxu0 0.0
    %8547 = vmatprep.subr.mxu0 0.0
    %8548 = vmatpush2.msra.mxu0 0.0
    %8549 = vmatprep.subr.mxu0 0.0
    %8550 = vmatpush2.msra.mxu0 0.0
    %8551 = vmatprep.subr.mxu0 0.0
    %8552 = vmatpush2.msra.mxu0 0.0
    %8553 = vmatprep.subr.mxu0 0.0
    %8554 = vmatpush2.msra.mxu0 0.0
    %8555 = vmatprep.mubr.f32.mxu0 0.0
    %8556 = vmatmul.mubr.f32.gmra.mxu0 %v8486
    %v8557 = vpop.f32.mrf.mxu0
    %v8558 = vadd.f32 0.0, %v8557
    %v8559 = vpop.f32.mrf.mxu0
    %8560 = vmatprep.mubr.f32.mxu0 0.0
    %8561 = vmatmul.mubr.f32.gmra.mxu0 %v8489
    %v8562 = vpop.f32.mrf.mxu0
    %v8563 = vadd.f32 0.0, %v8562
    %v8564 = vpop.f32.mrf.mxu0
    %8565 = vdwg.mxu0
    %v8566 = vadd.f32 %v8332, %v8558
    %v8567 = vadd.f32 %v8333, %v8563
    %v8568 = vlaneseq
    %v8569 = vshrl.u32 %v8568, 7
    %v8570 = vsub.s32 0, %v8569
    %v8571 = vrot.slane %v8337, %v8570
    %v8572 = vadd.f32 %v8566, %v8571
    %v8573 = vadd.f32 %v8567, %v8571
    %8574 = vst.msk [vmem:[#allocation2] sm:$0xff] %vm46, %v8572
    %8575 = vst.msk [vmem:[#allocation2 + $0x8] sm:$0xff] %vm46, %v8573
    // Predicated region
    $region30: #{transformer_forward.1} parent=1 // pred_check
      _
    $region31: #{transformer_forward.1} parent=1 // pred_check_branch
      %8577 = sbr.rel (0) target = $region33
    $region32: #{transformer_forward.1} parent=1 // pred_region
      %s8579 = ssub.s32 256, 256
      %8580 = vsyncadd [#allocation3], %s8579
      %s8581 = sshll.u32 [#allocation2], 4
      %s8582 = int_to_ptr.vmem [resolvable:$true] %s8581
      %8587 = dma.vmem_to_hbm [thread:$0]  %s8582, 256, %s7, [#allocation3], 128, 128, 8
    $region33: #{transformer_forward.1} parent=1 // pred_fallthru
      _
    // Predicated region
    $region34: #{transformer_forward.1} parent=1 // pred_check
      _
    $region35: #{transformer_forward.1} parent=1 // pred_check_branch
      %8589 = sbr.rel (0) target = $region37
    $region36: #{transformer_forward.1} parent=1 // pred_region
      %8590 = dma.done [#allocation3], 256
    $region37: #{transformer_forward.1} parent=1 // pred_fallthru
      _
    %8591 = vsyncpa [#allocation3], 1

</llo_original>
